<compile_context>
chip_gen: v6e
topology: v6e:2x2x1
jax: 0.10.0
libtpu: 0.0.40
codegen_flags: <defaults>
</compile_context>

<pallas_src>
import functools

import numpy as np
import jax
import jax.numpy as jnp
from jax.experimental import pallas as pl
from jax.experimental.pallas import tpu as pltpu

LEAKY_SLOPE = 0.01          # torch.nn.LeakyReLU default
H0 = 28
W0 = 28
L = H0 * W0                 # 784 (module hard-codes view(B, 1, 784) / view(B, -1, 28, 28))
OFF = 8                     # max causal left pad = (kernel_size-1)*max_dilation = 2*4


def _lrelu(v):
    return jnp.where(v >= 0, v, LEAKY_SLOPE * v)


# ----------------------------------------------------------------------------
# Fused kernel: one batch element per grid step, everything VMEM resident.
# ----------------------------------------------------------------------------
def _encoder_kernel(x_ref, c1dw_ref, c1db_ref,
                    e1m_ref, e1c_ref, e1b_ref,
                    e2m_ref, e2c_ref, e2b_ref,
                    e3m_ref, e3c_ref, e3b_ref,
                    fcw_ref, fcb_ref,
                    o_ref,
                    seq_ref, img_ref,
                    *, c1d_defs):
    f32 = jnp.float32

    # ---------------- Stage 1: causal conv1d stack (VPU, layout (C, OFF+L)) --
    # seq_ref[:, :OFF] stays zero -> causal left padding for every layer.
    seq_ref[...] = jnp.zeros(seq_ref.shape, f32)
    seq_ref[0:1, OFF:OFF + L] = x_ref[0]                      # (1, 784)

    wall = c1dw_ref[...]                                      # (C, 3 + 9*C)
    ball = c1db_ref[...]                                      # (C, 4)  column = layer
    C = ball.shape[0]

    for li, (cin, dil, woff) in enumerate(c1d_defs):
        acc = None
        for ci in range(cin):
            for k in range(3):
                shift = (2 - k) * dil                          # tap k reads x[l - shift]
                tap = seq_ref[ci:ci + 1, OFF - shift:OFF - shift + L]   # (1, L)
                wcol = wall[:, woff + ci * 3 + k:woff + ci * 3 + k + 1]  # (C, 1)
                term = wcol * tap                                        # (C, L) broadcast FMA
                acc = term if acc is None else acc + term
        acc = _lrelu(acc + ball[:, li:li + 1])
        seq_ref[0:C, OFF:OFF + L] = acc                        # next layer's input

    # ---------------- Bridge: (C, 784) -> (H0*C, W0), row index = h*C + c ----
    for h in range(H0):
        img_ref[C * h:C * h + C, :] = seq_ref[0:C, OFF + W0 * h:OFF + W0 * h + W0]
    X = img_ref[...]                                           # (112, 28)

    # ---------------- Stage 2: conv2d layers as structured matmuls (MXU) -----
    def conv2d(Xv, m_ref, c_ref, b_ref):
        acc = None
        for kw in range(c_ref.shape[0]):
            t = jnp.dot(Xv, c_ref[kw], preferred_element_type=f32)      # column select
            y = jnp.dot(m_ref[kw], t, preferred_element_type=f32)       # rows x weights
            acc = y if acc is None else acc + y
        return _lrelu(acc + b_ref[...])

    Y = conv2d(X, e1m_ref, e1c_ref, e1b_ref)    # (14*8,  14) = (112, 14)
    Y = conv2d(Y, e2m_ref, e2c_ref, e2b_ref)    # (7*16,  7)  = (112, 7)
    Y = conv2d(Y, e3m_ref, e3c_ref, e3b_ref)    # (7*32,  7)  = (224, 7)

    # ---------------- FC head ------------------------------------------------
    out = fcb_ref[...]                                         # (z_dim, 1)
    for w in range(fcw_ref.shape[0]):
        out = out + jnp.dot(fcw_ref[w], Y[:, w:w + 1], preferred_element_type=f32)
    o_ref[0] = out                                             # (z_dim, 1)


# ----------------------------------------------------------------------------
# Forward wrapper: exactly one pallas_call, trivial glue only.
# ----------------------------------------------------------------------------
def causal_reservoir_encoder(prep, x):
    B = x.shape[0]
    C = prep["c1db"].shape[0]                 # conv1d out_channels (4)
    z_dim = prep["fcb"].shape[0]
    # (Cin, dilation, weight column offset) for the 4 causal conv layers.
    c1d_defs = ((1, 1, 0), (C, 1, 3), (C, 2, 3 + 3 * C), (C, 4, 3 + 6 * C))

    xf = x.reshape(B, 1, L).astype(jnp.float32)   # metadata-only reshape

    weight_names = ("c1dw", "c1db", "e1m", "e1c", "e1b",
                    "e2m", "e2c", "e2b", "e3m", "e3c", "e3b", "fcw", "fcb")
    weights = [prep[n] for n in weight_names]

    def _full(a):
        zeros = (0,) * a.ndim
        return pl.BlockSpec(a.shape, lambda b, z=zeros: z)    # whole array, VMEM resident

    kernel = functools.partial(_encoder_kernel, c1d_defs=c1d_defs)
    out = pl.pallas_call(
        kernel,
        out_shape=jax.ShapeDtypeStruct((B, z_dim, 1), jnp.float32),
        grid_spec=pltpu.PrefetchScalarGridSpec(
            num_scalar_prefetch=0,
            grid=(B,),
            in_specs=[pl.BlockSpec((1, 1, L), lambda b: (b, 0, 0))]
                     + [_full(a) for a in weights],
            out_specs=pl.BlockSpec((1, z_dim, 1), lambda b: (b, 0, 0)),
            scratch_shapes=[pltpu.VMEM((C, OFF + L), jnp.float32),     # conv1d sequence
                            pltpu.VMEM((H0 * C, W0), jnp.float32)],    # 2D-stage image
        ),
        compiler_params=pltpu.CompilerParams(dimension_semantics=("parallel",)),
    )(xf, *weights)

    h_e = out[:, :, 0]                            # (B, z_dim)
    half = z_dim // 2
    return h_e[:, :half], h_e[:, half:]


# ----------------------------------------------------------------------------
# Init-time weight restructuring (hoisted out of the forward path).
# ----------------------------------------------------------------------------
def _conv2d_struct(w, b, h_in, w_in, stride, pad):
    """Build M_kw / C_kw / bias so that  conv2d(x) == sum_kw M_kw @ X @ C_kw + bias,
    with X[h*Cin+ci, w] = x[ci, h, w] and output rows indexed ho*Cout+co."""
    w = np.asarray(w, np.float32)
    b = np.asarray(b, np.float32)
    cout, cin, kh_n, kw_n = w.shape
    ho = (h_in + 2 * pad - kh_n) // stride + 1
    wo = (w_in + 2 * pad - kw_n) // stride + 1
    m = np.zeros((kw_n, ho * cout, h_in * cin), np.float32)
    c = np.zeros((kw_n, w_in, wo), np.float32)
    for kw in range(kw_n):
        for j in range(wo):
            wi = stride * j + kw - pad
            if 0 <= wi < w_in:
                c[kw, wi, j] = 1.0
        for i in range(ho):
            for kh in range(kh_n):
                hi = stride * i + kh - pad
                if 0 <= hi < h_in:
                    m[kw, i * cout:(i + 1) * cout, hi * cin:(hi + 1) * cin] += w[:, :, kh, kw]
    bias = np.tile(b.reshape(1, cout), (ho, 1)).reshape(ho * cout, 1)
    return m, c, bias, ho, wo


def prepare_params(params):
    C = int(np.asarray(params["c1_b"]).shape[0])
    c1dw = np.concatenate(
        [np.asarray(params["c1_w"], np.float32).reshape(C, -1),
         np.asarray(params["c2_w"], np.float32).reshape(C, -1),
         np.asarray(params["c3_w"], np.float32).reshape(C, -1),
         np.asarray(params["c4_w"], np.float32).reshape(C, -1)], axis=1)         # (C, 3+9C)
    c1db = np.stack([np.asarray(params["c%d_b" % i], np.float32) for i in (1, 2, 3, 4)],
                    axis=1)                                                       # (C, 4)

    e1m, e1c, e1b, ho1, wo1 = _conv2d_struct(params["e1_w"], params["e1_b"], H0, W0, 2, 1)
    e2m, e2c, e2b, ho2, wo2 = _conv2d_struct(params["e2_w"], params["e2_b"], ho1, wo1, 2, 1)
    e3m, e3c, e3b, ho3, wo3 = _conv2d_struct(params["e3_w"], params["e3_b"], ho2, wo2, 1, 1)

    fc_w = np.asarray(params["fc_w"], np.float32)
    fc_b = np.asarray(params["fc_b"], np.float32)
    z = fc_b.shape[0]
    cout3 = int(np.asarray(params["e3_b"]).shape[0])
    w4 = fc_w.reshape(z, cout3, ho3, wo3)                          # [j, ci, h, w] (NCHW flatten)
    fcw = np.transpose(w4, (3, 0, 2, 1)).reshape(wo3, z, ho3 * cout3)   # [w, j, h*C3+ci]
    fcb = fc_b.reshape(z, 1)

    prep = dict(c1dw=c1dw, c1db=c1db,
                e1m=e1m, e1c=e1c, e1b=e1b,
                e2m=e2m, e2c=e2c, e2b=e2b,
                e3m=e3m, e3c=e3c, e3b=e3b,
                fcw=fcw, fcb=fcb)
    return {k: jnp.asarray(v) for k, v in prep.items()}


# ----------------------------------------------------------------------------
# Deterministic synthetic parameters (same layout as the PyTorch module).
# ----------------------------------------------------------------------------
def init_params(key, in_channels=1, out_channels=4, num_filters=8, z_dim=16):
    keys = jax.random.split(key, 9)

    def w(k, shape):
        fan_in = 1
        for d in shape[1:]:
            fan_in *= d
        return jax.random.normal(k, shape, jnp.float32) / jnp.sqrt(float(fan_in))

    nf = num_filters
    return {
        "c1_w": w(keys[0], (out_channels, in_channels, 3)),
        "c1_b": jnp.zeros((out_channels,), jnp.float32),
        "c2_w": w(keys[1], (out_channels, out_channels, 3)),
        "c2_b": jnp.zeros((out_channels,), jnp.float32),
        "c3_w": w(keys[2], (out_channels, out_channels, 3)),
        "c3_b": jnp.zeros((out_channels,), jnp.float32),
        "c4_w": w(keys[3], (out_channels, out_channels, 3)),
        "c4_b": jnp.zeros((out_channels,), jnp.float32),
        "e1_w": w(keys[4], (nf, out_channels, 4, 4)),
        "e1_b": 0.01 * jnp.ones((nf,), jnp.float32),
        "e2_w": w(keys[5], (2 * nf, nf, 4, 4)),
        "e2_b": 0.01 * jnp.ones((2 * nf,), jnp.float32),
        "e3_w": w(keys[6], (4 * nf, 2 * nf, 3, 3)),
        "e3_b": 0.01 * jnp.ones((4 * nf,), jnp.float32),
        "fc_w": w(keys[7], (z_dim, 4 * nf * 7 * 7)),
        "fc_b": jnp.zeros((z_dim,), jnp.float32),
    }


# ----------------------------------------------------------------------------
# Pure-JAX reference of the PyTorch module (for correctness verification).
# ----------------------------------------------------------------------------
def _reference_forward(params, x):
    B = x.shape[0]
    hp = jax.lax.Precision.HIGHEST

    def cconv1d(h, w, b, d):
        pad = (w.shape[-1] - 1) * d
        y = jax.lax.conv_general_dilated(
            h, w, window_strides=(1,), padding=[(pad, 0)], rhs_dilation=(d,),
            dimension_numbers=("NCH", "OIH", "NCH"), precision=hp)
        return _lrelu(y + b[None, :, None])

    def conv2d(h, w, b, s, p):
        y = jax.lax.conv_general_dilated(
            h, w, window_strides=(s, s), padding=[(p, p), (p, p)],
            dimension_numbers=("NCHW", "OIHW", "NCHW"), precision=hp)
        return _lrelu(y + b[None, :, None, None])

    h = x.reshape(B, 1, L)
    h = cconv1d(h, params["c1_w"], params["c1_b"], 1)
    h = cconv1d(h, params["c2_w"], params["c2_b"], 1)
    h = cconv1d(h, params["c3_w"], params["c3_b"], 2)
    h = cconv1d(h, params["c4_w"], params["c4_b"], 4)
    h2 = h.reshape(B, -1, H0, W0)
    h2 = conv2d(h2, params["e1_w"], params["e1_b"], 2, 1)
    h2 = conv2d(h2, params["e2_w"], params["e2_b"], 2, 1)
    h2 = conv2d(h2, params["e3_w"], params["e3_b"], 1, 1)
    flat = h2.reshape(B, -1)
    h_e = jnp.dot(flat, params["fc_w"].T, precision=hp) + params["fc_b"]
    z = params["fc_b"].shape[0]
    return h_e[:, :z // 2], h_e[:, z // 2:]


if __name__ == "__main__":
    B, z_dim = 2, 16
    key = jax.random.PRNGKey(0)
    kx, kp = jax.random.split(key)
    x = jax.random.normal(kx, (B, 1, 28, 28), jnp.float32)   # forward implies 1*28*28 = 784
    params = init_params(kp, in_channels=1, out_channels=4, num_filters=8, z_dim=z_dim)
    prep = prepare_params(params)

    fwd = jax.jit(causal_reservoir_encoder)
    mu, log_var = fwd(prep, x)
    jax.block_until_ready((mu, log_var))

    assert mu.shape == (B, z_dim // 2), mu.shape
    assert log_var.shape == (B, z_dim // 2), log_var.shape
    assert mu.dtype == jnp.float32 and log_var.dtype == jnp.float32

    # Numerical check against a pure-JAX reference of the PyTorch module.
    mu_ref, lv_ref = jax.jit(_reference_forward)(params, x)
    assert jnp.allclose(mu, mu_ref, atol=1e-3, rtol=1e-3)
    assert jnp.allclose(log_var, lv_ref, atol=1e-3, rtol=1e-3)

    print("KERNEL_OK")
</pallas_src>

<mosaic_0001>
module attributes {stable_mosaic.version = 11 : i64} {
  func.func @_encoder_kernel(%arg0: i32, %arg1: memref<1x1x784xf32, #tpu.memory_space<vmem>>, %arg2: memref<4x39xf32, #tpu.memory_space<vmem>>, %arg3: memref<4x4xf32, #tpu.memory_space<vmem>>, %arg4: memref<4x112x112xf32, #tpu.memory_space<vmem>>, %arg5: memref<4x28x14xf32, #tpu.memory_space<vmem>>, %arg6: memref<112x1xf32, #tpu.memory_space<vmem>>, %arg7: memref<4x112x112xf32, #tpu.memory_space<vmem>>, %arg8: memref<4x14x7xf32, #tpu.memory_space<vmem>>, %arg9: memref<112x1xf32, #tpu.memory_space<vmem>>, %arg10: memref<3x224x112xf32, #tpu.memory_space<vmem>>, %arg11: memref<3x7x7xf32, #tpu.memory_space<vmem>>, %arg12: memref<224x1xf32, #tpu.memory_space<vmem>>, %arg13: memref<7x16x224xf32, #tpu.memory_space<vmem>>, %arg14: memref<16x1xf32, #tpu.memory_space<vmem>>, %arg15: memref<1x16x1xf32, #tpu.memory_space<vmem>>, %arg16: memref<4x792xf32, #tpu.memory_space<vmem>>, %arg17: memref<112x28xf32, #tpu.memory_space<vmem>>) attributes {dimension_semantics = [#tpu.dimension_semantics<parallel>], iteration_bounds = array<i64: 2>, scalar_prefetch = 0 : i64, scratch_operands = 2 : i64, tpu.core_type = #tpu.core_type<tc>, window_params = [{transform_indices = @transform_0, window_bounds = array<i64: 1, 1, 784>}, {pipeline_mode = #tpu.pipeline_mode<synchronous>, transform_indices = @transform_1, window_bounds = array<i64: 4, 39>}, {pipeline_mode = #tpu.pipeline_mode<synchronous>, transform_indices = @transform_2, window_bounds = array<i64: 4, 4>}, {pipeline_mode = #tpu.pipeline_mode<synchronous>, transform_indices = @transform_3, window_bounds = array<i64: 4, 112, 112>}, {pipeline_mode = #tpu.pipeline_mode<synchronous>, transform_indices = @transform_4, window_bounds = array<i64: 4, 28, 14>}, {pipeline_mode = #tpu.pipeline_mode<synchronous>, transform_indices = @transform_5, window_bounds = array<i64: 112, 1>}, {pipeline_mode = #tpu.pipeline_mode<synchronous>, transform_indices = @transform_6, window_bounds = array<i64: 4, 112, 112>}, {pipeline_mode = #tpu.pipeline_mode<synchronous>, transform_indices = @transform_7, window_bounds = array<i64: 4, 14, 7>}, {pipeline_mode = #tpu.pipeline_mode<synchronous>, transform_indices = @transform_8, window_bounds = array<i64: 112, 1>}, {pipeline_mode = #tpu.pipeline_mode<synchronous>, transform_indices = @transform_9, window_bounds = array<i64: 3, 224, 112>}, {pipeline_mode = #tpu.pipeline_mode<synchronous>, transform_indices = @transform_10, window_bounds = array<i64: 3, 7, 7>}, {pipeline_mode = #tpu.pipeline_mode<synchronous>, transform_indices = @transform_11, window_bounds = array<i64: 224, 1>}, {pipeline_mode = #tpu.pipeline_mode<synchronous>, transform_indices = @transform_12, window_bounds = array<i64: 7, 16, 224>}, {pipeline_mode = #tpu.pipeline_mode<synchronous>, transform_indices = @transform_13, window_bounds = array<i64: 16, 1>}, {transform_indices = @transform_14, window_bounds = array<i64: 1, 16, 1>}]} {
    %cst = arith.constant 0.000000e+00 : f32
    %0 = vector.broadcast %cst : f32 to vector<4x792xf32>
    %c0 = arith.constant 0 : index
    %c0_0 = arith.constant 0 : index
    %1 = vector.load %arg16[%c0, %c0_0] : memref<4x792xf32, #tpu.memory_space<vmem>>, vector<4x792xf32>
    tpu.vector_store %arg16[%c0, %c0_0], %0 {strides = array<i32>} : memref<4x792xf32, #tpu.memory_space<vmem>>, vector<4x792xf32>,
    %c0_1 = arith.constant 0 : index
    %c0_2 = arith.constant 0 : index
    %c0_3 = arith.constant 0 : index
    %2 = vector.load %arg1[%c0_1, %c0_2, %c0_3] : memref<1x1x784xf32, #tpu.memory_space<vmem>>, vector<1x1x784xf32>
    %3 = vector.shape_cast %2 : vector<1x1x784xf32> to vector<1x784xf32>
    %c0_4 = arith.constant 0 : index
    %c8 = arith.constant 8 : index
    %4 = vector.load %arg16[%c0_4, %c8] : memref<4x792xf32, #tpu.memory_space<vmem>>, vector<1x784xf32>
    tpu.vector_store %arg16[%c0_4, %c8], %3 {strides = array<i32>} : memref<4x792xf32, #tpu.memory_space<vmem>>, vector<1x784xf32>,
    %c0_5 = arith.constant 0 : index
    %c0_6 = arith.constant 0 : index
    %5 = vector.load %arg2[%c0_5, %c0_6] : memref<4x39xf32, #tpu.memory_space<vmem>>, vector<4x39xf32>
    %c0_7 = arith.constant 0 : index
    %c0_8 = arith.constant 0 : index
    %6 = vector.load %arg3[%c0_7, %c0_8] : memref<4x4xf32, #tpu.memory_space<vmem>>, vector<4x4xf32>
    %c0_9 = arith.constant 0 : index
    %c6 = arith.constant 6 : index
    %7 = vector.load %arg16[%c0_9, %c6] : memref<4x792xf32, #tpu.memory_space<vmem>>, vector<1x784xf32>
    %8 = vector.extract_strided_slice %5 {offsets = [0, 0], sizes = [4, 1], strides = [1, 1]} : vector<4x39xf32> to vector<4x1xf32>
    %9 = vector.broadcast %8 : vector<4x1xf32> to vector<4x784xf32>
    %10 = vector.broadcast %7 : vector<1x784xf32> to vector<4x784xf32>
    %11 = arith.mulf %9, %10 : vector<4x784xf32>
    %c0_10 = arith.constant 0 : index
    %c7 = arith.constant 7 : index
    %12 = vector.load %arg16[%c0_10, %c7] : memref<4x792xf32, #tpu.memory_space<vmem>>, vector<1x784xf32>
    %13 = vector.extract_strided_slice %5 {offsets = [0, 1], sizes = [4, 1], strides = [1, 1]} : vector<4x39xf32> to vector<4x1xf32>
    %14 = vector.broadcast %13 : vector<4x1xf32> to vector<4x784xf32>
    %15 = vector.broadcast %12 : vector<1x784xf32> to vector<4x784xf32>
    %16 = arith.mulf %14, %15 : vector<4x784xf32>
    %17 = arith.addf %11, %16 : vector<4x784xf32>
    %c0_11 = arith.constant 0 : index
    %c8_12 = arith.constant 8 : index
    %18 = vector.load %arg16[%c0_11, %c8_12] : memref<4x792xf32, #tpu.memory_space<vmem>>, vector<1x784xf32>
    %19 = vector.extract_strided_slice %5 {offsets = [0, 2], sizes = [4, 1], strides = [1, 1]} : vector<4x39xf32> to vector<4x1xf32>
    %20 = vector.broadcast %19 : vector<4x1xf32> to vector<4x784xf32>
    %21 = vector.broadcast %18 : vector<1x784xf32> to vector<4x784xf32>
    %22 = arith.mulf %20, %21 : vector<4x784xf32>
    %23 = arith.addf %17, %22 : vector<4x784xf32>
    %24 = vector.extract_strided_slice %6 {offsets = [0, 0], sizes = [4, 1], strides = [1, 1]} : vector<4x4xf32> to vector<4x1xf32>
    %25 = vector.broadcast %24 : vector<4x1xf32> to vector<4x784xf32>
    %26 = arith.addf %23, %25 : vector<4x784xf32>
    %cst_13 = arith.constant 0.000000e+00 : f32
    %27 = vector.broadcast %cst_13 : f32 to vector<4x784xf32>
    %28 = arith.cmpf oge, %26, %27 : vector<4x784xf32>
    %cst_14 = arith.constant 0.00999999977 : f32
    %29 = vector.broadcast %cst_14 : f32 to vector<4x784xf32>
    %30 = arith.mulf %29, %26 : vector<4x784xf32>
    %31 = arith.select %28, %26, %30 : vector<4x784xi1>, vector<4x784xf32>
    %c0_15 = arith.constant 0 : index
    %c8_16 = arith.constant 8 : index
    %32 = vector.load %arg16[%c0_15, %c8_16] : memref<4x792xf32, #tpu.memory_space<vmem>>, vector<4x784xf32>
    tpu.vector_store %arg16[%c0_15, %c8_16], %31 {strides = array<i32>} : memref<4x792xf32, #tpu.memory_space<vmem>>, vector<4x784xf32>,
    %c0_17 = arith.constant 0 : index
    %c6_18 = arith.constant 6 : index
    %33 = vector.load %arg16[%c0_17, %c6_18] : memref<4x792xf32, #tpu.memory_space<vmem>>, vector<1x784xf32>
    %34 = vector.extract_strided_slice %5 {offsets = [0, 3], sizes = [4, 1], strides = [1, 1]} : vector<4x39xf32> to vector<4x1xf32>
    %35 = vector.broadcast %34 : vector<4x1xf32> to vector<4x784xf32>
    %36 = vector.broadcast %33 : vector<1x784xf32> to vector<4x784xf32>
    %37 = arith.mulf %35, %36 : vector<4x784xf32>
    %c0_19 = arith.constant 0 : index
    %c7_20 = arith.constant 7 : index
    %38 = vector.load %arg16[%c0_19, %c7_20] : memref<4x792xf32, #tpu.memory_space<vmem>>, vector<1x784xf32>
    %39 = vector.extract_strided_slice %5 {offsets = [0, 4], sizes = [4, 1], strides = [1, 1]} : vector<4x39xf32> to vector<4x1xf32>
    %40 = vector.broadcast %39 : vector<4x1xf32> to vector<4x784xf32>
    %41 = vector.broadcast %38 : vector<1x784xf32> to vector<4x784xf32>
    %42 = arith.mulf %40, %41 : vector<4x784xf32>
    %43 = arith.addf %37, %42 : vector<4x784xf32>
    %c0_21 = arith.constant 0 : index
    %c8_22 = arith.constant 8 : index
    %44 = vector.load %arg16[%c0_21, %c8_22] : memref<4x792xf32, #tpu.memory_space<vmem>>, vector<1x784xf32>
    %45 = vector.extract_strided_slice %5 {offsets = [0, 5], sizes = [4, 1], strides = [1, 1]} : vector<4x39xf32> to vector<4x1xf32>
    %46 = vector.broadcast %45 : vector<4x1xf32> to vector<4x784xf32>
    %47 = vector.broadcast %44 : vector<1x784xf32> to vector<4x784xf32>
    %48 = arith.mulf %46, %47 : vector<4x784xf32>
    %49 = arith.addf %43, %48 : vector<4x784xf32>
    %c1 = arith.constant 1 : index
    %c6_23 = arith.constant 6 : index
    %50 = vector.load %arg16[%c1, %c6_23] : memref<4x792xf32, #tpu.memory_space<vmem>>, vector<1x784xf32>
    %51 = vector.extract_strided_slice %5 {offsets = [0, 6], sizes = [4, 1], strides = [1, 1]} : vector<4x39xf32> to vector<4x1xf32>
    %52 = vector.broadcast %51 : vector<4x1xf32> to vector<4x784xf32>
    %53 = vector.broadcast %50 : vector<1x784xf32> to vector<4x784xf32>
    %54 = arith.mulf %52, %53 : vector<4x784xf32>
    %55 = arith.addf %49, %54 : vector<4x784xf32>
    %c1_24 = arith.constant 1 : index
    %c7_25 = arith.constant 7 : index
    %56 = vector.load %arg16[%c1_24, %c7_25] : memref<4x792xf32, #tpu.memory_space<vmem>>, vector<1x784xf32>
    %57 = vector.extract_strided_slice %5 {offsets = [0, 7], sizes = [4, 1], strides = [1, 1]} : vector<4x39xf32> to vector<4x1xf32>
    %58 = vector.broadcast %57 : vector<4x1xf32> to vector<4x784xf32>
    %59 = vector.broadcast %56 : vector<1x784xf32> to vector<4x784xf32>
    %60 = arith.mulf %58, %59 : vector<4x784xf32>
    %61 = arith.addf %55, %60 : vector<4x784xf32>
    %c1_26 = arith.constant 1 : index
    %c8_27 = arith.constant 8 : index
    %62 = vector.load %arg16[%c1_26, %c8_27] : memref<4x792xf32, #tpu.memory_space<vmem>>, vector<1x784xf32>
    %63 = vector.extract_strided_slice %5 {offsets = [0, 8], sizes = [4, 1], strides = [1, 1]} : vector<4x39xf32> to vector<4x1xf32>
    %64 = vector.broadcast %63 : vector<4x1xf32> to vector<4x784xf32>
    %65 = vector.broadcast %62 : vector<1x784xf32> to vector<4x784xf32>
    %66 = arith.mulf %64, %65 : vector<4x784xf32>
    %67 = arith.addf %61, %66 : vector<4x784xf32>
    %c2 = arith.constant 2 : index
    %c6_28 = arith.constant 6 : index
    %68 = vector.load %arg16[%c2, %c6_28] : memref<4x792xf32, #tpu.memory_space<vmem>>, vector<1x784xf32>
    %69 = vector.extract_strided_slice %5 {offsets = [0, 9], sizes = [4, 1], strides = [1, 1]} : vector<4x39xf32> to vector<4x1xf32>
    %70 = vector.broadcast %69 : vector<4x1xf32> to vector<4x784xf32>
    %71 = vector.broadcast %68 : vector<1x784xf32> to vector<4x784xf32>
    %72 = arith.mulf %70, %71 : vector<4x784xf32>
    %73 = arith.addf %67, %72 : vector<4x784xf32>
    %c2_29 = arith.constant 2 : index
    %c7_30 = arith.constant 7 : index
    %74 = vector.load %arg16[%c2_29, %c7_30] : memref<4x792xf32, #tpu.memory_space<vmem>>, vector<1x784xf32>
    %75 = vector.extract_strided_slice %5 {offsets = [0, 10], sizes = [4, 1], strides = [1, 1]} : vector<4x39xf32> to vector<4x1xf32>
    %76 = vector.broadcast %75 : vector<4x1xf32> to vector<4x784xf32>
    %77 = vector.broadcast %74 : vector<1x784xf32> to vector<4x784xf32>
    %78 = arith.mulf %76, %77 : vector<4x784xf32>
    %79 = arith.addf %73, %78 : vector<4x784xf32>
    %c2_31 = arith.constant 2 : index
    %c8_32 = arith.constant 8 : index
    %80 = vector.load %arg16[%c2_31, %c8_32] : memref<4x792xf32, #tpu.memory_space<vmem>>, vector<1x784xf32>
    %81 = vector.extract_strided_slice %5 {offsets = [0, 11], sizes = [4, 1], strides = [1, 1]} : vector<4x39xf32> to vector<4x1xf32>
    %82 = vector.broadcast %81 : vector<4x1xf32> to vector<4x784xf32>
    %83 = vector.broadcast %80 : vector<1x784xf32> to vector<4x784xf32>
    %84 = arith.mulf %82, %83 : vector<4x784xf32>
    %85 = arith.addf %79, %84 : vector<4x784xf32>
    %c3 = arith.constant 3 : index
    %c6_33 = arith.constant 6 : index
    %86 = vector.load %arg16[%c3, %c6_33] : memref<4x792xf32, #tpu.memory_space<vmem>>, vector<1x784xf32>
    %87 = vector.extract_strided_slice %5 {offsets = [0, 12], sizes = [4, 1], strides = [1, 1]} : vector<4x39xf32> to vector<4x1xf32>
    %88 = vector.broadcast %87 : vector<4x1xf32> to vector<4x784xf32>
    %89 = vector.broadcast %86 : vector<1x784xf32> to vector<4x784xf32>
    %90 = arith.mulf %88, %89 : vector<4x784xf32>
    %91 = arith.addf %85, %90 : vector<4x784xf32>
    %c3_34 = arith.constant 3 : index
    %c7_35 = arith.constant 7 : index
    %92 = vector.load %arg16[%c3_34, %c7_35] : memref<4x792xf32, #tpu.memory_space<vmem>>, vector<1x784xf32>
    %93 = vector.extract_strided_slice %5 {offsets = [0, 13], sizes = [4, 1], strides = [1, 1]} : vector<4x39xf32> to vector<4x1xf32>
    %94 = vector.broadcast %93 : vector<4x1xf32> to vector<4x784xf32>
    %95 = vector.broadcast %92 : vector<1x784xf32> to vector<4x784xf32>
    %96 = arith.mulf %94, %95 : vector<4x784xf32>
    %97 = arith.addf %91, %96 : vector<4x784xf32>
    %c3_36 = arith.constant 3 : index
    %c8_37 = arith.constant 8 : index
    %98 = vector.load %arg16[%c3_36, %c8_37] : memref<4x792xf32, #tpu.memory_space<vmem>>, vector<1x784xf32>
    %99 = vector.extract_strided_slice %5 {offsets = [0, 14], sizes = [4, 1], strides = [1, 1]} : vector<4x39xf32> to vector<4x1xf32>
    %100 = vector.broadcast %99 : vector<4x1xf32> to vector<4x784xf32>
    %101 = vector.broadcast %98 : vector<1x784xf32> to vector<4x784xf32>
    %102 = arith.mulf %100, %101 : vector<4x784xf32>
    %103 = arith.addf %97, %102 : vector<4x784xf32>
    %104 = vector.extract_strided_slice %6 {offsets = [0, 1], sizes = [4, 1], strides = [1, 1]} : vector<4x4xf32> to vector<4x1xf32>
    %105 = vector.broadcast %104 : vector<4x1xf32> to vector<4x784xf32>
    %106 = arith.addf %103, %105 : vector<4x784xf32>
    %cst_38 = arith.constant 0.000000e+00 : f32
    %107 = vector.broadcast %cst_38 : f32 to vector<4x784xf32>
    %108 = arith.cmpf oge, %106, %107 : vector<4x784xf32>
    %cst_39 = arith.constant 0.00999999977 : f32
    %109 = vector.broadcast %cst_39 : f32 to vector<4x784xf32>
    %110 = arith.mulf %109, %106 : vector<4x784xf32>
    %111 = arith.select %108, %106, %110 : vector<4x784xi1>, vector<4x784xf32>
    %c0_40 = arith.constant 0 : index
    %c8_41 = arith.constant 8 : index
    %112 = vector.load %arg16[%c0_40, %c8_41] : memref<4x792xf32, #tpu.memory_space<vmem>>, vector<4x784xf32>
    tpu.vector_store %arg16[%c0_40, %c8_41], %111 {strides = array<i32>} : memref<4x792xf32, #tpu.memory_space<vmem>>, vector<4x784xf32>,
    %c0_42 = arith.constant 0 : index
    %c4 = arith.constant 4 : index
    %113 = vector.load %arg16[%c0_42, %c4] : memref<4x792xf32, #tpu.memory_space<vmem>>, vector<1x784xf32>
    %114 = vector.extract_strided_slice %5 {offsets = [0, 15], sizes = [4, 1], strides = [1, 1]} : vector<4x39xf32> to vector<4x1xf32>
    %115 = vector.broadcast %114 : vector<4x1xf32> to vector<4x784xf32>
    %116 = vector.broadcast %113 : vector<1x784xf32> to vector<4x784xf32>
    %117 = arith.mulf %115, %116 : vector<4x784xf32>
    %c0_43 = arith.constant 0 : index
    %c6_44 = arith.constant 6 : index
    %118 = vector.load %arg16[%c0_43, %c6_44] : memref<4x792xf32, #tpu.memory_space<vmem>>, vector<1x784xf32>
    %119 = vector.extract_strided_slice %5 {offsets = [0, 16], sizes = [4, 1], strides = [1, 1]} : vector<4x39xf32> to vector<4x1xf32>
    %120 = vector.broadcast %119 : vector<4x1xf32> to vector<4x784xf32>
    %121 = vector.broadcast %118 : vector<1x784xf32> to vector<4x784xf32>
    %122 = arith.mulf %120, %121 : vector<4x784xf32>
    %123 = arith.addf %117, %122 : vector<4x784xf32>
    %c0_45 = arith.constant 0 : index
    %c8_46 = arith.constant 8 : index
    %124 = vector.load %arg16[%c0_45, %c8_46] : memref<4x792xf32, #tpu.memory_space<vmem>>, vector<1x784xf32>
    %125 = vector.extract_strided_slice %5 {offsets = [0, 17], sizes = [4, 1], strides = [1, 1]} : vector<4x39xf32> to vector<4x1xf32>
    %126 = vector.broadcast %125 : vector<4x1xf32> to vector<4x784xf32>
    %127 = vector.broadcast %124 : vector<1x784xf32> to vector<4x784xf32>
    %128 = arith.mulf %126, %127 : vector<4x784xf32>
    %129 = arith.addf %123, %128 : vector<4x784xf32>
    %c1_47 = arith.constant 1 : index
    %c4_48 = arith.constant 4 : index
    %130 = vector.load %arg16[%c1_47, %c4_48] : memref<4x792xf32, #tpu.memory_space<vmem>>, vector<1x784xf32>
    %131 = vector.extract_strided_slice %5 {offsets = [0, 18], sizes = [4, 1], strides = [1, 1]} : vector<4x39xf32> to vector<4x1xf32>
    %132 = vector.broadcast %131 : vector<4x1xf32> to vector<4x784xf32>
    %133 = vector.broadcast %130 : vector<1x784xf32> to vector<4x784xf32>
    %134 = arith.mulf %132, %133 : vector<4x784xf32>
    %135 = arith.addf %129, %134 : vector<4x784xf32>
    %c1_49 = arith.constant 1 : index
    %c6_50 = arith.constant 6 : index
    %136 = vector.load %arg16[%c1_49, %c6_50] : memref<4x792xf32, #tpu.memory_space<vmem>>, vector<1x784xf32>
    %137 = vector.extract_strided_slice %5 {offsets = [0, 19], sizes = [4, 1], strides = [1, 1]} : vector<4x39xf32> to vector<4x1xf32>
    %138 = vector.broadcast %137 : vector<4x1xf32> to vector<4x784xf32>
    %139 = vector.broadcast %136 : vector<1x784xf32> to vector<4x784xf32>
    %140 = arith.mulf %138, %139 : vector<4x784xf32>
    %141 = arith.addf %135, %140 : vector<4x784xf32>
    %c1_51 = arith.constant 1 : index
    %c8_52 = arith.constant 8 : index
    %142 = vector.load %arg16[%c1_51, %c8_52] : memref<4x792xf32, #tpu.memory_space<vmem>>, vector<1x784xf32>
    %143 = vector.extract_strided_slice %5 {offsets = [0, 20], sizes = [4, 1], strides = [1, 1]} : vector<4x39xf32> to vector<4x1xf32>
    %144 = vector.broadcast %143 : vector<4x1xf32> to vector<4x784xf32>
    %145 = vector.broadcast %142 : vector<1x784xf32> to vector<4x784xf32>
    %146 = arith.mulf %144, %145 : vector<4x784xf32>
    %147 = arith.addf %141, %146 : vector<4x784xf32>
    %c2_53 = arith.constant 2 : index
    %c4_54 = arith.constant 4 : index
    %148 = vector.load %arg16[%c2_53, %c4_54] : memref<4x792xf32, #tpu.memory_space<vmem>>, vector<1x784xf32>
    %149 = vector.extract_strided_slice %5 {offsets = [0, 21], sizes = [4, 1], strides = [1, 1]} : vector<4x39xf32> to vector<4x1xf32>
    %150 = vector.broadcast %149 : vector<4x1xf32> to vector<4x784xf32>
    %151 = vector.broadcast %148 : vector<1x784xf32> to vector<4x784xf32>
    %152 = arith.mulf %150, %151 : vector<4x784xf32>
    %153 = arith.addf %147, %152 : vector<4x784xf32>
    %c2_55 = arith.constant 2 : index
    %c6_56 = arith.constant 6 : index
    %154 = vector.load %arg16[%c2_55, %c6_56] : memref<4x792xf32, #tpu.memory_space<vmem>>, vector<1x784xf32>
    %155 = vector.extract_strided_slice %5 {offsets = [0, 22], sizes = [4, 1], strides = [1, 1]} : vector<4x39xf32> to vector<4x1xf32>
    %156 = vector.broadcast %155 : vector<4x1xf32> to vector<4x784xf32>
    %157 = vector.broadcast %154 : vector<1x784xf32> to vector<4x784xf32>
    %158 = arith.mulf %156, %157 : vector<4x784xf32>
    %159 = arith.addf %153, %158 : vector<4x784xf32>
    %c2_57 = arith.constant 2 : index
    %c8_58 = arith.constant 8 : index
    %160 = vector.load %arg16[%c2_57, %c8_58] : memref<4x792xf32, #tpu.memory_space<vmem>>, vector<1x784xf32>
    %161 = vector.extract_strided_slice %5 {offsets = [0, 23], sizes = [4, 1], strides = [1, 1]} : vector<4x39xf32> to vector<4x1xf32>
    %162 = vector.broadcast %161 : vector<4x1xf32> to vector<4x784xf32>
    %163 = vector.broadcast %160 : vector<1x784xf32> to vector<4x784xf32>
    %164 = arith.mulf %162, %163 : vector<4x784xf32>
    %165 = arith.addf %159, %164 : vector<4x784xf32>
    %c3_59 = arith.constant 3 : index
    %c4_60 = arith.constant 4 : index
    %166 = vector.load %arg16[%c3_59, %c4_60] : memref<4x792xf32, #tpu.memory_space<vmem>>, vector<1x784xf32>
    %167 = vector.extract_strided_slice %5 {offsets = [0, 24], sizes = [4, 1], strides = [1, 1]} : vector<4x39xf32> to vector<4x1xf32>
    %168 = vector.broadcast %167 : vector<4x1xf32> to vector<4x784xf32>
    %169 = vector.broadcast %166 : vector<1x784xf32> to vector<4x784xf32>
    %170 = arith.mulf %168, %169 : vector<4x784xf32>
    %171 = arith.addf %165, %170 : vector<4x784xf32>
    %c3_61 = arith.constant 3 : index
    %c6_62 = arith.constant 6 : index
    %172 = vector.load %arg16[%c3_61, %c6_62] : memref<4x792xf32, #tpu.memory_space<vmem>>, vector<1x784xf32>
    %173 = vector.extract_strided_slice %5 {offsets = [0, 25], sizes = [4, 1], strides = [1, 1]} : vector<4x39xf32> to vector<4x1xf32>
    %174 = vector.broadcast %173 : vector<4x1xf32> to vector<4x784xf32>
    %175 = vector.broadcast %172 : vector<1x784xf32> to vector<4x784xf32>
    %176 = arith.mulf %174, %175 : vector<4x784xf32>
    %177 = arith.addf %171, %176 : vector<4x784xf32>
    %c3_63 = arith.constant 3 : index
    %c8_64 = arith.constant 8 : index
    %178 = vector.load %arg16[%c3_63, %c8_64] : memref<4x792xf32, #tpu.memory_space<vmem>>, vector<1x784xf32>
    %179 = vector.extract_strided_slice %5 {offsets = [0, 26], sizes = [4, 1], strides = [1, 1]} : vector<4x39xf32> to vector<4x1xf32>
    %180 = vector.broadcast %179 : vector<4x1xf32> to vector<4x784xf32>
    %181 = vector.broadcast %178 : vector<1x784xf32> to vector<4x784xf32>
    %182 = arith.mulf %180, %181 : vector<4x784xf32>
    %183 = arith.addf %177, %182 : vector<4x784xf32>
    %184 = vector.extract_strided_slice %6 {offsets = [0, 2], sizes = [4, 1], strides = [1, 1]} : vector<4x4xf32> to vector<4x1xf32>
    %185 = vector.broadcast %184 : vector<4x1xf32> to vector<4x784xf32>
    %186 = arith.addf %183, %185 : vector<4x784xf32>
    %cst_65 = arith.constant 0.000000e+00 : f32
    %187 = vector.broadcast %cst_65 : f32 to vector<4x784xf32>
    %188 = arith.cmpf oge, %186, %187 : vector<4x784xf32>
    %cst_66 = arith.constant 0.00999999977 : f32
    %189 = vector.broadcast %cst_66 : f32 to vector<4x784xf32>
    %190 = arith.mulf %189, %186 : vector<4x784xf32>
    %191 = arith.select %188, %186, %190 : vector<4x784xi1>, vector<4x784xf32>
    %c0_67 = arith.constant 0 : index
    %c8_68 = arith.constant 8 : index
    %192 = vector.load %arg16[%c0_67, %c8_68] : memref<4x792xf32, #tpu.memory_space<vmem>>, vector<4x784xf32>
    tpu.vector_store %arg16[%c0_67, %c8_68], %191 {strides = array<i32>} : memref<4x792xf32, #tpu.memory_space<vmem>>, vector<4x784xf32>,
    %c0_69 = arith.constant 0 : index
    %c0_70 = arith.constant 0 : index
    %193 = vector.load %arg16[%c0_69, %c0_70] : memref<4x792xf32, #tpu.memory_space<vmem>>, vector<1x784xf32>
    %194 = vector.extract_strided_slice %5 {offsets = [0, 27], sizes = [4, 1], strides = [1, 1]} : vector<4x39xf32> to vector<4x1xf32>
    %195 = vector.broadcast %194 : vector<4x1xf32> to vector<4x784xf32>
    %196 = vector.broadcast %193 : vector<1x784xf32> to vector<4x784xf32>
    %197 = arith.mulf %195, %196 : vector<4x784xf32>
    %c0_71 = arith.constant 0 : index
    %c4_72 = arith.constant 4 : index
    %198 = vector.load %arg16[%c0_71, %c4_72] : memref<4x792xf32, #tpu.memory_space<vmem>>, vector<1x784xf32>
    %199 = vector.extract_strided_slice %5 {offsets = [0, 28], sizes = [4, 1], strides = [1, 1]} : vector<4x39xf32> to vector<4x1xf32>
    %200 = vector.broadcast %199 : vector<4x1xf32> to vector<4x784xf32>
    %201 = vector.broadcast %198 : vector<1x784xf32> to vector<4x784xf32>
    %202 = arith.mulf %200, %201 : vector<4x784xf32>
    %203 = arith.addf %197, %202 : vector<4x784xf32>
    %c0_73 = arith.constant 0 : index
    %c8_74 = arith.constant 8 : index
    %204 = vector.load %arg16[%c0_73, %c8_74] : memref<4x792xf32, #tpu.memory_space<vmem>>, vector<1x784xf32>
    %205 = vector.extract_strided_slice %5 {offsets = [0, 29], sizes = [4, 1], strides = [1, 1]} : vector<4x39xf32> to vector<4x1xf32>
    %206 = vector.broadcast %205 : vector<4x1xf32> to vector<4x784xf32>
    %207 = vector.broadcast %204 : vector<1x784xf32> to vector<4x784xf32>
    %208 = arith.mulf %206, %207 : vector<4x784xf32>
    %209 = arith.addf %203, %208 : vector<4x784xf32>
    %c1_75 = arith.constant 1 : index
    %c0_76 = arith.constant 0 : index
    %210 = vector.load %arg16[%c1_75, %c0_76] : memref<4x792xf32, #tpu.memory_space<vmem>>, vector<1x784xf32>
    %211 = vector.extract_strided_slice %5 {offsets = [0, 30], sizes = [4, 1], strides = [1, 1]} : vector<4x39xf32> to vector<4x1xf32>
    %212 = vector.broadcast %211 : vector<4x1xf32> to vector<4x784xf32>
    %213 = vector.broadcast %210 : vector<1x784xf32> to vector<4x784xf32>
    %214 = arith.mulf %212, %213 : vector<4x784xf32>
    %215 = arith.addf %209, %214 : vector<4x784xf32>
    %c1_77 = arith.constant 1 : index
    %c4_78 = arith.constant 4 : index
    %216 = vector.load %arg16[%c1_77, %c4_78] : memref<4x792xf32, #tpu.memory_space<vmem>>, vector<1x784xf32>
    %217 = vector.extract_strided_slice %5 {offsets = [0, 31], sizes = [4, 1], strides = [1, 1]} : vector<4x39xf32> to vector<4x1xf32>
    %218 = vector.broadcast %217 : vector<4x1xf32> to vector<4x784xf32>
    %219 = vector.broadcast %216 : vector<1x784xf32> to vector<4x784xf32>
    %220 = arith.mulf %218, %219 : vector<4x784xf32>
    %221 = arith.addf %215, %220 : vector<4x784xf32>
    %c1_79 = arith.constant 1 : index
    %c8_80 = arith.constant 8 : index
    %222 = vector.load %arg16[%c1_79, %c8_80] : memref<4x792xf32, #tpu.memory_space<vmem>>, vector<1x784xf32>
    %223 = vector.extract_strided_slice %5 {offsets = [0, 32], sizes = [4, 1], strides = [1, 1]} : vector<4x39xf32> to vector<4x1xf32>
    %224 = vector.broadcast %223 : vector<4x1xf32> to vector<4x784xf32>
    %225 = vector.broadcast %222 : vector<1x784xf32> to vector<4x784xf32>
    %226 = arith.mulf %224, %225 : vector<4x784xf32>
    %227 = arith.addf %221, %226 : vector<4x784xf32>
    %c2_81 = arith.constant 2 : index
    %c0_82 = arith.constant 0 : index
    %228 = vector.load %arg16[%c2_81, %c0_82] : memref<4x792xf32, #tpu.memory_space<vmem>>, vector<1x784xf32>
    %229 = vector.extract_strided_slice %5 {offsets = [0, 33], sizes = [4, 1], strides = [1, 1]} : vector<4x39xf32> to vector<4x1xf32>
    %230 = vector.broadcast %229 : vector<4x1xf32> to vector<4x784xf32>
    %231 = vector.broadcast %228 : vector<1x784xf32> to vector<4x784xf32>
    %232 = arith.mulf %230, %231 : vector<4x784xf32>
    %233 = arith.addf %227, %232 : vector<4x784xf32>
    %c2_83 = arith.constant 2 : index
    %c4_84 = arith.constant 4 : index
    %234 = vector.load %arg16[%c2_83, %c4_84] : memref<4x792xf32, #tpu.memory_space<vmem>>, vector<1x784xf32>
    %235 = vector.extract_strided_slice %5 {offsets = [0, 34], sizes = [4, 1], strides = [1, 1]} : vector<4x39xf32> to vector<4x1xf32>
    %236 = vector.broadcast %235 : vector<4x1xf32> to vector<4x784xf32>
    %237 = vector.broadcast %234 : vector<1x784xf32> to vector<4x784xf32>
    %238 = arith.mulf %236, %237 : vector<4x784xf32>
    %239 = arith.addf %233, %238 : vector<4x784xf32>
    %c2_85 = arith.constant 2 : index
    %c8_86 = arith.constant 8 : index
    %240 = vector.load %arg16[%c2_85, %c8_86] : memref<4x792xf32, #tpu.memory_space<vmem>>, vector<1x784xf32>
    %241 = vector.extract_strided_slice %5 {offsets = [0, 35], sizes = [4, 1], strides = [1, 1]} : vector<4x39xf32> to vector<4x1xf32>
    %242 = vector.broadcast %241 : vector<4x1xf32> to vector<4x784xf32>
    %243 = vector.broadcast %240 : vector<1x784xf32> to vector<4x784xf32>
    %244 = arith.mulf %242, %243 : vector<4x784xf32>
    %245 = arith.addf %239, %244 : vector<4x784xf32>
    %c3_87 = arith.constant 3 : index
    %c0_88 = arith.constant 0 : index
    %246 = vector.load %arg16[%c3_87, %c0_88] : memref<4x792xf32, #tpu.memory_space<vmem>>, vector<1x784xf32>
    %247 = vector.extract_strided_slice %5 {offsets = [0, 36], sizes = [4, 1], strides = [1, 1]} : vector<4x39xf32> to vector<4x1xf32>
    %248 = vector.broadcast %247 : vector<4x1xf32> to vector<4x784xf32>
    %249 = vector.broadcast %246 : vector<1x784xf32> to vector<4x784xf32>
    %250 = arith.mulf %248, %249 : vector<4x784xf32>
    %251 = arith.addf %245, %250 : vector<4x784xf32>
    %c3_89 = arith.constant 3 : index
    %c4_90 = arith.constant 4 : index
    %252 = vector.load %arg16[%c3_89, %c4_90] : memref<4x792xf32, #tpu.memory_space<vmem>>, vector<1x784xf32>
    %253 = vector.extract_strided_slice %5 {offsets = [0, 37], sizes = [4, 1], strides = [1, 1]} : vector<4x39xf32> to vector<4x1xf32>
    %254 = vector.broadcast %253 : vector<4x1xf32> to vector<4x784xf32>
    %255 = vector.broadcast %252 : vector<1x784xf32> to vector<4x784xf32>
    %256 = arith.mulf %254, %255 : vector<4x784xf32>
    %257 = arith.addf %251, %256 : vector<4x784xf32>
    %c3_91 = arith.constant 3 : index
    %c8_92 = arith.constant 8 : index
    %258 = vector.load %arg16[%c3_91, %c8_92] : memref<4x792xf32, #tpu.memory_space<vmem>>, vector<1x784xf32>
    %259 = vector.extract_strided_slice %5 {offsets = [0, 38], sizes = [4, 1], strides = [1, 1]} : vector<4x39xf32> to vector<4x1xf32>
    %260 = vector.broadcast %259 : vector<4x1xf32> to vector<4x784xf32>
    %261 = vector.broadcast %258 : vector<1x784xf32> to vector<4x784xf32>
    %262 = arith.mulf %260, %261 : vector<4x784xf32>
    %263 = arith.addf %257, %262 : vector<4x784xf32>
    %264 = vector.extract_strided_slice %6 {offsets = [0, 3], sizes = [4, 1], strides = [1, 1]} : vector<4x4xf32> to vector<4x1xf32>
    %265 = vector.broadcast %264 : vector<4x1xf32> to vector<4x784xf32>
    %266 = arith.addf %263, %265 : vector<4x784xf32>
    %cst_93 = arith.constant 0.000000e+00 : f32
    %267 = vector.broadcast %cst_93 : f32 to vector<4x784xf32>
    %268 = arith.cmpf oge, %266, %267 : vector<4x784xf32>
    %cst_94 = arith.constant 0.00999999977 : f32
    %269 = vector.broadcast %cst_94 : f32 to vector<4x784xf32>
    %270 = arith.mulf %269, %266 : vector<4x784xf32>
    %271 = arith.select %268, %266, %270 : vector<4x784xi1>, vector<4x784xf32>
    %c0_95 = arith.constant 0 : index
    %c8_96 = arith.constant 8 : index
    %272 = vector.load %arg16[%c0_95, %c8_96] : memref<4x792xf32, #tpu.memory_space<vmem>>, vector<4x784xf32>
    tpu.vector_store %arg16[%c0_95, %c8_96], %271 {strides = array<i32>} : memref<4x792xf32, #tpu.memory_space<vmem>>, vector<4x784xf32>,
    %c0_97 = arith.constant 0 : index
    %c8_98 = arith.constant 8 : index
    %273 = vector.load %arg16[%c0_97, %c8_98] : memref<4x792xf32, #tpu.memory_space<vmem>>, vector<4x28xf32>
    %c0_99 = arith.constant 0 : index
    %c0_100 = arith.constant 0 : index
    %274 = vector.load %arg17[%c0_99, %c0_100] : memref<112x28xf32, #tpu.memory_space<vmem>>, vector<4x28xf32>
    tpu.vector_store %arg17[%c0_99, %c0_100], %273 {strides = array<i32>} : memref<112x28xf32, #tpu.memory_space<vmem>>, vector<4x28xf32>,
    %c0_101 = arith.constant 0 : index
    %c36 = arith.constant 36 : index
    %275 = vector.load %arg16[%c0_101, %c36] : memref<4x792xf32, #tpu.memory_space<vmem>>, vector<4x28xf32>
    %c4_102 = arith.constant 4 : index
    %c0_103 = arith.constant 0 : index
    %276 = vector.load %arg17[%c4_102, %c0_103] : memref<112x28xf32, #tpu.memory_space<vmem>>, vector<4x28xf32>
    tpu.vector_store %arg17[%c4_102, %c0_103], %275 {strides = array<i32>} : memref<112x28xf32, #tpu.memory_space<vmem>>, vector<4x28xf32>,
    %c0_104 = arith.constant 0 : index
    %c64 = arith.constant 64 : index
    %277 = vector.load %arg16[%c0_104, %c64] : memref<4x792xf32, #tpu.memory_space<vmem>>, vector<4x28xf32>
    %c8_105 = arith.constant 8 : index
    %c0_106 = arith.constant 0 : index
    %278 = vector.load %arg17[%c8_105, %c0_106] : memref<112x28xf32, #tpu.memory_space<vmem>>, vector<4x28xf32>
    tpu.vector_store %arg17[%c8_105, %c0_106], %277 {strides = array<i32>} : memref<112x28xf32, #tpu.memory_space<vmem>>, vector<4x28xf32>,
    %c0_107 = arith.constant 0 : index
    %c92 = arith.constant 92 : index
    %279 = vector.load %arg16[%c0_107, %c92] : memref<4x792xf32, #tpu.memory_space<vmem>>, vector<4x28xf32>
    %c12 = arith.constant 12 : index
    %c0_108 = arith.constant 0 : index
    %280 = vector.load %arg17[%c12, %c0_108] : memref<112x28xf32, #tpu.memory_space<vmem>>, vector<4x28xf32>
    tpu.vector_store %arg17[%c12, %c0_108], %279 {strides = array<i32>} : memref<112x28xf32, #tpu.memory_space<vmem>>, vector<4x28xf32>,
    %c0_109 = arith.constant 0 : index
    %c120 = arith.constant 120 : index
    %281 = vector.load %arg16[%c0_109, %c120] : memref<4x792xf32, #tpu.memory_space<vmem>>, vector<4x28xf32>
    %c16 = arith.constant 16 : index
    %c0_110 = arith.constant 0 : index
    %282 = vector.load %arg17[%c16, %c0_110] : memref<112x28xf32, #tpu.memory_space<vmem>>, vector<4x28xf32>
    tpu.vector_store %arg17[%c16, %c0_110], %281 {strides = array<i32>} : memref<112x28xf32, #tpu.memory_space<vmem>>, vector<4x28xf32>,
    %c0_111 = arith.constant 0 : index
    %c148 = arith.constant 148 : index
    %283 = vector.load %arg16[%c0_111, %c148] : memref<4x792xf32, #tpu.memory_space<vmem>>, vector<4x28xf32>
    %c20 = arith.constant 20 : index
    %c0_112 = arith.constant 0 : index
    %284 = vector.load %arg17[%c20, %c0_112] : memref<112x28xf32, #tpu.memory_space<vmem>>, vector<4x28xf32>
    tpu.vector_store %arg17[%c20, %c0_112], %283 {strides = array<i32>} : memref<112x28xf32, #tpu.memory_space<vmem>>, vector<4x28xf32>,
    %c0_113 = arith.constant 0 : index
    %c176 = arith.constant 176 : index
    %285 = vector.load %arg16[%c0_113, %c176] : memref<4x792xf32, #tpu.memory_space<vmem>>, vector<4x28xf32>
    %c24 = arith.constant 24 : index
    %c0_114 = arith.constant 0 : index
    %286 = vector.load %arg17[%c24, %c0_114] : memref<112x28xf32, #tpu.memory_space<vmem>>, vector<4x28xf32>
    tpu.vector_store %arg17[%c24, %c0_114], %285 {strides = array<i32>} : memref<112x28xf32, #tpu.memory_space<vmem>>, vector<4x28xf32>,
    %c0_115 = arith.constant 0 : index
    %c204 = arith.constant 204 : index
    %287 = vector.load %arg16[%c0_115, %c204] : memref<4x792xf32, #tpu.memory_space<vmem>>, vector<4x28xf32>
    %c28 = arith.constant 28 : index
    %c0_116 = arith.constant 0 : index
    %288 = vector.load %arg17[%c28, %c0_116] : memref<112x28xf32, #tpu.memory_space<vmem>>, vector<4x28xf32>
    tpu.vector_store %arg17[%c28, %c0_116], %287 {strides = array<i32>} : memref<112x28xf32, #tpu.memory_space<vmem>>, vector<4x28xf32>,
    %c0_117 = arith.constant 0 : index
    %c232 = arith.constant 232 : index
    %289 = vector.load %arg16[%c0_117, %c232] : memref<4x792xf32, #tpu.memory_space<vmem>>, vector<4x28xf32>
    %c32 = arith.constant 32 : index
    %c0_118 = arith.constant 0 : index
    %290 = vector.load %arg17[%c32, %c0_118] : memref<112x28xf32, #tpu.memory_space<vmem>>, vector<4x28xf32>
    tpu.vector_store %arg17[%c32, %c0_118], %289 {strides = array<i32>} : memref<112x28xf32, #tpu.memory_space<vmem>>, vector<4x28xf32>,
    %c0_119 = arith.constant 0 : index
    %c260 = arith.constant 260 : index
    %291 = vector.load %arg16[%c0_119, %c260] : memref<4x792xf32, #tpu.memory_space<vmem>>, vector<4x28xf32>
    %c36_120 = arith.constant 36 : index
    %c0_121 = arith.constant 0 : index
    %292 = vector.load %arg17[%c36_120, %c0_121] : memref<112x28xf32, #tpu.memory_space<vmem>>, vector<4x28xf32>
    tpu.vector_store %arg17[%c36_120, %c0_121], %291 {strides = array<i32>} : memref<112x28xf32, #tpu.memory_space<vmem>>, vector<4x28xf32>,
    %c0_122 = arith.constant 0 : index
    %c288 = arith.constant 288 : index
    %293 = vector.load %arg16[%c0_122, %c288] : memref<4x792xf32, #tpu.memory_space<vmem>>, vector<4x28xf32>
    %c40 = arith.constant 40 : index
    %c0_123 = arith.constant 0 : index
    %294 = vector.load %arg17[%c40, %c0_123] : memref<112x28xf32, #tpu.memory_space<vmem>>, vector<4x28xf32>
    tpu.vector_store %arg17[%c40, %c0_123], %293 {strides = array<i32>} : memref<112x28xf32, #tpu.memory_space<vmem>>, vector<4x28xf32>,
    %c0_124 = arith.constant 0 : index
    %c316 = arith.constant 316 : index
    %295 = vector.load %arg16[%c0_124, %c316] : memref<4x792xf32, #tpu.memory_space<vmem>>, vector<4x28xf32>
    %c44 = arith.constant 44 : index
    %c0_125 = arith.constant 0 : index
    %296 = vector.load %arg17[%c44, %c0_125] : memref<112x28xf32, #tpu.memory_space<vmem>>, vector<4x28xf32>
    tpu.vector_store %arg17[%c44, %c0_125], %295 {strides = array<i32>} : memref<112x28xf32, #tpu.memory_space<vmem>>, vector<4x28xf32>,
    %c0_126 = arith.constant 0 : index
    %c344 = arith.constant 344 : index
    %297 = vector.load %arg16[%c0_126, %c344] : memref<4x792xf32, #tpu.memory_space<vmem>>, vector<4x28xf32>
    %c48 = arith.constant 48 : index
    %c0_127 = arith.constant 0 : index
    %298 = vector.load %arg17[%c48, %c0_127] : memref<112x28xf32, #tpu.memory_space<vmem>>, vector<4x28xf32>
    tpu.vector_store %arg17[%c48, %c0_127], %297 {strides = array<i32>} : memref<112x28xf32, #tpu.memory_space<vmem>>, vector<4x28xf32>,
    %c0_128 = arith.constant 0 : index
    %c372 = arith.constant 372 : index
    %299 = vector.load %arg16[%c0_128, %c372] : memref<4x792xf32, #tpu.memory_space<vmem>>, vector<4x28xf32>
    %c52 = arith.constant 52 : index
    %c0_129 = arith.constant 0 : index
    %300 = vector.load %arg17[%c52, %c0_129] : memref<112x28xf32, #tpu.memory_space<vmem>>, vector<4x28xf32>
    tpu.vector_store %arg17[%c52, %c0_129], %299 {strides = array<i32>} : memref<112x28xf32, #tpu.memory_space<vmem>>, vector<4x28xf32>,
    %c0_130 = arith.constant 0 : index
    %c400 = arith.constant 400 : index
    %301 = vector.load %arg16[%c0_130, %c400] : memref<4x792xf32, #tpu.memory_space<vmem>>, vector<4x28xf32>
    %c56 = arith.constant 56 : index
    %c0_131 = arith.constant 0 : index
    %302 = vector.load %arg17[%c56, %c0_131] : memref<112x28xf32, #tpu.memory_space<vmem>>, vector<4x28xf32>
    tpu.vector_store %arg17[%c56, %c0_131], %301 {strides = array<i32>} : memref<112x28xf32, #tpu.memory_space<vmem>>, vector<4x28xf32>,
    %c0_132 = arith.constant 0 : index
    %c428 = arith.constant 428 : index
    %303 = vector.load %arg16[%c0_132, %c428] : memref<4x792xf32, #tpu.memory_space<vmem>>, vector<4x28xf32>
    %c60 = arith.constant 60 : index
    %c0_133 = arith.constant 0 : index
    %304 = vector.load %arg17[%c60, %c0_133] : memref<112x28xf32, #tpu.memory_space<vmem>>, vector<4x28xf32>
    tpu.vector_store %arg17[%c60, %c0_133], %303 {strides = array<i32>} : memref<112x28xf32, #tpu.memory_space<vmem>>, vector<4x28xf32>,
    %c0_134 = arith.constant 0 : index
    %c456 = arith.constant 456 : index
    %305 = vector.load %arg16[%c0_134, %c456] : memref<4x792xf32, #tpu.memory_space<vmem>>, vector<4x28xf32>
    %c64_135 = arith.constant 64 : index
    %c0_136 = arith.constant 0 : index
    %306 = vector.load %arg17[%c64_135, %c0_136] : memref<112x28xf32, #tpu.memory_space<vmem>>, vector<4x28xf32>
    tpu.vector_store %arg17[%c64_135, %c0_136], %305 {strides = array<i32>} : memref<112x28xf32, #tpu.memory_space<vmem>>, vector<4x28xf32>,
    %c0_137 = arith.constant 0 : index
    %c484 = arith.constant 484 : index
    %307 = vector.load %arg16[%c0_137, %c484] : memref<4x792xf32, #tpu.memory_space<vmem>>, vector<4x28xf32>
    %c68 = arith.constant 68 : index
    %c0_138 = arith.constant 0 : index
    %308 = vector.load %arg17[%c68, %c0_138] : memref<112x28xf32, #tpu.memory_space<vmem>>, vector<4x28xf32>
    tpu.vector_store %arg17[%c68, %c0_138], %307 {strides = array<i32>} : memref<112x28xf32, #tpu.memory_space<vmem>>, vector<4x28xf32>,
    %c0_139 = arith.constant 0 : index
    %c512 = arith.constant 512 : index
    %309 = vector.load %arg16[%c0_139, %c512] : memref<4x792xf32, #tpu.memory_space<vmem>>, vector<4x28xf32>
    %c72 = arith.constant 72 : index
    %c0_140 = arith.constant 0 : index
    %310 = vector.load %arg17[%c72, %c0_140] : memref<112x28xf32, #tpu.memory_space<vmem>>, vector<4x28xf32>
    tpu.vector_store %arg17[%c72, %c0_140], %309 {strides = array<i32>} : memref<112x28xf32, #tpu.memory_space<vmem>>, vector<4x28xf32>,
    %c0_141 = arith.constant 0 : index
    %c540 = arith.constant 540 : index
    %311 = vector.load %arg16[%c0_141, %c540] : memref<4x792xf32, #tpu.memory_space<vmem>>, vector<4x28xf32>
    %c76 = arith.constant 76 : index
    %c0_142 = arith.constant 0 : index
    %312 = vector.load %arg17[%c76, %c0_142] : memref<112x28xf32, #tpu.memory_space<vmem>>, vector<4x28xf32>
    tpu.vector_store %arg17[%c76, %c0_142], %311 {strides = array<i32>} : memref<112x28xf32, #tpu.memory_space<vmem>>, vector<4x28xf32>,
    %c0_143 = arith.constant 0 : index
    %c568 = arith.constant 568 : index
    %313 = vector.load %arg16[%c0_143, %c568] : memref<4x792xf32, #tpu.memory_space<vmem>>, vector<4x28xf32>
    %c80 = arith.constant 80 : index
    %c0_144 = arith.constant 0 : index
    %314 = vector.load %arg17[%c80, %c0_144] : memref<112x28xf32, #tpu.memory_space<vmem>>, vector<4x28xf32>
    tpu.vector_store %arg17[%c80, %c0_144], %313 {strides = array<i32>} : memref<112x28xf32, #tpu.memory_space<vmem>>, vector<4x28xf32>,
    %c0_145 = arith.constant 0 : index
    %c596 = arith.constant 596 : index
    %315 = vector.load %arg16[%c0_145, %c596] : memref<4x792xf32, #tpu.memory_space<vmem>>, vector<4x28xf32>
    %c84 = arith.constant 84 : index
    %c0_146 = arith.constant 0 : index
    %316 = vector.load %arg17[%c84, %c0_146] : memref<112x28xf32, #tpu.memory_space<vmem>>, vector<4x28xf32>
    tpu.vector_store %arg17[%c84, %c0_146], %315 {strides = array<i32>} : memref<112x28xf32, #tpu.memory_space<vmem>>, vector<4x28xf32>,
    %c0_147 = arith.constant 0 : index
    %c624 = arith.constant 624 : index
    %317 = vector.load %arg16[%c0_147, %c624] : memref<4x792xf32, #tpu.memory_space<vmem>>, vector<4x28xf32>
    %c88 = arith.constant 88 : index
    %c0_148 = arith.constant 0 : index
    %318 = vector.load %arg17[%c88, %c0_148] : memref<112x28xf32, #tpu.memory_space<vmem>>, vector<4x28xf32>
    tpu.vector_store %arg17[%c88, %c0_148], %317 {strides = array<i32>} : memref<112x28xf32, #tpu.memory_space<vmem>>, vector<4x28xf32>,
    %c0_149 = arith.constant 0 : index
    %c652 = arith.constant 652 : index
    %319 = vector.load %arg16[%c0_149, %c652] : memref<4x792xf32, #tpu.memory_space<vmem>>, vector<4x28xf32>
    %c92_150 = arith.constant 92 : index
    %c0_151 = arith.constant 0 : index
    %320 = vector.load %arg17[%c92_150, %c0_151] : memref<112x28xf32, #tpu.memory_space<vmem>>, vector<4x28xf32>
    tpu.vector_store %arg17[%c92_150, %c0_151], %319 {strides = array<i32>} : memref<112x28xf32, #tpu.memory_space<vmem>>, vector<4x28xf32>,
    %c0_152 = arith.constant 0 : index
    %c680 = arith.constant 680 : index
    %321 = vector.load %arg16[%c0_152, %c680] : memref<4x792xf32, #tpu.memory_space<vmem>>, vector<4x28xf32>
    %c96 = arith.constant 96 : index
    %c0_153 = arith.constant 0 : index
    %322 = vector.load %arg17[%c96, %c0_153] : memref<112x28xf32, #tpu.memory_space<vmem>>, vector<4x28xf32>
    tpu.vector_store %arg17[%c96, %c0_153], %321 {strides = array<i32>} : memref<112x28xf32, #tpu.memory_space<vmem>>, vector<4x28xf32>,
    %c0_154 = arith.constant 0 : index
    %c708 = arith.constant 708 : index
    %323 = vector.load %arg16[%c0_154, %c708] : memref<4x792xf32, #tpu.memory_space<vmem>>, vector<4x28xf32>
    %c100 = arith.constant 100 : index
    %c0_155 = arith.constant 0 : index
    %324 = vector.load %arg17[%c100, %c0_155] : memref<112x28xf32, #tpu.memory_space<vmem>>, vector<4x28xf32>
    tpu.vector_store %arg17[%c100, %c0_155], %323 {strides = array<i32>} : memref<112x28xf32, #tpu.memory_space<vmem>>, vector<4x28xf32>,
    %c0_156 = arith.constant 0 : index
    %c736 = arith.constant 736 : index
    %325 = vector.load %arg16[%c0_156, %c736] : memref<4x792xf32, #tpu.memory_space<vmem>>, vector<4x28xf32>
    %c104 = arith.constant 104 : index
    %c0_157 = arith.constant 0 : index
    %326 = vector.load %arg17[%c104, %c0_157] : memref<112x28xf32, #tpu.memory_space<vmem>>, vector<4x28xf32>
    tpu.vector_store %arg17[%c104, %c0_157], %325 {strides = array<i32>} : memref<112x28xf32, #tpu.memory_space<vmem>>, vector<4x28xf32>,
    %c0_158 = arith.constant 0 : index
    %c764 = arith.constant 764 : index
    %327 = vector.load %arg16[%c0_158, %c764] : memref<4x792xf32, #tpu.memory_space<vmem>>, vector<4x28xf32>
    %c108 = arith.constant 108 : index
    %c0_159 = arith.constant 0 : index
    %328 = vector.load %arg17[%c108, %c0_159] : memref<112x28xf32, #tpu.memory_space<vmem>>, vector<4x28xf32>
    tpu.vector_store %arg17[%c108, %c0_159], %327 {strides = array<i32>} : memref<112x28xf32, #tpu.memory_space<vmem>>, vector<4x28xf32>,
    %c0_160 = arith.constant 0 : index
    %c0_161 = arith.constant 0 : index
    %329 = vector.load %arg17[%c0_160, %c0_161] : memref<112x28xf32, #tpu.memory_space<vmem>>, vector<112x28xf32>
    %c0_162 = arith.constant 0 : index
    %c0_163 = arith.constant 0 : index
    %c0_164 = arith.constant 0 : index
    %330 = vector.load %arg5[%c0_162, %c0_163, %c0_164] : memref<4x28x14xf32, #tpu.memory_space<vmem>>, vector<1x28x14xf32>
    %331 = vector.shape_cast %330 : vector<1x28x14xf32> to vector<28x14xf32>
    %cst_165 = arith.constant dense<0.000000e+00> : vector<112x14xf32>
    %332 = tpu.matmul %329, %331, %cst_165 {dimension_numbers = #tpu.dot_dimension_numbers<[1], [0], [0], [1], [0, 0, 1, 1], [], []>} : vector<112x28xf32>, vector<28x14xf32>, vector<112x14xf32> -> vector<112x14xf32>
    %c0_166 = arith.constant 0 : index
    %c0_167 = arith.constant 0 : index
    %c0_168 = arith.constant 0 : index
    %333 = vector.load %arg4[%c0_166, %c0_167, %c0_168] : memref<4x112x112xf32, #tpu.memory_space<vmem>>, vector<1x112x112xf32>
    %334 = vector.shape_cast %333 : vector<1x112x112xf32> to vector<112x112xf32>
    %cst_169 = arith.constant dense<0.000000e+00> : vector<112x14xf32>
    %335 = tpu.matmul %334, %332, %cst_169 {dimension_numbers = #tpu.dot_dimension_numbers<[1], [0], [0], [1], [0, 0, 1, 1], [], []>} : vector<112x112xf32>, vector<112x14xf32>, vector<112x14xf32> -> vector<112x14xf32>
    %c1_170 = arith.constant 1 : index
    %c0_171 = arith.constant 0 : index
    %c0_172 = arith.constant 0 : index
    %336 = vector.load %arg5[%c1_170, %c0_171, %c0_172] : memref<4x28x14xf32, #tpu.memory_space<vmem>>, vector<1x28x14xf32>
    %337 = vector.shape_cast %336 : vector<1x28x14xf32> to vector<28x14xf32>
    %cst_173 = arith.constant dense<0.000000e+00> : vector<112x14xf32>
    %338 = tpu.matmul %329, %337, %cst_173 {dimension_numbers = #tpu.dot_dimension_numbers<[1], [0], [0], [1], [0, 0, 1, 1], [], []>} : vector<112x28xf32>, vector<28x14xf32>, vector<112x14xf32> -> vector<112x14xf32>
    %c1_174 = arith.constant 1 : index
    %c0_175 = arith.constant 0 : index
    %c0_176 = arith.constant 0 : index
    %339 = vector.load %arg4[%c1_174, %c0_175, %c0_176] : memref<4x112x112xf32, #tpu.memory_space<vmem>>, vector<1x112x112xf32>
    %340 = vector.shape_cast %339 : vector<1x112x112xf32> to vector<112x112xf32>
    %cst_177 = arith.constant dense<0.000000e+00> : vector<112x14xf32>
    %341 = tpu.matmul %340, %338, %cst_177 {dimension_numbers = #tpu.dot_dimension_numbers<[1], [0], [0], [1], [0, 0, 1, 1], [], []>} : vector<112x112xf32>, vector<112x14xf32>, vector<112x14xf32> -> vector<112x14xf32>
    %342 = arith.addf %335, %341 : vector<112x14xf32>
    %c2_178 = arith.constant 2 : index
    %c0_179 = arith.constant 0 : index
    %c0_180 = arith.constant 0 : index
    %343 = vector.load %arg5[%c2_178, %c0_179, %c0_180] : memref<4x28x14xf32, #tpu.memory_space<vmem>>, vector<1x28x14xf32>
    %344 = vector.shape_cast %343 : vector<1x28x14xf32> to vector<28x14xf32>
    %cst_181 = arith.constant dense<0.000000e+00> : vector<112x14xf32>
    %345 = tpu.matmul %329, %344, %cst_181 {dimension_numbers = #tpu.dot_dimension_numbers<[1], [0], [0], [1], [0, 0, 1, 1], [], []>} : vector<112x28xf32>, vector<28x14xf32>, vector<112x14xf32> -> vector<112x14xf32>
    %c2_182 = arith.constant 2 : index
    %c0_183 = arith.constant 0 : index
    %c0_184 = arith.constant 0 : index
    %346 = vector.load %arg4[%c2_182, %c0_183, %c0_184] : memref<4x112x112xf32, #tpu.memory_space<vmem>>, vector<1x112x112xf32>
    %347 = vector.shape_cast %346 : vector<1x112x112xf32> to vector<112x112xf32>
    %cst_185 = arith.constant dense<0.000000e+00> : vector<112x14xf32>
    %348 = tpu.matmul %347, %345, %cst_185 {dimension_numbers = #tpu.dot_dimension_numbers<[1], [0], [0], [1], [0, 0, 1, 1], [], []>} : vector<112x112xf32>, vector<112x14xf32>, vector<112x14xf32> -> vector<112x14xf32>
    %349 = arith.addf %342, %348 : vector<112x14xf32>
    %c3_186 = arith.constant 3 : index
    %c0_187 = arith.constant 0 : index
    %c0_188 = arith.constant 0 : index
    %350 = vector.load %arg5[%c3_186, %c0_187, %c0_188] : memref<4x28x14xf32, #tpu.memory_space<vmem>>, vector<1x28x14xf32>
    %351 = vector.shape_cast %350 : vector<1x28x14xf32> to vector<28x14xf32>
    %cst_189 = arith.constant dense<0.000000e+00> : vector<112x14xf32>
    %352 = tpu.matmul %329, %351, %cst_189 {dimension_numbers = #tpu.dot_dimension_numbers<[1], [0], [0], [1], [0, 0, 1, 1], [], []>} : vector<112x28xf32>, vector<28x14xf32>, vector<112x14xf32> -> vector<112x14xf32>
    %c3_190 = arith.constant 3 : index
    %c0_191 = arith.constant 0 : index
    %c0_192 = arith.constant 0 : index
    %353 = vector.load %arg4[%c3_190, %c0_191, %c0_192] : memref<4x112x112xf32, #tpu.memory_space<vmem>>, vector<1x112x112xf32>
    %354 = vector.shape_cast %353 : vector<1x112x112xf32> to vector<112x112xf32>
    %cst_193 = arith.constant dense<0.000000e+00> : vector<112x14xf32>
    %355 = tpu.matmul %354, %352, %cst_193 {dimension_numbers = #tpu.dot_dimension_numbers<[1], [0], [0], [1], [0, 0, 1, 1], [], []>} : vector<112x112xf32>, vector<112x14xf32>, vector<112x14xf32> -> vector<112x14xf32>
    %356 = arith.addf %349, %355 : vector<112x14xf32>
    %c0_194 = arith.constant 0 : index
    %c0_195 = arith.constant 0 : index
    %357 = vector.load %arg6[%c0_194, %c0_195] : memref<112x1xf32, #tpu.memory_space<vmem>>, vector<112x1xf32>
    %358 = vector.broadcast %357 : vector<112x1xf32> to vector<112x14xf32>
    %359 = arith.addf %356, %358 : vector<112x14xf32>
    %cst_196 = arith.constant 0.000000e+00 : f32
    %360 = vector.broadcast %cst_196 : f32 to vector<112x14xf32>
    %361 = arith.cmpf oge, %359, %360 : vector<112x14xf32>
    %cst_197 = arith.constant 0.00999999977 : f32
    %362 = vector.broadcast %cst_197 : f32 to vector<112x14xf32>
    %363 = arith.mulf %362, %359 : vector<112x14xf32>
    %364 = arith.select %361, %359, %363 : vector<112x14xi1>, vector<112x14xf32>
    %c0_198 = arith.constant 0 : index
    %c0_199 = arith.constant 0 : index
    %c0_200 = arith.constant 0 : index
    %365 = vector.load %arg8[%c0_198, %c0_199, %c0_200] : memref<4x14x7xf32, #tpu.memory_space<vmem>>, vector<1x14x7xf32>
    %366 = vector.shape_cast %365 : vector<1x14x7xf32> to vector<14x7xf32>
    %cst_201 = arith.constant dense<0.000000e+00> : vector<112x7xf32>
    %367 = tpu.matmul %364, %366, %cst_201 {dimension_numbers = #tpu.dot_dimension_numbers<[1], [0], [0], [1], [0, 0, 1, 1], [], []>} : vector<112x14xf32>, vector<14x7xf32>, vector<112x7xf32> -> vector<112x7xf32>
    %c0_202 = arith.constant 0 : index
    %c0_203 = arith.constant 0 : index
    %c0_204 = arith.constant 0 : index
    %368 = vector.load %arg7[%c0_202, %c0_203, %c0_204] : memref<4x112x112xf32, #tpu.memory_space<vmem>>, vector<1x112x112xf32>
    %369 = vector.shape_cast %368 : vector<1x112x112xf32> to vector<112x112xf32>
    %cst_205 = arith.constant dense<0.000000e+00> : vector<112x7xf32>
    %370 = tpu.matmul %369, %367, %cst_205 {dimension_numbers = #tpu.dot_dimension_numbers<[1], [0], [0], [1], [0, 0, 1, 1], [], []>} : vector<112x112xf32>, vector<112x7xf32>, vector<112x7xf32> -> vector<112x7xf32>
    %c1_206 = arith.constant 1 : index
    %c0_207 = arith.constant 0 : index
    %c0_208 = arith.constant 0 : index
    %371 = vector.load %arg8[%c1_206, %c0_207, %c0_208] : memref<4x14x7xf32, #tpu.memory_space<vmem>>, vector<1x14x7xf32>
    %372 = vector.shape_cast %371 : vector<1x14x7xf32> to vector<14x7xf32>
    %cst_209 = arith.constant dense<0.000000e+00> : vector<112x7xf32>
    %373 = tpu.matmul %364, %372, %cst_209 {dimension_numbers = #tpu.dot_dimension_numbers<[1], [0], [0], [1], [0, 0, 1, 1], [], []>} : vector<112x14xf32>, vector<14x7xf32>, vector<112x7xf32> -> vector<112x7xf32>
    %c1_210 = arith.constant 1 : index
    %c0_211 = arith.constant 0 : index
    %c0_212 = arith.constant 0 : index
    %374 = vector.load %arg7[%c1_210, %c0_211, %c0_212] : memref<4x112x112xf32, #tpu.memory_space<vmem>>, vector<1x112x112xf32>
    %375 = vector.shape_cast %374 : vector<1x112x112xf32> to vector<112x112xf32>
    %cst_213 = arith.constant dense<0.000000e+00> : vector<112x7xf32>
    %376 = tpu.matmul %375, %373, %cst_213 {dimension_numbers = #tpu.dot_dimension_numbers<[1], [0], [0], [1], [0, 0, 1, 1], [], []>} : vector<112x112xf32>, vector<112x7xf32>, vector<112x7xf32> -> vector<112x7xf32>
    %377 = arith.addf %370, %376 : vector<112x7xf32>
    %c2_214 = arith.constant 2 : index
    %c0_215 = arith.constant 0 : index
    %c0_216 = arith.constant 0 : index
    %378 = vector.load %arg8[%c2_214, %c0_215, %c0_216] : memref<4x14x7xf32, #tpu.memory_space<vmem>>, vector<1x14x7xf32>
    %379 = vector.shape_cast %378 : vector<1x14x7xf32> to vector<14x7xf32>
    %cst_217 = arith.constant dense<0.000000e+00> : vector<112x7xf32>
    %380 = tpu.matmul %364, %379, %cst_217 {dimension_numbers = #tpu.dot_dimension_numbers<[1], [0], [0], [1], [0, 0, 1, 1], [], []>} : vector<112x14xf32>, vector<14x7xf32>, vector<112x7xf32> -> vector<112x7xf32>
    %c2_218 = arith.constant 2 : index
    %c0_219 = arith.constant 0 : index
    %c0_220 = arith.constant 0 : index
    %381 = vector.load %arg7[%c2_218, %c0_219, %c0_220] : memref<4x112x112xf32, #tpu.memory_space<vmem>>, vector<1x112x112xf32>
    %382 = vector.shape_cast %381 : vector<1x112x112xf32> to vector<112x112xf32>
    %cst_221 = arith.constant dense<0.000000e+00> : vector<112x7xf32>
    %383 = tpu.matmul %382, %380, %cst_221 {dimension_numbers = #tpu.dot_dimension_numbers<[1], [0], [0], [1], [0, 0, 1, 1], [], []>} : vector<112x112xf32>, vector<112x7xf32>, vector<112x7xf32> -> vector<112x7xf32>
    %384 = arith.addf %377, %383 : vector<112x7xf32>
    %c3_222 = arith.constant 3 : index
    %c0_223 = arith.constant 0 : index
    %c0_224 = arith.constant 0 : index
    %385 = vector.load %arg8[%c3_222, %c0_223, %c0_224] : memref<4x14x7xf32, #tpu.memory_space<vmem>>, vector<1x14x7xf32>
    %386 = vector.shape_cast %385 : vector<1x14x7xf32> to vector<14x7xf32>
    %cst_225 = arith.constant dense<0.000000e+00> : vector<112x7xf32>
    %387 = tpu.matmul %364, %386, %cst_225 {dimension_numbers = #tpu.dot_dimension_numbers<[1], [0], [0], [1], [0, 0, 1, 1], [], []>} : vector<112x14xf32>, vector<14x7xf32>, vector<112x7xf32> -> vector<112x7xf32>
    %c3_226 = arith.constant 3 : index
    %c0_227 = arith.constant 0 : index
    %c0_228 = arith.constant 0 : index
    %388 = vector.load %arg7[%c3_226, %c0_227, %c0_228] : memref<4x112x112xf32, #tpu.memory_space<vmem>>, vector<1x112x112xf32>
    %389 = vector.shape_cast %388 : vector<1x112x112xf32> to vector<112x112xf32>
    %cst_229 = arith.constant dense<0.000000e+00> : vector<112x7xf32>
    %390 = tpu.matmul %389, %387, %cst_229 {dimension_numbers = #tpu.dot_dimension_numbers<[1], [0], [0], [1], [0, 0, 1, 1], [], []>} : vector<112x112xf32>, vector<112x7xf32>, vector<112x7xf32> -> vector<112x7xf32>
    %391 = arith.addf %384, %390 : vector<112x7xf32>
    %c0_230 = arith.constant 0 : index
    %c0_231 = arith.constant 0 : index
    %392 = vector.load %arg9[%c0_230, %c0_231] : memref<112x1xf32, #tpu.memory_space<vmem>>, vector<112x1xf32>
    %393 = vector.broadcast %392 : vector<112x1xf32> to vector<112x7xf32>
    %394 = arith.addf %391, %393 : vector<112x7xf32>
    %cst_232 = arith.constant 0.000000e+00 : f32
    %395 = vector.broadcast %cst_232 : f32 to vector<112x7xf32>
    %396 = arith.cmpf oge, %394, %395 : vector<112x7xf32>
    %cst_233 = arith.constant 0.00999999977 : f32
    %397 = vector.broadcast %cst_233 : f32 to vector<112x7xf32>
    %398 = arith.mulf %397, %394 : vector<112x7xf32>
    %399 = arith.select %396, %394, %398 : vector<112x7xi1>, vector<112x7xf32>
    %c0_234 = arith.constant 0 : index
    %c0_235 = arith.constant 0 : index
    %c0_236 = arith.constant 0 : index
    %400 = vector.load %arg11[%c0_234, %c0_235, %c0_236] : memref<3x7x7xf32, #tpu.memory_space<vmem>>, vector<1x7x7xf32>
    %401 = vector.shape_cast %400 : vector<1x7x7xf32> to vector<7x7xf32>
    %cst_237 = arith.constant dense<0.000000e+00> : vector<112x7xf32>
    %402 = tpu.matmul %399, %401, %cst_237 {dimension_numbers = #tpu.dot_dimension_numbers<[1], [0], [0], [1], [0, 0, 1, 1], [], []>} : vector<112x7xf32>, vector<7x7xf32>, vector<112x7xf32> -> vector<112x7xf32>
    %c0_238 = arith.constant 0 : index
    %c0_239 = arith.constant 0 : index
    %c0_240 = arith.constant 0 : index
    %403 = vector.load %arg10[%c0_238, %c0_239, %c0_240] : memref<3x224x112xf32, #tpu.memory_space<vmem>>, vector<1x224x112xf32>
    %404 = vector.shape_cast %403 : vector<1x224x112xf32> to vector<224x112xf32>
    %cst_241 = arith.constant dense<0.000000e+00> : vector<224x7xf32>
    %405 = tpu.matmul %404, %402, %cst_241 {dimension_numbers = #tpu.dot_dimension_numbers<[1], [0], [0], [1], [0, 0, 1, 1], [], []>} : vector<224x112xf32>, vector<112x7xf32>, vector<224x7xf32> -> vector<224x7xf32>
    %c1_242 = arith.constant 1 : index
    %c0_243 = arith.constant 0 : index
    %c0_244 = arith.constant 0 : index
    %406 = vector.load %arg11[%c1_242, %c0_243, %c0_244] : memref<3x7x7xf32, #tpu.memory_space<vmem>>, vector<1x7x7xf32>
    %407 = vector.shape_cast %406 : vector<1x7x7xf32> to vector<7x7xf32>
    %cst_245 = arith.constant dense<0.000000e+00> : vector<112x7xf32>
    %408 = tpu.matmul %399, %407, %cst_245 {dimension_numbers = #tpu.dot_dimension_numbers<[1], [0], [0], [1], [0, 0, 1, 1], [], []>} : vector<112x7xf32>, vector<7x7xf32>, vector<112x7xf32> -> vector<112x7xf32>
    %c1_246 = arith.constant 1 : index
    %c0_247 = arith.constant 0 : index
    %c0_248 = arith.constant 0 : index
    %409 = vector.load %arg10[%c1_246, %c0_247, %c0_248] : memref<3x224x112xf32, #tpu.memory_space<vmem>>, vector<1x224x112xf32>
    %410 = vector.shape_cast %409 : vector<1x224x112xf32> to vector<224x112xf32>
    %cst_249 = arith.constant dense<0.000000e+00> : vector<224x7xf32>
    %411 = tpu.matmul %410, %408, %cst_249 {dimension_numbers = #tpu.dot_dimension_numbers<[1], [0], [0], [1], [0, 0, 1, 1], [], []>} : vector<224x112xf32>, vector<112x7xf32>, vector<224x7xf32> -> vector<224x7xf32>
    %412 = arith.addf %405, %411 : vector<224x7xf32>
    %c2_250 = arith.constant 2 : index
    %c0_251 = arith.constant 0 : index
    %c0_252 = arith.constant 0 : index
    %413 = vector.load %arg11[%c2_250, %c0_251, %c0_252] : memref<3x7x7xf32, #tpu.memory_space<vmem>>, vector<1x7x7xf32>
    %414 = vector.shape_cast %413 : vector<1x7x7xf32> to vector<7x7xf32>
    %cst_253 = arith.constant dense<0.000000e+00> : vector<112x7xf32>
    %415 = tpu.matmul %399, %414, %cst_253 {dimension_numbers = #tpu.dot_dimension_numbers<[1], [0], [0], [1], [0, 0, 1, 1], [], []>} : vector<112x7xf32>, vector<7x7xf32>, vector<112x7xf32> -> vector<112x7xf32>
    %c2_254 = arith.constant 2 : index
    %c0_255 = arith.constant 0 : index
    %c0_256 = arith.constant 0 : index
    %416 = vector.load %arg10[%c2_254, %c0_255, %c0_256] : memref<3x224x112xf32, #tpu.memory_space<vmem>>, vector<1x224x112xf32>
    %417 = vector.shape_cast %416 : vector<1x224x112xf32> to vector<224x112xf32>
    %cst_257 = arith.constant dense<0.000000e+00> : vector<224x7xf32>
    %418 = tpu.matmul %417, %415, %cst_257 {dimension_numbers = #tpu.dot_dimension_numbers<[1], [0], [0], [1], [0, 0, 1, 1], [], []>} : vector<224x112xf32>, vector<112x7xf32>, vector<224x7xf32> -> vector<224x7xf32>
    %419 = arith.addf %412, %418 : vector<224x7xf32>
    %c0_258 = arith.constant 0 : index
    %c0_259 = arith.constant 0 : index
    %420 = vector.load %arg12[%c0_258, %c0_259] : memref<224x1xf32, #tpu.memory_space<vmem>>, vector<224x1xf32>
    %421 = vector.broadcast %420 : vector<224x1xf32> to vector<224x7xf32>
    %422 = arith.addf %419, %421 : vector<224x7xf32>
    %cst_260 = arith.constant 0.000000e+00 : f32
    %423 = vector.broadcast %cst_260 : f32 to vector<224x7xf32>
    %424 = arith.cmpf oge, %422, %423 : vector<224x7xf32>
    %cst_261 = arith.constant 0.00999999977 : f32
    %425 = vector.broadcast %cst_261 : f32 to vector<224x7xf32>
    %426 = arith.mulf %425, %422 : vector<224x7xf32>
    %427 = arith.select %424, %422, %426 : vector<224x7xi1>, vector<224x7xf32>
    %c0_262 = arith.constant 0 : index
    %c0_263 = arith.constant 0 : index
    %428 = vector.load %arg14[%c0_262, %c0_263] : memref<16x1xf32, #tpu.memory_space<vmem>>, vector<16x1xf32>
    %c0_264 = arith.constant 0 : index
    %c0_265 = arith.constant 0 : index
    %c0_266 = arith.constant 0 : index
    %429 = vector.load %arg13[%c0_264, %c0_265, %c0_266] : memref<7x16x224xf32, #tpu.memory_space<vmem>>, vector<1x16x224xf32>
    %430 = vector.shape_cast %429 : vector<1x16x224xf32> to vector<16x224xf32>
    %431 = vector.extract_strided_slice %427 {offsets = [0, 0], sizes = [224, 1], strides = [1, 1]} : vector<224x7xf32> to vector<224x1xf32>
    %cst_267 = arith.constant dense<0.000000e+00> : vector<16x1xf32>
    %432 = tpu.matmul %430, %431, %cst_267 {dimension_numbers = #tpu.dot_dimension_numbers<[1], [0], [0], [1], [0, 0, 1, 1], [], []>} : vector<16x224xf32>, vector<224x1xf32>, vector<16x1xf32> -> vector<16x1xf32>
    %433 = arith.addf %428, %432 : vector<16x1xf32>
    %c1_268 = arith.constant 1 : index
    %c0_269 = arith.constant 0 : index
    %c0_270 = arith.constant 0 : index
    %434 = vector.load %arg13[%c1_268, %c0_269, %c0_270] : memref<7x16x224xf32, #tpu.memory_space<vmem>>, vector<1x16x224xf32>
    %435 = vector.shape_cast %434 : vector<1x16x224xf32> to vector<16x224xf32>
    %436 = vector.extract_strided_slice %427 {offsets = [0, 1], sizes = [224, 1], strides = [1, 1]} : vector<224x7xf32> to vector<224x1xf32>
    %cst_271 = arith.constant dense<0.000000e+00> : vector<16x1xf32>
    %437 = tpu.matmul %435, %436, %cst_271 {dimension_numbers = #tpu.dot_dimension_numbers<[1], [0], [0], [1], [0, 0, 1, 1], [], []>} : vector<16x224xf32>, vector<224x1xf32>, vector<16x1xf32> -> vector<16x1xf32>
    %438 = arith.addf %433, %437 : vector<16x1xf32>
    %c2_272 = arith.constant 2 : index
    %c0_273 = arith.constant 0 : index
    %c0_274 = arith.constant 0 : index
    %439 = vector.load %arg13[%c2_272, %c0_273, %c0_274] : memref<7x16x224xf32, #tpu.memory_space<vmem>>, vector<1x16x224xf32>
    %440 = vector.shape_cast %439 : vector<1x16x224xf32> to vector<16x224xf32>
    %441 = vector.extract_strided_slice %427 {offsets = [0, 2], sizes = [224, 1], strides = [1, 1]} : vector<224x7xf32> to vector<224x1xf32>
    %cst_275 = arith.constant dense<0.000000e+00> : vector<16x1xf32>
    %442 = tpu.matmul %440, %441, %cst_275 {dimension_numbers = #tpu.dot_dimension_numbers<[1], [0], [0], [1], [0, 0, 1, 1], [], []>} : vector<16x224xf32>, vector<224x1xf32>, vector<16x1xf32> -> vector<16x1xf32>
    %443 = arith.addf %438, %442 : vector<16x1xf32>
    %c3_276 = arith.constant 3 : index
    %c0_277 = arith.constant 0 : index
    %c0_278 = arith.constant 0 : index
    %444 = vector.load %arg13[%c3_276, %c0_277, %c0_278] : memref<7x16x224xf32, #tpu.memory_space<vmem>>, vector<1x16x224xf32>
    %445 = vector.shape_cast %444 : vector<1x16x224xf32> to vector<16x224xf32>
    %446 = vector.extract_strided_slice %427 {offsets = [0, 3], sizes = [224, 1], strides = [1, 1]} : vector<224x7xf32> to vector<224x1xf32>
    %cst_279 = arith.constant dense<0.000000e+00> : vector<16x1xf32>
    %447 = tpu.matmul %445, %446, %cst_279 {dimension_numbers = #tpu.dot_dimension_numbers<[1], [0], [0], [1], [0, 0, 1, 1], [], []>} : vector<16x224xf32>, vector<224x1xf32>, vector<16x1xf32> -> vector<16x1xf32>
    %448 = arith.addf %443, %447 : vector<16x1xf32>
    %c4_280 = arith.constant 4 : index
    %c0_281 = arith.constant 0 : index
    %c0_282 = arith.constant 0 : index
    %449 = vector.load %arg13[%c4_280, %c0_281, %c0_282] : memref<7x16x224xf32, #tpu.memory_space<vmem>>, vector<1x16x224xf32>
    %450 = vector.shape_cast %449 : vector<1x16x224xf32> to vector<16x224xf32>
    %451 = vector.extract_strided_slice %427 {offsets = [0, 4], sizes = [224, 1], strides = [1, 1]} : vector<224x7xf32> to vector<224x1xf32>
    %cst_283 = arith.constant dense<0.000000e+00> : vector<16x1xf32>
    %452 = tpu.matmul %450, %451, %cst_283 {dimension_numbers = #tpu.dot_dimension_numbers<[1], [0], [0], [1], [0, 0, 1, 1], [], []>} : vector<16x224xf32>, vector<224x1xf32>, vector<16x1xf32> -> vector<16x1xf32>
    %453 = arith.addf %448, %452 : vector<16x1xf32>
    %c5 = arith.constant 5 : index
    %c0_284 = arith.constant 0 : index
    %c0_285 = arith.constant 0 : index
    %454 = vector.load %arg13[%c5, %c0_284, %c0_285] : memref<7x16x224xf32, #tpu.memory_space<vmem>>, vector<1x16x224xf32>
    %455 = vector.shape_cast %454 : vector<1x16x224xf32> to vector<16x224xf32>
    %456 = vector.extract_strided_slice %427 {offsets = [0, 5], sizes = [224, 1], strides = [1, 1]} : vector<224x7xf32> to vector<224x1xf32>
    %cst_286 = arith.constant dense<0.000000e+00> : vector<16x1xf32>
    %457 = tpu.matmul %455, %456, %cst_286 {dimension_numbers = #tpu.dot_dimension_numbers<[1], [0], [0], [1], [0, 0, 1, 1], [], []>} : vector<16x224xf32>, vector<224x1xf32>, vector<16x1xf32> -> vector<16x1xf32>
    %458 = arith.addf %453, %457 : vector<16x1xf32>
    %c6_287 = arith.constant 6 : index
    %c0_288 = arith.constant 0 : index
    %c0_289 = arith.constant 0 : index
    %459 = vector.load %arg13[%c6_287, %c0_288, %c0_289] : memref<7x16x224xf32, #tpu.memory_space<vmem>>, vector<1x16x224xf32>
    %460 = vector.shape_cast %459 : vector<1x16x224xf32> to vector<16x224xf32>
    %461 = vector.extract_strided_slice %427 {offsets = [0, 6], sizes = [224, 1], strides = [1, 1]} : vector<224x7xf32> to vector<224x1xf32>
    %cst_290 = arith.constant dense<0.000000e+00> : vector<16x1xf32>
    %462 = tpu.matmul %460, %461, %cst_290 {dimension_numbers = #tpu.dot_dimension_numbers<[1], [0], [0], [1], [0, 0, 1, 1], [], []>} : vector<16x224xf32>, vector<224x1xf32>, vector<16x1xf32> -> vector<16x1xf32>
    %463 = arith.addf %458, %462 : vector<16x1xf32>
    %c0_291 = arith.constant 0 : index
    %c0_292 = arith.constant 0 : index
    %c0_293 = arith.constant 0 : index
    %464 = vector.load %arg15[%c0_291, %c0_292, %c0_293] : memref<1x16x1xf32, #tpu.memory_space<vmem>>, vector<1x16x1xf32>
    %465 = vector.shape_cast %464 : vector<1x16x1xf32> to vector<16x1xf32>
    %466 = vector.shape_cast %463 : vector<16x1xf32> to vector<1x16x1xf32>
    tpu.vector_store %arg15[%c0_291, %c0_292, %c0_293], %466 {strides = array<i32>} : memref<1x16x1xf32, #tpu.memory_space<vmem>>, vector<1x16x1xf32>,
    return
  }
  func.func @transform_0(%arg0: i32) -> (i32, i32, i32) {
    %c0_i32 = arith.constant 0 : i32
    %c0_i32_0 = arith.constant 0 : i32
    %c0_i32_1 = arith.constant 0 : i32
    return %arg0, %c0_i32, %c0_i32_0 : i32, i32, i32
  }
  func.func @transform_1(%arg0: i32) -> (i32, i32) {
    %c0_i32 = arith.constant 0 : i32
    %c0_i32_0 = arith.constant 0 : i32
    %c0_i32_1 = arith.constant 0 : i32
    return %c0_i32, %c0_i32_0 : i32, i32
  }
  func.func @transform_2(%arg0: i32) -> (i32, i32) {
    %c0_i32 = arith.constant 0 : i32
    %c0_i32_0 = arith.constant 0 : i32
    %c0_i32_1 = arith.constant 0 : i32
    return %c0_i32, %c0_i32_0 : i32, i32
  }
  func.func @transform_3(%arg0: i32) -> (i32, i32, i32) {
    %c0_i32 = arith.constant 0 : i32
    %c0_i32_0 = arith.constant 0 : i32
    %c0_i32_1 = arith.constant 0 : i32
    %c0_i32_2 = arith.constant 0 : i32
    return %c0_i32, %c0_i32_0, %c0_i32_1 : i32, i32, i32
  }
  func.func @transform_4(%arg0: i32) -> (i32, i32, i32) {
    %c0_i32 = arith.constant 0 : i32
    %c0_i32_0 = arith.constant 0 : i32
    %c0_i32_1 = arith.constant 0 : i32
    %c0_i32_2 = arith.constant 0 : i32
    return %c0_i32, %c0_i32_0, %c0_i32_1 : i32, i32, i32
  }
  func.func @transform_5(%arg0: i32) -> (i32, i32) {
    %c0_i32 = arith.constant 0 : i32
    %c0_i32_0 = arith.constant 0 : i32
    %c0_i32_1 = arith.constant 0 : i32
    return %c0_i32, %c0_i32_0 : i32, i32
  }
  func.func @transform_6(%arg0: i32) -> (i32, i32, i32) {
    %c0_i32 = arith.constant 0 : i32
    %c0_i32_0 = arith.constant 0 : i32
    %c0_i32_1 = arith.constant 0 : i32
    %c0_i32_2 = arith.constant 0 : i32
    return %c0_i32, %c0_i32_0, %c0_i32_1 : i32, i32, i32
  }
  func.func @transform_7(%arg0: i32) -> (i32, i32, i32) {
    %c0_i32 = arith.constant 0 : i32
    %c0_i32_0 = arith.constant 0 : i32
    %c0_i32_1 = arith.constant 0 : i32
    %c0_i32_2 = arith.constant 0 : i32
    return %c0_i32, %c0_i32_0, %c0_i32_1 : i32, i32, i32
  }
  func.func @transform_8(%arg0: i32) -> (i32, i32) {
    %c0_i32 = arith.constant 0 : i32
    %c0_i32_0 = arith.constant 0 : i32
    %c0_i32_1 = arith.constant 0 : i32
    return %c0_i32, %c0_i32_0 : i32, i32
  }
  func.func @transform_9(%arg0: i32) -> (i32, i32, i32) {
    %c0_i32 = arith.constant 0 : i32
    %c0_i32_0 = arith.constant 0 : i32
    %c0_i32_1 = arith.constant 0 : i32
    %c0_i32_2 = arith.constant 0 : i32
    return %c0_i32, %c0_i32_0, %c0_i32_1 : i32, i32, i32
  }
  func.func @transform_10(%arg0: i32) -> (i32, i32, i32) {
    %c0_i32 = arith.constant 0 : i32
    %c0_i32_0 = arith.constant 0 : i32
    %c0_i32_1 = arith.constant 0 : i32
    %c0_i32_2 = arith.constant 0 : i32
    return %c0_i32, %c0_i32_0, %c0_i32_1 : i32, i32, i32
  }
  func.func @transform_11(%arg0: i32) -> (i32, i32) {
    %c0_i32 = arith.constant 0 : i32
    %c0_i32_0 = arith.constant 0 : i32
    %c0_i32_1 = arith.constant 0 : i32
    return %c0_i32, %c0_i32_0 : i32, i32
  }
  func.func @transform_12(%arg0: i32) -> (i32, i32, i32) {
    %c0_i32 = arith.constant 0 : i32
    %c0_i32_0 = arith.constant 0 : i32
    %c0_i32_1 = arith.constant 0 : i32
    %c0_i32_2 = arith.constant 0 : i32
    return %c0_i32, %c0_i32_0, %c0_i32_1 : i32, i32, i32
  }
  func.func @transform_13(%arg0: i32) -> (i32, i32) {
    %c0_i32 = arith.constant 0 : i32
    %c0_i32_0 = arith.constant 0 : i32
    %c0_i32_1 = arith.constant 0 : i32
    return %c0_i32, %c0_i32_0 : i32, i32
  }
  func.func @transform_14(%arg0: i32) -> (i32, i32, i32) {
    %c0_i32 = arith.constant 0 : i32
    %c0_i32_0 = arith.constant 0 : i32
    %c0_i32_1 = arith.constant 0 : i32
    return %arg0, %c0_i32, %c0_i32_0 : i32, i32, i32
  }
}

</mosaic_0001>

<llo_original>
// kernel: causal_reservoir_encoder.1
$region0: #{causal_reservoir_encoder.1}
  #allocation0 [shape = 'u32[]', space=smem, size = 0x4, offset = 0x4, fixed_abs, tag = 'smem constant byte address 0x4 - core index']
  #allocation1 [shape = 'u32[144,128]{1,0:T(1,128)}', space=vmem, size = 0x12000, scoped, tag = 'internal scratch']
  #allocation2 [shape = 'f32[4,792]{1,0:T(4,128)}', space=vmem, size = 0x3800, scoped, tag = 'scratch operand']
  #allocation3 [shape = 'f32[112,28]{1,0:T(8,128)}', space=vmem, size = 0xe000, scoped, tag = 'scratch operand']
  %s0 = inlined_call_operand.vmem [shape: f32[2,1,784], index: 0, kind: input, shape index: {}]
  %s1 = inlined_call_operand.vmem [shape: f32[4,39], index: 1, kind: input, shape index: {}]
  %s2 = inlined_call_operand.vmem [shape: f32[4,4], index: 2, kind: input, shape index: {}]
  %s3 = inlined_call_operand.hbm [shape: f32[4,112,112], index: 3, kind: input, shape index: {}]
  %s4 = inlined_call_operand.vmem [shape: f32[4,28,14], index: 4, kind: input, shape index: {}]
  %s5 = inlined_call_operand.vmem [shape: f32[112,1], index: 5, kind: input, shape index: {}]
  %s6 = inlined_call_operand.hbm [shape: f32[4,112,112], index: 6, kind: input, shape index: {}]
  %s7 = inlined_call_operand.vmem [shape: f32[4,14,7], index: 7, kind: input, shape index: {}]
  %s8 = inlined_call_operand.vmem [shape: f32[112,1], index: 8, kind: input, shape index: {}]
  %s9 = inlined_call_operand.vmem [shape: f32[3,224,112], index: 9, kind: input, shape index: {}]
  %s10 = inlined_call_operand.hbm [shape: f32[3,7,7], index: 10, kind: input, shape index: {}]
  %s11 = inlined_call_operand.vmem [shape: f32[224,1], index: 11, kind: input, shape index: {}]
  %s12 = inlined_call_operand.vmem [shape: f32[7,16,224], index: 12, kind: input, shape index: {}]
  %s13 = inlined_call_operand.vmem [shape: f32[16,1], index: 13, kind: input, shape index: {}]
  %s14 = inlined_call_operand.vmem [shape: f32[2,16,1], index: 14, kind: output, shape index: {}]
  %s15 = sld [smem:[#allocation0]]
  $region101: #{causal_reservoir_encoder.1} parent=0
    _
  %s17 = ssub.s32 1, %s15
  %s18 = scalar_select 0, %s17, %s15
  $region1: #{causal_reservoir_encoder.1} parent=0
    #allocation4 [shape = 'u8[229376]{0}', space=vmem, size = 0x38000, scoped, tag = 'input window, operand 3, single buffered']
    #allocation5 [shape = 's32[2]{0}', space=sflag, size = 0x8, scoped, tag = 'scoped memory for causal_reservoir_encoder.1']
    #allocation6 [shape = 'u8[229376]{0}', space=vmem, size = 0x38000, scoped, tag = 'input window, operand 6, single buffered']
    #allocation7 [shape = 's32[1]{0}', space=sflag, size = 0x4, scoped, tag = 'scoped memory for causal_reservoir_encoder.1']
    #allocation8 [shape = 'u8[12288]{0}', space=vmem, size = 0x3000, scoped, tag = 'input window, operand 10, single buffered']
    %19 = vsyncpa [#allocation5], 0
    %20 = vsyncpa [#allocation7], 0
    loop: start=0, step=1, limit=4
    $region2: #{causal_reservoir_encoder.1} parent=1 // loop_pre_header
      _
    $region3: #{causal_reservoir_encoder.1} parent=1 // loop_header
      %s22 = sphi 0, %s26
      %p23 = scmp.ge.s32.totalorder %s22, 4
      %s32 = sphi 0, %s34
      %s35 = sphi 0, %s32
      %s36 = sphi 0, %s35
      %s52 = sphi 0, %s36
      %s56 = sphi 0, %s56
      %s58 = sphi 0, %s56
      %s59 = sphi 0, %s58
      %s73 = sphi 0, %s59
      %s77 = sphi 0, %s77
      %s79 = sphi 0, %s77
      %s80 = sphi 0, %s79
      %s94 = sphi 0, %s80
      %s98 = sphi 0, %s98
      %s100 = sphi 0, %s98
      %s101 = sphi 0, %s100
      %s115 = sphi 0, %s101
      %s119 = sphi 0, %s119
      %s121 = sphi 0, %s119
      %s122 = sphi 0, %s121
      %s136 = sphi 0, %s122
      %s140 = sphi 0, %s140
      %s142 = sphi 0, %s140
      %s143 = sphi 0, %s142
      %s157 = sphi 0, %s143
      %s161 = sphi 0, %s161
      %s163 = sphi 0, %s161
      %s164 = sphi 0, %s163
      %s178 = sphi 0, %s164
      %s182 = sphi 0, %s182
      %s184 = sphi 0, %s182
      %s185 = sphi 0, %s184
      %s199 = sphi 0, %s185
      %s203 = sphi 0, %s203
      %s205 = sphi 0, %s203
      %s206 = sphi 0, %s205
      %s220 = sphi 0, %s206
      %s224 = sphi 0, %s224
      %s226 = sphi 0, %s224
      %s227 = sphi 0, %s226
      %s241 = sphi 0, %s227
      %s245 = sphi 0, %s245
      %s247 = sphi 0, %s245
      %s248 = sphi 0, %s247
      %s262 = sphi 0, %s248
      %s266 = sphi 0, %s266
      %s268 = sphi 0, %s266
      %s269 = sphi 0, %s268
      %s283 = sphi 0, %s269
      %s287 = sphi 0, %s287
      %s289 = sphi 0, %s287
      %s290 = sphi 0, %s289
      %s304 = sphi 0, %s290
      %s308 = sphi 0, %s308
      %s310 = sphi 0, %s308
      %s311 = sphi 0, %s310
      %s325 = sphi 0, %s311
      %s331 = sphi 0, %s333
      %s334 = sphi 0, %s331
      %s335 = sphi 0, %s334
      %s351 = sphi 0, %s335
    $region4: #{causal_reservoir_encoder.1} parent=1 // loop_header_branch
      %25 = sbr.rel (%p23) target = $region8
    $region5: #{causal_reservoir_encoder.1} parent=1 // loop_body
      %s27 = ssub.s32 %s22, 1
      %s28 = ssub.s32 %s22, 2
      %s29 = sadd.s32 %s22, 1
      %s30 = ssub.s32 %s22, %s29
      %p31 = scmp.eq.s32.totalorder %s30, 0
      %s33 = sadd.s32 %s32, 1
      %s34 = scalar_select %p31, %s32, %s33
      %p37 = pneg %p31
      %p38 = scmp.eq.s32.totalorder %s22, 1
      %p39 = por %p37, %p38
      %p40 = scmp.ne.s32.totalorder %s32, %s35
      %p41 = scmp.eq.s32.totalorder %s22, 0
      %p42 = por %p40, %p41
      %p43 = scmp.ne.s32.totalorder %s32, %s35
      %p44 = scmp.eq.s32.totalorder %s27, 1
      %p45 = por %p43, %p44
      %p46 = scmp.ne.s32.totalorder %s35, %s36
      %p47 = scmp.eq.s32.totalorder %s27, 0
      %p48 = por %p46, %p47
      %p49 = scmp.ne.s32.totalorder %s35, %s36
      %p50 = scmp.eq.s32.totalorder %s28, 1
      %p51 = por %p49, %p50
      %p53 = scmp.ne.s32.totalorder %s36, %s52
      %p54 = scmp.eq.s32.totalorder %s28, 0
      %p55 = por %p53, %p54
      %s57 = sadd.s32 %s56, 1
      %p60 = scmp.eq.s32.totalorder %s22, 1
      %p61 = scmp.ne.s32.totalorder %s56, %s58
      %p62 = scmp.eq.s32.totalorder %s22, 0
      %p63 = por %p61, %p62
      %p64 = scmp.ne.s32.totalorder %s56, %s58
      %p65 = scmp.eq.s32.totalorder %s27, 1
      %p66 = por %p64, %p65
      %p67 = scmp.ne.s32.totalorder %s58, %s59
      %p68 = scmp.eq.s32.totalorder %s27, 0
      %p69 = por %p67, %p68
      %p70 = scmp.ne.s32.totalorder %s58, %s59
      %p71 = scmp.eq.s32.totalorder %s28, 1
      %p72 = por %p70, %p71
      %p74 = scmp.ne.s32.totalorder %s59, %s73
      %p75 = scmp.eq.s32.totalorder %s28, 0
      %p76 = por %p74, %p75
      %s78 = sadd.s32 %s77, 1
      %p81 = scmp.eq.s32.totalorder %s22, 1
      %p82 = scmp.ne.s32.totalorder %s77, %s79
      %p83 = scmp.eq.s32.totalorder %s22, 0
      %p84 = por %p82, %p83
      %p85 = scmp.ne.s32.totalorder %s77, %s79
      %p86 = scmp.eq.s32.totalorder %s27, 1
      %p87 = por %p85, %p86
      %p88 = scmp.ne.s32.totalorder %s79, %s80
      %p89 = scmp.eq.s32.totalorder %s27, 0
      %p90 = por %p88, %p89
      %p91 = scmp.ne.s32.totalorder %s79, %s80
      %p92 = scmp.eq.s32.totalorder %s28, 1
      %p93 = por %p91, %p92
      %p95 = scmp.ne.s32.totalorder %s80, %s94
      %p96 = scmp.eq.s32.totalorder %s28, 0
      %p97 = por %p95, %p96
      %s99 = sadd.s32 %s98, 1
      %p102 = scmp.eq.s32.totalorder %s22, 1
      %p103 = scmp.ne.s32.totalorder %s98, %s100
      %p104 = scmp.eq.s32.totalorder %s22, 0
      %p105 = por %p103, %p104
      %p106 = scmp.ne.s32.totalorder %s98, %s100
      %p107 = scmp.eq.s32.totalorder %s27, 1
      %p108 = por %p106, %p107
      %p109 = scmp.ne.s32.totalorder %s100, %s101
      %p110 = scmp.eq.s32.totalorder %s27, 0
      %p111 = por %p109, %p110
      %p112 = scmp.ne.s32.totalorder %s100, %s101
      %p113 = scmp.eq.s32.totalorder %s28, 1
      %p114 = por %p112, %p113
      %p116 = scmp.ne.s32.totalorder %s101, %s115
      %p117 = scmp.eq.s32.totalorder %s28, 0
      %p118 = por %p116, %p117
      %s120 = sadd.s32 %s119, 1
      %p123 = scmp.eq.s32.totalorder %s22, 1
      %p124 = scmp.ne.s32.totalorder %s119, %s121
      %p125 = scmp.eq.s32.totalorder %s22, 0
      %p126 = por %p124, %p125
      %p127 = scmp.ne.s32.totalorder %s119, %s121
      %p128 = scmp.eq.s32.totalorder %s27, 1
      %p129 = por %p127, %p128
      %p130 = scmp.ne.s32.totalorder %s121, %s122
      %p131 = scmp.eq.s32.totalorder %s27, 0
      %p132 = por %p130, %p131
      %p133 = scmp.ne.s32.totalorder %s121, %s122
      %p134 = scmp.eq.s32.totalorder %s28, 1
      %p135 = por %p133, %p134
      %p137 = scmp.ne.s32.totalorder %s122, %s136
      %p138 = scmp.eq.s32.totalorder %s28, 0
      %p139 = por %p137, %p138
      %s141 = sadd.s32 %s140, 1
      %p144 = scmp.eq.s32.totalorder %s22, 1
      %p145 = scmp.ne.s32.totalorder %s140, %s142
      %p146 = scmp.eq.s32.totalorder %s22, 0
      %p147 = por %p145, %p146
      %p148 = scmp.ne.s32.totalorder %s140, %s142
      %p149 = scmp.eq.s32.totalorder %s27, 1
      %p150 = por %p148, %p149
      %p151 = scmp.ne.s32.totalorder %s142, %s143
      %p152 = scmp.eq.s32.totalorder %s27, 0
      %p153 = por %p151, %p152
      %p154 = scmp.ne.s32.totalorder %s142, %s143
      %p155 = scmp.eq.s32.totalorder %s28, 1
      %p156 = por %p154, %p155
      %p158 = scmp.ne.s32.totalorder %s143, %s157
      %p159 = scmp.eq.s32.totalorder %s28, 0
      %p160 = por %p158, %p159
      %s162 = sadd.s32 %s161, 1
      %p165 = scmp.eq.s32.totalorder %s22, 1
      %p166 = scmp.ne.s32.totalorder %s161, %s163
      %p167 = scmp.eq.s32.totalorder %s22, 0
      %p168 = por %p166, %p167
      %p169 = scmp.ne.s32.totalorder %s161, %s163
      %p170 = scmp.eq.s32.totalorder %s27, 1
      %p171 = por %p169, %p170
      %p172 = scmp.ne.s32.totalorder %s163, %s164
      %p173 = scmp.eq.s32.totalorder %s27, 0
      %p174 = por %p172, %p173
      %p175 = scmp.ne.s32.totalorder %s163, %s164
      %p176 = scmp.eq.s32.totalorder %s28, 1
      %p177 = por %p175, %p176
      %p179 = scmp.ne.s32.totalorder %s164, %s178
      %p180 = scmp.eq.s32.totalorder %s28, 0
      %p181 = por %p179, %p180
      %s183 = sadd.s32 %s182, 1
      %p186 = scmp.eq.s32.totalorder %s22, 1
      %p187 = scmp.ne.s32.totalorder %s182, %s184
      %p188 = scmp.eq.s32.totalorder %s22, 0
      %p189 = por %p187, %p188
      %p190 = scmp.ne.s32.totalorder %s182, %s184
      %p191 = scmp.eq.s32.totalorder %s27, 1
      %p192 = por %p190, %p191
      %p193 = scmp.ne.s32.totalorder %s184, %s185
      %p194 = scmp.eq.s32.totalorder %s27, 0
      %p195 = por %p193, %p194
      %p196 = scmp.ne.s32.totalorder %s184, %s185
      %p197 = scmp.eq.s32.totalorder %s28, 1
      %p198 = por %p196, %p197
      %p200 = scmp.ne.s32.totalorder %s185, %s199
      %p201 = scmp.eq.s32.totalorder %s28, 0
      %p202 = por %p200, %p201
      %s204 = sadd.s32 %s203, 1
      %p207 = scmp.eq.s32.totalorder %s22, 1
      %p208 = scmp.ne.s32.totalorder %s203, %s205
      %p209 = scmp.eq.s32.totalorder %s22, 0
      %p210 = por %p208, %p209
      %p211 = scmp.ne.s32.totalorder %s203, %s205
      %p212 = scmp.eq.s32.totalorder %s27, 1
      %p213 = por %p211, %p212
      %p214 = scmp.ne.s32.totalorder %s205, %s206
      %p215 = scmp.eq.s32.totalorder %s27, 0
      %p216 = por %p214, %p215
      %p217 = scmp.ne.s32.totalorder %s205, %s206
      %p218 = scmp.eq.s32.totalorder %s28, 1
      %p219 = por %p217, %p218
      %p221 = scmp.ne.s32.totalorder %s206, %s220
      %p222 = scmp.eq.s32.totalorder %s28, 0
      %p223 = por %p221, %p222
      %s225 = sadd.s32 %s224, 1
      %p228 = scmp.eq.s32.totalorder %s22, 1
      %p229 = scmp.ne.s32.totalorder %s224, %s226
      %p230 = scmp.eq.s32.totalorder %s22, 0
      %p231 = por %p229, %p230
      %p232 = scmp.ne.s32.totalorder %s224, %s226
      %p233 = scmp.eq.s32.totalorder %s27, 1
      %p234 = por %p232, %p233
      %p235 = scmp.ne.s32.totalorder %s226, %s227
      %p236 = scmp.eq.s32.totalorder %s27, 0
      %p237 = por %p235, %p236
      %p238 = scmp.ne.s32.totalorder %s226, %s227
      %p239 = scmp.eq.s32.totalorder %s28, 1
      %p240 = por %p238, %p239
      %p242 = scmp.ne.s32.totalorder %s227, %s241
      %p243 = scmp.eq.s32.totalorder %s28, 0
      %p244 = por %p242, %p243
      %s246 = sadd.s32 %s245, 1
      %p249 = scmp.eq.s32.totalorder %s22, 1
      %p250 = scmp.ne.s32.totalorder %s245, %s247
      %p251 = scmp.eq.s32.totalorder %s22, 0
      %p252 = por %p250, %p251
      %p253 = scmp.ne.s32.totalorder %s245, %s247
      %p254 = scmp.eq.s32.totalorder %s27, 1
      %p255 = por %p253, %p254
      %p256 = scmp.ne.s32.totalorder %s247, %s248
      %p257 = scmp.eq.s32.totalorder %s27, 0
      %p258 = por %p256, %p257
      %p259 = scmp.ne.s32.totalorder %s247, %s248
      %p260 = scmp.eq.s32.totalorder %s28, 1
      %p261 = por %p259, %p260
      %p263 = scmp.ne.s32.totalorder %s248, %s262
      %p264 = scmp.eq.s32.totalorder %s28, 0
      %p265 = por %p263, %p264
      %s267 = sadd.s32 %s266, 1
      %p270 = scmp.eq.s32.totalorder %s22, 1
      %p271 = scmp.ne.s32.totalorder %s266, %s268
      %p272 = scmp.eq.s32.totalorder %s22, 0
      %p273 = por %p271, %p272
      %p274 = scmp.ne.s32.totalorder %s266, %s268
      %p275 = scmp.eq.s32.totalorder %s27, 1
      %p276 = por %p274, %p275
      %p277 = scmp.ne.s32.totalorder %s268, %s269
      %p278 = scmp.eq.s32.totalorder %s27, 0
      %p279 = por %p277, %p278
      %p280 = scmp.ne.s32.totalorder %s268, %s269
      %p281 = scmp.eq.s32.totalorder %s28, 1
      %p282 = por %p280, %p281
      %p284 = scmp.ne.s32.totalorder %s269, %s283
      %p285 = scmp.eq.s32.totalorder %s28, 0
      %p286 = por %p284, %p285
      %s288 = sadd.s32 %s287, 1
      %p291 = scmp.eq.s32.totalorder %s22, 1
      %p292 = scmp.ne.s32.totalorder %s287, %s289
      %p293 = scmp.eq.s32.totalorder %s22, 0
      %p294 = por %p292, %p293
      %p295 = scmp.ne.s32.totalorder %s287, %s289
      %p296 = scmp.eq.s32.totalorder %s27, 1
      %p297 = por %p295, %p296
      %p298 = scmp.ne.s32.totalorder %s289, %s290
      %p299 = scmp.eq.s32.totalorder %s27, 0
      %p300 = por %p298, %p299
      %p301 = scmp.ne.s32.totalorder %s289, %s290
      %p302 = scmp.eq.s32.totalorder %s28, 1
      %p303 = por %p301, %p302
      %p305 = scmp.ne.s32.totalorder %s290, %s304
      %p306 = scmp.eq.s32.totalorder %s28, 0
      %p307 = por %p305, %p306
      %s309 = sadd.s32 %s308, 1
      %p312 = scmp.eq.s32.totalorder %s22, 1
      %p313 = scmp.ne.s32.totalorder %s308, %s310
      %p314 = scmp.eq.s32.totalorder %s22, 0
      %p315 = por %p313, %p314
      %p316 = scmp.ne.s32.totalorder %s308, %s310
      %p317 = scmp.eq.s32.totalorder %s27, 1
      %p318 = por %p316, %p317
      %p319 = scmp.ne.s32.totalorder %s310, %s311
      %p320 = scmp.eq.s32.totalorder %s27, 0
      %p321 = por %p319, %p320
      %p322 = scmp.ne.s32.totalorder %s310, %s311
      %p323 = scmp.eq.s32.totalorder %s28, 1
      %p324 = por %p322, %p323
      %p326 = scmp.ne.s32.totalorder %s311, %s325
      %p327 = scmp.eq.s32.totalorder %s28, 0
      %p328 = por %p326, %p327
      %s329 = ssub.s32 %s22, %s29
      %p330 = scmp.eq.s32.totalorder %s329, 0
      %s332 = sadd.s32 %s331, 1
      %s333 = scalar_select %p330, %s331, %s332
      %p336 = pneg %p330
      %p337 = scmp.eq.s32.totalorder %s22, 1
      %p338 = por %p336, %p337
      %p339 = scmp.ne.s32.totalorder %s331, %s334
      %p340 = scmp.eq.s32.totalorder %s22, 0
      %p341 = por %p339, %p340
      %p342 = scmp.ne.s32.totalorder %s331, %s334
      %p343 = scmp.eq.s32.totalorder %s27, 1
      %p344 = por %p342, %p343
      %p345 = scmp.ne.s32.totalorder %s334, %s335
      %p346 = scmp.eq.s32.totalorder %s27, 0
      %p347 = por %p345, %p346
      %p348 = scmp.ne.s32.totalorder %s334, %s335
      %p349 = scmp.eq.s32.totalorder %s28, 1
      %p350 = por %p348, %p349
      %p352 = scmp.ne.s32.totalorder %s335, %s351
      %p353 = scmp.eq.s32.totalorder %s28, 0
      %p354 = por %p352, %p353
      %p355 = scmp.le.s32.totalorder 1, %s22
      %p356 = scmp.lt.s32.totalorder %s22, 3
      %p357 = pnand %p355, %p356
      %p358 = pneg %p357
      // Predicated region
      $region9: #{causal_reservoir_encoder.1} parent=5 // pred_check
        _
      $region10: #{causal_reservoir_encoder.1} parent=5 // pred_check_branch
        %360 = sbr.rel (%p357) target = $region12
      $region11: #{causal_reservoir_encoder.1} parent=5 // pred_region
        %s361 = ssub.s32 %s22, 1
        // Predicated region
        $region13: #{causal_reservoir_encoder.1} parent=11 // pred_check
          %p362 = pneg %p69
        $region14: #{causal_reservoir_encoder.1} parent=11 // pred_check_branch
          %364 = sbr.rel (%p362) target = $region16
        $region15: #{causal_reservoir_encoder.1} parent=11 // pred_region
          _
        $region16: #{causal_reservoir_encoder.1} parent=11 // pred_fallthru
          _
        // Predicated region
        $region17: #{causal_reservoir_encoder.1} parent=11 // pred_check
          %p365 = pneg %p90
        $region18: #{causal_reservoir_encoder.1} parent=11 // pred_check_branch
          %367 = sbr.rel (%p365) target = $region20
        $region19: #{causal_reservoir_encoder.1} parent=11 // pred_region
          _
        $region20: #{causal_reservoir_encoder.1} parent=11 // pred_fallthru
          _
        // Predicated region
        $region21: #{causal_reservoir_encoder.1} parent=11 // pred_check
          %p368 = pneg %p111
        $region22: #{causal_reservoir_encoder.1} parent=11 // pred_check_branch
          %370 = sbr.rel (%p368) target = $region24
        $region23: #{causal_reservoir_encoder.1} parent=11 // pred_region
          %s372 = ssub.s32 7168, 7168
          %373 = vsyncadd [#allocation5], %s372
          %s374 = sshll.u32 [#allocation4], 4
          %s375 = int_to_ptr.vmem [resolvable:$true] %s374
          %380 = dma.hbm_to_vmem [thread:$0]  %s3, 7168, %s375, [#allocation5], 128, 128, 8
        $region24: #{causal_reservoir_encoder.1} parent=11 // pred_fallthru
          _
        // Predicated region
        $region25: #{causal_reservoir_encoder.1} parent=11 // pred_check
          %p381 = pneg %p132
        $region26: #{causal_reservoir_encoder.1} parent=11 // pred_check_branch
          %383 = sbr.rel (%p381) target = $region28
        $region27: #{causal_reservoir_encoder.1} parent=11 // pred_region
          _
        $region28: #{causal_reservoir_encoder.1} parent=11 // pred_fallthru
          _
        // Predicated region
        $region29: #{causal_reservoir_encoder.1} parent=11 // pred_check
          %p384 = pneg %p153
        $region30: #{causal_reservoir_encoder.1} parent=11 // pred_check_branch
          %386 = sbr.rel (%p384) target = $region32
        $region31: #{causal_reservoir_encoder.1} parent=11 // pred_region
          _
        $region32: #{causal_reservoir_encoder.1} parent=11 // pred_fallthru
          _
        // Predicated region
        $region33: #{causal_reservoir_encoder.1} parent=11 // pred_check
          %p387 = pneg %p174
        $region34: #{causal_reservoir_encoder.1} parent=11 // pred_check_branch
          %389 = sbr.rel (%p387) target = $region36
        $region35: #{causal_reservoir_encoder.1} parent=11 // pred_region
          %s391 = ssub.s32 7168, 7168
          %392 = vsyncadd [#allocation7], %s391
          %s393 = sshll.u32 [#allocation6], 4
          %s394 = int_to_ptr.vmem [resolvable:$true] %s393
          %399 = dma.hbm_to_vmem [thread:$0]  %s6, 7168, %s394, [#allocation7], 128, 128, 8
        $region36: #{causal_reservoir_encoder.1} parent=11 // pred_fallthru
          _
        // Predicated region
        $region37: #{causal_reservoir_encoder.1} parent=11 // pred_check
          %p400 = pneg %p195
        $region38: #{causal_reservoir_encoder.1} parent=11 // pred_check_branch
          %402 = sbr.rel (%p400) target = $region40
        $region39: #{causal_reservoir_encoder.1} parent=11 // pred_region
          _
        $region40: #{causal_reservoir_encoder.1} parent=11 // pred_fallthru
          _
        // Predicated region
        $region41: #{causal_reservoir_encoder.1} parent=11 // pred_check
          %p403 = pneg %p216
        $region42: #{causal_reservoir_encoder.1} parent=11 // pred_check_branch
          %405 = sbr.rel (%p403) target = $region44
        $region43: #{causal_reservoir_encoder.1} parent=11 // pred_region
          _
        $region44: #{causal_reservoir_encoder.1} parent=11 // pred_fallthru
          _
        // Predicated region
        $region45: #{causal_reservoir_encoder.1} parent=11 // pred_check
          %p406 = pneg %p237
        $region46: #{causal_reservoir_encoder.1} parent=11 // pred_check_branch
          %408 = sbr.rel (%p406) target = $region48
        $region47: #{causal_reservoir_encoder.1} parent=11 // pred_region
          _
        $region48: #{causal_reservoir_encoder.1} parent=11 // pred_fallthru
          _
        // Predicated region
        $region49: #{causal_reservoir_encoder.1} parent=11 // pred_check
          %p409 = pneg %p258
        $region50: #{causal_reservoir_encoder.1} parent=11 // pred_check_branch
          %411 = sbr.rel (%p409) target = $region52
        $region51: #{causal_reservoir_encoder.1} parent=11 // pred_region
          %s413 = ssub.s32 384, 384
          %414 = vsyncadd [#allocation7], %s413
          %s415 = sshll.u32 [#allocation8], 4
          %s416 = int_to_ptr.vmem [resolvable:$true] %s415
          %421 = dma.hbm_to_vmem [thread:$0]  %s10, 384, %s416, [#allocation7], 128, 128, 8
        $region52: #{causal_reservoir_encoder.1} parent=11 // pred_fallthru
          _
        // Predicated region
        $region53: #{causal_reservoir_encoder.1} parent=11 // pred_check
          %p422 = pneg %p279
        $region54: #{causal_reservoir_encoder.1} parent=11 // pred_check_branch
          %424 = sbr.rel (%p422) target = $region56
        $region55: #{causal_reservoir_encoder.1} parent=11 // pred_region
          _
        $region56: #{causal_reservoir_encoder.1} parent=11 // pred_fallthru
          _
        // Predicated region
        $region57: #{causal_reservoir_encoder.1} parent=11 // pred_check
          %p425 = pneg %p300
        $region58: #{causal_reservoir_encoder.1} parent=11 // pred_check_branch
          %427 = sbr.rel (%p425) target = $region60
        $region59: #{causal_reservoir_encoder.1} parent=11 // pred_region
          _
        $region60: #{causal_reservoir_encoder.1} parent=11 // pred_fallthru
          _
        // Predicated region
        $region61: #{causal_reservoir_encoder.1} parent=11 // pred_check
          %p428 = pneg %p321
        $region62: #{causal_reservoir_encoder.1} parent=11 // pred_check_branch
          %430 = sbr.rel (%p428) target = $region64
        $region63: #{causal_reservoir_encoder.1} parent=11 // pred_region
          _
        $region64: #{causal_reservoir_encoder.1} parent=11 // pred_fallthru
          _
      $region12: #{causal_reservoir_encoder.1} parent=5 // pred_fallthru
        _
      %p431 = scmp.lt.s32.totalorder %s22, 2
      // Predicated region
      $region65: #{causal_reservoir_encoder.1} parent=5 // pred_check
        %p432 = pneg %p431
      $region66: #{causal_reservoir_encoder.1} parent=5 // pred_check_branch
        %434 = sbr.rel (%p432) target = $region68
      $region67: #{causal_reservoir_encoder.1} parent=5 // pred_region
        // Predicated region
        $region69: #{causal_reservoir_encoder.1} parent=67 // pred_check
          %p435 = pneg %p42
        $region70: #{causal_reservoir_encoder.1} parent=67 // pred_check_branch
          %437 = sbr.rel (%p435) target = $region72
        $region71: #{causal_reservoir_encoder.1} parent=67 // pred_region
          %p438 = scmp.lt.s32.totalorder %s22, 1
          %s439 = scalar_select %p438, %s22, 1
          %s440 = smul.addr %s439, 7
          %s441 = scalar_lea.vmem %s0, %s440
        $region72: #{causal_reservoir_encoder.1} parent=67 // pred_fallthru
          _
      $region68: #{causal_reservoir_encoder.1} parent=5 // pred_fallthru
        _
      %p442 = scmp.le.s32.totalorder 1, %s22
      %p443 = scmp.lt.s32.totalorder %s22, 3
      %p444 = pnand %p442, %p443
      %p445 = pneg %p444
      // Predicated region
      $region73: #{causal_reservoir_encoder.1} parent=5 // pred_check
        _
      $region74: #{causal_reservoir_encoder.1} parent=5 // pred_check_branch
        %447 = sbr.rel (%p444) target = $region76
      $region75: #{causal_reservoir_encoder.1} parent=5 // pred_region
        %s448 = ssub.s32 %s22, 1
        // Predicated region
        $region77: #{causal_reservoir_encoder.1} parent=75 // pred_check
          %p449 = pneg %p111
        $region78: #{causal_reservoir_encoder.1} parent=75 // pred_check_branch
          %451 = sbr.rel (%p449) target = $region80
        $region79: #{causal_reservoir_encoder.1} parent=75 // pred_region
          %452 = dma.done [#allocation5], 7168
        $region80: #{causal_reservoir_encoder.1} parent=75 // pred_fallthru
          _
        // Predicated region
        $region81: #{causal_reservoir_encoder.1} parent=75 // pred_check
          %p453 = pneg %p174
        $region82: #{causal_reservoir_encoder.1} parent=75 // pred_check_branch
          %455 = sbr.rel (%p453) target = $region84
        $region83: #{causal_reservoir_encoder.1} parent=75 // pred_region
          %456 = dma.done [#allocation7], 7168
        $region84: #{causal_reservoir_encoder.1} parent=75 // pred_fallthru
          _
        // Predicated region
        $region85: #{causal_reservoir_encoder.1} parent=75 // pred_check
          %p457 = pneg %p258
        $region86: #{causal_reservoir_encoder.1} parent=75 // pred_check_branch
          %459 = sbr.rel (%p457) target = $region88
        $region87: #{causal_reservoir_encoder.1} parent=75 // pred_region
          %460 = dma.done [#allocation7], 384
        $region88: #{causal_reservoir_encoder.1} parent=75 // pred_fallthru
          _
        %p461 = scmp.lt.s32.totalorder %s27, 1
        %s462 = scalar_select %p461, %s27, 1
        %s463 = smul.addr %s462, 7
        %s464 = scalar_lea.vmem %s0, %s463
        %p465 = pneg %p48
        %p466 = pneg %p45
        %p467 = pneg %p69
        %p468 = pneg %p66
        %p469 = pneg %p90
        %p470 = pneg %p87
        %p471 = pneg %p111
        %p472 = pneg %p108
        %p473 = pneg %p132
        %p474 = pneg %p129
        %p475 = pneg %p153
        %p476 = pneg %p150
        %p477 = pneg %p174
        %p478 = pneg %p171
        %p479 = pneg %p195
        %p480 = pneg %p192
        %p481 = pneg %p216
        %p482 = pneg %p213
        %p483 = pneg %p237
        %p484 = pneg %p234
        %p485 = pneg %p258
        %p486 = pneg %p255
        %p487 = pneg %p279
        %p488 = pneg %p276
        %p489 = pneg %p300
        %p490 = pneg %p297
        %p491 = pneg %p321
        %p492 = pneg %p318
        %p493 = pneg %p347
        %p494 = pneg %p344
        %p495 = scmp.lt.s32.totalorder %s27, 1
        %s496 = scalar_select %p495, %s27, 1
        %s497 = smul.addr %s496, 2
        %s498 = smul.addr %s497, 8
        %s499 = scalar_lea.vmem %s14, %s498
        %p500 = scmp.lt.s32.totalorder %s27, 1
        %s501 = scalar_select %p500, %s27, 1
        %s502 = smul.addr %s501, 7
        %s503 = scalar_lea.vmem %s0, %s502
        %p504 = scmp.lt.s32.totalorder %s27, 1
        %s505 = scalar_select %p504, %s27, 1
        %s506 = smul.addr %s505, 2
        %s507 = smul.addr %s506, 8
        %s508 = scalar_lea.vmem %s14, %s507
        %509 = vst [vmem:[#allocation2] sm:$0xff] 0.0
        %510 = vst [vmem:[#allocation2 + $0x8] sm:$0xff] 0.0
        %511 = vst [vmem:[#allocation2 + $0x10] sm:$0xff] 0.0
        %vm512 = vcmask 191488
        %513 = vst.msk [vmem:[#allocation2 + $0x18] sm:$0xf] %vm512, 0.0
        %v514 = vld [vmem:[%s503] sm:$0x7f]
        %516 = vrot.lane.b32.xlu0 %v514, 8
        %v517 = vpop.permute.xlu0 %516
        %v518 = vrot.slane %v517, 7
        %vm519 = vcmask 64512
        %v520 = vsel %vm519, %v518, %v517
        %v522 = vlaneseq
        %vm523 = vcmp.ge.s32.totalorder %v522, 8
        %vm524 = vcmp.lt.s32.totalorder %v522, 792
        %vm525 = vmand %vm523, %vm524
        %526 = vst.msk [vmem:[#allocation2] ss:$4 sm:$0x7f] %vm525, %v520
        %v527 = vld [vmem:[%s1] sm:$0xf]
        %v528 = vld [vmem:[%s2] sm:$0xf]
        %v529 = vld [vmem:[#allocation2] ss:$4 sm:$0x7f]
        %531 = vset.pattern.permute.xlu0 0
        %532 = vperm.xlu0 %531, %v527
        %v533 = vpop.permute.xlu0 %532
        %v536 = vlaneseq
        %v537 = vshrl.u32 %v536, 7
        %v538 = vsub.s32 0, %v537
        %v539 = vrot.slane %v529, %v538
        %v540 = vlaneseq
        %v541 = vshrl.u32 %v540, 7
        %v542 = vsub.s32 1, %v541
        %v543 = vrot.slane %v529, %v542
        %v544 = vlaneseq
        %v545 = vshrl.u32 %v544, 7
        %v546 = vsub.s32 2, %v545
        %v547 = vrot.slane %v529, %v546
        %v548 = vlaneseq
        %v549 = vshrl.u32 %v548, 7
        %v550 = vsub.s32 3, %v549
        %v551 = vrot.slane %v529, %v550
        %v552 = vlaneseq
        %v553 = vshrl.u32 %v552, 7
        %v554 = vsub.s32 4, %v553
        %v555 = vrot.slane %v529, %v554
        %v556 = vlaneseq
        %v557 = vshrl.u32 %v556, 7
        %v558 = vsub.s32 5, %v557
        %v559 = vrot.slane %v529, %v558
        %v560 = vlaneseq
        %v561 = vshrl.u32 %v560, 7
        %v562 = vsub.s32 6, %v561
        %v563 = vrot.slane %v529, %v562
        %v571 = vmul.f32 %v533, %v539
        %v572 = vmul.f32 %v533, %v543
        %v573 = vmul.f32 %v533, %v547
        %v574 = vmul.f32 %v533, %v551
        %v575 = vmul.f32 %v533, %v555
        %v576 = vmul.f32 %v533, %v559
        %v577 = vmul.f32 %v533, %v563
        %578 = vset.pattern.permute.xlu0 1
        %579 = vperm.xlu0 %578, %v527
        %v580 = vpop.permute.xlu0 %579
        %v582 = vmul.f32 %v580, %v539
        %v583 = vmul.f32 %v580, %v543
        %v584 = vmul.f32 %v580, %v547
        %v585 = vmul.f32 %v580, %v551
        %v586 = vmul.f32 %v580, %v555
        %v587 = vmul.f32 %v580, %v559
        %v588 = vmul.f32 %v580, %v563
        %596 = vrot.lane.b32.xlu0 %v582, 127
        %v597 = vpop.permute.xlu0 %596
        %598 = vrot.lane.b32.xlu0 %v583, 127
        %v599 = vpop.permute.xlu0 %598
        %600 = vrot.lane.b32.xlu0 %v584, 127
        %v601 = vpop.permute.xlu0 %600
        %602 = vrot.lane.b32.xlu0 %v585, 127
        %v603 = vpop.permute.xlu0 %602
        %604 = vrot.lane.b32.xlu0 %v586, 127
        %v605 = vpop.permute.xlu0 %604
        %606 = vrot.lane.b32.xlu0 %v587, 127
        %v607 = vpop.permute.xlu0 %606
        %608 = vrot.lane.b32.xlu0 %v588, 127
        %v609 = vpop.permute.xlu0 %608
        %vm610 = vcmask 1039360
        %v611 = vsel %vm610, %v597, %v599
        %v612 = vsel %vm610, %v599, %v601
        %v613 = vsel %vm610, %v601, %v603
        %v614 = vsel %vm610, %v603, %v605
        %v615 = vsel %vm610, %v605, %v607
        %v616 = vsel %vm610, %v607, %v609
        %v624 = vadd.f32 %v571, %v611
        %v625 = vadd.f32 %v572, %v612
        %v626 = vadd.f32 %v573, %v613
        %v627 = vadd.f32 %v574, %v614
        %v628 = vadd.f32 %v575, %v615
        %v629 = vadd.f32 %v576, %v616
        %v630 = vadd.f32 %v577, %v609
        %631 = vset.pattern.permute.xlu0 2
        %632 = vperm.xlu0 %631, %v527
        %v633 = vpop.permute.xlu0 %632
        %v635 = vmul.f32 %v633, %v539
        %v636 = vmul.f32 %v633, %v543
        %v637 = vmul.f32 %v633, %v547
        %v638 = vmul.f32 %v633, %v551
        %v639 = vmul.f32 %v633, %v555
        %v640 = vmul.f32 %v633, %v559
        %v641 = vmul.f32 %v633, %v563
        %649 = vrot.lane.b32.xlu0 %v635, 126
        %v650 = vpop.permute.xlu0 %649
        %651 = vrot.lane.b32.xlu0 %v636, 126
        %v652 = vpop.permute.xlu0 %651
        %653 = vrot.lane.b32.xlu0 %v637, 126
        %v654 = vpop.permute.xlu0 %653
        %655 = vrot.lane.b32.xlu0 %v638, 126
        %v656 = vpop.permute.xlu0 %655
        %657 = vrot.lane.b32.xlu0 %v639, 126
        %v658 = vpop.permute.xlu0 %657
        %659 = vrot.lane.b32.xlu0 %v640, 126
        %v660 = vpop.permute.xlu0 %659
        %661 = vrot.lane.b32.xlu0 %v641, 126
        %v662 = vpop.permute.xlu0 %661
        %vm663 = vcmask 1031168
        %v664 = vsel %vm663, %v650, %v652
        %v665 = vsel %vm663, %v652, %v654
        %v666 = vsel %vm663, %v654, %v656
        %v667 = vsel %vm663, %v656, %v658
        %v668 = vsel %vm663, %v658, %v660
        %v669 = vsel %vm663, %v660, %v662
        %v677 = vadd.f32 %v624, %v664
        %v678 = vadd.f32 %v625, %v665
        %v679 = vadd.f32 %v626, %v666
        %v680 = vadd.f32 %v627, %v667
        %v681 = vadd.f32 %v628, %v668
        %v682 = vadd.f32 %v629, %v669
        %v683 = vadd.f32 %v630, %v662
        %685 = vset.pattern.permute.xlu0 0
        %686 = vperm.xlu0 %685, %v528
        %v687 = vpop.permute.xlu0 %686
        %v689 = vadd.f32 %v677, %v687
        %v690 = vadd.f32 %v678, %v687
        %v691 = vadd.f32 %v679, %v687
        %v692 = vadd.f32 %v680, %v687
        %v693 = vadd.f32 %v681, %v687
        %v694 = vadd.f32 %v682, %v687
        %v695 = vadd.f32 %v683, %v687
        %vm696 = vcmp.ge.f32.partialorder %v689, 0.0
        %vm697 = vcmp.ge.f32.partialorder %v690, 0.0
        %vm698 = vcmp.ge.f32.partialorder %v691, 0.0
        %vm699 = vcmp.ge.f32.partialorder %v692, 0.0
        %vm700 = vcmp.ge.f32.partialorder %v693, 0.0
        %vm701 = vcmp.ge.f32.partialorder %v694, 0.0
        %vm702 = vcmp.ge.f32.partialorder %v695, 0.0
        %v703 = vmul.f32 %v689, 0.01
        %v704 = vmul.f32 %v690, 0.01
        %v705 = vmul.f32 %v691, 0.01
        %v706 = vmul.f32 %v692, 0.01
        %v707 = vmul.f32 %v693, 0.01
        %v708 = vmul.f32 %v694, 0.01
        %v709 = vmul.f32 %v695, 0.01
        %v710 = vsel %vm696, %v689, %v703
        %v711 = vsel %vm697, %v690, %v704
        %v712 = vsel %vm698, %v691, %v705
        %v713 = vsel %vm699, %v692, %v706
        %v714 = vsel %vm700, %v693, %v707
        %v715 = vsel %vm701, %v694, %v708
        %v716 = vsel %vm702, %v695, %v709
        %v724 = vcombine.low %v710, %v711
        %v725 = vcombine.low %v712, %v713
        %v726 = vcombine.low %v714, %v715
        %727 = vrot.lane.b32.xlu0 %v724, 2
        %v728 = vpop.permute.xlu0 %727
        %729 = vrot.lane.b32.xlu0 %v725, 2
        %v730 = vpop.permute.xlu0 %729
        %731 = vrot.lane.b32.xlu0 %v726, 2
        %v732 = vpop.permute.xlu0 %731
        %733 = vrot.lane.b32.xlu0 %v716, 2
        %v734 = vpop.permute.xlu0 %733
        %v735 = vrot.slane %v728, 4
        %v736 = vrot.slane %v730, 4
        %v737 = vrot.slane %v732, 4
        %vm738 = vcmask 15360
        %v739 = vsel %vm738, %v735, %v728
        %vm740 = vcmask 1043456
        %v741 = vsel %vm740, %v735, %v736
        %v742 = vsel %vm738, %v741, %v730
        %v743 = vsel %vm740, %v736, %v737
        %v744 = vsel %vm738, %v743, %v732
        %v745 = vsel %vm738, %v737, %v734
        %vm750 = vcmask 1043520
        %vm751 = vcmask 1047556
        %vm752 = vmor %vm751, %vm750
        %753 = vst.msk [vmem:[#allocation2] sm:$0xff] %vm752, %v739
        %754 = vst [vmem:[#allocation2 + $0x8] sm:$0xff] %v742
        %755 = vst [vmem:[#allocation2 + $0x10] sm:$0xff] %v744
        %756 = vst.msk [vmem:[#allocation2 + $0x18] sm:$0xf] %vm512, %v745
        %v757 = vld [vmem:[#allocation2] ss:$4 sm:$0x7f]
        %758 = vset.pattern.permute.xlu0 3
        %759 = vperm.xlu0 %758, %v527
        %v760 = vpop.permute.xlu0 %759
        %v763 = vlaneseq
        %v764 = vshrl.u32 %v763, 7
        %v765 = vsub.s32 0, %v764
        %v766 = vrot.slane %v757, %v765
        %v767 = vlaneseq
        %v768 = vshrl.u32 %v767, 7
        %v769 = vsub.s32 1, %v768
        %v770 = vrot.slane %v757, %v769
        %v771 = vlaneseq
        %v772 = vshrl.u32 %v771, 7
        %v773 = vsub.s32 2, %v772
        %v774 = vrot.slane %v757, %v773
        %v775 = vlaneseq
        %v776 = vshrl.u32 %v775, 7
        %v777 = vsub.s32 3, %v776
        %v778 = vrot.slane %v757, %v777
        %v779 = vlaneseq
        %v780 = vshrl.u32 %v779, 7
        %v781 = vsub.s32 4, %v780
        %v782 = vrot.slane %v757, %v781
        %v783 = vlaneseq
        %v784 = vshrl.u32 %v783, 7
        %v785 = vsub.s32 5, %v784
        %v786 = vrot.slane %v757, %v785
        %v787 = vlaneseq
        %v788 = vshrl.u32 %v787, 7
        %v789 = vsub.s32 6, %v788
        %v790 = vrot.slane %v757, %v789
        %v798 = vmul.f32 %v760, %v766
        %v799 = vmul.f32 %v760, %v770
        %v800 = vmul.f32 %v760, %v774
        %v801 = vmul.f32 %v760, %v778
        %v802 = vmul.f32 %v760, %v782
        %v803 = vmul.f32 %v760, %v786
        %v804 = vmul.f32 %v760, %v790
        %805 = vset.pattern.permute.xlu0 4
        %806 = vperm.xlu0 %805, %v527
        %v807 = vpop.permute.xlu0 %806
        %v809 = vmul.f32 %v807, %v766
        %v810 = vmul.f32 %v807, %v770
        %v811 = vmul.f32 %v807, %v774
        %v812 = vmul.f32 %v807, %v778
        %v813 = vmul.f32 %v807, %v782
        %v814 = vmul.f32 %v807, %v786
        %v815 = vmul.f32 %v807, %v790
        %823 = vrot.lane.b32.xlu0 %v809, 127
        %v824 = vpop.permute.xlu0 %823
        %825 = vrot.lane.b32.xlu0 %v810, 127
        %v826 = vpop.permute.xlu0 %825
        %827 = vrot.lane.b32.xlu0 %v811, 127
        %v828 = vpop.permute.xlu0 %827
        %829 = vrot.lane.b32.xlu0 %v812, 127
        %v830 = vpop.permute.xlu0 %829
        %831 = vrot.lane.b32.xlu0 %v813, 127
        %v832 = vpop.permute.xlu0 %831
        %833 = vrot.lane.b32.xlu0 %v814, 127
        %v834 = vpop.permute.xlu0 %833
        %835 = vrot.lane.b32.xlu0 %v815, 127
        %v836 = vpop.permute.xlu0 %835
        %v837 = vsel %vm610, %v824, %v826
        %v838 = vsel %vm610, %v826, %v828
        %v839 = vsel %vm610, %v828, %v830
        %v840 = vsel %vm610, %v830, %v832
        %v841 = vsel %vm610, %v832, %v834
        %v842 = vsel %vm610, %v834, %v836
        %v850 = vadd.f32 %v798, %v837
        %v851 = vadd.f32 %v799, %v838
        %v852 = vadd.f32 %v800, %v839
        %v853 = vadd.f32 %v801, %v840
        %v854 = vadd.f32 %v802, %v841
        %v855 = vadd.f32 %v803, %v842
        %v856 = vadd.f32 %v804, %v836
        %857 = vset.pattern.permute.xlu0 5
        %858 = vperm.xlu0 %857, %v527
        %v859 = vpop.permute.xlu0 %858
        %v861 = vmul.f32 %v859, %v766
        %v862 = vmul.f32 %v859, %v770
        %v863 = vmul.f32 %v859, %v774
        %v864 = vmul.f32 %v859, %v778
        %v865 = vmul.f32 %v859, %v782
        %v866 = vmul.f32 %v859, %v786
        %v867 = vmul.f32 %v859, %v790
        %875 = vrot.lane.b32.xlu0 %v861, 126
        %v876 = vpop.permute.xlu0 %875
        %877 = vrot.lane.b32.xlu0 %v862, 126
        %v878 = vpop.permute.xlu0 %877
        %879 = vrot.lane.b32.xlu0 %v863, 126
        %v880 = vpop.permute.xlu0 %879
        %881 = vrot.lane.b32.xlu0 %v864, 126
        %v882 = vpop.permute.xlu0 %881
        %883 = vrot.lane.b32.xlu0 %v865, 126
        %v884 = vpop.permute.xlu0 %883
        %885 = vrot.lane.b32.xlu0 %v866, 126
        %v886 = vpop.permute.xlu0 %885
        %887 = vrot.lane.b32.xlu0 %v867, 126
        %v888 = vpop.permute.xlu0 %887
        %v889 = vsel %vm663, %v876, %v878
        %v890 = vsel %vm663, %v878, %v880
        %v891 = vsel %vm663, %v880, %v882
        %v892 = vsel %vm663, %v882, %v884
        %v893 = vsel %vm663, %v884, %v886
        %v894 = vsel %vm663, %v886, %v888
        %v902 = vadd.f32 %v850, %v889
        %v903 = vadd.f32 %v851, %v890
        %v904 = vadd.f32 %v852, %v891
        %v905 = vadd.f32 %v853, %v892
        %v906 = vadd.f32 %v854, %v893
        %v907 = vadd.f32 %v855, %v894
        %v908 = vadd.f32 %v856, %v888
        %s909 = scalar_lea.vmem [#allocation2], 1
        %v910 = vld [vmem:[%s909] ss:$4 sm:$0x7f]
        %911 = vset.pattern.permute.xlu0 6
        %912 = vperm.xlu0 %911, %v527
        %v913 = vpop.permute.xlu0 %912
        %v916 = vlaneseq
        %v917 = vshrl.u32 %v916, 7
        %v918 = vsub.s32 0, %v917
        %v919 = vrot.slane %v910, %v918
        %v920 = vlaneseq
        %v921 = vshrl.u32 %v920, 7
        %v922 = vsub.s32 1, %v921
        %v923 = vrot.slane %v910, %v922
        %v924 = vlaneseq
        %v925 = vshrl.u32 %v924, 7
        %v926 = vsub.s32 2, %v925
        %v927 = vrot.slane %v910, %v926
        %v928 = vlaneseq
        %v929 = vshrl.u32 %v928, 7
        %v930 = vsub.s32 3, %v929
        %v931 = vrot.slane %v910, %v930
        %v932 = vlaneseq
        %v933 = vshrl.u32 %v932, 7
        %v934 = vsub.s32 4, %v933
        %v935 = vrot.slane %v910, %v934
        %v936 = vlaneseq
        %v937 = vshrl.u32 %v936, 7
        %v938 = vsub.s32 5, %v937
        %v939 = vrot.slane %v910, %v938
        %v940 = vlaneseq
        %v941 = vshrl.u32 %v940, 7
        %v942 = vsub.s32 6, %v941
        %v943 = vrot.slane %v910, %v942
        %v951 = vmul.f32 %v913, %v919
        %v952 = vmul.f32 %v913, %v923
        %v953 = vmul.f32 %v913, %v927
        %v954 = vmul.f32 %v913, %v931
        %v955 = vmul.f32 %v913, %v935
        %v956 = vmul.f32 %v913, %v939
        %v957 = vmul.f32 %v913, %v943
        %v958 = vadd.f32 %v902, %v951
        %v959 = vadd.f32 %v903, %v952
        %v960 = vadd.f32 %v904, %v953
        %v961 = vadd.f32 %v905, %v954
        %v962 = vadd.f32 %v906, %v955
        %v963 = vadd.f32 %v907, %v956
        %v964 = vadd.f32 %v908, %v957
        %965 = vset.pattern.permute.xlu0 7
        %966 = vperm.xlu0 %965, %v527
        %v967 = vpop.permute.xlu0 %966
        %v969 = vmul.f32 %v967, %v919
        %v970 = vmul.f32 %v967, %v923
        %v971 = vmul.f32 %v967, %v927
        %v972 = vmul.f32 %v967, %v931
        %v973 = vmul.f32 %v967, %v935
        %v974 = vmul.f32 %v967, %v939
        %v975 = vmul.f32 %v967, %v943
        %983 = vrot.lane.b32.xlu0 %v969, 127
        %v984 = vpop.permute.xlu0 %983
        %985 = vrot.lane.b32.xlu0 %v970, 127
        %v986 = vpop.permute.xlu0 %985
        %987 = vrot.lane.b32.xlu0 %v971, 127
        %v988 = vpop.permute.xlu0 %987
        %989 = vrot.lane.b32.xlu0 %v972, 127
        %v990 = vpop.permute.xlu0 %989
        %991 = vrot.lane.b32.xlu0 %v973, 127
        %v992 = vpop.permute.xlu0 %991
        %993 = vrot.lane.b32.xlu0 %v974, 127
        %v994 = vpop.permute.xlu0 %993
        %995 = vrot.lane.b32.xlu0 %v975, 127
        %v996 = vpop.permute.xlu0 %995
        %v997 = vsel %vm610, %v984, %v986
        %v998 = vsel %vm610, %v986, %v988
        %v999 = vsel %vm610, %v988, %v990
        %v1000 = vsel %vm610, %v990, %v992
        %v1001 = vsel %vm610, %v992, %v994
        %v1002 = vsel %vm610, %v994, %v996
        %v1010 = vadd.f32 %v958, %v997
        %v1011 = vadd.f32 %v959, %v998
        %v1012 = vadd.f32 %v960, %v999
        %v1013 = vadd.f32 %v961, %v1000
        %v1014 = vadd.f32 %v962, %v1001
        %v1015 = vadd.f32 %v963, %v1002
        %v1016 = vadd.f32 %v964, %v996
        %1017 = vset.pattern.permute.xlu0 8
        %1018 = vperm.xlu0 %1017, %v527
        %v1019 = vpop.permute.xlu0 %1018
        %v1021 = vmul.f32 %v1019, %v919
        %v1022 = vmul.f32 %v1019, %v923
        %v1023 = vmul.f32 %v1019, %v927
        %v1024 = vmul.f32 %v1019, %v931
        %v1025 = vmul.f32 %v1019, %v935
        %v1026 = vmul.f32 %v1019, %v939
        %v1027 = vmul.f32 %v1019, %v943
        %1035 = vrot.lane.b32.xlu0 %v1021, 126
        %v1036 = vpop.permute.xlu0 %1035
        %1037 = vrot.lane.b32.xlu0 %v1022, 126
        %v1038 = vpop.permute.xlu0 %1037
        %1039 = vrot.lane.b32.xlu0 %v1023, 126
        %v1040 = vpop.permute.xlu0 %1039
        %1041 = vrot.lane.b32.xlu0 %v1024, 126
        %v1042 = vpop.permute.xlu0 %1041
        %1043 = vrot.lane.b32.xlu0 %v1025, 126
        %v1044 = vpop.permute.xlu0 %1043
        %1045 = vrot.lane.b32.xlu0 %v1026, 126
        %v1046 = vpop.permute.xlu0 %1045
        %1047 = vrot.lane.b32.xlu0 %v1027, 126
        %v1048 = vpop.permute.xlu0 %1047
        %v1049 = vsel %vm663, %v1036, %v1038
        %v1050 = vsel %vm663, %v1038, %v1040
        %v1051 = vsel %vm663, %v1040, %v1042
        %v1052 = vsel %vm663, %v1042, %v1044
        %v1053 = vsel %vm663, %v1044, %v1046
        %v1054 = vsel %vm663, %v1046, %v1048
        %v1062 = vadd.f32 %v1010, %v1049
        %v1063 = vadd.f32 %v1011, %v1050
        %v1064 = vadd.f32 %v1012, %v1051
        %v1065 = vadd.f32 %v1013, %v1052
        %v1066 = vadd.f32 %v1014, %v1053
        %v1067 = vadd.f32 %v1015, %v1054
        %v1068 = vadd.f32 %v1016, %v1048
        %s1069 = scalar_lea.vmem [#allocation2], 2
        %v1070 = vld [vmem:[%s1069] ss:$4 sm:$0x7f]
        %1071 = vset.pattern.permute.xlu0 9
        %1072 = vperm.xlu0 %1071, %v527
        %v1073 = vpop.permute.xlu0 %1072
        %v1076 = vlaneseq
        %v1077 = vshrl.u32 %v1076, 7
        %v1078 = vsub.s32 0, %v1077
        %v1079 = vrot.slane %v1070, %v1078
        %v1080 = vlaneseq
        %v1081 = vshrl.u32 %v1080, 7
        %v1082 = vsub.s32 1, %v1081
        %v1083 = vrot.slane %v1070, %v1082
        %v1084 = vlaneseq
        %v1085 = vshrl.u32 %v1084, 7
        %v1086 = vsub.s32 2, %v1085
        %v1087 = vrot.slane %v1070, %v1086
        %v1088 = vlaneseq
        %v1089 = vshrl.u32 %v1088, 7
        %v1090 = vsub.s32 3, %v1089
        %v1091 = vrot.slane %v1070, %v1090
        %v1092 = vlaneseq
        %v1093 = vshrl.u32 %v1092, 7
        %v1094 = vsub.s32 4, %v1093
        %v1095 = vrot.slane %v1070, %v1094
        %v1096 = vlaneseq
        %v1097 = vshrl.u32 %v1096, 7
        %v1098 = vsub.s32 5, %v1097
        %v1099 = vrot.slane %v1070, %v1098
        %v1100 = vlaneseq
        %v1101 = vshrl.u32 %v1100, 7
        %v1102 = vsub.s32 6, %v1101
        %v1103 = vrot.slane %v1070, %v1102
        %v1111 = vmul.f32 %v1073, %v1079
        %v1112 = vmul.f32 %v1073, %v1083
        %v1113 = vmul.f32 %v1073, %v1087
        %v1114 = vmul.f32 %v1073, %v1091
        %v1115 = vmul.f32 %v1073, %v1095
        %v1116 = vmul.f32 %v1073, %v1099
        %v1117 = vmul.f32 %v1073, %v1103
        %v1118 = vadd.f32 %v1062, %v1111
        %v1119 = vadd.f32 %v1063, %v1112
        %v1120 = vadd.f32 %v1064, %v1113
        %v1121 = vadd.f32 %v1065, %v1114
        %v1122 = vadd.f32 %v1066, %v1115
        %v1123 = vadd.f32 %v1067, %v1116
        %v1124 = vadd.f32 %v1068, %v1117
        %1125 = vset.pattern.permute.xlu0 10
        %1126 = vperm.xlu0 %1125, %v527
        %v1127 = vpop.permute.xlu0 %1126
        %v1129 = vmul.f32 %v1127, %v1079
        %v1130 = vmul.f32 %v1127, %v1083
        %v1131 = vmul.f32 %v1127, %v1087
        %v1132 = vmul.f32 %v1127, %v1091
        %v1133 = vmul.f32 %v1127, %v1095
        %v1134 = vmul.f32 %v1127, %v1099
        %v1135 = vmul.f32 %v1127, %v1103
        %1143 = vrot.lane.b32.xlu0 %v1129, 127
        %v1144 = vpop.permute.xlu0 %1143
        %1145 = vrot.lane.b32.xlu0 %v1130, 127
        %v1146 = vpop.permute.xlu0 %1145
        %1147 = vrot.lane.b32.xlu0 %v1131, 127
        %v1148 = vpop.permute.xlu0 %1147
        %1149 = vrot.lane.b32.xlu0 %v1132, 127
        %v1150 = vpop.permute.xlu0 %1149
        %1151 = vrot.lane.b32.xlu0 %v1133, 127
        %v1152 = vpop.permute.xlu0 %1151
        %1153 = vrot.lane.b32.xlu0 %v1134, 127
        %v1154 = vpop.permute.xlu0 %1153
        %1155 = vrot.lane.b32.xlu0 %v1135, 127
        %v1156 = vpop.permute.xlu0 %1155
        %v1157 = vsel %vm610, %v1144, %v1146
        %v1158 = vsel %vm610, %v1146, %v1148
        %v1159 = vsel %vm610, %v1148, %v1150
        %v1160 = vsel %vm610, %v1150, %v1152
        %v1161 = vsel %vm610, %v1152, %v1154
        %v1162 = vsel %vm610, %v1154, %v1156
        %v1170 = vadd.f32 %v1118, %v1157
        %v1171 = vadd.f32 %v1119, %v1158
        %v1172 = vadd.f32 %v1120, %v1159
        %v1173 = vadd.f32 %v1121, %v1160
        %v1174 = vadd.f32 %v1122, %v1161
        %v1175 = vadd.f32 %v1123, %v1162
        %v1176 = vadd.f32 %v1124, %v1156
        %1177 = vset.pattern.permute.xlu0 11
        %1178 = vperm.xlu0 %1177, %v527
        %v1179 = vpop.permute.xlu0 %1178
        %v1181 = vmul.f32 %v1179, %v1079
        %v1182 = vmul.f32 %v1179, %v1083
        %v1183 = vmul.f32 %v1179, %v1087
        %v1184 = vmul.f32 %v1179, %v1091
        %v1185 = vmul.f32 %v1179, %v1095
        %v1186 = vmul.f32 %v1179, %v1099
        %v1187 = vmul.f32 %v1179, %v1103
        %1195 = vrot.lane.b32.xlu0 %v1181, 126
        %v1196 = vpop.permute.xlu0 %1195
        %1197 = vrot.lane.b32.xlu0 %v1182, 126
        %v1198 = vpop.permute.xlu0 %1197
        %1199 = vrot.lane.b32.xlu0 %v1183, 126
        %v1200 = vpop.permute.xlu0 %1199
        %1201 = vrot.lane.b32.xlu0 %v1184, 126
        %v1202 = vpop.permute.xlu0 %1201
        %1203 = vrot.lane.b32.xlu0 %v1185, 126
        %v1204 = vpop.permute.xlu0 %1203
        %1205 = vrot.lane.b32.xlu0 %v1186, 126
        %v1206 = vpop.permute.xlu0 %1205
        %1207 = vrot.lane.b32.xlu0 %v1187, 126
        %v1208 = vpop.permute.xlu0 %1207
        %v1209 = vsel %vm663, %v1196, %v1198
        %v1210 = vsel %vm663, %v1198, %v1200
        %v1211 = vsel %vm663, %v1200, %v1202
        %v1212 = vsel %vm663, %v1202, %v1204
        %v1213 = vsel %vm663, %v1204, %v1206
        %v1214 = vsel %vm663, %v1206, %v1208
        %v1222 = vadd.f32 %v1170, %v1209
        %v1223 = vadd.f32 %v1171, %v1210
        %v1224 = vadd.f32 %v1172, %v1211
        %v1225 = vadd.f32 %v1173, %v1212
        %v1226 = vadd.f32 %v1174, %v1213
        %v1227 = vadd.f32 %v1175, %v1214
        %v1228 = vadd.f32 %v1176, %v1208
        %s1229 = scalar_lea.vmem [#allocation2], 3
        %v1230 = vld [vmem:[%s1229] ss:$4 sm:$0x7f]
        %1231 = vset.pattern.permute.xlu0 12
        %1232 = vperm.xlu0 %1231, %v527
        %v1233 = vpop.permute.xlu0 %1232
        %v1236 = vlaneseq
        %v1237 = vshrl.u32 %v1236, 7
        %v1238 = vsub.s32 0, %v1237
        %v1239 = vrot.slane %v1230, %v1238
        %v1240 = vlaneseq
        %v1241 = vshrl.u32 %v1240, 7
        %v1242 = vsub.s32 1, %v1241
        %v1243 = vrot.slane %v1230, %v1242
        %v1244 = vlaneseq
        %v1245 = vshrl.u32 %v1244, 7
        %v1246 = vsub.s32 2, %v1245
        %v1247 = vrot.slane %v1230, %v1246
        %v1248 = vlaneseq
        %v1249 = vshrl.u32 %v1248, 7
        %v1250 = vsub.s32 3, %v1249
        %v1251 = vrot.slane %v1230, %v1250
        %v1252 = vlaneseq
        %v1253 = vshrl.u32 %v1252, 7
        %v1254 = vsub.s32 4, %v1253
        %v1255 = vrot.slane %v1230, %v1254
        %v1256 = vlaneseq
        %v1257 = vshrl.u32 %v1256, 7
        %v1258 = vsub.s32 5, %v1257
        %v1259 = vrot.slane %v1230, %v1258
        %v1260 = vlaneseq
        %v1261 = vshrl.u32 %v1260, 7
        %v1262 = vsub.s32 6, %v1261
        %v1263 = vrot.slane %v1230, %v1262
        %v1271 = vmul.f32 %v1233, %v1239
        %v1272 = vmul.f32 %v1233, %v1243
        %v1273 = vmul.f32 %v1233, %v1247
        %v1274 = vmul.f32 %v1233, %v1251
        %v1275 = vmul.f32 %v1233, %v1255
        %v1276 = vmul.f32 %v1233, %v1259
        %v1277 = vmul.f32 %v1233, %v1263
        %v1278 = vadd.f32 %v1222, %v1271
        %v1279 = vadd.f32 %v1223, %v1272
        %v1280 = vadd.f32 %v1224, %v1273
        %v1281 = vadd.f32 %v1225, %v1274
        %v1282 = vadd.f32 %v1226, %v1275
        %v1283 = vadd.f32 %v1227, %v1276
        %v1284 = vadd.f32 %v1228, %v1277
        %1285 = vset.pattern.permute.xlu0 13
        %1286 = vperm.xlu0 %1285, %v527
        %v1287 = vpop.permute.xlu0 %1286
        %v1289 = vmul.f32 %v1287, %v1239
        %v1290 = vmul.f32 %v1287, %v1243
        %v1291 = vmul.f32 %v1287, %v1247
        %v1292 = vmul.f32 %v1287, %v1251
        %v1293 = vmul.f32 %v1287, %v1255
        %v1294 = vmul.f32 %v1287, %v1259
        %v1295 = vmul.f32 %v1287, %v1263
        %1303 = vrot.lane.b32.xlu0 %v1289, 127
        %v1304 = vpop.permute.xlu0 %1303
        %1305 = vrot.lane.b32.xlu0 %v1290, 127
        %v1306 = vpop.permute.xlu0 %1305
        %1307 = vrot.lane.b32.xlu0 %v1291, 127
        %v1308 = vpop.permute.xlu0 %1307
        %1309 = vrot.lane.b32.xlu0 %v1292, 127
        %v1310 = vpop.permute.xlu0 %1309
        %1311 = vrot.lane.b32.xlu0 %v1293, 127
        %v1312 = vpop.permute.xlu0 %1311
        %1313 = vrot.lane.b32.xlu0 %v1294, 127
        %v1314 = vpop.permute.xlu0 %1313
        %1315 = vrot.lane.b32.xlu0 %v1295, 127
        %v1316 = vpop.permute.xlu0 %1315
        %v1317 = vsel %vm610, %v1304, %v1306
        %v1318 = vsel %vm610, %v1306, %v1308
        %v1319 = vsel %vm610, %v1308, %v1310
        %v1320 = vsel %vm610, %v1310, %v1312
        %v1321 = vsel %vm610, %v1312, %v1314
        %v1322 = vsel %vm610, %v1314, %v1316
        %v1330 = vadd.f32 %v1278, %v1317
        %v1331 = vadd.f32 %v1279, %v1318
        %v1332 = vadd.f32 %v1280, %v1319
        %v1333 = vadd.f32 %v1281, %v1320
        %v1334 = vadd.f32 %v1282, %v1321
        %v1335 = vadd.f32 %v1283, %v1322
        %v1336 = vadd.f32 %v1284, %v1316
        %1337 = vset.pattern.permute.xlu0 14
        %1338 = vperm.xlu0 %1337, %v527
        %v1339 = vpop.permute.xlu0 %1338
        %v1341 = vmul.f32 %v1339, %v1239
        %v1342 = vmul.f32 %v1339, %v1243
        %v1343 = vmul.f32 %v1339, %v1247
        %v1344 = vmul.f32 %v1339, %v1251
        %v1345 = vmul.f32 %v1339, %v1255
        %v1346 = vmul.f32 %v1339, %v1259
        %v1347 = vmul.f32 %v1339, %v1263
        %1355 = vrot.lane.b32.xlu0 %v1341, 126
        %v1356 = vpop.permute.xlu0 %1355
        %1357 = vrot.lane.b32.xlu0 %v1342, 126
        %v1358 = vpop.permute.xlu0 %1357
        %1359 = vrot.lane.b32.xlu0 %v1343, 126
        %v1360 = vpop.permute.xlu0 %1359
        %1361 = vrot.lane.b32.xlu0 %v1344, 126
        %v1362 = vpop.permute.xlu0 %1361
        %1363 = vrot.lane.b32.xlu0 %v1345, 126
        %v1364 = vpop.permute.xlu0 %1363
        %1365 = vrot.lane.b32.xlu0 %v1346, 126
        %v1366 = vpop.permute.xlu0 %1365
        %1367 = vrot.lane.b32.xlu0 %v1347, 126
        %v1368 = vpop.permute.xlu0 %1367
        %v1369 = vsel %vm663, %v1356, %v1358
        %v1370 = vsel %vm663, %v1358, %v1360
        %v1371 = vsel %vm663, %v1360, %v1362
        %v1372 = vsel %vm663, %v1362, %v1364
        %v1373 = vsel %vm663, %v1364, %v1366
        %v1374 = vsel %vm663, %v1366, %v1368
        %v1382 = vadd.f32 %v1330, %v1369
        %v1383 = vadd.f32 %v1331, %v1370
        %v1384 = vadd.f32 %v1332, %v1371
        %v1385 = vadd.f32 %v1333, %v1372
        %v1386 = vadd.f32 %v1334, %v1373
        %v1387 = vadd.f32 %v1335, %v1374
        %v1388 = vadd.f32 %v1336, %v1368
        %1389 = vset.pattern.permute.xlu0 1
        %1390 = vperm.xlu0 %1389, %v528
        %v1391 = vpop.permute.xlu0 %1390
        %v1393 = vadd.f32 %v1382, %v1391
        %v1394 = vadd.f32 %v1383, %v1391
        %v1395 = vadd.f32 %v1384, %v1391
        %v1396 = vadd.f32 %v1385, %v1391
        %v1397 = vadd.f32 %v1386, %v1391
        %v1398 = vadd.f32 %v1387, %v1391
        %v1399 = vadd.f32 %v1388, %v1391
        %vm1400 = vcmp.ge.f32.partialorder %v1393, 0.0
        %vm1401 = vcmp.ge.f32.partialorder %v1394, 0.0
        %vm1402 = vcmp.ge.f32.partialorder %v1395, 0.0
        %vm1403 = vcmp.ge.f32.partialorder %v1396, 0.0
        %vm1404 = vcmp.ge.f32.partialorder %v1397, 0.0
        %vm1405 = vcmp.ge.f32.partialorder %v1398, 0.0
        %vm1406 = vcmp.ge.f32.partialorder %v1399, 0.0
        %v1407 = vmul.f32 %v1393, 0.01
        %v1408 = vmul.f32 %v1394, 0.01
        %v1409 = vmul.f32 %v1395, 0.01
        %v1410 = vmul.f32 %v1396, 0.01
        %v1411 = vmul.f32 %v1397, 0.01
        %v1412 = vmul.f32 %v1398, 0.01
        %v1413 = vmul.f32 %v1399, 0.01
        %v1414 = vsel %vm1400, %v1393, %v1407
        %v1415 = vsel %vm1401, %v1394, %v1408
        %v1416 = vsel %vm1402, %v1395, %v1409
        %v1417 = vsel %vm1403, %v1396, %v1410
        %v1418 = vsel %vm1404, %v1397, %v1411
        %v1419 = vsel %vm1405, %v1398, %v1412
        %v1420 = vsel %vm1406, %v1399, %v1413
        %v1428 = vcombine.low %v1414, %v1415
        %v1429 = vcombine.low %v1416, %v1417
        %v1430 = vcombine.low %v1418, %v1419
        %1431 = vrot.lane.b32.xlu0 %v1428, 2
        %v1432 = vpop.permute.xlu0 %1431
        %1433 = vrot.lane.b32.xlu0 %v1429, 2
        %v1434 = vpop.permute.xlu0 %1433
        %1435 = vrot.lane.b32.xlu0 %v1430, 2
        %v1436 = vpop.permute.xlu0 %1435
        %1437 = vrot.lane.b32.xlu0 %v1420, 2
        %v1438 = vpop.permute.xlu0 %1437
        %v1439 = vrot.slane %v1432, 4
        %v1440 = vrot.slane %v1434, 4
        %v1441 = vrot.slane %v1436, 4
        %v1442 = vsel %vm738, %v1439, %v1432
        %v1443 = vsel %vm740, %v1439, %v1440
        %v1444 = vsel %vm738, %v1443, %v1434
        %v1445 = vsel %vm740, %v1440, %v1441
        %v1446 = vsel %vm738, %v1445, %v1436
        %v1447 = vsel %vm738, %v1441, %v1438
        %1452 = vst.msk [vmem:[#allocation2] sm:$0xff] %vm752, %v1442
        %1453 = vst [vmem:[#allocation2 + $0x8] sm:$0xff] %v1444
        %1454 = vst [vmem:[#allocation2 + $0x10] sm:$0xff] %v1446
        %1455 = vst.msk [vmem:[#allocation2 + $0x18] sm:$0xf] %vm512, %v1447
        %v1456 = vld [vmem:[#allocation2] ss:$4 sm:$0x7f]
        %1457 = vset.pattern.permute.xlu0 15
        %1458 = vperm.xlu0 %1457, %v527
        %v1459 = vpop.permute.xlu0 %1458
        %v1462 = vlaneseq
        %v1463 = vshrl.u32 %v1462, 7
        %v1464 = vsub.s32 0, %v1463
        %v1465 = vrot.slane %v1456, %v1464
        %v1466 = vlaneseq
        %v1467 = vshrl.u32 %v1466, 7
        %v1468 = vsub.s32 1, %v1467
        %v1469 = vrot.slane %v1456, %v1468
        %v1470 = vlaneseq
        %v1471 = vshrl.u32 %v1470, 7
        %v1472 = vsub.s32 2, %v1471
        %v1473 = vrot.slane %v1456, %v1472
        %v1474 = vlaneseq
        %v1475 = vshrl.u32 %v1474, 7
        %v1476 = vsub.s32 3, %v1475
        %v1477 = vrot.slane %v1456, %v1476
        %v1478 = vlaneseq
        %v1479 = vshrl.u32 %v1478, 7
        %v1480 = vsub.s32 4, %v1479
        %v1481 = vrot.slane %v1456, %v1480
        %v1482 = vlaneseq
        %v1483 = vshrl.u32 %v1482, 7
        %v1484 = vsub.s32 5, %v1483
        %v1485 = vrot.slane %v1456, %v1484
        %v1486 = vlaneseq
        %v1487 = vshrl.u32 %v1486, 7
        %v1488 = vsub.s32 6, %v1487
        %v1489 = vrot.slane %v1456, %v1488
        %v1497 = vmul.f32 %v1459, %v1465
        %v1498 = vmul.f32 %v1459, %v1469
        %v1499 = vmul.f32 %v1459, %v1473
        %v1500 = vmul.f32 %v1459, %v1477
        %v1501 = vmul.f32 %v1459, %v1481
        %v1502 = vmul.f32 %v1459, %v1485
        %v1503 = vmul.f32 %v1459, %v1489
        %1504 = vset.pattern.permute.xlu0 16
        %1505 = vperm.xlu0 %1504, %v527
        %v1506 = vpop.permute.xlu0 %1505
        %v1508 = vmul.f32 %v1506, %v1465
        %v1509 = vmul.f32 %v1506, %v1469
        %v1510 = vmul.f32 %v1506, %v1473
        %v1511 = vmul.f32 %v1506, %v1477
        %v1512 = vmul.f32 %v1506, %v1481
        %v1513 = vmul.f32 %v1506, %v1485
        %v1514 = vmul.f32 %v1506, %v1489
        %1522 = vrot.lane.b32.xlu0 %v1508, 126
        %v1523 = vpop.permute.xlu0 %1522
        %1524 = vrot.lane.b32.xlu0 %v1509, 126
        %v1525 = vpop.permute.xlu0 %1524
        %1526 = vrot.lane.b32.xlu0 %v1510, 126
        %v1527 = vpop.permute.xlu0 %1526
        %1528 = vrot.lane.b32.xlu0 %v1511, 126
        %v1529 = vpop.permute.xlu0 %1528
        %1530 = vrot.lane.b32.xlu0 %v1512, 126
        %v1531 = vpop.permute.xlu0 %1530
        %1532 = vrot.lane.b32.xlu0 %v1513, 126
        %v1533 = vpop.permute.xlu0 %1532
        %1534 = vrot.lane.b32.xlu0 %v1514, 126
        %v1535 = vpop.permute.xlu0 %1534
        %v1536 = vsel %vm663, %v1523, %v1525
        %v1537 = vsel %vm663, %v1525, %v1527
        %v1538 = vsel %vm663, %v1527, %v1529
        %v1539 = vsel %vm663, %v1529, %v1531
        %v1540 = vsel %vm663, %v1531, %v1533
        %v1541 = vsel %vm663, %v1533, %v1535
        %v1549 = vadd.f32 %v1497, %v1536
        %v1550 = vadd.f32 %v1498, %v1537
        %v1551 = vadd.f32 %v1499, %v1538
        %v1552 = vadd.f32 %v1500, %v1539
        %v1553 = vadd.f32 %v1501, %v1540
        %v1554 = vadd.f32 %v1502, %v1541
        %v1555 = vadd.f32 %v1503, %v1535
        %1556 = vset.pattern.permute.xlu0 17
        %1557 = vperm.xlu0 %1556, %v527
        %v1558 = vpop.permute.xlu0 %1557
        %v1560 = vmul.f32 %v1558, %v1465
        %v1561 = vmul.f32 %v1558, %v1469
        %v1562 = vmul.f32 %v1558, %v1473
        %v1563 = vmul.f32 %v1558, %v1477
        %v1564 = vmul.f32 %v1558, %v1481
        %v1565 = vmul.f32 %v1558, %v1485
        %v1566 = vmul.f32 %v1558, %v1489
        %1574 = vrot.lane.b32.xlu0 %v1560, 124
        %v1575 = vpop.permute.xlu0 %1574
        %1576 = vrot.lane.b32.xlu0 %v1561, 124
        %v1577 = vpop.permute.xlu0 %1576
        %1578 = vrot.lane.b32.xlu0 %v1562, 124
        %v1579 = vpop.permute.xlu0 %1578
        %1580 = vrot.lane.b32.xlu0 %v1563, 124
        %v1581 = vpop.permute.xlu0 %1580
        %1582 = vrot.lane.b32.xlu0 %v1564, 124
        %v1583 = vpop.permute.xlu0 %1582
        %1584 = vrot.lane.b32.xlu0 %v1565, 124
        %v1585 = vpop.permute.xlu0 %1584
        %1586 = vrot.lane.b32.xlu0 %v1566, 124
        %v1587 = vpop.permute.xlu0 %1586
        %vm1588 = vcmask 1014784
        %v1589 = vsel %vm1588, %v1575, %v1577
        %v1590 = vsel %vm1588, %v1577, %v1579
        %v1591 = vsel %vm1588, %v1579, %v1581
        %v1592 = vsel %vm1588, %v1581, %v1583
        %v1593 = vsel %vm1588, %v1583, %v1585
        %v1594 = vsel %vm1588, %v1585, %v1587
        %v1602 = vadd.f32 %v1549, %v1589
        %v1603 = vadd.f32 %v1550, %v1590
        %v1604 = vadd.f32 %v1551, %v1591
        %v1605 = vadd.f32 %v1552, %v1592
        %v1606 = vadd.f32 %v1553, %v1593
        %v1607 = vadd.f32 %v1554, %v1594
        %v1608 = vadd.f32 %v1555, %v1587
        %v1609 = vld [vmem:[%s909] ss:$4 sm:$0x7f]
        %1610 = vset.pattern.permute.xlu0 18
        %1611 = vperm.xlu0 %1610, %v527
        %v1612 = vpop.permute.xlu0 %1611
        %v1615 = vlaneseq
        %v1616 = vshrl.u32 %v1615, 7
        %v1617 = vsub.s32 0, %v1616
        %v1618 = vrot.slane %v1609, %v1617
        %v1619 = vlaneseq
        %v1620 = vshrl.u32 %v1619, 7
        %v1621 = vsub.s32 1, %v1620
        %v1622 = vrot.slane %v1609, %v1621
        %v1623 = vlaneseq
        %v1624 = vshrl.u32 %v1623, 7
        %v1625 = vsub.s32 2, %v1624
        %v1626 = vrot.slane %v1609, %v1625
        %v1627 = vlaneseq
        %v1628 = vshrl.u32 %v1627, 7
        %v1629 = vsub.s32 3, %v1628
        %v1630 = vrot.slane %v1609, %v1629
        %v1631 = vlaneseq
        %v1632 = vshrl.u32 %v1631, 7
        %v1633 = vsub.s32 4, %v1632
        %v1634 = vrot.slane %v1609, %v1633
        %v1635 = vlaneseq
        %v1636 = vshrl.u32 %v1635, 7
        %v1637 = vsub.s32 5, %v1636
        %v1638 = vrot.slane %v1609, %v1637
        %v1639 = vlaneseq
        %v1640 = vshrl.u32 %v1639, 7
        %v1641 = vsub.s32 6, %v1640
        %v1642 = vrot.slane %v1609, %v1641
        %v1650 = vmul.f32 %v1612, %v1618
        %v1651 = vmul.f32 %v1612, %v1622
        %v1652 = vmul.f32 %v1612, %v1626
        %v1653 = vmul.f32 %v1612, %v1630
        %v1654 = vmul.f32 %v1612, %v1634
        %v1655 = vmul.f32 %v1612, %v1638
        %v1656 = vmul.f32 %v1612, %v1642
        %v1657 = vadd.f32 %v1602, %v1650
        %v1658 = vadd.f32 %v1603, %v1651
        %v1659 = vadd.f32 %v1604, %v1652
        %v1660 = vadd.f32 %v1605, %v1653
        %v1661 = vadd.f32 %v1606, %v1654
        %v1662 = vadd.f32 %v1607, %v1655
        %v1663 = vadd.f32 %v1608, %v1656
        %1664 = vset.pattern.permute.xlu0 19
        %1665 = vperm.xlu0 %1664, %v527
        %v1666 = vpop.permute.xlu0 %1665
        %v1668 = vmul.f32 %v1666, %v1618
        %v1669 = vmul.f32 %v1666, %v1622
        %v1670 = vmul.f32 %v1666, %v1626
        %v1671 = vmul.f32 %v1666, %v1630
        %v1672 = vmul.f32 %v1666, %v1634
        %v1673 = vmul.f32 %v1666, %v1638
        %v1674 = vmul.f32 %v1666, %v1642
        %1682 = vrot.lane.b32.xlu0 %v1668, 126
        %v1683 = vpop.permute.xlu0 %1682
        %1684 = vrot.lane.b32.xlu0 %v1669, 126
        %v1685 = vpop.permute.xlu0 %1684
        %1686 = vrot.lane.b32.xlu0 %v1670, 126
        %v1687 = vpop.permute.xlu0 %1686
        %1688 = vrot.lane.b32.xlu0 %v1671, 126
        %v1689 = vpop.permute.xlu0 %1688
        %1690 = vrot.lane.b32.xlu0 %v1672, 126
        %v1691 = vpop.permute.xlu0 %1690
        %1692 = vrot.lane.b32.xlu0 %v1673, 126
        %v1693 = vpop.permute.xlu0 %1692
        %1694 = vrot.lane.b32.xlu0 %v1674, 126
        %v1695 = vpop.permute.xlu0 %1694
        %v1696 = vsel %vm663, %v1683, %v1685
        %v1697 = vsel %vm663, %v1685, %v1687
        %v1698 = vsel %vm663, %v1687, %v1689
        %v1699 = vsel %vm663, %v1689, %v1691
        %v1700 = vsel %vm663, %v1691, %v1693
        %v1701 = vsel %vm663, %v1693, %v1695
        %v1709 = vadd.f32 %v1657, %v1696
        %v1710 = vadd.f32 %v1658, %v1697
        %v1711 = vadd.f32 %v1659, %v1698
        %v1712 = vadd.f32 %v1660, %v1699
        %v1713 = vadd.f32 %v1661, %v1700
        %v1714 = vadd.f32 %v1662, %v1701
        %v1715 = vadd.f32 %v1663, %v1695
        %1716 = vset.pattern.permute.xlu0 20
        %1717 = vperm.xlu0 %1716, %v527
        %v1718 = vpop.permute.xlu0 %1717
        %v1720 = vmul.f32 %v1718, %v1618
        %v1721 = vmul.f32 %v1718, %v1622
        %v1722 = vmul.f32 %v1718, %v1626
        %v1723 = vmul.f32 %v1718, %v1630
        %v1724 = vmul.f32 %v1718, %v1634
        %v1725 = vmul.f32 %v1718, %v1638
        %v1726 = vmul.f32 %v1718, %v1642
        %1734 = vrot.lane.b32.xlu0 %v1720, 124
        %v1735 = vpop.permute.xlu0 %1734
        %1736 = vrot.lane.b32.xlu0 %v1721, 124
        %v1737 = vpop.permute.xlu0 %1736
        %1738 = vrot.lane.b32.xlu0 %v1722, 124
        %v1739 = vpop.permute.xlu0 %1738
        %1740 = vrot.lane.b32.xlu0 %v1723, 124
        %v1741 = vpop.permute.xlu0 %1740
        %1742 = vrot.lane.b32.xlu0 %v1724, 124
        %v1743 = vpop.permute.xlu0 %1742
        %1744 = vrot.lane.b32.xlu0 %v1725, 124
        %v1745 = vpop.permute.xlu0 %1744
        %1746 = vrot.lane.b32.xlu0 %v1726, 124
        %v1747 = vpop.permute.xlu0 %1746
        %v1748 = vsel %vm1588, %v1735, %v1737
        %v1749 = vsel %vm1588, %v1737, %v1739
        %v1750 = vsel %vm1588, %v1739, %v1741
        %v1751 = vsel %vm1588, %v1741, %v1743
        %v1752 = vsel %vm1588, %v1743, %v1745
        %v1753 = vsel %vm1588, %v1745, %v1747
        %v1761 = vadd.f32 %v1709, %v1748
        %v1762 = vadd.f32 %v1710, %v1749
        %v1763 = vadd.f32 %v1711, %v1750
        %v1764 = vadd.f32 %v1712, %v1751
        %v1765 = vadd.f32 %v1713, %v1752
        %v1766 = vadd.f32 %v1714, %v1753
        %v1767 = vadd.f32 %v1715, %v1747
        %v1768 = vld [vmem:[%s1069] ss:$4 sm:$0x7f]
        %1769 = vset.pattern.permute.xlu0 21
        %1770 = vperm.xlu0 %1769, %v527
        %v1771 = vpop.permute.xlu0 %1770
        %v1774 = vlaneseq
        %v1775 = vshrl.u32 %v1774, 7
        %v1776 = vsub.s32 0, %v1775
        %v1777 = vrot.slane %v1768, %v1776
        %v1778 = vlaneseq
        %v1779 = vshrl.u32 %v1778, 7
        %v1780 = vsub.s32 1, %v1779
        %v1781 = vrot.slane %v1768, %v1780
        %v1782 = vlaneseq
        %v1783 = vshrl.u32 %v1782, 7
        %v1784 = vsub.s32 2, %v1783
        %v1785 = vrot.slane %v1768, %v1784
        %v1786 = vlaneseq
        %v1787 = vshrl.u32 %v1786, 7
        %v1788 = vsub.s32 3, %v1787
        %v1789 = vrot.slane %v1768, %v1788
        %v1790 = vlaneseq
        %v1791 = vshrl.u32 %v1790, 7
        %v1792 = vsub.s32 4, %v1791
        %v1793 = vrot.slane %v1768, %v1792
        %v1794 = vlaneseq
        %v1795 = vshrl.u32 %v1794, 7
        %v1796 = vsub.s32 5, %v1795
        %v1797 = vrot.slane %v1768, %v1796
        %v1798 = vlaneseq
        %v1799 = vshrl.u32 %v1798, 7
        %v1800 = vsub.s32 6, %v1799
        %v1801 = vrot.slane %v1768, %v1800
        %v1809 = vmul.f32 %v1771, %v1777
        %v1810 = vmul.f32 %v1771, %v1781
        %v1811 = vmul.f32 %v1771, %v1785
        %v1812 = vmul.f32 %v1771, %v1789
        %v1813 = vmul.f32 %v1771, %v1793
        %v1814 = vmul.f32 %v1771, %v1797
        %v1815 = vmul.f32 %v1771, %v1801
        %v1816 = vadd.f32 %v1761, %v1809
        %v1817 = vadd.f32 %v1762, %v1810
        %v1818 = vadd.f32 %v1763, %v1811
        %v1819 = vadd.f32 %v1764, %v1812
        %v1820 = vadd.f32 %v1765, %v1813
        %v1821 = vadd.f32 %v1766, %v1814
        %v1822 = vadd.f32 %v1767, %v1815
        %1823 = vset.pattern.permute.xlu0 22
        %1824 = vperm.xlu0 %1823, %v527
        %v1825 = vpop.permute.xlu0 %1824
        %v1827 = vmul.f32 %v1825, %v1777
        %v1828 = vmul.f32 %v1825, %v1781
        %v1829 = vmul.f32 %v1825, %v1785
        %v1830 = vmul.f32 %v1825, %v1789
        %v1831 = vmul.f32 %v1825, %v1793
        %v1832 = vmul.f32 %v1825, %v1797
        %v1833 = vmul.f32 %v1825, %v1801
        %1841 = vrot.lane.b32.xlu0 %v1827, 126
        %v1842 = vpop.permute.xlu0 %1841
        %1843 = vrot.lane.b32.xlu0 %v1828, 126
        %v1844 = vpop.permute.xlu0 %1843
        %1845 = vrot.lane.b32.xlu0 %v1829, 126
        %v1846 = vpop.permute.xlu0 %1845
        %1847 = vrot.lane.b32.xlu0 %v1830, 126
        %v1848 = vpop.permute.xlu0 %1847
        %1849 = vrot.lane.b32.xlu0 %v1831, 126
        %v1850 = vpop.permute.xlu0 %1849
        %1851 = vrot.lane.b32.xlu0 %v1832, 126
        %v1852 = vpop.permute.xlu0 %1851
        %1853 = vrot.lane.b32.xlu0 %v1833, 126
        %v1854 = vpop.permute.xlu0 %1853
        %v1855 = vsel %vm663, %v1842, %v1844
        %v1856 = vsel %vm663, %v1844, %v1846
        %v1857 = vsel %vm663, %v1846, %v1848
        %v1858 = vsel %vm663, %v1848, %v1850
        %v1859 = vsel %vm663, %v1850, %v1852
        %v1860 = vsel %vm663, %v1852, %v1854
        %v1868 = vadd.f32 %v1816, %v1855
        %v1869 = vadd.f32 %v1817, %v1856
        %v1870 = vadd.f32 %v1818, %v1857
        %v1871 = vadd.f32 %v1819, %v1858
        %v1872 = vadd.f32 %v1820, %v1859
        %v1873 = vadd.f32 %v1821, %v1860
        %v1874 = vadd.f32 %v1822, %v1854
        %1875 = vset.pattern.permute.xlu0 23
        %1876 = vperm.xlu0 %1875, %v527
        %v1877 = vpop.permute.xlu0 %1876
        %v1879 = vmul.f32 %v1877, %v1777
        %v1880 = vmul.f32 %v1877, %v1781
        %v1881 = vmul.f32 %v1877, %v1785
        %v1882 = vmul.f32 %v1877, %v1789
        %v1883 = vmul.f32 %v1877, %v1793
        %v1884 = vmul.f32 %v1877, %v1797
        %v1885 = vmul.f32 %v1877, %v1801
        %1893 = vrot.lane.b32.xlu0 %v1879, 124
        %v1894 = vpop.permute.xlu0 %1893
        %1895 = vrot.lane.b32.xlu0 %v1880, 124
        %v1896 = vpop.permute.xlu0 %1895
        %1897 = vrot.lane.b32.xlu0 %v1881, 124
        %v1898 = vpop.permute.xlu0 %1897
        %1899 = vrot.lane.b32.xlu0 %v1882, 124
        %v1900 = vpop.permute.xlu0 %1899
        %1901 = vrot.lane.b32.xlu0 %v1883, 124
        %v1902 = vpop.permute.xlu0 %1901
        %1903 = vrot.lane.b32.xlu0 %v1884, 124
        %v1904 = vpop.permute.xlu0 %1903
        %1905 = vrot.lane.b32.xlu0 %v1885, 124
        %v1906 = vpop.permute.xlu0 %1905
        %v1907 = vsel %vm1588, %v1894, %v1896
        %v1908 = vsel %vm1588, %v1896, %v1898
        %v1909 = vsel %vm1588, %v1898, %v1900
        %v1910 = vsel %vm1588, %v1900, %v1902
        %v1911 = vsel %vm1588, %v1902, %v1904
        %v1912 = vsel %vm1588, %v1904, %v1906
        %v1920 = vadd.f32 %v1868, %v1907
        %v1921 = vadd.f32 %v1869, %v1908
        %v1922 = vadd.f32 %v1870, %v1909
        %v1923 = vadd.f32 %v1871, %v1910
        %v1924 = vadd.f32 %v1872, %v1911
        %v1925 = vadd.f32 %v1873, %v1912
        %v1926 = vadd.f32 %v1874, %v1906
        %v1927 = vld [vmem:[%s1229] ss:$4 sm:$0x7f]
        %1928 = vset.pattern.permute.xlu0 24
        %1929 = vperm.xlu0 %1928, %v527
        %v1930 = vpop.permute.xlu0 %1929
        %v1933 = vlaneseq
        %v1934 = vshrl.u32 %v1933, 7
        %v1935 = vsub.s32 0, %v1934
        %v1936 = vrot.slane %v1927, %v1935
        %v1937 = vlaneseq
        %v1938 = vshrl.u32 %v1937, 7
        %v1939 = vsub.s32 1, %v1938
        %v1940 = vrot.slane %v1927, %v1939
        %v1941 = vlaneseq
        %v1942 = vshrl.u32 %v1941, 7
        %v1943 = vsub.s32 2, %v1942
        %v1944 = vrot.slane %v1927, %v1943
        %v1945 = vlaneseq
        %v1946 = vshrl.u32 %v1945, 7
        %v1947 = vsub.s32 3, %v1946
        %v1948 = vrot.slane %v1927, %v1947
        %v1949 = vlaneseq
        %v1950 = vshrl.u32 %v1949, 7
        %v1951 = vsub.s32 4, %v1950
        %v1952 = vrot.slane %v1927, %v1951
        %v1953 = vlaneseq
        %v1954 = vshrl.u32 %v1953, 7
        %v1955 = vsub.s32 5, %v1954
        %v1956 = vrot.slane %v1927, %v1955
        %v1957 = vlaneseq
        %v1958 = vshrl.u32 %v1957, 7
        %v1959 = vsub.s32 6, %v1958
        %v1960 = vrot.slane %v1927, %v1959
        %v1968 = vmul.f32 %v1930, %v1936
        %v1969 = vmul.f32 %v1930, %v1940
        %v1970 = vmul.f32 %v1930, %v1944
        %v1971 = vmul.f32 %v1930, %v1948
        %v1972 = vmul.f32 %v1930, %v1952
        %v1973 = vmul.f32 %v1930, %v1956
        %v1974 = vmul.f32 %v1930, %v1960
        %v1975 = vadd.f32 %v1920, %v1968
        %v1976 = vadd.f32 %v1921, %v1969
        %v1977 = vadd.f32 %v1922, %v1970
        %v1978 = vadd.f32 %v1923, %v1971
        %v1979 = vadd.f32 %v1924, %v1972
        %v1980 = vadd.f32 %v1925, %v1973
        %v1981 = vadd.f32 %v1926, %v1974
        %1982 = vset.pattern.permute.xlu0 25
        %1983 = vperm.xlu0 %1982, %v527
        %v1984 = vpop.permute.xlu0 %1983
        %v1986 = vmul.f32 %v1984, %v1936
        %v1987 = vmul.f32 %v1984, %v1940
        %v1988 = vmul.f32 %v1984, %v1944
        %v1989 = vmul.f32 %v1984, %v1948
        %v1990 = vmul.f32 %v1984, %v1952
        %v1991 = vmul.f32 %v1984, %v1956
        %v1992 = vmul.f32 %v1984, %v1960
        %2000 = vrot.lane.b32.xlu0 %v1986, 126
        %v2001 = vpop.permute.xlu0 %2000
        %2002 = vrot.lane.b32.xlu0 %v1987, 126
        %v2003 = vpop.permute.xlu0 %2002
        %2004 = vrot.lane.b32.xlu0 %v1988, 126
        %v2005 = vpop.permute.xlu0 %2004
        %2006 = vrot.lane.b32.xlu0 %v1989, 126
        %v2007 = vpop.permute.xlu0 %2006
        %2008 = vrot.lane.b32.xlu0 %v1990, 126
        %v2009 = vpop.permute.xlu0 %2008
        %2010 = vrot.lane.b32.xlu0 %v1991, 126
        %v2011 = vpop.permute.xlu0 %2010
        %2012 = vrot.lane.b32.xlu0 %v1992, 126
        %v2013 = vpop.permute.xlu0 %2012
        %v2014 = vsel %vm663, %v2001, %v2003
        %v2015 = vsel %vm663, %v2003, %v2005
        %v2016 = vsel %vm663, %v2005, %v2007
        %v2017 = vsel %vm663, %v2007, %v2009
        %v2018 = vsel %vm663, %v2009, %v2011
        %v2019 = vsel %vm663, %v2011, %v2013
        %v2027 = vadd.f32 %v1975, %v2014
        %v2028 = vadd.f32 %v1976, %v2015
        %v2029 = vadd.f32 %v1977, %v2016
        %v2030 = vadd.f32 %v1978, %v2017
        %v2031 = vadd.f32 %v1979, %v2018
        %v2032 = vadd.f32 %v1980, %v2019
        %v2033 = vadd.f32 %v1981, %v2013
        %2034 = vset.pattern.permute.xlu0 26
        %2035 = vperm.xlu0 %2034, %v527
        %v2036 = vpop.permute.xlu0 %2035
        %v2038 = vmul.f32 %v2036, %v1936
        %v2039 = vmul.f32 %v2036, %v1940
        %v2040 = vmul.f32 %v2036, %v1944
        %v2041 = vmul.f32 %v2036, %v1948
        %v2042 = vmul.f32 %v2036, %v1952
        %v2043 = vmul.f32 %v2036, %v1956
        %v2044 = vmul.f32 %v2036, %v1960
        %2052 = vrot.lane.b32.xlu0 %v2038, 124
        %v2053 = vpop.permute.xlu0 %2052
        %2054 = vrot.lane.b32.xlu0 %v2039, 124
        %v2055 = vpop.permute.xlu0 %2054
        %2056 = vrot.lane.b32.xlu0 %v2040, 124
        %v2057 = vpop.permute.xlu0 %2056
        %2058 = vrot.lane.b32.xlu0 %v2041, 124
        %v2059 = vpop.permute.xlu0 %2058
        %2060 = vrot.lane.b32.xlu0 %v2042, 124
        %v2061 = vpop.permute.xlu0 %2060
        %2062 = vrot.lane.b32.xlu0 %v2043, 124
        %v2063 = vpop.permute.xlu0 %2062
        %2064 = vrot.lane.b32.xlu0 %v2044, 124
        %v2065 = vpop.permute.xlu0 %2064
        %v2066 = vsel %vm1588, %v2053, %v2055
        %v2067 = vsel %vm1588, %v2055, %v2057
        %v2068 = vsel %vm1588, %v2057, %v2059
        %v2069 = vsel %vm1588, %v2059, %v2061
        %v2070 = vsel %vm1588, %v2061, %v2063
        %v2071 = vsel %vm1588, %v2063, %v2065
        %v2079 = vadd.f32 %v2027, %v2066
        %v2080 = vadd.f32 %v2028, %v2067
        %v2081 = vadd.f32 %v2029, %v2068
        %v2082 = vadd.f32 %v2030, %v2069
        %v2083 = vadd.f32 %v2031, %v2070
        %v2084 = vadd.f32 %v2032, %v2071
        %v2085 = vadd.f32 %v2033, %v2065
        %2086 = vset.pattern.permute.xlu0 2
        %2087 = vperm.xlu0 %2086, %v528
        %v2088 = vpop.permute.xlu0 %2087
        %v2090 = vadd.f32 %v2079, %v2088
        %v2091 = vadd.f32 %v2080, %v2088
        %v2092 = vadd.f32 %v2081, %v2088
        %v2093 = vadd.f32 %v2082, %v2088
        %v2094 = vadd.f32 %v2083, %v2088
        %v2095 = vadd.f32 %v2084, %v2088
        %v2096 = vadd.f32 %v2085, %v2088
        %vm2097 = vcmp.ge.f32.partialorder %v2090, 0.0
        %vm2098 = vcmp.ge.f32.partialorder %v2091, 0.0
        %vm2099 = vcmp.ge.f32.partialorder %v2092, 0.0
        %vm2100 = vcmp.ge.f32.partialorder %v2093, 0.0
        %vm2101 = vcmp.ge.f32.partialorder %v2094, 0.0
        %vm2102 = vcmp.ge.f32.partialorder %v2095, 0.0
        %vm2103 = vcmp.ge.f32.partialorder %v2096, 0.0
        %v2104 = vmul.f32 %v2090, 0.01
        %v2105 = vmul.f32 %v2091, 0.01
        %v2106 = vmul.f32 %v2092, 0.01
        %v2107 = vmul.f32 %v2093, 0.01
        %v2108 = vmul.f32 %v2094, 0.01
        %v2109 = vmul.f32 %v2095, 0.01
        %v2110 = vmul.f32 %v2096, 0.01
        %v2111 = vsel %vm2097, %v2090, %v2104
        %v2112 = vsel %vm2098, %v2091, %v2105
        %v2113 = vsel %vm2099, %v2092, %v2106
        %v2114 = vsel %vm2100, %v2093, %v2107
        %v2115 = vsel %vm2101, %v2094, %v2108
        %v2116 = vsel %vm2102, %v2095, %v2109
        %v2117 = vsel %vm2103, %v2096, %v2110
        %v2125 = vcombine.low %v2111, %v2112
        %v2126 = vcombine.low %v2113, %v2114
        %v2127 = vcombine.low %v2115, %v2116
        %2128 = vrot.lane.b32.xlu0 %v2125, 4
        %v2129 = vpop.permute.xlu0 %2128
        %2130 = vrot.lane.b32.xlu0 %v2126, 4
        %v2131 = vpop.permute.xlu0 %2130
        %2132 = vrot.lane.b32.xlu0 %v2127, 4
        %v2133 = vpop.permute.xlu0 %2132
        %2134 = vrot.lane.b32.xlu0 %v2117, 4
        %v2135 = vpop.permute.xlu0 %2134
        %v2136 = vrot.slane %v2129, 4
        %v2137 = vrot.slane %v2131, 4
        %v2138 = vrot.slane %v2133, 4
        %vm2139 = vcmask 31744
        %v2140 = vsel %vm2139, %v2136, %v2129
        %v2141 = vsel %vm740, %v2136, %v2137
        %v2142 = vsel %vm2139, %v2141, %v2131
        %v2143 = vsel %vm740, %v2137, %v2138
        %v2144 = vsel %vm2139, %v2143, %v2133
        %v2145 = vsel %vm2139, %v2138, %v2135
        %2150 = vst.msk [vmem:[#allocation2] sm:$0xff] %vm752, %v2140
        %2151 = vst [vmem:[#allocation2 + $0x8] sm:$0xff] %v2142
        %2152 = vst [vmem:[#allocation2 + $0x10] sm:$0xff] %v2144
        %2153 = vst.msk [vmem:[#allocation2 + $0x18] sm:$0xf] %vm512, %v2145
        %v2154 = vld [vmem:[#allocation2] ss:$4 sm:$0x7f]
        %2155 = vset.pattern.permute.xlu0 27
        %2156 = vperm.xlu0 %2155, %v527
        %v2157 = vpop.permute.xlu0 %2156
        %v2160 = vlaneseq
        %v2161 = vshrl.u32 %v2160, 7
        %v2162 = vsub.s32 0, %v2161
        %v2163 = vrot.slane %v2154, %v2162
        %v2164 = vlaneseq
        %v2165 = vshrl.u32 %v2164, 7
        %v2166 = vsub.s32 1, %v2165
        %v2167 = vrot.slane %v2154, %v2166
        %v2168 = vlaneseq
        %v2169 = vshrl.u32 %v2168, 7
        %v2170 = vsub.s32 2, %v2169
        %v2171 = vrot.slane %v2154, %v2170
        %v2172 = vlaneseq
        %v2173 = vshrl.u32 %v2172, 7
        %v2174 = vsub.s32 3, %v2173
        %v2175 = vrot.slane %v2154, %v2174
        %v2176 = vlaneseq
        %v2177 = vshrl.u32 %v2176, 7
        %v2178 = vsub.s32 4, %v2177
        %v2179 = vrot.slane %v2154, %v2178
        %v2180 = vlaneseq
        %v2181 = vshrl.u32 %v2180, 7
        %v2182 = vsub.s32 5, %v2181
        %v2183 = vrot.slane %v2154, %v2182
        %v2184 = vlaneseq
        %v2185 = vshrl.u32 %v2184, 7
        %v2186 = vsub.s32 6, %v2185
        %v2187 = vrot.slane %v2154, %v2186
        %v2195 = vmul.f32 %v2157, %v2163
        %v2196 = vmul.f32 %v2157, %v2167
        %v2197 = vmul.f32 %v2157, %v2171
        %v2198 = vmul.f32 %v2157, %v2175
        %v2199 = vmul.f32 %v2157, %v2179
        %v2200 = vmul.f32 %v2157, %v2183
        %v2201 = vmul.f32 %v2157, %v2187
        %2202 = vset.pattern.permute.xlu0 28
        %2203 = vperm.xlu0 %2202, %v527
        %v2204 = vpop.permute.xlu0 %2203
        %v2206 = vmul.f32 %v2204, %v2163
        %v2207 = vmul.f32 %v2204, %v2167
        %v2208 = vmul.f32 %v2204, %v2171
        %v2209 = vmul.f32 %v2204, %v2175
        %v2210 = vmul.f32 %v2204, %v2179
        %v2211 = vmul.f32 %v2204, %v2183
        %v2212 = vmul.f32 %v2204, %v2187
        %2220 = vrot.lane.b32.xlu0 %v2206, 124
        %v2221 = vpop.permute.xlu0 %2220
        %2222 = vrot.lane.b32.xlu0 %v2207, 124
        %v2223 = vpop.permute.xlu0 %2222
        %2224 = vrot.lane.b32.xlu0 %v2208, 124
        %v2225 = vpop.permute.xlu0 %2224
        %2226 = vrot.lane.b32.xlu0 %v2209, 124
        %v2227 = vpop.permute.xlu0 %2226
        %2228 = vrot.lane.b32.xlu0 %v2210, 124
        %v2229 = vpop.permute.xlu0 %2228
        %2230 = vrot.lane.b32.xlu0 %v2211, 124
        %v2231 = vpop.permute.xlu0 %2230
        %2232 = vrot.lane.b32.xlu0 %v2212, 124
        %v2233 = vpop.permute.xlu0 %2232
        %v2234 = vsel %vm1588, %v2221, %v2223
        %v2235 = vsel %vm1588, %v2223, %v2225
        %v2236 = vsel %vm1588, %v2225, %v2227
        %v2237 = vsel %vm1588, %v2227, %v2229
        %v2238 = vsel %vm1588, %v2229, %v2231
        %v2239 = vsel %vm1588, %v2231, %v2233
        %v2247 = vadd.f32 %v2195, %v2234
        %v2248 = vadd.f32 %v2196, %v2235
        %v2249 = vadd.f32 %v2197, %v2236
        %v2250 = vadd.f32 %v2198, %v2237
        %v2251 = vadd.f32 %v2199, %v2238
        %v2252 = vadd.f32 %v2200, %v2239
        %v2253 = vadd.f32 %v2201, %v2233
        %2254 = vset.pattern.permute.xlu0 29
        %2255 = vperm.xlu0 %2254, %v527
        %v2256 = vpop.permute.xlu0 %2255
        %v2258 = vmul.f32 %v2256, %v2163
        %v2259 = vmul.f32 %v2256, %v2167
        %v2260 = vmul.f32 %v2256, %v2171
        %v2261 = vmul.f32 %v2256, %v2175
        %v2262 = vmul.f32 %v2256, %v2179
        %v2263 = vmul.f32 %v2256, %v2183
        %v2264 = vmul.f32 %v2256, %v2187
        %2272 = vrot.lane.b32.xlu0 %v2258, 120
        %v2273 = vpop.permute.xlu0 %2272
        %2274 = vrot.lane.b32.xlu0 %v2259, 120
        %v2275 = vpop.permute.xlu0 %2274
        %2276 = vrot.lane.b32.xlu0 %v2260, 120
        %v2277 = vpop.permute.xlu0 %2276
        %2278 = vrot.lane.b32.xlu0 %v2261, 120
        %v2279 = vpop.permute.xlu0 %2278
        %2280 = vrot.lane.b32.xlu0 %v2262, 120
        %v2281 = vpop.permute.xlu0 %2280
        %2282 = vrot.lane.b32.xlu0 %v2263, 120
        %v2283 = vpop.permute.xlu0 %2282
        %2284 = vrot.lane.b32.xlu0 %v2264, 120
        %v2285 = vpop.permute.xlu0 %2284
        %vm2286 = vcmask 982016
        %v2287 = vsel %vm2286, %v2273, %v2275
        %v2288 = vsel %vm2286, %v2275, %v2277
        %v2289 = vsel %vm2286, %v2277, %v2279
        %v2290 = vsel %vm2286, %v2279, %v2281
        %v2291 = vsel %vm2286, %v2281, %v2283
        %v2292 = vsel %vm2286, %v2283, %v2285
        %v2300 = vadd.f32 %v2247, %v2287
        %v2301 = vadd.f32 %v2248, %v2288
        %v2302 = vadd.f32 %v2249, %v2289
        %v2303 = vadd.f32 %v2250, %v2290
        %v2304 = vadd.f32 %v2251, %v2291
        %v2305 = vadd.f32 %v2252, %v2292
        %v2306 = vadd.f32 %v2253, %v2285
        %v2307 = vld [vmem:[%s909] ss:$4 sm:$0x7f]
        %2308 = vset.pattern.permute.xlu0 30
        %2309 = vperm.xlu0 %2308, %v527
        %v2310 = vpop.permute.xlu0 %2309
        %v2313 = vlaneseq
        %v2314 = vshrl.u32 %v2313, 7
        %v2315 = vsub.s32 0, %v2314
        %v2316 = vrot.slane %v2307, %v2315
        %v2317 = vlaneseq
        %v2318 = vshrl.u32 %v2317, 7
        %v2319 = vsub.s32 1, %v2318
        %v2320 = vrot.slane %v2307, %v2319
        %v2321 = vlaneseq
        %v2322 = vshrl.u32 %v2321, 7
        %v2323 = vsub.s32 2, %v2322
        %v2324 = vrot.slane %v2307, %v2323
        %v2325 = vlaneseq
        %v2326 = vshrl.u32 %v2325, 7
        %v2327 = vsub.s32 3, %v2326
        %v2328 = vrot.slane %v2307, %v2327
        %v2329 = vlaneseq
        %v2330 = vshrl.u32 %v2329, 7
        %v2331 = vsub.s32 4, %v2330
        %v2332 = vrot.slane %v2307, %v2331
        %v2333 = vlaneseq
        %v2334 = vshrl.u32 %v2333, 7
        %v2335 = vsub.s32 5, %v2334
        %v2336 = vrot.slane %v2307, %v2335
        %v2337 = vlaneseq
        %v2338 = vshrl.u32 %v2337, 7
        %v2339 = vsub.s32 6, %v2338
        %v2340 = vrot.slane %v2307, %v2339
        %v2348 = vmul.f32 %v2310, %v2316
        %v2349 = vmul.f32 %v2310, %v2320
        %v2350 = vmul.f32 %v2310, %v2324
        %v2351 = vmul.f32 %v2310, %v2328
        %v2352 = vmul.f32 %v2310, %v2332
        %v2353 = vmul.f32 %v2310, %v2336
        %v2354 = vmul.f32 %v2310, %v2340
        %v2355 = vadd.f32 %v2300, %v2348
        %v2356 = vadd.f32 %v2301, %v2349
        %v2357 = vadd.f32 %v2302, %v2350
        %v2358 = vadd.f32 %v2303, %v2351
        %v2359 = vadd.f32 %v2304, %v2352
        %v2360 = vadd.f32 %v2305, %v2353
        %v2361 = vadd.f32 %v2306, %v2354
        %2362 = vset.pattern.permute.xlu0 31
        %2363 = vperm.xlu0 %2362, %v527
        %v2364 = vpop.permute.xlu0 %2363
        %v2366 = vmul.f32 %v2364, %v2316
        %v2367 = vmul.f32 %v2364, %v2320
        %v2368 = vmul.f32 %v2364, %v2324
        %v2369 = vmul.f32 %v2364, %v2328
        %v2370 = vmul.f32 %v2364, %v2332
        %v2371 = vmul.f32 %v2364, %v2336
        %v2372 = vmul.f32 %v2364, %v2340
        %2380 = vrot.lane.b32.xlu0 %v2366, 124
        %v2381 = vpop.permute.xlu0 %2380
        %2382 = vrot.lane.b32.xlu0 %v2367, 124
        %v2383 = vpop.permute.xlu0 %2382
        %2384 = vrot.lane.b32.xlu0 %v2368, 124
        %v2385 = vpop.permute.xlu0 %2384
        %2386 = vrot.lane.b32.xlu0 %v2369, 124
        %v2387 = vpop.permute.xlu0 %2386
        %2388 = vrot.lane.b32.xlu0 %v2370, 124
        %v2389 = vpop.permute.xlu0 %2388
        %2390 = vrot.lane.b32.xlu0 %v2371, 124
        %v2391 = vpop.permute.xlu0 %2390
        %2392 = vrot.lane.b32.xlu0 %v2372, 124
        %v2393 = vpop.permute.xlu0 %2392
        %v2394 = vsel %vm1588, %v2381, %v2383
        %v2395 = vsel %vm1588, %v2383, %v2385
        %v2396 = vsel %vm1588, %v2385, %v2387
        %v2397 = vsel %vm1588, %v2387, %v2389
        %v2398 = vsel %vm1588, %v2389, %v2391
        %v2399 = vsel %vm1588, %v2391, %v2393
        %v2407 = vadd.f32 %v2355, %v2394
        %v2408 = vadd.f32 %v2356, %v2395
        %v2409 = vadd.f32 %v2357, %v2396
        %v2410 = vadd.f32 %v2358, %v2397
        %v2411 = vadd.f32 %v2359, %v2398
        %v2412 = vadd.f32 %v2360, %v2399
        %v2413 = vadd.f32 %v2361, %v2393
        %2414 = vset.pattern.permute.xlu0 32
        %2415 = vperm.xlu0 %2414, %v527
        %v2416 = vpop.permute.xlu0 %2415
        %v2418 = vmul.f32 %v2416, %v2316
        %v2419 = vmul.f32 %v2416, %v2320
        %v2420 = vmul.f32 %v2416, %v2324
        %v2421 = vmul.f32 %v2416, %v2328
        %v2422 = vmul.f32 %v2416, %v2332
        %v2423 = vmul.f32 %v2416, %v2336
        %v2424 = vmul.f32 %v2416, %v2340
        %2432 = vrot.lane.b32.xlu0 %v2418, 120
        %v2433 = vpop.permute.xlu0 %2432
        %2434 = vrot.lane.b32.xlu0 %v2419, 120
        %v2435 = vpop.permute.xlu0 %2434
        %2436 = vrot.lane.b32.xlu0 %v2420, 120
        %v2437 = vpop.permute.xlu0 %2436
        %2438 = vrot.lane.b32.xlu0 %v2421, 120
        %v2439 = vpop.permute.xlu0 %2438
        %2440 = vrot.lane.b32.xlu0 %v2422, 120
        %v2441 = vpop.permute.xlu0 %2440
        %2442 = vrot.lane.b32.xlu0 %v2423, 120
        %v2443 = vpop.permute.xlu0 %2442
        %2444 = vrot.lane.b32.xlu0 %v2424, 120
        %v2445 = vpop.permute.xlu0 %2444
        %v2446 = vsel %vm2286, %v2433, %v2435
        %v2447 = vsel %vm2286, %v2435, %v2437
        %v2448 = vsel %vm2286, %v2437, %v2439
        %v2449 = vsel %vm2286, %v2439, %v2441
        %v2450 = vsel %vm2286, %v2441, %v2443
        %v2451 = vsel %vm2286, %v2443, %v2445
        %v2459 = vadd.f32 %v2407, %v2446
        %v2460 = vadd.f32 %v2408, %v2447
        %v2461 = vadd.f32 %v2409, %v2448
        %v2462 = vadd.f32 %v2410, %v2449
        %v2463 = vadd.f32 %v2411, %v2450
        %v2464 = vadd.f32 %v2412, %v2451
        %v2465 = vadd.f32 %v2413, %v2445
        %v2466 = vld [vmem:[%s1069] ss:$4 sm:$0x7f]
        %2467 = vset.pattern.permute.xlu0 33
        %2468 = vperm.xlu0 %2467, %v527
        %v2469 = vpop.permute.xlu0 %2468
        %v2472 = vlaneseq
        %v2473 = vshrl.u32 %v2472, 7
        %v2474 = vsub.s32 0, %v2473
        %v2475 = vrot.slane %v2466, %v2474
        %v2476 = vlaneseq
        %v2477 = vshrl.u32 %v2476, 7
        %v2478 = vsub.s32 1, %v2477
        %v2479 = vrot.slane %v2466, %v2478
        %v2480 = vlaneseq
        %v2481 = vshrl.u32 %v2480, 7
        %v2482 = vsub.s32 2, %v2481
        %v2483 = vrot.slane %v2466, %v2482
        %v2484 = vlaneseq
        %v2485 = vshrl.u32 %v2484, 7
        %v2486 = vsub.s32 3, %v2485
        %v2487 = vrot.slane %v2466, %v2486
        %v2488 = vlaneseq
        %v2489 = vshrl.u32 %v2488, 7
        %v2490 = vsub.s32 4, %v2489
        %v2491 = vrot.slane %v2466, %v2490
        %v2492 = vlaneseq
        %v2493 = vshrl.u32 %v2492, 7
        %v2494 = vsub.s32 5, %v2493
        %v2495 = vrot.slane %v2466, %v2494
        %v2496 = vlaneseq
        %v2497 = vshrl.u32 %v2496, 7
        %v2498 = vsub.s32 6, %v2497
        %v2499 = vrot.slane %v2466, %v2498
        %v2507 = vmul.f32 %v2469, %v2475
        %v2508 = vmul.f32 %v2469, %v2479
        %v2509 = vmul.f32 %v2469, %v2483
        %v2510 = vmul.f32 %v2469, %v2487
        %v2511 = vmul.f32 %v2469, %v2491
        %v2512 = vmul.f32 %v2469, %v2495
        %v2513 = vmul.f32 %v2469, %v2499
        %v2514 = vadd.f32 %v2459, %v2507
        %v2515 = vadd.f32 %v2460, %v2508
        %v2516 = vadd.f32 %v2461, %v2509
        %v2517 = vadd.f32 %v2462, %v2510
        %v2518 = vadd.f32 %v2463, %v2511
        %v2519 = vadd.f32 %v2464, %v2512
        %v2520 = vadd.f32 %v2465, %v2513
        %2521 = vset.pattern.permute.xlu0 34
        %2522 = vperm.xlu0 %2521, %v527
        %v2523 = vpop.permute.xlu0 %2522
        %v2525 = vmul.f32 %v2523, %v2475
        %v2526 = vmul.f32 %v2523, %v2479
        %v2527 = vmul.f32 %v2523, %v2483
        %v2528 = vmul.f32 %v2523, %v2487
        %v2529 = vmul.f32 %v2523, %v2491
        %v2530 = vmul.f32 %v2523, %v2495
        %v2531 = vmul.f32 %v2523, %v2499
        %2539 = vrot.lane.b32.xlu0 %v2525, 124
        %v2540 = vpop.permute.xlu0 %2539
        %2541 = vrot.lane.b32.xlu0 %v2526, 124
        %v2542 = vpop.permute.xlu0 %2541
        %2543 = vrot.lane.b32.xlu0 %v2527, 124
        %v2544 = vpop.permute.xlu0 %2543
        %2545 = vrot.lane.b32.xlu0 %v2528, 124
        %v2546 = vpop.permute.xlu0 %2545
        %2547 = vrot.lane.b32.xlu0 %v2529, 124
        %v2548 = vpop.permute.xlu0 %2547
        %2549 = vrot.lane.b32.xlu0 %v2530, 124
        %v2550 = vpop.permute.xlu0 %2549
        %2551 = vrot.lane.b32.xlu0 %v2531, 124
        %v2552 = vpop.permute.xlu0 %2551
        %v2553 = vsel %vm1588, %v2540, %v2542
        %v2554 = vsel %vm1588, %v2542, %v2544
        %v2555 = vsel %vm1588, %v2544, %v2546
        %v2556 = vsel %vm1588, %v2546, %v2548
        %v2557 = vsel %vm1588, %v2548, %v2550
        %v2558 = vsel %vm1588, %v2550, %v2552
        %v2566 = vadd.f32 %v2514, %v2553
        %v2567 = vadd.f32 %v2515, %v2554
        %v2568 = vadd.f32 %v2516, %v2555
        %v2569 = vadd.f32 %v2517, %v2556
        %v2570 = vadd.f32 %v2518, %v2557
        %v2571 = vadd.f32 %v2519, %v2558
        %v2572 = vadd.f32 %v2520, %v2552
        %2573 = vset.pattern.permute.xlu0 35
        %2574 = vperm.xlu0 %2573, %v527
        %v2575 = vpop.permute.xlu0 %2574
        %v2577 = vmul.f32 %v2575, %v2475
        %v2578 = vmul.f32 %v2575, %v2479
        %v2579 = vmul.f32 %v2575, %v2483
        %v2580 = vmul.f32 %v2575, %v2487
        %v2581 = vmul.f32 %v2575, %v2491
        %v2582 = vmul.f32 %v2575, %v2495
        %v2583 = vmul.f32 %v2575, %v2499
        %2591 = vrot.lane.b32.xlu0 %v2577, 120
        %v2592 = vpop.permute.xlu0 %2591
        %2593 = vrot.lane.b32.xlu0 %v2578, 120
        %v2594 = vpop.permute.xlu0 %2593
        %2595 = vrot.lane.b32.xlu0 %v2579, 120
        %v2596 = vpop.permute.xlu0 %2595
        %2597 = vrot.lane.b32.xlu0 %v2580, 120
        %v2598 = vpop.permute.xlu0 %2597
        %2599 = vrot.lane.b32.xlu0 %v2581, 120
        %v2600 = vpop.permute.xlu0 %2599
        %2601 = vrot.lane.b32.xlu0 %v2582, 120
        %v2602 = vpop.permute.xlu0 %2601
        %2603 = vrot.lane.b32.xlu0 %v2583, 120
        %v2604 = vpop.permute.xlu0 %2603
        %v2605 = vsel %vm2286, %v2592, %v2594
        %v2606 = vsel %vm2286, %v2594, %v2596
        %v2607 = vsel %vm2286, %v2596, %v2598
        %v2608 = vsel %vm2286, %v2598, %v2600
        %v2609 = vsel %vm2286, %v2600, %v2602
        %v2610 = vsel %vm2286, %v2602, %v2604
        %v2618 = vadd.f32 %v2566, %v2605
        %v2619 = vadd.f32 %v2567, %v2606
        %v2620 = vadd.f32 %v2568, %v2607
        %v2621 = vadd.f32 %v2569, %v2608
        %v2622 = vadd.f32 %v2570, %v2609
        %v2623 = vadd.f32 %v2571, %v2610
        %v2624 = vadd.f32 %v2572, %v2604
        %v2625 = vld [vmem:[%s1229] ss:$4 sm:$0x7f]
        %2626 = vset.pattern.permute.xlu0 36
        %2627 = vperm.xlu0 %2626, %v527
        %v2628 = vpop.permute.xlu0 %2627
        %v2631 = vlaneseq
        %v2632 = vshrl.u32 %v2631, 7
        %v2633 = vsub.s32 0, %v2632
        %v2634 = vrot.slane %v2625, %v2633
        %v2635 = vlaneseq
        %v2636 = vshrl.u32 %v2635, 7
        %v2637 = vsub.s32 1, %v2636
        %v2638 = vrot.slane %v2625, %v2637
        %v2639 = vlaneseq
        %v2640 = vshrl.u32 %v2639, 7
        %v2641 = vsub.s32 2, %v2640
        %v2642 = vrot.slane %v2625, %v2641
        %v2643 = vlaneseq
        %v2644 = vshrl.u32 %v2643, 7
        %v2645 = vsub.s32 3, %v2644
        %v2646 = vrot.slane %v2625, %v2645
        %v2647 = vlaneseq
        %v2648 = vshrl.u32 %v2647, 7
        %v2649 = vsub.s32 4, %v2648
        %v2650 = vrot.slane %v2625, %v2649
        %v2651 = vlaneseq
        %v2652 = vshrl.u32 %v2651, 7
        %v2653 = vsub.s32 5, %v2652
        %v2654 = vrot.slane %v2625, %v2653
        %v2655 = vlaneseq
        %v2656 = vshrl.u32 %v2655, 7
        %v2657 = vsub.s32 6, %v2656
        %v2658 = vrot.slane %v2625, %v2657
        %v2666 = vmul.f32 %v2628, %v2634
        %v2667 = vmul.f32 %v2628, %v2638
        %v2668 = vmul.f32 %v2628, %v2642
        %v2669 = vmul.f32 %v2628, %v2646
        %v2670 = vmul.f32 %v2628, %v2650
        %v2671 = vmul.f32 %v2628, %v2654
        %v2672 = vmul.f32 %v2628, %v2658
        %v2673 = vadd.f32 %v2618, %v2666
        %v2674 = vadd.f32 %v2619, %v2667
        %v2675 = vadd.f32 %v2620, %v2668
        %v2676 = vadd.f32 %v2621, %v2669
        %v2677 = vadd.f32 %v2622, %v2670
        %v2678 = vadd.f32 %v2623, %v2671
        %v2679 = vadd.f32 %v2624, %v2672
        %2680 = vset.pattern.permute.xlu0 37
        %2681 = vperm.xlu0 %2680, %v527
        %v2682 = vpop.permute.xlu0 %2681
        %v2684 = vmul.f32 %v2682, %v2634
        %v2685 = vmul.f32 %v2682, %v2638
        %v2686 = vmul.f32 %v2682, %v2642
        %v2687 = vmul.f32 %v2682, %v2646
        %v2688 = vmul.f32 %v2682, %v2650
        %v2689 = vmul.f32 %v2682, %v2654
        %v2690 = vmul.f32 %v2682, %v2658
        %2698 = vrot.lane.b32.xlu0 %v2684, 124
        %v2699 = vpop.permute.xlu0 %2698
        %2700 = vrot.lane.b32.xlu0 %v2685, 124
        %v2701 = vpop.permute.xlu0 %2700
        %2702 = vrot.lane.b32.xlu0 %v2686, 124
        %v2703 = vpop.permute.xlu0 %2702
        %2704 = vrot.lane.b32.xlu0 %v2687, 124
        %v2705 = vpop.permute.xlu0 %2704
        %2706 = vrot.lane.b32.xlu0 %v2688, 124
        %v2707 = vpop.permute.xlu0 %2706
        %2708 = vrot.lane.b32.xlu0 %v2689, 124
        %v2709 = vpop.permute.xlu0 %2708
        %2710 = vrot.lane.b32.xlu0 %v2690, 124
        %v2711 = vpop.permute.xlu0 %2710
        %v2712 = vsel %vm1588, %v2699, %v2701
        %v2713 = vsel %vm1588, %v2701, %v2703
        %v2714 = vsel %vm1588, %v2703, %v2705
        %v2715 = vsel %vm1588, %v2705, %v2707
        %v2716 = vsel %vm1588, %v2707, %v2709
        %v2717 = vsel %vm1588, %v2709, %v2711
        %v2725 = vadd.f32 %v2673, %v2712
        %v2726 = vadd.f32 %v2674, %v2713
        %v2727 = vadd.f32 %v2675, %v2714
        %v2728 = vadd.f32 %v2676, %v2715
        %v2729 = vadd.f32 %v2677, %v2716
        %v2730 = vadd.f32 %v2678, %v2717
        %v2731 = vadd.f32 %v2679, %v2711
        %2732 = vset.pattern.permute.xlu0 38
        %2733 = vperm.xlu0 %2732, %v527
        %v2734 = vpop.permute.xlu0 %2733
        %v2736 = vmul.f32 %v2734, %v2634
        %v2737 = vmul.f32 %v2734, %v2638
        %v2738 = vmul.f32 %v2734, %v2642
        %v2739 = vmul.f32 %v2734, %v2646
        %v2740 = vmul.f32 %v2734, %v2650
        %v2741 = vmul.f32 %v2734, %v2654
        %v2742 = vmul.f32 %v2734, %v2658
        %2750 = vrot.lane.b32.xlu0 %v2736, 120
        %v2751 = vpop.permute.xlu0 %2750
        %2752 = vrot.lane.b32.xlu0 %v2737, 120
        %v2753 = vpop.permute.xlu0 %2752
        %2754 = vrot.lane.b32.xlu0 %v2738, 120
        %v2755 = vpop.permute.xlu0 %2754
        %2756 = vrot.lane.b32.xlu0 %v2739, 120
        %v2757 = vpop.permute.xlu0 %2756
        %2758 = vrot.lane.b32.xlu0 %v2740, 120
        %v2759 = vpop.permute.xlu0 %2758
        %2760 = vrot.lane.b32.xlu0 %v2741, 120
        %v2761 = vpop.permute.xlu0 %2760
        %2762 = vrot.lane.b32.xlu0 %v2742, 120
        %v2763 = vpop.permute.xlu0 %2762
        %v2764 = vsel %vm2286, %v2751, %v2753
        %v2765 = vsel %vm2286, %v2753, %v2755
        %v2766 = vsel %vm2286, %v2755, %v2757
        %v2767 = vsel %vm2286, %v2757, %v2759
        %v2768 = vsel %vm2286, %v2759, %v2761
        %v2769 = vsel %vm2286, %v2761, %v2763
        %v2777 = vadd.f32 %v2725, %v2764
        %v2778 = vadd.f32 %v2726, %v2765
        %v2779 = vadd.f32 %v2727, %v2766
        %v2780 = vadd.f32 %v2728, %v2767
        %v2781 = vadd.f32 %v2729, %v2768
        %v2782 = vadd.f32 %v2730, %v2769
        %v2783 = vadd.f32 %v2731, %v2763
        %2784 = vset.pattern.permute.xlu0 3
        %2785 = vperm.xlu0 %2784, %v528
        %v2786 = vpop.permute.xlu0 %2785
        %v2788 = vadd.f32 %v2777, %v2786
        %v2789 = vadd.f32 %v2778, %v2786
        %v2790 = vadd.f32 %v2779, %v2786
        %v2791 = vadd.f32 %v2780, %v2786
        %v2792 = vadd.f32 %v2781, %v2786
        %v2793 = vadd.f32 %v2782, %v2786
        %v2794 = vadd.f32 %v2783, %v2786
        %vm2795 = vcmp.ge.f32.partialorder %v2788, 0.0
        %vm2796 = vcmp.ge.f32.partialorder %v2789, 0.0
        %vm2797 = vcmp.ge.f32.partialorder %v2790, 0.0
        %vm2798 = vcmp.ge.f32.partialorder %v2791, 0.0
        %vm2799 = vcmp.ge.f32.partialorder %v2792, 0.0
        %vm2800 = vcmp.ge.f32.partialorder %v2793, 0.0
        %vm2801 = vcmp.ge.f32.partialorder %v2794, 0.0
        %v2802 = vmul.f32 %v2788, 0.01
        %v2803 = vmul.f32 %v2789, 0.01
        %v2804 = vmul.f32 %v2790, 0.01
        %v2805 = vmul.f32 %v2791, 0.01
        %v2806 = vmul.f32 %v2792, 0.01
        %v2807 = vmul.f32 %v2793, 0.01
        %v2808 = vmul.f32 %v2794, 0.01
        %v2809 = vsel %vm2795, %v2788, %v2802
        %v2810 = vsel %vm2796, %v2789, %v2803
        %v2811 = vsel %vm2797, %v2790, %v2804
        %v2812 = vsel %vm2798, %v2791, %v2805
        %v2813 = vsel %vm2799, %v2792, %v2806
        %v2814 = vsel %vm2800, %v2793, %v2807
        %v2815 = vsel %vm2801, %v2794, %v2808
        %v2823 = vcombine.low %v2809, %v2810
        %v2824 = vcombine.low %v2811, %v2812
        %v2825 = vcombine.low %v2813, %v2814
        %2826 = vrot.lane.b32.xlu0 %v2823, 8
        %v2827 = vpop.permute.xlu0 %2826
        %2828 = vrot.lane.b32.xlu0 %v2824, 8
        %v2829 = vpop.permute.xlu0 %2828
        %2830 = vrot.lane.b32.xlu0 %v2825, 8
        %v2831 = vpop.permute.xlu0 %2830
        %2832 = vrot.lane.b32.xlu0 %v2815, 8
        %v2833 = vpop.permute.xlu0 %2832
        %v2834 = vrot.slane %v2827, 4
        %v2835 = vrot.slane %v2829, 4
        %v2836 = vrot.slane %v2831, 4
        %v2837 = vsel %vm519, %v2834, %v2827
        %v2838 = vsel %vm740, %v2834, %v2835
        %v2839 = vsel %vm519, %v2838, %v2829
        %v2840 = vsel %vm740, %v2835, %v2836
        %v2841 = vsel %vm519, %v2840, %v2831
        %v2842 = vsel %vm519, %v2836, %v2833
        %2847 = vst.msk [vmem:[#allocation2] sm:$0xff] %vm752, %v2837
        %2848 = vst [vmem:[#allocation2 + $0x8] sm:$0xff] %v2839
        %2849 = vst [vmem:[#allocation2 + $0x10] sm:$0xff] %v2841
        %2850 = vst.msk [vmem:[#allocation2 + $0x18] sm:$0xf] %vm512, %v2842
        %v2851 = vld [vmem:[#allocation2] sm:$0xf]
        %2853 = vrot.lane.b32.xlu0 %v2851, 120
        %v2854 = vpop.permute.xlu0 %2853
        %vm2856 = vcmask 224256
        %2857 = vst.msk [vmem:[#allocation3] sm:$0xf] %vm2856, %v2854
        %v2858 = vld [vmem:[#allocation2] sm:$0xf]
        %2860 = vrot.lane.b32.xlu0 %v2858, 92
        %v2861 = vpop.permute.xlu0 %2860
        %2863 = vst.msk [vmem:[#allocation3 + $0x4] sm:$0xf] %vm2856, %v2861
        %v2864 = vld [vmem:[#allocation2] sm:$0xf]
        %2866 = vrot.lane.b32.xlu0 %v2864, 64
        %v2867 = vpop.permute.xlu0 %2866
        %2869 = vst.msk [vmem:[#allocation3 + $0x8] sm:$0xf] %vm2856, %v2867
        %v2870 = vld [vmem:[#allocation2] sm:$0xf]
        %2872 = vrot.lane.b32.xlu0 %v2870, 36
        %v2873 = vpop.permute.xlu0 %2872
        %2875 = vst.msk [vmem:[#allocation3 + $0xc] sm:$0xf] %vm2856, %v2873
        %v2876 = vld [vmem:[#allocation2] sm:$0xff]
        %v2878 = vcombine.high %v2876, %v2876
        %2879 = vrot.lane.b32.xlu0 %v2876, 8
        %v2880 = vpop.permute.xlu0 %2879
        %2881 = vrot.lane.b32.xlu0 %v2878, 8
        %v2882 = vpop.permute.xlu0 %2881
        %v2883 = vsel %vm519, %v2880, %v2882
        %2885 = vst.msk [vmem:[#allocation3 + $0x10] sm:$0xf] %vm2856, %v2883
        %v2886 = vld [vmem:[#allocation2 + $0x4] sm:$0xf]
        %2888 = vrot.lane.b32.xlu0 %v2886, 108
        %v2889 = vpop.permute.xlu0 %2888
        %2891 = vst.msk [vmem:[#allocation3 + $0x14] sm:$0xf] %vm2856, %v2889
        %v2892 = vld [vmem:[#allocation2 + $0x4] sm:$0xf]
        %2894 = vrot.lane.b32.xlu0 %v2892, 80
        %v2895 = vpop.permute.xlu0 %2894
        %2897 = vst.msk [vmem:[#allocation3 + $0x18] sm:$0xf] %vm2856, %v2895
        %v2898 = vld [vmem:[#allocation2 + $0x4] sm:$0xf]
        %2900 = vrot.lane.b32.xlu0 %v2898, 52
        %v2901 = vpop.permute.xlu0 %2900
        %2903 = vst.msk [vmem:[#allocation3 + $0x1c] sm:$0xf] %vm2856, %v2901
        %v2904 = vld [vmem:[#allocation2 + $0x4] sm:$0xff]
        %v2906 = vcombine.high %v2904, %v2904
        %2907 = vrot.lane.b32.xlu0 %v2904, 24
        %v2908 = vpop.permute.xlu0 %2907
        %2909 = vrot.lane.b32.xlu0 %v2906, 24
        %v2910 = vpop.permute.xlu0 %2909
        %vm2911 = vcmask 195584
        %v2912 = vsel %vm2911, %v2908, %v2910
        %2914 = vst.msk [vmem:[#allocation3 + $0x20] sm:$0xf] %vm2856, %v2912
        %v2915 = vld [vmem:[#allocation2 + $0x8] sm:$0xf]
        %2917 = vrot.lane.b32.xlu0 %v2915, 124
        %v2918 = vpop.permute.xlu0 %2917
        %2920 = vst.msk [vmem:[#allocation3 + $0x24] sm:$0xf] %vm2856, %v2918
        %v2921 = vld [vmem:[#allocation2 + $0x8] sm:$0xf]
        %2923 = vrot.lane.b32.xlu0 %v2921, 96
        %v2924 = vpop.permute.xlu0 %2923
        %2926 = vst.msk [vmem:[#allocation3 + $0x28] sm:$0xf] %vm2856, %v2924
        %v2927 = vld [vmem:[#allocation2 + $0x8] sm:$0xf]
        %2929 = vrot.lane.b32.xlu0 %v2927, 68
        %v2930 = vpop.permute.xlu0 %2929
        %2932 = vst.msk [vmem:[#allocation3 + $0x2c] sm:$0xf] %vm2856, %v2930
        %v2933 = vld [vmem:[#allocation2 + $0x8] sm:$0xf]
        %2935 = vrot.lane.b32.xlu0 %v2933, 40
        %v2936 = vpop.permute.xlu0 %2935
        %2938 = vst.msk [vmem:[#allocation3 + $0x30] sm:$0xf] %vm2856, %v2936
        %v2939 = vld [vmem:[#allocation2 + $0x8] sm:$0xff]
        %v2941 = vcombine.high %v2939, %v2939
        %2942 = vrot.lane.b32.xlu0 %v2939, 12
        %v2943 = vpop.permute.xlu0 %2942
        %2944 = vrot.lane.b32.xlu0 %v2941, 12
        %v2945 = vpop.permute.xlu0 %2944
        %vm2946 = vcmask 97280
        %v2947 = vsel %vm2946, %v2943, %v2945
        %2949 = vst.msk [vmem:[#allocation3 + $0x34] sm:$0xf] %vm2856, %v2947
        %v2950 = vld [vmem:[#allocation2 + $0xc] sm:$0xf]
        %2952 = vrot.lane.b32.xlu0 %v2950, 112
        %v2953 = vpop.permute.xlu0 %2952
        %2955 = vst.msk [vmem:[#allocation3 + $0x38] sm:$0xf] %vm2856, %v2953
        %v2956 = vld [vmem:[#allocation2 + $0xc] sm:$0xf]
        %2958 = vrot.lane.b32.xlu0 %v2956, 84
        %v2959 = vpop.permute.xlu0 %2958
        %2961 = vst.msk [vmem:[#allocation3 + $0x3c] sm:$0xf] %vm2856, %v2959
        %v2962 = vld [vmem:[#allocation2 + $0xc] sm:$0xf]
        %2964 = vrot.lane.b32.xlu0 %v2962, 56
        %v2965 = vpop.permute.xlu0 %2964
        %2967 = vst.msk [vmem:[#allocation3 + $0x40] sm:$0xf] %vm2856, %v2965
        %v2968 = vld [vmem:[#allocation2 + $0xc] sm:$0xf]
        %2970 = vrot.lane.b32.xlu0 %v2968, 28
        %v2971 = vpop.permute.xlu0 %2970
        %2973 = vst.msk [vmem:[#allocation3 + $0x44] sm:$0xf] %vm2856, %v2971
        %v2974 = vld [vmem:[#allocation2 + $0x10] sm:$0xf]
        %2975 = vst.msk [vmem:[#allocation3 + $0x48] sm:$0xf] %vm2856, %v2974
        %v2976 = vld [vmem:[#allocation2 + $0x10] sm:$0xf]
        %2978 = vrot.lane.b32.xlu0 %v2976, 100
        %v2979 = vpop.permute.xlu0 %2978
        %2981 = vst.msk [vmem:[#allocation3 + $0x4c] sm:$0xf] %vm2856, %v2979
        %v2982 = vld [vmem:[#allocation2 + $0x10] sm:$0xf]
        %2984 = vrot.lane.b32.xlu0 %v2982, 72
        %v2985 = vpop.permute.xlu0 %2984
        %2987 = vst.msk [vmem:[#allocation3 + $0x50] sm:$0xf] %vm2856, %v2985
        %v2988 = vld [vmem:[#allocation2 + $0x10] sm:$0xf]
        %2990 = vrot.lane.b32.xlu0 %v2988, 44
        %v2991 = vpop.permute.xlu0 %2990
        %2993 = vst.msk [vmem:[#allocation3 + $0x54] sm:$0xf] %vm2856, %v2991
        %v2994 = vld [vmem:[#allocation2 + $0x10] sm:$0xff]
        %v2996 = vcombine.high %v2994, %v2994
        %2997 = vrot.lane.b32.xlu0 %v2994, 16
        %v2998 = vpop.permute.xlu0 %2997
        %2999 = vrot.lane.b32.xlu0 %v2996, 16
        %v3000 = vpop.permute.xlu0 %2999
        %vm3001 = vcmask 130048
        %v3002 = vsel %vm3001, %v2998, %v3000
        %3004 = vst.msk [vmem:[#allocation3 + $0x58] sm:$0xf] %vm2856, %v3002
        %v3005 = vld [vmem:[#allocation2 + $0x14] sm:$0xf]
        %3007 = vrot.lane.b32.xlu0 %v3005, 116
        %v3008 = vpop.permute.xlu0 %3007
        %3010 = vst.msk [vmem:[#allocation3 + $0x5c] sm:$0xf] %vm2856, %v3008
        %v3011 = vld [vmem:[#allocation2 + $0x14] sm:$0xf]
        %3013 = vrot.lane.b32.xlu0 %v3011, 88
        %v3014 = vpop.permute.xlu0 %3013
        %3016 = vst.msk [vmem:[#allocation3 + $0x60] sm:$0xf] %vm2856, %v3014
        %v3017 = vld [vmem:[#allocation2 + $0x14] sm:$0xf]
        %3019 = vrot.lane.b32.xlu0 %v3017, 60
        %v3020 = vpop.permute.xlu0 %3019
        %3022 = vst.msk [vmem:[#allocation3 + $0x64] sm:$0xf] %vm2856, %v3020
        %v3023 = vld [vmem:[#allocation2 + $0x14] sm:$0xf]
        %3025 = vrot.lane.b32.xlu0 %v3023, 32
        %v3026 = vpop.permute.xlu0 %3025
        %3028 = vst.msk [vmem:[#allocation3 + $0x68] sm:$0xf] %vm2856, %v3026
        %v3029 = vld [vmem:[#allocation2 + $0x14] sm:$0xff]
        %v3031 = vcombine.high %v3029, %v3029
        %3032 = vrot.lane.b32.xlu0 %v3029, 4
        %v3033 = vpop.permute.xlu0 %3032
        %3034 = vrot.lane.b32.xlu0 %v3031, 4
        %v3035 = vpop.permute.xlu0 %3034
        %v3036 = vsel %vm2139, %v3033, %v3035
        %3038 = vst.msk [vmem:[#allocation3 + $0x6c] sm:$0xf] %vm2856, %v3036
        %v3039 = vld [vmem:[#allocation3] sm:$0xff]
        %v3040 = vld [vmem:[#allocation3 + $0x8] sm:$0xff]
        %v3041 = vld [vmem:[#allocation3 + $0x10] sm:$0xff]
        %v3042 = vld [vmem:[#allocation3 + $0x18] sm:$0xff]
        %v3043 = vld [vmem:[#allocation3 + $0x20] sm:$0xff]
        %v3044 = vld [vmem:[#allocation3 + $0x28] sm:$0xff]
        %v3045 = vld [vmem:[#allocation3 + $0x30] sm:$0xff]
        %v3046 = vld [vmem:[#allocation3 + $0x38] sm:$0xff]
        %v3047 = vld [vmem:[#allocation3 + $0x40] sm:$0xff]
        %v3048 = vld [vmem:[#allocation3 + $0x48] sm:$0xff]
        %v3049 = vld [vmem:[#allocation3 + $0x50] sm:$0xff]
        %v3050 = vld [vmem:[#allocation3 + $0x58] sm:$0xff]
        %v3051 = vld [vmem:[#allocation3 + $0x60] sm:$0xff]
        %v3052 = vld [vmem:[#allocation3 + $0x68] sm:$0xff]
        %v3053 = vld [vmem:[%s4] sm:$0xff]
        %v3054 = vld [vmem:[%s4 + $0x8] sm:$0xff]
        %v3055 = vld [vmem:[%s4 + $0x10] sm:$0xff]
        %v3056 = vld [vmem:[%s4 + $0x18] sm:$0xf]
        %vm3057 = vcmask 228352
        %v3059 = vsel %vm3057, %v3039, 0
        %v3062 = vsel %vm3057, %v3040, 0
        %v3065 = vsel %vm3057, %v3041, 0
        %v3068 = vsel %vm3057, %v3042, 0
        %v3071 = vsel %vm3057, %v3043, 0
        %v3074 = vsel %vm3057, %v3044, 0
        %v3077 = vsel %vm3057, %v3045, 0
        %v3080 = vsel %vm3057, %v3046, 0
        %v3083 = vsel %vm3057, %v3047, 0
        %v3086 = vsel %vm3057, %v3048, 0
        %v3089 = vsel %vm3057, %v3049, 0
        %v3092 = vsel %vm3057, %v3050, 0
        %v3095 = vsel %vm3057, %v3051, 0
        %v3098 = vsel %vm3057, %v3052, 0
        %v3101 = vsel %vm740, %v3056, 0
        %3103 = vmatprep.subr.mxu0 0.0
        %3104 = vmatpush1.msra.mxu0 0.0
        %3105 = vmatprep.subr.mxu0 0.0
        %3106 = vmatpush1.msra.mxu0 0.0
        %3107 = vmatprep.subr.mxu0 0.0
        %3108 = vmatpush1.msra.mxu0 0.0
        %3109 = vmatprep.subr.mxu0 0.0
        %3110 = vmatpush1.msra.mxu0 0.0
        %3111 = vmatprep.subr.mxu0 0.0
        %3112 = vmatpush1.msra.mxu0 0.0
        %3113 = vmatprep.subr.mxu0 0.0
        %3114 = vmatpush1.msra.mxu0 0.0
        %3115 = vmatprep.subr.mxu0 0.0
        %3116 = vmatpush1.msra.mxu0 0.0
        %3117 = vmatprep.subr.mxu0 0.0
        %3118 = vmatpush1.msra.mxu0 0.0
        %3119 = vmatprep.subr.mxu0 0.0
        %3120 = vmatpush1.msra.mxu0 0.0
        %3121 = vmatprep.subr.mxu0 0.0
        %3122 = vmatpush1.msra.mxu0 0.0
        %3123 = vmatprep.subr.mxu0 0.0
        %3124 = vmatpush1.msra.mxu0 0.0
        %3125 = vmatprep.subr.mxu0 0.0
        %3126 = vmatpush1.msra.mxu0 0.0
        %3127 = vmatprep.subr.mxu0 0.0
        %3128 = vmatpush1.msra.mxu0 %v3101
        %3129 = vmatprep.subr.mxu0 0.0
        %3130 = vmatpush1.msra.mxu0 %v3055
        %3131 = vmatprep.subr.mxu0 0.0
        %3132 = vmatpush1.msra.mxu0 %v3054
        %3133 = vmatprep.subr.mxu0 0.0
        %3134 = vmatpush1.msra.mxu0 %v3053
        %3135 = vmatprep.subr.mxu0 0.0
        %3136 = vmatpush2.msra.mxu0 0.0
        %3137 = vmatprep.subr.mxu0 0.0
        %3138 = vmatpush2.msra.mxu0 0.0
        %3139 = vmatprep.subr.mxu0 0.0
        %3140 = vmatpush2.msra.mxu0 0.0
        %3141 = vmatprep.subr.mxu0 0.0
        %3142 = vmatpush2.msra.mxu0 0.0
        %3143 = vmatprep.subr.mxu0 0.0
        %3144 = vmatpush2.msra.mxu0 0.0
        %3145 = vmatprep.subr.mxu0 0.0
        %3146 = vmatpush2.msra.mxu0 0.0
        %3147 = vmatprep.subr.mxu0 0.0
        %3148 = vmatpush2.msra.mxu0 0.0
        %3149 = vmatprep.subr.mxu0 0.0
        %3150 = vmatpush2.msra.mxu0 0.0
        %3151 = vmatprep.subr.mxu0 0.0
        %3152 = vmatpush2.msra.mxu0 0.0
        %3153 = vmatprep.subr.mxu0 0.0
        %3154 = vmatpush2.msra.mxu0 0.0
        %3155 = vmatprep.subr.mxu0 0.0
        %3156 = vmatpush2.msra.mxu0 0.0
        %3157 = vmatprep.subr.mxu0 0.0
        %3158 = vmatpush2.msra.mxu0 0.0
        %3159 = vmatprep.subr.mxu0 0.0
        %3160 = vmatpush2.msra.mxu0 0.0
        %3161 = vmatprep.subr.mxu0 0.0
        %3162 = vmatpush2.msra.mxu0 0.0
        %3163 = vmatprep.subr.mxu0 0.0
        %3164 = vmatpush2.msra.mxu0 0.0
        %3165 = vmatprep.subr.mxu0 0.0
        %3166 = vmatpush2.msra.mxu0 0.0
        %3167 = vmatprep.mubr.f32.mxu0 0.0
        %3168 = vmatmul.mubr.f32.gmra.mxu0 %v3059
        %v3169 = vpop.f32.mrf.mxu0
        %v3170 = vadd.f32 0.0, %v3169
        %v3171 = vpop.f32.mrf.mxu0
        %3172 = vmatprep.mubr.f32.mxu0 0.0
        %3173 = vmatmul.mubr.f32.gmra.mxu0 %v3062
        %v3174 = vpop.f32.mrf.mxu0
        %v3175 = vadd.f32 0.0, %v3174
        %v3176 = vpop.f32.mrf.mxu0
        %3177 = vmatprep.mubr.f32.mxu0 0.0
        %3178 = vmatmul.mubr.f32.gmra.mxu0 %v3065
        %v3179 = vpop.f32.mrf.mxu0
        %v3180 = vadd.f32 0.0, %v3179
        %v3181 = vpop.f32.mrf.mxu0
        %3182 = vmatprep.mubr.f32.mxu0 0.0
        %3183 = vmatmul.mubr.f32.gmra.mxu0 %v3068
        %v3184 = vpop.f32.mrf.mxu0
        %v3185 = vadd.f32 0.0, %v3184
        %v3186 = vpop.f32.mrf.mxu0
        %3187 = vmatprep.mubr.f32.mxu0 0.0
        %3188 = vmatmul.mubr.f32.gmra.mxu0 %v3071
        %v3189 = vpop.f32.mrf.mxu0
        %v3190 = vadd.f32 0.0, %v3189
        %v3191 = vpop.f32.mrf.mxu0
        %3192 = vmatprep.mubr.f32.mxu0 0.0
        %3193 = vmatmul.mubr.f32.gmra.mxu0 %v3074
        %v3194 = vpop.f32.mrf.mxu0
        %v3195 = vadd.f32 0.0, %v3194
        %v3196 = vpop.f32.mrf.mxu0
        %3197 = vmatprep.mubr.f32.mxu0 0.0
        %3198 = vmatmul.mubr.f32.gmra.mxu0 %v3077
        %v3199 = vpop.f32.mrf.mxu0
        %v3200 = vadd.f32 0.0, %v3199
        %v3201 = vpop.f32.mrf.mxu0
        %3202 = vmatprep.mubr.f32.mxu0 0.0
        %3203 = vmatmul.mubr.f32.gmra.mxu0 %v3080
        %v3204 = vpop.f32.mrf.mxu0
        %v3205 = vadd.f32 0.0, %v3204
        %v3206 = vpop.f32.mrf.mxu0
        %3207 = vmatprep.mubr.f32.mxu0 0.0
        %3208 = vmatmul.mubr.f32.gmra.mxu0 %v3083
        %v3209 = vpop.f32.mrf.mxu0
        %v3210 = vadd.f32 0.0, %v3209
        %v3211 = vpop.f32.mrf.mxu0
        %3212 = vmatprep.mubr.f32.mxu0 0.0
        %3213 = vmatmul.mubr.f32.gmra.mxu0 %v3086
        %v3214 = vpop.f32.mrf.mxu0
        %v3215 = vadd.f32 0.0, %v3214
        %v3216 = vpop.f32.mrf.mxu0
        %3217 = vmatprep.mubr.f32.mxu0 0.0
        %3218 = vmatmul.mubr.f32.gmra.mxu0 %v3089
        %v3219 = vpop.f32.mrf.mxu0
        %v3220 = vadd.f32 0.0, %v3219
        %v3221 = vpop.f32.mrf.mxu0
        %3222 = vmatprep.mubr.f32.mxu0 0.0
        %3223 = vmatmul.mubr.f32.gmra.mxu0 %v3092
        %v3224 = vpop.f32.mrf.mxu0
        %v3225 = vadd.f32 0.0, %v3224
        %v3226 = vpop.f32.mrf.mxu0
        %3227 = vmatprep.mubr.f32.mxu0 0.0
        %3228 = vmatmul.mubr.f32.gmra.mxu0 %v3095
        %v3229 = vpop.f32.mrf.mxu0
        %v3230 = vadd.f32 0.0, %v3229
        %v3231 = vpop.f32.mrf.mxu0
        %3232 = vmatprep.mubr.f32.mxu0 0.0
        %3233 = vmatmul.mubr.f32.gmra.mxu0 %v3098
        %v3234 = vpop.f32.mrf.mxu0
        %v3235 = vadd.f32 0.0, %v3234
        %v3236 = vpop.f32.mrf.mxu0
        %3237 = vdwg.mxu0
        %v3238 = vld [vmem:[#allocation4] sm:$0xff]
        %v3239 = vld [vmem:[#allocation4 + $0x8] sm:$0xff]
        %v3240 = vld [vmem:[#allocation4 + $0x10] sm:$0xff]
        %v3241 = vld [vmem:[#allocation4 + $0x18] sm:$0xff]
        %v3242 = vld [vmem:[#allocation4 + $0x20] sm:$0xff]
        %v3243 = vld [vmem:[#allocation4 + $0x28] sm:$0xff]
        %v3244 = vld [vmem:[#allocation4 + $0x30] sm:$0xff]
        %v3245 = vld [vmem:[#allocation4 + $0x38] sm:$0xff]
        %v3246 = vld [vmem:[#allocation4 + $0x40] sm:$0xff]
        %v3247 = vld [vmem:[#allocation4 + $0x48] sm:$0xff]
        %v3248 = vld [vmem:[#allocation4 + $0x50] sm:$0xff]
        %v3249 = vld [vmem:[#allocation4 + $0x58] sm:$0xff]
        %v3250 = vld [vmem:[#allocation4 + $0x60] sm:$0xff]
        %v3251 = vld [vmem:[#allocation4 + $0x68] sm:$0xff]
        %s3252 = scalar_lea.vmem %s4, 32
        %v3253 = vld [vmem:[%s3252] sm:$0xff]
        %v3254 = vld [vmem:[%s3252 + $0x8] sm:$0xff]
        %v3255 = vld [vmem:[%s3252 + $0x10] sm:$0xff]
        %v3256 = vld [vmem:[%s3252 + $0x18] sm:$0xf]
        %v3258 = vsel %vm740, %v3256, 0
        %3260 = vmatprep.subr.mxu0 0.0
        %3261 = vmatpush1.msra.mxu0 0.0
        %3262 = vmatprep.subr.mxu0 0.0
        %3263 = vmatpush1.msra.mxu0 0.0
        %3264 = vmatprep.subr.mxu0 0.0
        %3265 = vmatpush1.msra.mxu0 0.0
        %3266 = vmatprep.subr.mxu0 0.0
        %3267 = vmatpush1.msra.mxu0 0.0
        %3268 = vmatprep.subr.mxu0 0.0
        %3269 = vmatpush1.msra.mxu0 0.0
        %3270 = vmatprep.subr.mxu0 0.0
        %3271 = vmatpush1.msra.mxu0 0.0
        %3272 = vmatprep.subr.mxu0 0.0
        %3273 = vmatpush1.msra.mxu0 0.0
        %3274 = vmatprep.subr.mxu0 0.0
        %3275 = vmatpush1.msra.mxu0 0.0
        %3276 = vmatprep.subr.mxu0 0.0
        %3277 = vmatpush1.msra.mxu0 0.0
        %3278 = vmatprep.subr.mxu0 0.0
        %3279 = vmatpush1.msra.mxu0 0.0
        %3280 = vmatprep.subr.mxu0 0.0
        %3281 = vmatpush1.msra.mxu0 0.0
        %3282 = vmatprep.subr.mxu0 0.0
        %3283 = vmatpush1.msra.mxu0 0.0
        %3284 = vmatprep.subr.mxu0 0.0
        %3285 = vmatpush1.msra.mxu0 %v3258
        %3286 = vmatprep.subr.mxu0 0.0
        %3287 = vmatpush1.msra.mxu0 %v3255
        %3288 = vmatprep.subr.mxu0 0.0
        %3289 = vmatpush1.msra.mxu0 %v3254
        %3290 = vmatprep.subr.mxu0 0.0
        %3291 = vmatpush1.msra.mxu0 %v3253
        %3292 = vmatprep.subr.mxu0 0.0
        %3293 = vmatpush2.msra.mxu0 0.0
        %3294 = vmatprep.subr.mxu0 0.0
        %3295 = vmatpush2.msra.mxu0 0.0
        %3296 = vmatprep.subr.mxu0 0.0
        %3297 = vmatpush2.msra.mxu0 0.0
        %3298 = vmatprep.subr.mxu0 0.0
        %3299 = vmatpush2.msra.mxu0 0.0
        %3300 = vmatprep.subr.mxu0 0.0
        %3301 = vmatpush2.msra.mxu0 0.0
        %3302 = vmatprep.subr.mxu0 0.0
        %3303 = vmatpush2.msra.mxu0 0.0
        %3304 = vmatprep.subr.mxu0 0.0
        %3305 = vmatpush2.msra.mxu0 0.0
        %3306 = vmatprep.subr.mxu0 0.0
        %3307 = vmatpush2.msra.mxu0 0.0
        %3308 = vmatprep.subr.mxu0 0.0
        %3309 = vmatpush2.msra.mxu0 0.0
        %3310 = vmatprep.subr.mxu0 0.0
        %3311 = vmatpush2.msra.mxu0 0.0
        %3312 = vmatprep.subr.mxu0 0.0
        %3313 = vmatpush2.msra.mxu0 0.0
        %3314 = vmatprep.subr.mxu0 0.0
        %3315 = vmatpush2.msra.mxu0 0.0
        %3316 = vmatprep.subr.mxu0 0.0
        %3317 = vmatpush2.msra.mxu0 0.0
        %3318 = vmatprep.subr.mxu0 0.0
        %3319 = vmatpush2.msra.mxu0 0.0
        %3320 = vmatprep.subr.mxu0 0.0
        %3321 = vmatpush2.msra.mxu0 0.0
        %3322 = vmatprep.subr.mxu0 0.0
        %3323 = vmatpush2.msra.mxu0 0.0
        %3324 = vmatprep.mubr.f32.mxu0 0.0
        %3325 = vmatmul.mubr.f32.gmra.mxu0 %v3059
        %v3326 = vpop.f32.mrf.mxu0
        %v3327 = vadd.f32 0.0, %v3326
        %v3328 = vpop.f32.mrf.mxu0
        %3329 = vmatprep.mubr.f32.mxu0 0.0
        %3330 = vmatmul.mubr.f32.gmra.mxu0 %v3062
        %v3331 = vpop.f32.mrf.mxu0
        %v3332 = vadd.f32 0.0, %v3331
        %v3333 = vpop.f32.mrf.mxu0
        %3334 = vmatprep.mubr.f32.mxu0 0.0
        %3335 = vmatmul.mubr.f32.gmra.mxu0 %v3065
        %v3336 = vpop.f32.mrf.mxu0
        %v3337 = vadd.f32 0.0, %v3336
        %v3338 = vpop.f32.mrf.mxu0
        %3339 = vmatprep.mubr.f32.mxu0 0.0
        %3340 = vmatmul.mubr.f32.gmra.mxu0 %v3068
        %v3341 = vpop.f32.mrf.mxu0
        %v3342 = vadd.f32 0.0, %v3341
        %v3343 = vpop.f32.mrf.mxu0
        %3344 = vmatprep.mubr.f32.mxu0 0.0
        %3345 = vmatmul.mubr.f32.gmra.mxu0 %v3071
        %v3346 = vpop.f32.mrf.mxu0
        %v3347 = vadd.f32 0.0, %v3346
        %v3348 = vpop.f32.mrf.mxu0
        %3349 = vmatprep.mubr.f32.mxu0 0.0
        %3350 = vmatmul.mubr.f32.gmra.mxu0 %v3074
        %v3351 = vpop.f32.mrf.mxu0
        %v3352 = vadd.f32 0.0, %v3351
        %v3353 = vpop.f32.mrf.mxu0
        %3354 = vmatprep.mubr.f32.mxu0 0.0
        %3355 = vmatmul.mubr.f32.gmra.mxu0 %v3077
        %v3356 = vpop.f32.mrf.mxu0
        %v3357 = vadd.f32 0.0, %v3356
        %v3358 = vpop.f32.mrf.mxu0
        %3359 = vmatprep.mubr.f32.mxu0 0.0
        %3360 = vmatmul.mubr.f32.gmra.mxu0 %v3080
        %v3361 = vpop.f32.mrf.mxu0
        %v3362 = vadd.f32 0.0, %v3361
        %v3363 = vpop.f32.mrf.mxu0
        %3364 = vmatprep.mubr.f32.mxu0 0.0
        %3365 = vmatmul.mubr.f32.gmra.mxu0 %v3083
        %v3366 = vpop.f32.mrf.mxu0
        %v3367 = vadd.f32 0.0, %v3366
        %v3368 = vpop.f32.mrf.mxu0
        %3369 = vmatprep.mubr.f32.mxu0 0.0
        %3370 = vmatmul.mubr.f32.gmra.mxu0 %v3086
        %v3371 = vpop.f32.mrf.mxu0
        %v3372 = vadd.f32 0.0, %v3371
        %v3373 = vpop.f32.mrf.mxu0
        %3374 = vmatprep.mubr.f32.mxu0 0.0
        %3375 = vmatmul.mubr.f32.gmra.mxu0 %v3089
        %v3376 = vpop.f32.mrf.mxu0
        %v3377 = vadd.f32 0.0, %v3376
        %v3378 = vpop.f32.mrf.mxu0
        %3379 = vmatprep.mubr.f32.mxu0 0.0
        %3380 = vmatmul.mubr.f32.gmra.mxu0 %v3092
        %v3381 = vpop.f32.mrf.mxu0
        %v3382 = vadd.f32 0.0, %v3381
        %v3383 = vpop.f32.mrf.mxu0
        %3384 = vmatprep.mubr.f32.mxu0 0.0
        %3385 = vmatmul.mubr.f32.gmra.mxu0 %v3095
        %v3386 = vpop.f32.mrf.mxu0
        %v3387 = vadd.f32 0.0, %v3386
        %v3388 = vpop.f32.mrf.mxu0
        %3389 = vmatprep.mubr.f32.mxu0 0.0
        %3390 = vmatmul.mubr.f32.gmra.mxu0 %v3098
        %v3391 = vpop.f32.mrf.mxu0
        %v3392 = vadd.f32 0.0, %v3391
        %v3393 = vpop.f32.mrf.mxu0
        %3394 = vdwg.mxu0
        %s3395 = scalar_lea.vmem [#allocation4], 112
        %v3396 = vld [vmem:[%s3395] sm:$0xff]
        %v3397 = vld [vmem:[%s3395 + $0x8] sm:$0xff]
        %v3398 = vld [vmem:[%s3395 + $0x10] sm:$0xff]
        %v3399 = vld [vmem:[%s3395 + $0x18] sm:$0xff]
        %v3400 = vld [vmem:[%s3395 + $0x20] sm:$0xff]
        %v3401 = vld [vmem:[%s3395 + $0x28] sm:$0xff]
        %v3402 = vld [vmem:[%s3395 + $0x30] sm:$0xff]
        %v3403 = vld [vmem:[%s3395 + $0x38] sm:$0xff]
        %v3404 = vld [vmem:[%s3395 + $0x40] sm:$0xff]
        %v3405 = vld [vmem:[%s3395 + $0x48] sm:$0xff]
        %v3406 = vld [vmem:[%s3395 + $0x50] sm:$0xff]
        %v3407 = vld [vmem:[%s3395 + $0x58] sm:$0xff]
        %v3408 = vld [vmem:[%s3395 + $0x60] sm:$0xff]
        %v3409 = vld [vmem:[%s3395 + $0x68] sm:$0xff]
        %vm3410 = vcmask 916480
        %v3412 = vsel %vm3410, %v3396, 0
        %v3415 = vsel %vm3410, %v3397, 0
        %v3418 = vsel %vm3410, %v3398, 0
        %v3421 = vsel %vm3410, %v3399, 0
        %v3424 = vsel %vm3410, %v3400, 0
        %v3427 = vsel %vm3410, %v3401, 0
        %v3430 = vsel %vm3410, %v3402, 0
        %v3433 = vsel %vm3410, %v3403, 0
        %v3436 = vsel %vm3410, %v3404, 0
        %v3439 = vsel %vm3410, %v3405, 0
        %v3442 = vsel %vm3410, %v3406, 0
        %v3445 = vsel %vm3410, %v3407, 0
        %v3448 = vsel %vm3410, %v3408, 0
        %v3451 = vsel %vm3410, %v3409, 0
        %3453 = vmatprep.subr.mxu0 0.0
        %3454 = vmatpush1.msra.mxu0 0.0
        %3455 = vmatprep.subr.mxu0 0.0
        %3456 = vmatpush1.msra.mxu0 0.0
        %3457 = vmatprep.subr.mxu0 0.0
        %3458 = vmatpush1.msra.mxu0 %v3392
        %3459 = vmatprep.subr.mxu0 0.0
        %3460 = vmatpush1.msra.mxu0 %v3387
        %3461 = vmatprep.subr.mxu0 0.0
        %3462 = vmatpush1.msra.mxu0 %v3382
        %3463 = vmatprep.subr.mxu0 0.0
        %3464 = vmatpush1.msra.mxu0 %v3377
        %3465 = vmatprep.subr.mxu0 0.0
        %3466 = vmatpush1.msra.mxu0 %v3372
        %3467 = vmatprep.subr.mxu0 0.0
        %3468 = vmatpush1.msra.mxu0 %v3367
        %3469 = vmatprep.subr.mxu0 0.0
        %3470 = vmatpush1.msra.mxu0 %v3362
        %3471 = vmatprep.subr.mxu0 0.0
        %3472 = vmatpush1.msra.mxu0 %v3357
        %3473 = vmatprep.subr.mxu0 0.0
        %3474 = vmatpush1.msra.mxu0 %v3352
        %3475 = vmatprep.subr.mxu0 0.0
        %3476 = vmatpush1.msra.mxu0 %v3347
        %3477 = vmatprep.subr.mxu0 0.0
        %3478 = vmatpush1.msra.mxu0 %v3342
        %3479 = vmatprep.subr.mxu0 0.0
        %3480 = vmatpush1.msra.mxu0 %v3337
        %3481 = vmatprep.subr.mxu0 0.0
        %3482 = vmatpush1.msra.mxu0 %v3332
        %3483 = vmatprep.subr.mxu0 0.0
        %3484 = vmatpush1.msra.mxu0 %v3327
        %3485 = vmatprep.subr.mxu0 0.0
        %3486 = vmatpush2.msra.mxu0 0.0
        %3487 = vmatprep.subr.mxu0 0.0
        %3488 = vmatpush2.msra.mxu0 0.0
        %3489 = vmatprep.subr.mxu0 0.0
        %3490 = vmatpush2.msra.mxu0 0.0
        %3491 = vmatprep.subr.mxu0 0.0
        %3492 = vmatpush2.msra.mxu0 0.0
        %3493 = vmatprep.subr.mxu0 0.0
        %3494 = vmatpush2.msra.mxu0 0.0
        %3495 = vmatprep.subr.mxu0 0.0
        %3496 = vmatpush2.msra.mxu0 0.0
        %3497 = vmatprep.subr.mxu0 0.0
        %3498 = vmatpush2.msra.mxu0 0.0
        %3499 = vmatprep.subr.mxu0 0.0
        %3500 = vmatpush2.msra.mxu0 0.0
        %3501 = vmatprep.subr.mxu0 0.0
        %3502 = vmatpush2.msra.mxu0 0.0
        %3503 = vmatprep.subr.mxu0 0.0
        %3504 = vmatpush2.msra.mxu0 0.0
        %3505 = vmatprep.subr.mxu0 0.0
        %3506 = vmatpush2.msra.mxu0 0.0
        %3507 = vmatprep.subr.mxu0 0.0
        %3508 = vmatpush2.msra.mxu0 0.0
        %3509 = vmatprep.subr.mxu0 0.0
        %3510 = vmatpush2.msra.mxu0 0.0
        %3511 = vmatprep.subr.mxu0 0.0
        %3512 = vmatpush2.msra.mxu0 0.0
        %3513 = vmatprep.subr.mxu0 0.0
        %3514 = vmatpush2.msra.mxu0 0.0
        %3515 = vmatprep.subr.mxu0 0.0
        %3516 = vmatpush2.msra.mxu0 0.0
        %3517 = vmatprep.mubr.f32.mxu0 0.0
        %3518 = vmatmul.mubr.f32.gmra.mxu0 %v3412
        %v3519 = vpop.f32.mrf.mxu0
        %v3520 = vadd.f32 0.0, %v3519
        %v3521 = vpop.f32.mrf.mxu0
        %3522 = vmatprep.mubr.f32.mxu0 0.0
        %3523 = vmatmul.mubr.f32.gmra.mxu0 %v3415
        %v3524 = vpop.f32.mrf.mxu0
        %v3525 = vadd.f32 0.0, %v3524
        %v3526 = vpop.f32.mrf.mxu0
        %3527 = vmatprep.mubr.f32.mxu0 0.0
        %3528 = vmatmul.mubr.f32.gmra.mxu0 %v3418
        %v3529 = vpop.f32.mrf.mxu0
        %v3530 = vadd.f32 0.0, %v3529
        %v3531 = vpop.f32.mrf.mxu0
        %3532 = vmatprep.mubr.f32.mxu0 0.0
        %3533 = vmatmul.mubr.f32.gmra.mxu0 %v3421
        %v3534 = vpop.f32.mrf.mxu0
        %v3535 = vadd.f32 0.0, %v3534
        %v3536 = vpop.f32.mrf.mxu0
        %3537 = vmatprep.mubr.f32.mxu0 0.0
        %3538 = vmatmul.mubr.f32.gmra.mxu0 %v3424
        %v3539 = vpop.f32.mrf.mxu0
        %v3540 = vadd.f32 0.0, %v3539
        %v3541 = vpop.f32.mrf.mxu0
        %3542 = vmatprep.mubr.f32.mxu0 0.0
        %3543 = vmatmul.mubr.f32.gmra.mxu0 %v3427
        %v3544 = vpop.f32.mrf.mxu0
        %v3545 = vadd.f32 0.0, %v3544
        %v3546 = vpop.f32.mrf.mxu0
        %3547 = vmatprep.mubr.f32.mxu0 0.0
        %3548 = vmatmul.mubr.f32.gmra.mxu0 %v3430
        %v3549 = vpop.f32.mrf.mxu0
        %v3550 = vadd.f32 0.0, %v3549
        %v3551 = vpop.f32.mrf.mxu0
        %3552 = vmatprep.mubr.f32.mxu0 0.0
        %3553 = vmatmul.mubr.f32.gmra.mxu0 %v3433
        %v3554 = vpop.f32.mrf.mxu0
        %v3555 = vadd.f32 0.0, %v3554
        %v3556 = vpop.f32.mrf.mxu0
        %3557 = vmatprep.mubr.f32.mxu0 0.0
        %3558 = vmatmul.mubr.f32.gmra.mxu0 %v3436
        %v3559 = vpop.f32.mrf.mxu0
        %v3560 = vadd.f32 0.0, %v3559
        %v3561 = vpop.f32.mrf.mxu0
        %3562 = vmatprep.mubr.f32.mxu0 0.0
        %3563 = vmatmul.mubr.f32.gmra.mxu0 %v3439
        %v3564 = vpop.f32.mrf.mxu0
        %v3565 = vadd.f32 0.0, %v3564
        %v3566 = vpop.f32.mrf.mxu0
        %3567 = vmatprep.mubr.f32.mxu0 0.0
        %3568 = vmatmul.mubr.f32.gmra.mxu0 %v3442
        %v3569 = vpop.f32.mrf.mxu0
        %v3570 = vadd.f32 0.0, %v3569
        %v3571 = vpop.f32.mrf.mxu0
        %3572 = vmatprep.mubr.f32.mxu0 0.0
        %3573 = vmatmul.mubr.f32.gmra.mxu0 %v3445
        %v3574 = vpop.f32.mrf.mxu0
        %v3575 = vadd.f32 0.0, %v3574
        %v3576 = vpop.f32.mrf.mxu0
        %3577 = vmatprep.mubr.f32.mxu0 0.0
        %3578 = vmatmul.mubr.f32.gmra.mxu0 %v3448
        %v3579 = vpop.f32.mrf.mxu0
        %v3580 = vadd.f32 0.0, %v3579
        %v3581 = vpop.f32.mrf.mxu0
        %3582 = vmatprep.mubr.f32.mxu0 0.0
        %3583 = vmatmul.mubr.f32.gmra.mxu0 %v3451
        %v3584 = vpop.f32.mrf.mxu0
        %v3585 = vadd.f32 0.0, %v3584
        %v3586 = vpop.f32.mrf.mxu0
        %3587 = vdwg.mxu0
        %v3589 = vsel %vm3410, %v3238, 0
        %v3592 = vsel %vm3410, %v3239, 0
        %v3595 = vsel %vm3410, %v3240, 0
        %v3598 = vsel %vm3410, %v3241, 0
        %v3601 = vsel %vm3410, %v3242, 0
        %v3604 = vsel %vm3410, %v3243, 0
        %v3607 = vsel %vm3410, %v3244, 0
        %v3610 = vsel %vm3410, %v3245, 0
        %v3613 = vsel %vm3410, %v3246, 0
        %v3616 = vsel %vm3410, %v3247, 0
        %v3619 = vsel %vm3410, %v3248, 0
        %v3622 = vsel %vm3410, %v3249, 0
        %v3625 = vsel %vm3410, %v3250, 0
        %v3628 = vsel %vm3410, %v3251, 0
        %3630 = vmatprep.subr.mxu0 0.0
        %3631 = vmatpush1.msra.mxu0 0.0
        %3632 = vmatprep.subr.mxu0 0.0
        %3633 = vmatpush1.msra.mxu0 0.0
        %3634 = vmatprep.subr.mxu0 0.0
        %3635 = vmatpush1.msra.mxu0 %v3235
        %3636 = vmatprep.subr.mxu0 0.0
        %3637 = vmatpush1.msra.mxu0 %v3230
        %3638 = vmatprep.subr.mxu0 0.0
        %3639 = vmatpush1.msra.mxu0 %v3225
        %3640 = vmatprep.subr.mxu0 0.0
        %3641 = vmatpush1.msra.mxu0 %v3220
        %3642 = vmatprep.subr.mxu0 0.0
        %3643 = vmatpush1.msra.mxu0 %v3215
        %3644 = vmatprep.subr.mxu0 0.0
        %3645 = vmatpush1.msra.mxu0 %v3210
        %3646 = vmatprep.subr.mxu0 0.0
        %3647 = vmatpush1.msra.mxu0 %v3205
        %3648 = vmatprep.subr.mxu0 0.0
        %3649 = vmatpush1.msra.mxu0 %v3200
        %3650 = vmatprep.subr.mxu0 0.0
        %3651 = vmatpush1.msra.mxu0 %v3195
        %3652 = vmatprep.subr.mxu0 0.0
        %3653 = vmatpush1.msra.mxu0 %v3190
        %3654 = vmatprep.subr.mxu0 0.0
        %3655 = vmatpush1.msra.mxu0 %v3185
        %3656 = vmatprep.subr.mxu0 0.0
        %3657 = vmatpush1.msra.mxu0 %v3180
        %3658 = vmatprep.subr.mxu0 0.0
        %3659 = vmatpush1.msra.mxu0 %v3175
        %3660 = vmatprep.subr.mxu0 0.0
        %3661 = vmatpush1.msra.mxu0 %v3170
        %3662 = vmatprep.subr.mxu0 0.0
        %3663 = vmatpush2.msra.mxu0 0.0
        %3664 = vmatprep.subr.mxu0 0.0
        %3665 = vmatpush2.msra.mxu0 0.0
        %3666 = vmatprep.subr.mxu0 0.0
        %3667 = vmatpush2.msra.mxu0 0.0
        %3668 = vmatprep.subr.mxu0 0.0
        %3669 = vmatpush2.msra.mxu0 0.0
        %3670 = vmatprep.subr.mxu0 0.0
        %3671 = vmatpush2.msra.mxu0 0.0
        %3672 = vmatprep.subr.mxu0 0.0
        %3673 = vmatpush2.msra.mxu0 0.0
        %3674 = vmatprep.subr.mxu0 0.0
        %3675 = vmatpush2.msra.mxu0 0.0
        %3676 = vmatprep.subr.mxu0 0.0
        %3677 = vmatpush2.msra.mxu0 0.0
        %3678 = vmatprep.subr.mxu0 0.0
        %3679 = vmatpush2.msra.mxu0 0.0
        %3680 = vmatprep.subr.mxu0 0.0
        %3681 = vmatpush2.msra.mxu0 0.0
        %3682 = vmatprep.subr.mxu0 0.0
        %3683 = vmatpush2.msra.mxu0 0.0
        %3684 = vmatprep.subr.mxu0 0.0
        %3685 = vmatpush2.msra.mxu0 0.0
        %3686 = vmatprep.subr.mxu0 0.0
        %3687 = vmatpush2.msra.mxu0 0.0
        %3688 = vmatprep.subr.mxu0 0.0
        %3689 = vmatpush2.msra.mxu0 0.0
        %3690 = vmatprep.subr.mxu0 0.0
        %3691 = vmatpush2.msra.mxu0 0.0
        %3692 = vmatprep.subr.mxu0 0.0
        %3693 = vmatpush2.msra.mxu0 0.0
        %3694 = vmatprep.mubr.f32.mxu0 0.0
        %3695 = vmatmul.mubr.f32.gmra.mxu0 %v3589
        %v3696 = vpop.f32.mrf.mxu0
        %v3697 = vadd.f32 %v3520, %v3696
        %v3698 = vpop.f32.mrf.mxu0
        %3699 = vmatprep.mubr.f32.mxu0 0.0
        %3700 = vmatmul.mubr.f32.gmra.mxu0 %v3592
        %v3701 = vpop.f32.mrf.mxu0
        %v3702 = vadd.f32 %v3525, %v3701
        %v3703 = vpop.f32.mrf.mxu0
        %3704 = vmatprep.mubr.f32.mxu0 0.0
        %3705 = vmatmul.mubr.f32.gmra.mxu0 %v3595
        %v3706 = vpop.f32.mrf.mxu0
        %v3707 = vadd.f32 %v3530, %v3706
        %v3708 = vpop.f32.mrf.mxu0
        %3709 = vmatprep.mubr.f32.mxu0 0.0
        %3710 = vmatmul.mubr.f32.gmra.mxu0 %v3598
        %v3711 = vpop.f32.mrf.mxu0
        %v3712 = vadd.f32 %v3535, %v3711
        %v3713 = vpop.f32.mrf.mxu0
        %3714 = vmatprep.mubr.f32.mxu0 0.0
        %3715 = vmatmul.mubr.f32.gmra.mxu0 %v3601
        %v3716 = vpop.f32.mrf.mxu0
        %v3717 = vadd.f32 %v3540, %v3716
        %v3718 = vpop.f32.mrf.mxu0
        %3719 = vmatprep.mubr.f32.mxu0 0.0
        %3720 = vmatmul.mubr.f32.gmra.mxu0 %v3604
        %v3721 = vpop.f32.mrf.mxu0
        %v3722 = vadd.f32 %v3545, %v3721
        %v3723 = vpop.f32.mrf.mxu0
        %3724 = vmatprep.mubr.f32.mxu0 0.0
        %3725 = vmatmul.mubr.f32.gmra.mxu0 %v3607
        %v3726 = vpop.f32.mrf.mxu0
        %v3727 = vadd.f32 %v3550, %v3726
        %v3728 = vpop.f32.mrf.mxu0
        %3729 = vmatprep.mubr.f32.mxu0 0.0
        %3730 = vmatmul.mubr.f32.gmra.mxu0 %v3610
        %v3731 = vpop.f32.mrf.mxu0
        %v3732 = vadd.f32 %v3555, %v3731
        %v3733 = vpop.f32.mrf.mxu0
        %3734 = vmatprep.mubr.f32.mxu0 0.0
        %3735 = vmatmul.mubr.f32.gmra.mxu0 %v3613
        %v3736 = vpop.f32.mrf.mxu0
        %v3737 = vadd.f32 %v3560, %v3736
        %v3738 = vpop.f32.mrf.mxu0
        %3739 = vmatprep.mubr.f32.mxu0 0.0
        %3740 = vmatmul.mubr.f32.gmra.mxu0 %v3616
        %v3741 = vpop.f32.mrf.mxu0
        %v3742 = vadd.f32 %v3565, %v3741
        %v3743 = vpop.f32.mrf.mxu0
        %3744 = vmatprep.mubr.f32.mxu0 0.0
        %3745 = vmatmul.mubr.f32.gmra.mxu0 %v3619
        %v3746 = vpop.f32.mrf.mxu0
        %v3747 = vadd.f32 %v3570, %v3746
        %v3748 = vpop.f32.mrf.mxu0
        %3749 = vmatprep.mubr.f32.mxu0 0.0
        %3750 = vmatmul.mubr.f32.gmra.mxu0 %v3622
        %v3751 = vpop.f32.mrf.mxu0
        %v3752 = vadd.f32 %v3575, %v3751
        %v3753 = vpop.f32.mrf.mxu0
        %3754 = vmatprep.mubr.f32.mxu0 0.0
        %3755 = vmatmul.mubr.f32.gmra.mxu0 %v3625
        %v3756 = vpop.f32.mrf.mxu0
        %v3757 = vadd.f32 %v3580, %v3756
        %v3758 = vpop.f32.mrf.mxu0
        %3759 = vmatprep.mubr.f32.mxu0 0.0
        %3760 = vmatmul.mubr.f32.gmra.mxu0 %v3628
        %v3761 = vpop.f32.mrf.mxu0
        %v3762 = vadd.f32 %v3585, %v3761
        %v3763 = vpop.f32.mrf.mxu0
        %3764 = vdwg.mxu0
        %s3765 = scalar_lea.vmem %s4, 64
        %v3766 = vld [vmem:[%s3765] sm:$0xff]
        %v3767 = vld [vmem:[%s3765 + $0x8] sm:$0xff]
        %v3768 = vld [vmem:[%s3765 + $0x10] sm:$0xff]
        %v3769 = vld [vmem:[%s3765 + $0x18] sm:$0xf]
        %v3771 = vsel %vm740, %v3769, 0
        %3773 = vmatprep.subr.mxu0 0.0
        %3774 = vmatpush1.msra.mxu0 0.0
        %3775 = vmatprep.subr.mxu0 0.0
        %3776 = vmatpush1.msra.mxu0 0.0
        %3777 = vmatprep.subr.mxu0 0.0
        %3778 = vmatpush1.msra.mxu0 0.0
        %3779 = vmatprep.subr.mxu0 0.0
        %3780 = vmatpush1.msra.mxu0 0.0
        %3781 = vmatprep.subr.mxu0 0.0
        %3782 = vmatpush1.msra.mxu0 0.0
        %3783 = vmatprep.subr.mxu0 0.0
        %3784 = vmatpush1.msra.mxu0 0.0
        %3785 = vmatprep.subr.mxu0 0.0
        %3786 = vmatpush1.msra.mxu0 0.0
        %3787 = vmatprep.subr.mxu0 0.0
        %3788 = vmatpush1.msra.mxu0 0.0
        %3789 = vmatprep.subr.mxu0 0.0
        %3790 = vmatpush1.msra.mxu0 0.0
        %3791 = vmatprep.subr.mxu0 0.0
        %3792 = vmatpush1.msra.mxu0 0.0
        %3793 = vmatprep.subr.mxu0 0.0
        %3794 = vmatpush1.msra.mxu0 0.0
        %3795 = vmatprep.subr.mxu0 0.0
        %3796 = vmatpush1.msra.mxu0 0.0
        %3797 = vmatprep.subr.mxu0 0.0
        %3798 = vmatpush1.msra.mxu0 %v3771
        %3799 = vmatprep.subr.mxu0 0.0
        %3800 = vmatpush1.msra.mxu0 %v3768
        %3801 = vmatprep.subr.mxu0 0.0
        %3802 = vmatpush1.msra.mxu0 %v3767
        %3803 = vmatprep.subr.mxu0 0.0
        %3804 = vmatpush1.msra.mxu0 %v3766
        %3805 = vmatprep.subr.mxu0 0.0
        %3806 = vmatpush2.msra.mxu0 0.0
        %3807 = vmatprep.subr.mxu0 0.0
        %3808 = vmatpush2.msra.mxu0 0.0
        %3809 = vmatprep.subr.mxu0 0.0
        %3810 = vmatpush2.msra.mxu0 0.0
        %3811 = vmatprep.subr.mxu0 0.0
        %3812 = vmatpush2.msra.mxu0 0.0
        %3813 = vmatprep.subr.mxu0 0.0
        %3814 = vmatpush2.msra.mxu0 0.0
        %3815 = vmatprep.subr.mxu0 0.0
        %3816 = vmatpush2.msra.mxu0 0.0
        %3817 = vmatprep.subr.mxu0 0.0
        %3818 = vmatpush2.msra.mxu0 0.0
        %3819 = vmatprep.subr.mxu0 0.0
        %3820 = vmatpush2.msra.mxu0 0.0
        %3821 = vmatprep.subr.mxu0 0.0
        %3822 = vmatpush2.msra.mxu0 0.0
        %3823 = vmatprep.subr.mxu0 0.0
        %3824 = vmatpush2.msra.mxu0 0.0
        %3825 = vmatprep.subr.mxu0 0.0
        %3826 = vmatpush2.msra.mxu0 0.0
        %3827 = vmatprep.subr.mxu0 0.0
        %3828 = vmatpush2.msra.mxu0 0.0
        %3829 = vmatprep.subr.mxu0 0.0
        %3830 = vmatpush2.msra.mxu0 0.0
        %3831 = vmatprep.subr.mxu0 0.0
        %3832 = vmatpush2.msra.mxu0 0.0
        %3833 = vmatprep.subr.mxu0 0.0
        %3834 = vmatpush2.msra.mxu0 0.0
        %3835 = vmatprep.subr.mxu0 0.0
        %3836 = vmatpush2.msra.mxu0 0.0
        %3837 = vmatprep.mubr.f32.mxu0 0.0
        %3838 = vmatmul.mubr.f32.gmra.mxu0 %v3059
        %v3839 = vpop.f32.mrf.mxu0
        %v3840 = vadd.f32 0.0, %v3839
        %v3841 = vpop.f32.mrf.mxu0
        %3842 = vmatprep.mubr.f32.mxu0 0.0
        %3843 = vmatmul.mubr.f32.gmra.mxu0 %v3062
        %v3844 = vpop.f32.mrf.mxu0
        %v3845 = vadd.f32 0.0, %v3844
        %v3846 = vpop.f32.mrf.mxu0
        %3847 = vmatprep.mubr.f32.mxu0 0.0
        %3848 = vmatmul.mubr.f32.gmra.mxu0 %v3065
        %v3849 = vpop.f32.mrf.mxu0
        %v3850 = vadd.f32 0.0, %v3849
        %v3851 = vpop.f32.mrf.mxu0
        %3852 = vmatprep.mubr.f32.mxu0 0.0
        %3853 = vmatmul.mubr.f32.gmra.mxu0 %v3068
        %v3854 = vpop.f32.mrf.mxu0
        %v3855 = vadd.f32 0.0, %v3854
        %v3856 = vpop.f32.mrf.mxu0
        %3857 = vmatprep.mubr.f32.mxu0 0.0
        %3858 = vmatmul.mubr.f32.gmra.mxu0 %v3071
        %v3859 = vpop.f32.mrf.mxu0
        %v3860 = vadd.f32 0.0, %v3859
        %v3861 = vpop.f32.mrf.mxu0
        %3862 = vmatprep.mubr.f32.mxu0 0.0
        %3863 = vmatmul.mubr.f32.gmra.mxu0 %v3074
        %v3864 = vpop.f32.mrf.mxu0
        %v3865 = vadd.f32 0.0, %v3864
        %v3866 = vpop.f32.mrf.mxu0
        %3867 = vmatprep.mubr.f32.mxu0 0.0
        %3868 = vmatmul.mubr.f32.gmra.mxu0 %v3077
        %v3869 = vpop.f32.mrf.mxu0
        %v3870 = vadd.f32 0.0, %v3869
        %v3871 = vpop.f32.mrf.mxu0
        %3872 = vmatprep.mubr.f32.mxu0 0.0
        %3873 = vmatmul.mubr.f32.gmra.mxu0 %v3080
        %v3874 = vpop.f32.mrf.mxu0
        %v3875 = vadd.f32 0.0, %v3874
        %v3876 = vpop.f32.mrf.mxu0
        %3877 = vmatprep.mubr.f32.mxu0 0.0
        %3878 = vmatmul.mubr.f32.gmra.mxu0 %v3083
        %v3879 = vpop.f32.mrf.mxu0
        %v3880 = vadd.f32 0.0, %v3879
        %v3881 = vpop.f32.mrf.mxu0
        %3882 = vmatprep.mubr.f32.mxu0 0.0
        %3883 = vmatmul.mubr.f32.gmra.mxu0 %v3086
        %v3884 = vpop.f32.mrf.mxu0
        %v3885 = vadd.f32 0.0, %v3884
        %v3886 = vpop.f32.mrf.mxu0
        %3887 = vmatprep.mubr.f32.mxu0 0.0
        %3888 = vmatmul.mubr.f32.gmra.mxu0 %v3089
        %v3889 = vpop.f32.mrf.mxu0
        %v3890 = vadd.f32 0.0, %v3889
        %v3891 = vpop.f32.mrf.mxu0
        %3892 = vmatprep.mubr.f32.mxu0 0.0
        %3893 = vmatmul.mubr.f32.gmra.mxu0 %v3092
        %v3894 = vpop.f32.mrf.mxu0
        %v3895 = vadd.f32 0.0, %v3894
        %v3896 = vpop.f32.mrf.mxu0
        %3897 = vmatprep.mubr.f32.mxu0 0.0
        %3898 = vmatmul.mubr.f32.gmra.mxu0 %v3095
        %v3899 = vpop.f32.mrf.mxu0
        %v3900 = vadd.f32 0.0, %v3899
        %v3901 = vpop.f32.mrf.mxu0
        %3902 = vmatprep.mubr.f32.mxu0 0.0
        %3903 = vmatmul.mubr.f32.gmra.mxu0 %v3098
        %v3904 = vpop.f32.mrf.mxu0
        %v3905 = vadd.f32 0.0, %v3904
        %v3906 = vpop.f32.mrf.mxu0
        %3907 = vdwg.mxu0
        %s3908 = scalar_lea.vmem [#allocation4], 224
        %v3909 = vld [vmem:[%s3908] sm:$0xff]
        %v3910 = vld [vmem:[%s3908 + $0x8] sm:$0xff]
        %v3911 = vld [vmem:[%s3908 + $0x10] sm:$0xff]
        %v3912 = vld [vmem:[%s3908 + $0x18] sm:$0xff]
        %v3913 = vld [vmem:[%s3908 + $0x20] sm:$0xff]
        %v3914 = vld [vmem:[%s3908 + $0x28] sm:$0xff]
        %v3915 = vld [vmem:[%s3908 + $0x30] sm:$0xff]
        %v3916 = vld [vmem:[%s3908 + $0x38] sm:$0xff]
        %v3917 = vld [vmem:[%s3908 + $0x40] sm:$0xff]
        %v3918 = vld [vmem:[%s3908 + $0x48] sm:$0xff]
        %v3919 = vld [vmem:[%s3908 + $0x50] sm:$0xff]
        %v3920 = vld [vmem:[%s3908 + $0x58] sm:$0xff]
        %v3921 = vld [vmem:[%s3908 + $0x60] sm:$0xff]
        %v3922 = vld [vmem:[%s3908 + $0x68] sm:$0xff]
        %v3924 = vsel %vm3410, %v3909, 0
        %v3927 = vsel %vm3410, %v3910, 0
        %v3930 = vsel %vm3410, %v3911, 0
        %v3933 = vsel %vm3410, %v3912, 0
        %v3936 = vsel %vm3410, %v3913, 0
        %v3939 = vsel %vm3410, %v3914, 0
        %v3942 = vsel %vm3410, %v3915, 0
        %v3945 = vsel %vm3410, %v3916, 0
        %v3948 = vsel %vm3410, %v3917, 0
        %v3951 = vsel %vm3410, %v3918, 0
        %v3954 = vsel %vm3410, %v3919, 0
        %v3957 = vsel %vm3410, %v3920, 0
        %v3960 = vsel %vm3410, %v3921, 0
        %v3963 = vsel %vm3410, %v3922, 0
        %3965 = vmatprep.subr.mxu0 0.0
        %3966 = vmatpush1.msra.mxu0 0.0
        %3967 = vmatprep.subr.mxu0 0.0
        %3968 = vmatpush1.msra.mxu0 0.0
        %3969 = vmatprep.subr.mxu0 0.0
        %3970 = vmatpush1.msra.mxu0 %v3905
        %3971 = vmatprep.subr.mxu0 0.0
        %3972 = vmatpush1.msra.mxu0 %v3900
        %3973 = vmatprep.subr.mxu0 0.0
        %3974 = vmatpush1.msra.mxu0 %v3895
        %3975 = vmatprep.subr.mxu0 0.0
        %3976 = vmatpush1.msra.mxu0 %v3890
        %3977 = vmatprep.subr.mxu0 0.0
        %3978 = vmatpush1.msra.mxu0 %v3885
        %3979 = vmatprep.subr.mxu0 0.0
        %3980 = vmatpush1.msra.mxu0 %v3880
        %3981 = vmatprep.subr.mxu0 0.0
        %3982 = vmatpush1.msra.mxu0 %v3875
        %3983 = vmatprep.subr.mxu0 0.0
        %3984 = vmatpush1.msra.mxu0 %v3870
        %3985 = vmatprep.subr.mxu0 0.0
        %3986 = vmatpush1.msra.mxu0 %v3865
        %3987 = vmatprep.subr.mxu0 0.0
        %3988 = vmatpush1.msra.mxu0 %v3860
        %3989 = vmatprep.subr.mxu0 0.0
        %3990 = vmatpush1.msra.mxu0 %v3855
        %3991 = vmatprep.subr.mxu0 0.0
        %3992 = vmatpush1.msra.mxu0 %v3850
        %3993 = vmatprep.subr.mxu0 0.0
        %3994 = vmatpush1.msra.mxu0 %v3845
        %3995 = vmatprep.subr.mxu0 0.0
        %3996 = vmatpush1.msra.mxu0 %v3840
        %3997 = vmatprep.subr.mxu0 0.0
        %3998 = vmatpush2.msra.mxu0 0.0
        %3999 = vmatprep.subr.mxu0 0.0
        %4000 = vmatpush2.msra.mxu0 0.0
        %4001 = vmatprep.subr.mxu0 0.0
        %4002 = vmatpush2.msra.mxu0 0.0
        %4003 = vmatprep.subr.mxu0 0.0
        %4004 = vmatpush2.msra.mxu0 0.0
        %4005 = vmatprep.subr.mxu0 0.0
        %4006 = vmatpush2.msra.mxu0 0.0
        %4007 = vmatprep.subr.mxu0 0.0
        %4008 = vmatpush2.msra.mxu0 0.0
        %4009 = vmatprep.subr.mxu0 0.0
        %4010 = vmatpush2.msra.mxu0 0.0
        %4011 = vmatprep.subr.mxu0 0.0
        %4012 = vmatpush2.msra.mxu0 0.0
        %4013 = vmatprep.subr.mxu0 0.0
        %4014 = vmatpush2.msra.mxu0 0.0
        %4015 = vmatprep.subr.mxu0 0.0
        %4016 = vmatpush2.msra.mxu0 0.0
        %4017 = vmatprep.subr.mxu0 0.0
        %4018 = vmatpush2.msra.mxu0 0.0
        %4019 = vmatprep.subr.mxu0 0.0
        %4020 = vmatpush2.msra.mxu0 0.0
        %4021 = vmatprep.subr.mxu0 0.0
        %4022 = vmatpush2.msra.mxu0 0.0
        %4023 = vmatprep.subr.mxu0 0.0
        %4024 = vmatpush2.msra.mxu0 0.0
        %4025 = vmatprep.subr.mxu0 0.0
        %4026 = vmatpush2.msra.mxu0 0.0
        %4027 = vmatprep.subr.mxu0 0.0
        %4028 = vmatpush2.msra.mxu0 0.0
        %4029 = vmatprep.mubr.f32.mxu0 0.0
        %4030 = vmatmul.mubr.f32.gmra.mxu0 %v3924
        %v4031 = vpop.f32.mrf.mxu0
        %v4032 = vadd.f32 0.0, %v4031
        %v4033 = vpop.f32.mrf.mxu0
        %4034 = vmatprep.mubr.f32.mxu0 0.0
        %4035 = vmatmul.mubr.f32.gmra.mxu0 %v3927
        %v4036 = vpop.f32.mrf.mxu0
        %v4037 = vadd.f32 0.0, %v4036
        %v4038 = vpop.f32.mrf.mxu0
        %4039 = vmatprep.mubr.f32.mxu0 0.0
        %4040 = vmatmul.mubr.f32.gmra.mxu0 %v3930
        %v4041 = vpop.f32.mrf.mxu0
        %v4042 = vadd.f32 0.0, %v4041
        %v4043 = vpop.f32.mrf.mxu0
        %4044 = vmatprep.mubr.f32.mxu0 0.0
        %4045 = vmatmul.mubr.f32.gmra.mxu0 %v3933
        %v4046 = vpop.f32.mrf.mxu0
        %v4047 = vadd.f32 0.0, %v4046
        %v4048 = vpop.f32.mrf.mxu0
        %4049 = vmatprep.mubr.f32.mxu0 0.0
        %4050 = vmatmul.mubr.f32.gmra.mxu0 %v3936
        %v4051 = vpop.f32.mrf.mxu0
        %v4052 = vadd.f32 0.0, %v4051
        %v4053 = vpop.f32.mrf.mxu0
        %4054 = vmatprep.mubr.f32.mxu0 0.0
        %4055 = vmatmul.mubr.f32.gmra.mxu0 %v3939
        %v4056 = vpop.f32.mrf.mxu0
        %v4057 = vadd.f32 0.0, %v4056
        %v4058 = vpop.f32.mrf.mxu0
        %4059 = vmatprep.mubr.f32.mxu0 0.0
        %4060 = vmatmul.mubr.f32.gmra.mxu0 %v3942
        %v4061 = vpop.f32.mrf.mxu0
        %v4062 = vadd.f32 0.0, %v4061
        %v4063 = vpop.f32.mrf.mxu0
        %4064 = vmatprep.mubr.f32.mxu0 0.0
        %4065 = vmatmul.mubr.f32.gmra.mxu0 %v3945
        %v4066 = vpop.f32.mrf.mxu0
        %v4067 = vadd.f32 0.0, %v4066
        %v4068 = vpop.f32.mrf.mxu0
        %4069 = vmatprep.mubr.f32.mxu0 0.0
        %4070 = vmatmul.mubr.f32.gmra.mxu0 %v3948
        %v4071 = vpop.f32.mrf.mxu0
        %v4072 = vadd.f32 0.0, %v4071
        %v4073 = vpop.f32.mrf.mxu0
        %4074 = vmatprep.mubr.f32.mxu0 0.0
        %4075 = vmatmul.mubr.f32.gmra.mxu0 %v3951
        %v4076 = vpop.f32.mrf.mxu0
        %v4077 = vadd.f32 0.0, %v4076
        %v4078 = vpop.f32.mrf.mxu0
        %4079 = vmatprep.mubr.f32.mxu0 0.0
        %4080 = vmatmul.mubr.f32.gmra.mxu0 %v3954
        %v4081 = vpop.f32.mrf.mxu0
        %v4082 = vadd.f32 0.0, %v4081
        %v4083 = vpop.f32.mrf.mxu0
        %4084 = vmatprep.mubr.f32.mxu0 0.0
        %4085 = vmatmul.mubr.f32.gmra.mxu0 %v3957
        %v4086 = vpop.f32.mrf.mxu0
        %v4087 = vadd.f32 0.0, %v4086
        %v4088 = vpop.f32.mrf.mxu0
        %4089 = vmatprep.mubr.f32.mxu0 0.0
        %4090 = vmatmul.mubr.f32.gmra.mxu0 %v3960
        %v4091 = vpop.f32.mrf.mxu0
        %v4092 = vadd.f32 0.0, %v4091
        %v4093 = vpop.f32.mrf.mxu0
        %4094 = vmatprep.mubr.f32.mxu0 0.0
        %4095 = vmatmul.mubr.f32.gmra.mxu0 %v3963
        %v4096 = vpop.f32.mrf.mxu0
        %v4097 = vadd.f32 0.0, %v4096
        %v4098 = vpop.f32.mrf.mxu0
        %4099 = vdwg.mxu0
        %v4100 = vadd.f32 %v3697, %v4032
        %v4101 = vadd.f32 %v3702, %v4037
        %v4102 = vadd.f32 %v3707, %v4042
        %v4103 = vadd.f32 %v3712, %v4047
        %v4104 = vadd.f32 %v3717, %v4052
        %v4105 = vadd.f32 %v3722, %v4057
        %v4106 = vadd.f32 %v3727, %v4062
        %v4107 = vadd.f32 %v3732, %v4067
        %v4108 = vadd.f32 %v3737, %v4072
        %v4109 = vadd.f32 %v3742, %v4077
        %v4110 = vadd.f32 %v3747, %v4082
        %v4111 = vadd.f32 %v3752, %v4087
        %v4112 = vadd.f32 %v3757, %v4092
        %v4113 = vadd.f32 %v3762, %v4097
        %s4114 = scalar_lea.vmem %s4, 96
        %v4115 = vld [vmem:[%s4114] sm:$0xff]
        %v4116 = vld [vmem:[%s4114 + $0x8] sm:$0xff]
        %v4117 = vld [vmem:[%s4114 + $0x10] sm:$0xff]
        %v4118 = vld [vmem:[%s4114 + $0x18] sm:$0xf]
        %v4120 = vsel %vm740, %v4118, 0
        %4122 = vmatprep.subr.mxu0 0.0
        %4123 = vmatpush1.msra.mxu0 0.0
        %4124 = vmatprep.subr.mxu0 0.0
        %4125 = vmatpush1.msra.mxu0 0.0
        %4126 = vmatprep.subr.mxu0 0.0
        %4127 = vmatpush1.msra.mxu0 0.0
        %4128 = vmatprep.subr.mxu0 0.0
        %4129 = vmatpush1.msra.mxu0 0.0
        %4130 = vmatprep.subr.mxu0 0.0
        %4131 = vmatpush1.msra.mxu0 0.0
        %4132 = vmatprep.subr.mxu0 0.0
        %4133 = vmatpush1.msra.mxu0 0.0
        %4134 = vmatprep.subr.mxu0 0.0
        %4135 = vmatpush1.msra.mxu0 0.0
        %4136 = vmatprep.subr.mxu0 0.0
        %4137 = vmatpush1.msra.mxu0 0.0
        %4138 = vmatprep.subr.mxu0 0.0
        %4139 = vmatpush1.msra.mxu0 0.0
        %4140 = vmatprep.subr.mxu0 0.0
        %4141 = vmatpush1.msra.mxu0 0.0
        %4142 = vmatprep.subr.mxu0 0.0
        %4143 = vmatpush1.msra.mxu0 0.0
        %4144 = vmatprep.subr.mxu0 0.0
        %4145 = vmatpush1.msra.mxu0 0.0
        %4146 = vmatprep.subr.mxu0 0.0
        %4147 = vmatpush1.msra.mxu0 %v4120
        %4148 = vmatprep.subr.mxu0 0.0
        %4149 = vmatpush1.msra.mxu0 %v4117
        %4150 = vmatprep.subr.mxu0 0.0
        %4151 = vmatpush1.msra.mxu0 %v4116
        %4152 = vmatprep.subr.mxu0 0.0
        %4153 = vmatpush1.msra.mxu0 %v4115
        %4154 = vmatprep.subr.mxu0 0.0
        %4155 = vmatpush2.msra.mxu0 0.0
        %4156 = vmatprep.subr.mxu0 0.0
        %4157 = vmatpush2.msra.mxu0 0.0
        %4158 = vmatprep.subr.mxu0 0.0
        %4159 = vmatpush2.msra.mxu0 0.0
        %4160 = vmatprep.subr.mxu0 0.0
        %4161 = vmatpush2.msra.mxu0 0.0
        %4162 = vmatprep.subr.mxu0 0.0
        %4163 = vmatpush2.msra.mxu0 0.0
        %4164 = vmatprep.subr.mxu0 0.0
        %4165 = vmatpush2.msra.mxu0 0.0
        %4166 = vmatprep.subr.mxu0 0.0
        %4167 = vmatpush2.msra.mxu0 0.0
        %4168 = vmatprep.subr.mxu0 0.0
        %4169 = vmatpush2.msra.mxu0 0.0
        %4170 = vmatprep.subr.mxu0 0.0
        %4171 = vmatpush2.msra.mxu0 0.0
        %4172 = vmatprep.subr.mxu0 0.0
        %4173 = vmatpush2.msra.mxu0 0.0
        %4174 = vmatprep.subr.mxu0 0.0
        %4175 = vmatpush2.msra.mxu0 0.0
        %4176 = vmatprep.subr.mxu0 0.0
        %4177 = vmatpush2.msra.mxu0 0.0
        %4178 = vmatprep.subr.mxu0 0.0
        %4179 = vmatpush2.msra.mxu0 0.0
        %4180 = vmatprep.subr.mxu0 0.0
        %4181 = vmatpush2.msra.mxu0 0.0
        %4182 = vmatprep.subr.mxu0 0.0
        %4183 = vmatpush2.msra.mxu0 0.0
        %4184 = vmatprep.subr.mxu0 0.0
        %4185 = vmatpush2.msra.mxu0 0.0
        %4186 = vmatprep.mubr.f32.mxu0 0.0
        %4187 = vmatmul.mubr.f32.gmra.mxu0 %v3059
        %v4188 = vpop.f32.mrf.mxu0
        %v4189 = vadd.f32 0.0, %v4188
        %v4190 = vpop.f32.mrf.mxu0
        %4191 = vmatprep.mubr.f32.mxu0 0.0
        %4192 = vmatmul.mubr.f32.gmra.mxu0 %v3062
        %v4193 = vpop.f32.mrf.mxu0
        %v4194 = vadd.f32 0.0, %v4193
        %v4195 = vpop.f32.mrf.mxu0
        %4196 = vmatprep.mubr.f32.mxu0 0.0
        %4197 = vmatmul.mubr.f32.gmra.mxu0 %v3065
        %v4198 = vpop.f32.mrf.mxu0
        %v4199 = vadd.f32 0.0, %v4198
        %v4200 = vpop.f32.mrf.mxu0
        %4201 = vmatprep.mubr.f32.mxu0 0.0
        %4202 = vmatmul.mubr.f32.gmra.mxu0 %v3068
        %v4203 = vpop.f32.mrf.mxu0
        %v4204 = vadd.f32 0.0, %v4203
        %v4205 = vpop.f32.mrf.mxu0
        %4206 = vmatprep.mubr.f32.mxu0 0.0
        %4207 = vmatmul.mubr.f32.gmra.mxu0 %v3071
        %v4208 = vpop.f32.mrf.mxu0
        %v4209 = vadd.f32 0.0, %v4208
        %v4210 = vpop.f32.mrf.mxu0
        %4211 = vmatprep.mubr.f32.mxu0 0.0
        %4212 = vmatmul.mubr.f32.gmra.mxu0 %v3074
        %v4213 = vpop.f32.mrf.mxu0
        %v4214 = vadd.f32 0.0, %v4213
        %v4215 = vpop.f32.mrf.mxu0
        %4216 = vmatprep.mubr.f32.mxu0 0.0
        %4217 = vmatmul.mubr.f32.gmra.mxu0 %v3077
        %v4218 = vpop.f32.mrf.mxu0
        %v4219 = vadd.f32 0.0, %v4218
        %v4220 = vpop.f32.mrf.mxu0
        %4221 = vmatprep.mubr.f32.mxu0 0.0
        %4222 = vmatmul.mubr.f32.gmra.mxu0 %v3080
        %v4223 = vpop.f32.mrf.mxu0
        %v4224 = vadd.f32 0.0, %v4223
        %v4225 = vpop.f32.mrf.mxu0
        %4226 = vmatprep.mubr.f32.mxu0 0.0
        %4227 = vmatmul.mubr.f32.gmra.mxu0 %v3083
        %v4228 = vpop.f32.mrf.mxu0
        %v4229 = vadd.f32 0.0, %v4228
        %v4230 = vpop.f32.mrf.mxu0
        %4231 = vmatprep.mubr.f32.mxu0 0.0
        %4232 = vmatmul.mubr.f32.gmra.mxu0 %v3086
        %v4233 = vpop.f32.mrf.mxu0
        %v4234 = vadd.f32 0.0, %v4233
        %v4235 = vpop.f32.mrf.mxu0
        %4236 = vmatprep.mubr.f32.mxu0 0.0
        %4237 = vmatmul.mubr.f32.gmra.mxu0 %v3089
        %v4238 = vpop.f32.mrf.mxu0
        %v4239 = vadd.f32 0.0, %v4238
        %v4240 = vpop.f32.mrf.mxu0
        %4241 = vmatprep.mubr.f32.mxu0 0.0
        %4242 = vmatmul.mubr.f32.gmra.mxu0 %v3092
        %v4243 = vpop.f32.mrf.mxu0
        %v4244 = vadd.f32 0.0, %v4243
        %v4245 = vpop.f32.mrf.mxu0
        %4246 = vmatprep.mubr.f32.mxu0 0.0
        %4247 = vmatmul.mubr.f32.gmra.mxu0 %v3095
        %v4248 = vpop.f32.mrf.mxu0
        %v4249 = vadd.f32 0.0, %v4248
        %v4250 = vpop.f32.mrf.mxu0
        %4251 = vmatprep.mubr.f32.mxu0 0.0
        %4252 = vmatmul.mubr.f32.gmra.mxu0 %v3098
        %v4253 = vpop.f32.mrf.mxu0
        %v4254 = vadd.f32 0.0, %v4253
        %v4255 = vpop.f32.mrf.mxu0
        %4256 = vdwg.mxu0
        %s4257 = scalar_lea.vmem [#allocation4], 336
        %v4258 = vld [vmem:[%s4257] sm:$0xff]
        %v4259 = vld [vmem:[%s4257 + $0x8] sm:$0xff]
        %v4260 = vld [vmem:[%s4257 + $0x10] sm:$0xff]
        %v4261 = vld [vmem:[%s4257 + $0x18] sm:$0xff]
        %v4262 = vld [vmem:[%s4257 + $0x20] sm:$0xff]
        %v4263 = vld [vmem:[%s4257 + $0x28] sm:$0xff]
        %v4264 = vld [vmem:[%s4257 + $0x30] sm:$0xff]
        %v4265 = vld [vmem:[%s4257 + $0x38] sm:$0xff]
        %v4266 = vld [vmem:[%s4257 + $0x40] sm:$0xff]
        %v4267 = vld [vmem:[%s4257 + $0x48] sm:$0xff]
        %v4268 = vld [vmem:[%s4257 + $0x50] sm:$0xff]
        %v4269 = vld [vmem:[%s4257 + $0x58] sm:$0xff]
        %v4270 = vld [vmem:[%s4257 + $0x60] sm:$0xff]
        %v4271 = vld [vmem:[%s4257 + $0x68] sm:$0xff]
        %v4273 = vsel %vm3410, %v4258, 0
        %v4276 = vsel %vm3410, %v4259, 0
        %v4279 = vsel %vm3410, %v4260, 0
        %v4282 = vsel %vm3410, %v4261, 0
        %v4285 = vsel %vm3410, %v4262, 0
        %v4288 = vsel %vm3410, %v4263, 0
        %v4291 = vsel %vm3410, %v4264, 0
        %v4294 = vsel %vm3410, %v4265, 0
        %v4297 = vsel %vm3410, %v4266, 0
        %v4300 = vsel %vm3410, %v4267, 0
        %v4303 = vsel %vm3410, %v4268, 0
        %v4306 = vsel %vm3410, %v4269, 0
        %v4309 = vsel %vm3410, %v4270, 0
        %v4312 = vsel %vm3410, %v4271, 0
        %4314 = vmatprep.subr.mxu0 0.0
        %4315 = vmatpush1.msra.mxu0 0.0
        %4316 = vmatprep.subr.mxu0 0.0
        %4317 = vmatpush1.msra.mxu0 0.0
        %4318 = vmatprep.subr.mxu0 0.0
        %4319 = vmatpush1.msra.mxu0 %v4254
        %4320 = vmatprep.subr.mxu0 0.0
        %4321 = vmatpush1.msra.mxu0 %v4249
        %4322 = vmatprep.subr.mxu0 0.0
        %4323 = vmatpush1.msra.mxu0 %v4244
        %4324 = vmatprep.subr.mxu0 0.0
        %4325 = vmatpush1.msra.mxu0 %v4239
        %4326 = vmatprep.subr.mxu0 0.0
        %4327 = vmatpush1.msra.mxu0 %v4234
        %4328 = vmatprep.subr.mxu0 0.0
        %4329 = vmatpush1.msra.mxu0 %v4229
        %4330 = vmatprep.subr.mxu0 0.0
        %4331 = vmatpush1.msra.mxu0 %v4224
        %4332 = vmatprep.subr.mxu0 0.0
        %4333 = vmatpush1.msra.mxu0 %v4219
        %4334 = vmatprep.subr.mxu0 0.0
        %4335 = vmatpush1.msra.mxu0 %v4214
        %4336 = vmatprep.subr.mxu0 0.0
        %4337 = vmatpush1.msra.mxu0 %v4209
        %4338 = vmatprep.subr.mxu0 0.0
        %4339 = vmatpush1.msra.mxu0 %v4204
        %4340 = vmatprep.subr.mxu0 0.0
        %4341 = vmatpush1.msra.mxu0 %v4199
        %4342 = vmatprep.subr.mxu0 0.0
        %4343 = vmatpush1.msra.mxu0 %v4194
        %4344 = vmatprep.subr.mxu0 0.0
        %4345 = vmatpush1.msra.mxu0 %v4189
        %4346 = vmatprep.subr.mxu0 0.0
        %4347 = vmatpush2.msra.mxu0 0.0
        %4348 = vmatprep.subr.mxu0 0.0
        %4349 = vmatpush2.msra.mxu0 0.0
        %4350 = vmatprep.subr.mxu0 0.0
        %4351 = vmatpush2.msra.mxu0 0.0
        %4352 = vmatprep.subr.mxu0 0.0
        %4353 = vmatpush2.msra.mxu0 0.0
        %4354 = vmatprep.subr.mxu0 0.0
        %4355 = vmatpush2.msra.mxu0 0.0
        %4356 = vmatprep.subr.mxu0 0.0
        %4357 = vmatpush2.msra.mxu0 0.0
        %4358 = vmatprep.subr.mxu0 0.0
        %4359 = vmatpush2.msra.mxu0 0.0
        %4360 = vmatprep.subr.mxu0 0.0
        %4361 = vmatpush2.msra.mxu0 0.0
        %4362 = vmatprep.subr.mxu0 0.0
        %4363 = vmatpush2.msra.mxu0 0.0
        %4364 = vmatprep.subr.mxu0 0.0
        %4365 = vmatpush2.msra.mxu0 0.0
        %4366 = vmatprep.subr.mxu0 0.0
        %4367 = vmatpush2.msra.mxu0 0.0
        %4368 = vmatprep.subr.mxu0 0.0
        %4369 = vmatpush2.msra.mxu0 0.0
        %4370 = vmatprep.subr.mxu0 0.0
        %4371 = vmatpush2.msra.mxu0 0.0
        %4372 = vmatprep.subr.mxu0 0.0
        %4373 = vmatpush2.msra.mxu0 0.0
        %4374 = vmatprep.subr.mxu0 0.0
        %4375 = vmatpush2.msra.mxu0 0.0
        %4376 = vmatprep.subr.mxu0 0.0
        %4377 = vmatpush2.msra.mxu0 0.0
        %4378 = vmatprep.mubr.f32.mxu0 0.0
        %4379 = vmatmul.mubr.f32.gmra.mxu0 %v4273
        %v4380 = vpop.f32.mrf.mxu0
        %v4381 = vadd.f32 0.0, %v4380
        %v4382 = vpop.f32.mrf.mxu0
        %4383 = vmatprep.mubr.f32.mxu0 0.0
        %4384 = vmatmul.mubr.f32.gmra.mxu0 %v4276
        %v4385 = vpop.f32.mrf.mxu0
        %v4386 = vadd.f32 0.0, %v4385
        %v4387 = vpop.f32.mrf.mxu0
        %4388 = vmatprep.mubr.f32.mxu0 0.0
        %4389 = vmatmul.mubr.f32.gmra.mxu0 %v4279
        %v4390 = vpop.f32.mrf.mxu0
        %v4391 = vadd.f32 0.0, %v4390
        %v4392 = vpop.f32.mrf.mxu0
        %4393 = vmatprep.mubr.f32.mxu0 0.0
        %4394 = vmatmul.mubr.f32.gmra.mxu0 %v4282
        %v4395 = vpop.f32.mrf.mxu0
        %v4396 = vadd.f32 0.0, %v4395
        %v4397 = vpop.f32.mrf.mxu0
        %4398 = vmatprep.mubr.f32.mxu0 0.0
        %4399 = vmatmul.mubr.f32.gmra.mxu0 %v4285
        %v4400 = vpop.f32.mrf.mxu0
        %v4401 = vadd.f32 0.0, %v4400
        %v4402 = vpop.f32.mrf.mxu0
        %4403 = vmatprep.mubr.f32.mxu0 0.0
        %4404 = vmatmul.mubr.f32.gmra.mxu0 %v4288
        %v4405 = vpop.f32.mrf.mxu0
        %v4406 = vadd.f32 0.0, %v4405
        %v4407 = vpop.f32.mrf.mxu0
        %4408 = vmatprep.mubr.f32.mxu0 0.0
        %4409 = vmatmul.mubr.f32.gmra.mxu0 %v4291
        %v4410 = vpop.f32.mrf.mxu0
        %v4411 = vadd.f32 0.0, %v4410
        %v4412 = vpop.f32.mrf.mxu0
        %4413 = vmatprep.mubr.f32.mxu0 0.0
        %4414 = vmatmul.mubr.f32.gmra.mxu0 %v4294
        %v4415 = vpop.f32.mrf.mxu0
        %v4416 = vadd.f32 0.0, %v4415
        %v4417 = vpop.f32.mrf.mxu0
        %4418 = vmatprep.mubr.f32.mxu0 0.0
        %4419 = vmatmul.mubr.f32.gmra.mxu0 %v4297
        %v4420 = vpop.f32.mrf.mxu0
        %v4421 = vadd.f32 0.0, %v4420
        %v4422 = vpop.f32.mrf.mxu0
        %4423 = vmatprep.mubr.f32.mxu0 0.0
        %4424 = vmatmul.mubr.f32.gmra.mxu0 %v4300
        %v4425 = vpop.f32.mrf.mxu0
        %v4426 = vadd.f32 0.0, %v4425
        %v4427 = vpop.f32.mrf.mxu0
        %4428 = vmatprep.mubr.f32.mxu0 0.0
        %4429 = vmatmul.mubr.f32.gmra.mxu0 %v4303
        %v4430 = vpop.f32.mrf.mxu0
        %v4431 = vadd.f32 0.0, %v4430
        %v4432 = vpop.f32.mrf.mxu0
        %4433 = vmatprep.mubr.f32.mxu0 0.0
        %4434 = vmatmul.mubr.f32.gmra.mxu0 %v4306
        %v4435 = vpop.f32.mrf.mxu0
        %v4436 = vadd.f32 0.0, %v4435
        %v4437 = vpop.f32.mrf.mxu0
        %4438 = vmatprep.mubr.f32.mxu0 0.0
        %4439 = vmatmul.mubr.f32.gmra.mxu0 %v4309
        %v4440 = vpop.f32.mrf.mxu0
        %v4441 = vadd.f32 0.0, %v4440
        %v4442 = vpop.f32.mrf.mxu0
        %4443 = vmatprep.mubr.f32.mxu0 0.0
        %4444 = vmatmul.mubr.f32.gmra.mxu0 %v4312
        %v4445 = vpop.f32.mrf.mxu0
        %v4446 = vadd.f32 0.0, %v4445
        %v4447 = vpop.f32.mrf.mxu0
        %4448 = vdwg.mxu0
        %v4449 = vadd.f32 %v4100, %v4381
        %v4450 = vadd.f32 %v4101, %v4386
        %v4451 = vadd.f32 %v4102, %v4391
        %v4452 = vadd.f32 %v4103, %v4396
        %v4453 = vadd.f32 %v4104, %v4401
        %v4454 = vadd.f32 %v4105, %v4406
        %v4455 = vadd.f32 %v4106, %v4411
        %v4456 = vadd.f32 %v4107, %v4416
        %v4457 = vadd.f32 %v4108, %v4421
        %v4458 = vadd.f32 %v4109, %v4426
        %v4459 = vadd.f32 %v4110, %v4431
        %v4460 = vadd.f32 %v4111, %v4436
        %v4461 = vadd.f32 %v4112, %v4441
        %v4462 = vadd.f32 %v4113, %v4446
        %v4463 = vld [vmem:[%s5] sm:$0xff]
        %v4464 = vld [vmem:[%s5 + $0x8] sm:$0xff]
        %v4465 = vld [vmem:[%s5 + $0x10] sm:$0xff]
        %v4466 = vld [vmem:[%s5 + $0x18] sm:$0xff]
        %v4467 = vld [vmem:[%s5 + $0x20] sm:$0xff]
        %v4468 = vld [vmem:[%s5 + $0x28] sm:$0xff]
        %v4469 = vld [vmem:[%s5 + $0x30] sm:$0xff]
        %v4470 = vld [vmem:[%s5 + $0x38] sm:$0xff]
        %v4471 = vld [vmem:[%s5 + $0x40] sm:$0xff]
        %v4472 = vld [vmem:[%s5 + $0x48] sm:$0xff]
        %v4473 = vld [vmem:[%s5 + $0x50] sm:$0xff]
        %v4474 = vld [vmem:[%s5 + $0x58] sm:$0xff]
        %v4475 = vld [vmem:[%s5 + $0x60] sm:$0xff]
        %v4476 = vld [vmem:[%s5 + $0x68] sm:$0xff]
        %4478 = vset.pattern.permute.xlu0 0
        %4479 = vperm.xlu0 %4478, %v4463
        %v4480 = vpop.permute.xlu0 %4479
        %4483 = vset.pattern.permute.xlu0 0
        %4484 = vperm.xlu0 %4483, %v4464
        %v4485 = vpop.permute.xlu0 %4484
        %4488 = vset.pattern.permute.xlu0 0
        %4489 = vperm.xlu0 %4488, %v4465
        %v4490 = vpop.permute.xlu0 %4489
        %4493 = vset.pattern.permute.xlu0 0
        %4494 = vperm.xlu0 %4493, %v4466
        %v4495 = vpop.permute.xlu0 %4494
        %4498 = vset.pattern.permute.xlu0 0
        %4499 = vperm.xlu0 %4498, %v4467
        %v4500 = vpop.permute.xlu0 %4499
        %4503 = vset.pattern.permute.xlu0 0
        %4504 = vperm.xlu0 %4503, %v4468
        %v4505 = vpop.permute.xlu0 %4504
        %4508 = vset.pattern.permute.xlu0 0
        %4509 = vperm.xlu0 %4508, %v4469
        %v4510 = vpop.permute.xlu0 %4509
        %4513 = vset.pattern.permute.xlu0 0
        %4514 = vperm.xlu0 %4513, %v4470
        %v4515 = vpop.permute.xlu0 %4514
        %4518 = vset.pattern.permute.xlu0 0
        %4519 = vperm.xlu0 %4518, %v4471
        %v4520 = vpop.permute.xlu0 %4519
        %4523 = vset.pattern.permute.xlu0 0
        %4524 = vperm.xlu0 %4523, %v4472
        %v4525 = vpop.permute.xlu0 %4524
        %4528 = vset.pattern.permute.xlu0 0
        %4529 = vperm.xlu0 %4528, %v4473
        %v4530 = vpop.permute.xlu0 %4529
        %4533 = vset.pattern.permute.xlu0 0
        %4534 = vperm.xlu0 %4533, %v4474
        %v4535 = vpop.permute.xlu0 %4534
        %4538 = vset.pattern.permute.xlu0 0
        %4539 = vperm.xlu0 %4538, %v4475
        %v4540 = vpop.permute.xlu0 %4539
        %4543 = vset.pattern.permute.xlu0 0
        %4544 = vperm.xlu0 %4543, %v4476
        %v4545 = vpop.permute.xlu0 %4544
        %v4547 = vadd.f32 %v4449, %v4480
        %v4548 = vadd.f32 %v4450, %v4485
        %v4549 = vadd.f32 %v4451, %v4490
        %v4550 = vadd.f32 %v4452, %v4495
        %v4551 = vadd.f32 %v4453, %v4500
        %v4552 = vadd.f32 %v4454, %v4505
        %v4553 = vadd.f32 %v4455, %v4510
        %v4554 = vadd.f32 %v4456, %v4515
        %v4555 = vadd.f32 %v4457, %v4520
        %v4556 = vadd.f32 %v4458, %v4525
        %v4557 = vadd.f32 %v4459, %v4530
        %v4558 = vadd.f32 %v4460, %v4535
        %v4559 = vadd.f32 %v4461, %v4540
        %v4560 = vadd.f32 %v4462, %v4545
        %vm4561 = vcmp.ge.f32.partialorder %v4547, 0.0
        %vm4562 = vcmp.ge.f32.partialorder %v4548, 0.0
        %vm4563 = vcmp.ge.f32.partialorder %v4549, 0.0
        %vm4564 = vcmp.ge.f32.partialorder %v4550, 0.0
        %vm4565 = vcmp.ge.f32.partialorder %v4551, 0.0
        %vm4566 = vcmp.ge.f32.partialorder %v4552, 0.0
        %vm4567 = vcmp.ge.f32.partialorder %v4553, 0.0
        %vm4568 = vcmp.ge.f32.partialorder %v4554, 0.0
        %vm4569 = vcmp.ge.f32.partialorder %v4555, 0.0
        %vm4570 = vcmp.ge.f32.partialorder %v4556, 0.0
        %vm4571 = vcmp.ge.f32.partialorder %v4557, 0.0
        %vm4572 = vcmp.ge.f32.partialorder %v4558, 0.0
        %vm4573 = vcmp.ge.f32.partialorder %v4559, 0.0
        %vm4574 = vcmp.ge.f32.partialorder %v4560, 0.0
        %v4575 = vmul.f32 %v4547, 0.01
        %v4576 = vmul.f32 %v4548, 0.01
        %v4577 = vmul.f32 %v4549, 0.01
        %v4578 = vmul.f32 %v4550, 0.01
        %v4579 = vmul.f32 %v4551, 0.01
        %v4580 = vmul.f32 %v4552, 0.01
        %v4581 = vmul.f32 %v4553, 0.01
        %v4582 = vmul.f32 %v4554, 0.01
        %v4583 = vmul.f32 %v4555, 0.01
        %v4584 = vmul.f32 %v4556, 0.01
        %v4585 = vmul.f32 %v4557, 0.01
        %v4586 = vmul.f32 %v4558, 0.01
        %v4587 = vmul.f32 %v4559, 0.01
        %v4588 = vmul.f32 %v4560, 0.01
        %v4589 = vsel %vm4561, %v4547, %v4575
        %v4590 = vsel %vm4562, %v4548, %v4576
        %v4591 = vsel %vm4563, %v4549, %v4577
        %v4592 = vsel %vm4564, %v4550, %v4578
        %v4593 = vsel %vm4565, %v4551, %v4579
        %v4594 = vsel %vm4566, %v4552, %v4580
        %v4595 = vsel %vm4567, %v4553, %v4581
        %v4596 = vsel %vm4568, %v4554, %v4582
        %v4597 = vsel %vm4569, %v4555, %v4583
        %v4598 = vsel %vm4570, %v4556, %v4584
        %v4599 = vsel %vm4571, %v4557, %v4585
        %v4600 = vsel %vm4572, %v4558, %v4586
        %v4601 = vsel %vm4573, %v4559, %v4587
        %v4602 = vsel %vm4574, %v4560, %v4588
        %v4603 = vld [vmem:[%s7] sm:$0xff]
        %v4604 = vld [vmem:[%s7 + $0x8] sm:$0x3f]
        %vm4605 = vcmask 113664
        %v4607 = vsel %vm4605, %v4589, 0
        %v4610 = vsel %vm4605, %v4590, 0
        %v4613 = vsel %vm4605, %v4591, 0
        %v4616 = vsel %vm4605, %v4592, 0
        %v4619 = vsel %vm4605, %v4593, 0
        %v4622 = vsel %vm4605, %v4594, 0
        %v4625 = vsel %vm4605, %v4595, 0
        %v4628 = vsel %vm4605, %v4596, 0
        %v4631 = vsel %vm4605, %v4597, 0
        %v4634 = vsel %vm4605, %v4598, 0
        %v4637 = vsel %vm4605, %v4599, 0
        %v4640 = vsel %vm4605, %v4600, 0
        %v4643 = vsel %vm4605, %v4601, 0
        %v4646 = vsel %vm4605, %v4602, 0
        %vm4648 = vcmask 1045504
        %v4650 = vsel %vm4648, %v4604, 0
        %4652 = vmatprep.subr.mxu0 0.0
        %4653 = vmatpush1.msra.mxu0 0.0
        %4654 = vmatprep.subr.mxu0 0.0
        %4655 = vmatpush1.msra.mxu0 0.0
        %4656 = vmatprep.subr.mxu0 0.0
        %4657 = vmatpush1.msra.mxu0 0.0
        %4658 = vmatprep.subr.mxu0 0.0
        %4659 = vmatpush1.msra.mxu0 0.0
        %4660 = vmatprep.subr.mxu0 0.0
        %4661 = vmatpush1.msra.mxu0 0.0
        %4662 = vmatprep.subr.mxu0 0.0
        %4663 = vmatpush1.msra.mxu0 0.0
        %4664 = vmatprep.subr.mxu0 0.0
        %4665 = vmatpush1.msra.mxu0 0.0
        %4666 = vmatprep.subr.mxu0 0.0
        %4667 = vmatpush1.msra.mxu0 0.0
        %4668 = vmatprep.subr.mxu0 0.0
        %4669 = vmatpush1.msra.mxu0 0.0
        %4670 = vmatprep.subr.mxu0 0.0
        %4671 = vmatpush1.msra.mxu0 0.0
        %4672 = vmatprep.subr.mxu0 0.0
        %4673 = vmatpush1.msra.mxu0 0.0
        %4674 = vmatprep.subr.mxu0 0.0
        %4675 = vmatpush1.msra.mxu0 0.0
        %4676 = vmatprep.subr.mxu0 0.0
        %4677 = vmatpush1.msra.mxu0 0.0
        %4678 = vmatprep.subr.mxu0 0.0
        %4679 = vmatpush1.msra.mxu0 0.0
        %4680 = vmatprep.subr.mxu0 0.0
        %4681 = vmatpush1.msra.mxu0 %v4650
        %4682 = vmatprep.subr.mxu0 0.0
        %4683 = vmatpush1.msra.mxu0 %v4603
        %4684 = vmatprep.subr.mxu0 0.0
        %4685 = vmatpush2.msra.mxu0 0.0
        %4686 = vmatprep.subr.mxu0 0.0
        %4687 = vmatpush2.msra.mxu0 0.0
        %4688 = vmatprep.subr.mxu0 0.0
        %4689 = vmatpush2.msra.mxu0 0.0
        %4690 = vmatprep.subr.mxu0 0.0
        %4691 = vmatpush2.msra.mxu0 0.0
        %4692 = vmatprep.subr.mxu0 0.0
        %4693 = vmatpush2.msra.mxu0 0.0
        %4694 = vmatprep.subr.mxu0 0.0
        %4695 = vmatpush2.msra.mxu0 0.0
        %4696 = vmatprep.subr.mxu0 0.0
        %4697 = vmatpush2.msra.mxu0 0.0
        %4698 = vmatprep.subr.mxu0 0.0
        %4699 = vmatpush2.msra.mxu0 0.0
        %4700 = vmatprep.subr.mxu0 0.0
        %4701 = vmatpush2.msra.mxu0 0.0
        %4702 = vmatprep.subr.mxu0 0.0
        %4703 = vmatpush2.msra.mxu0 0.0
        %4704 = vmatprep.subr.mxu0 0.0
        %4705 = vmatpush2.msra.mxu0 0.0
        %4706 = vmatprep.subr.mxu0 0.0
        %4707 = vmatpush2.msra.mxu0 0.0
        %4708 = vmatprep.subr.mxu0 0.0
        %4709 = vmatpush2.msra.mxu0 0.0
        %4710 = vmatprep.subr.mxu0 0.0
        %4711 = vmatpush2.msra.mxu0 0.0
        %4712 = vmatprep.subr.mxu0 0.0
        %4713 = vmatpush2.msra.mxu0 0.0
        %4714 = vmatprep.subr.mxu0 0.0
        %4715 = vmatpush2.msra.mxu0 0.0
        %4716 = vmatprep.mubr.f32.mxu0 0.0
        %4717 = vmatmul.mubr.f32.gmra.mxu0 %v4607
        %v4718 = vpop.f32.mrf.mxu0
        %v4719 = vadd.f32 0.0, %v4718
        %v4720 = vpop.f32.mrf.mxu0
        %4721 = vmatprep.mubr.f32.mxu0 0.0
        %4722 = vmatmul.mubr.f32.gmra.mxu0 %v4610
        %v4723 = vpop.f32.mrf.mxu0
        %v4724 = vadd.f32 0.0, %v4723
        %v4725 = vpop.f32.mrf.mxu0
        %4726 = vmatprep.mubr.f32.mxu0 0.0
        %4727 = vmatmul.mubr.f32.gmra.mxu0 %v4613
        %v4728 = vpop.f32.mrf.mxu0
        %v4729 = vadd.f32 0.0, %v4728
        %v4730 = vpop.f32.mrf.mxu0
        %4731 = vmatprep.mubr.f32.mxu0 0.0
        %4732 = vmatmul.mubr.f32.gmra.mxu0 %v4616
        %v4733 = vpop.f32.mrf.mxu0
        %v4734 = vadd.f32 0.0, %v4733
        %v4735 = vpop.f32.mrf.mxu0
        %4736 = vmatprep.mubr.f32.mxu0 0.0
        %4737 = vmatmul.mubr.f32.gmra.mxu0 %v4619
        %v4738 = vpop.f32.mrf.mxu0
        %v4739 = vadd.f32 0.0, %v4738
        %v4740 = vpop.f32.mrf.mxu0
        %4741 = vmatprep.mubr.f32.mxu0 0.0
        %4742 = vmatmul.mubr.f32.gmra.mxu0 %v4622
        %v4743 = vpop.f32.mrf.mxu0
        %v4744 = vadd.f32 0.0, %v4743
        %v4745 = vpop.f32.mrf.mxu0
        %4746 = vmatprep.mubr.f32.mxu0 0.0
        %4747 = vmatmul.mubr.f32.gmra.mxu0 %v4625
        %v4748 = vpop.f32.mrf.mxu0
        %v4749 = vadd.f32 0.0, %v4748
        %v4750 = vpop.f32.mrf.mxu0
        %4751 = vmatprep.mubr.f32.mxu0 0.0
        %4752 = vmatmul.mubr.f32.gmra.mxu0 %v4628
        %v4753 = vpop.f32.mrf.mxu0
        %v4754 = vadd.f32 0.0, %v4753
        %v4755 = vpop.f32.mrf.mxu0
        %4756 = vmatprep.mubr.f32.mxu0 0.0
        %4757 = vmatmul.mubr.f32.gmra.mxu0 %v4631
        %v4758 = vpop.f32.mrf.mxu0
        %v4759 = vadd.f32 0.0, %v4758
        %v4760 = vpop.f32.mrf.mxu0
        %4761 = vmatprep.mubr.f32.mxu0 0.0
        %4762 = vmatmul.mubr.f32.gmra.mxu0 %v4634
        %v4763 = vpop.f32.mrf.mxu0
        %v4764 = vadd.f32 0.0, %v4763
        %v4765 = vpop.f32.mrf.mxu0
        %4766 = vmatprep.mubr.f32.mxu0 0.0
        %4767 = vmatmul.mubr.f32.gmra.mxu0 %v4637
        %v4768 = vpop.f32.mrf.mxu0
        %v4769 = vadd.f32 0.0, %v4768
        %v4770 = vpop.f32.mrf.mxu0
        %4771 = vmatprep.mubr.f32.mxu0 0.0
        %4772 = vmatmul.mubr.f32.gmra.mxu0 %v4640
        %v4773 = vpop.f32.mrf.mxu0
        %v4774 = vadd.f32 0.0, %v4773
        %v4775 = vpop.f32.mrf.mxu0
        %4776 = vmatprep.mubr.f32.mxu0 0.0
        %4777 = vmatmul.mubr.f32.gmra.mxu0 %v4643
        %v4778 = vpop.f32.mrf.mxu0
        %v4779 = vadd.f32 0.0, %v4778
        %v4780 = vpop.f32.mrf.mxu0
        %4781 = vmatprep.mubr.f32.mxu0 0.0
        %4782 = vmatmul.mubr.f32.gmra.mxu0 %v4646
        %v4783 = vpop.f32.mrf.mxu0
        %v4784 = vadd.f32 0.0, %v4783
        %v4785 = vpop.f32.mrf.mxu0
        %4786 = vdwg.mxu0
        %v4787 = vld [vmem:[#allocation6] sm:$0xff]
        %v4788 = vld [vmem:[#allocation6 + $0x8] sm:$0xff]
        %v4789 = vld [vmem:[#allocation6 + $0x10] sm:$0xff]
        %v4790 = vld [vmem:[#allocation6 + $0x18] sm:$0xff]
        %v4791 = vld [vmem:[#allocation6 + $0x20] sm:$0xff]
        %v4792 = vld [vmem:[#allocation6 + $0x28] sm:$0xff]
        %v4793 = vld [vmem:[#allocation6 + $0x30] sm:$0xff]
        %v4794 = vld [vmem:[#allocation6 + $0x38] sm:$0xff]
        %v4795 = vld [vmem:[#allocation6 + $0x40] sm:$0xff]
        %v4796 = vld [vmem:[#allocation6 + $0x48] sm:$0xff]
        %v4797 = vld [vmem:[#allocation6 + $0x50] sm:$0xff]
        %v4798 = vld [vmem:[#allocation6 + $0x58] sm:$0xff]
        %v4799 = vld [vmem:[#allocation6 + $0x60] sm:$0xff]
        %v4800 = vld [vmem:[#allocation6 + $0x68] sm:$0xff]
        %s4801 = scalar_lea.vmem %s7, 16
        %v4802 = vld [vmem:[%s4801] sm:$0xff]
        %v4803 = vld [vmem:[%s4801 + $0x8] sm:$0x3f]
        %v4805 = vsel %vm4648, %v4803, 0
        %4807 = vmatprep.subr.mxu0 0.0
        %4808 = vmatpush1.msra.mxu0 0.0
        %4809 = vmatprep.subr.mxu0 0.0
        %4810 = vmatpush1.msra.mxu0 0.0
        %4811 = vmatprep.subr.mxu0 0.0
        %4812 = vmatpush1.msra.mxu0 0.0
        %4813 = vmatprep.subr.mxu0 0.0
        %4814 = vmatpush1.msra.mxu0 0.0
        %4815 = vmatprep.subr.mxu0 0.0
        %4816 = vmatpush1.msra.mxu0 0.0
        %4817 = vmatprep.subr.mxu0 0.0
        %4818 = vmatpush1.msra.mxu0 0.0
        %4819 = vmatprep.subr.mxu0 0.0
        %4820 = vmatpush1.msra.mxu0 0.0
        %4821 = vmatprep.subr.mxu0 0.0
        %4822 = vmatpush1.msra.mxu0 0.0
        %4823 = vmatprep.subr.mxu0 0.0
        %4824 = vmatpush1.msra.mxu0 0.0
        %4825 = vmatprep.subr.mxu0 0.0
        %4826 = vmatpush1.msra.mxu0 0.0
        %4827 = vmatprep.subr.mxu0 0.0
        %4828 = vmatpush1.msra.mxu0 0.0
        %4829 = vmatprep.subr.mxu0 0.0
        %4830 = vmatpush1.msra.mxu0 0.0
        %4831 = vmatprep.subr.mxu0 0.0
        %4832 = vmatpush1.msra.mxu0 0.0
        %4833 = vmatprep.subr.mxu0 0.0
        %4834 = vmatpush1.msra.mxu0 0.0
        %4835 = vmatprep.subr.mxu0 0.0
        %4836 = vmatpush1.msra.mxu0 %v4805
        %4837 = vmatprep.subr.mxu0 0.0
        %4838 = vmatpush1.msra.mxu0 %v4802
        %4839 = vmatprep.subr.mxu0 0.0
        %4840 = vmatpush2.msra.mxu0 0.0
        %4841 = vmatprep.subr.mxu0 0.0
        %4842 = vmatpush2.msra.mxu0 0.0
        %4843 = vmatprep.subr.mxu0 0.0
        %4844 = vmatpush2.msra.mxu0 0.0
        %4845 = vmatprep.subr.mxu0 0.0
        %4846 = vmatpush2.msra.mxu0 0.0
        %4847 = vmatprep.subr.mxu0 0.0
        %4848 = vmatpush2.msra.mxu0 0.0
        %4849 = vmatprep.subr.mxu0 0.0
        %4850 = vmatpush2.msra.mxu0 0.0
        %4851 = vmatprep.subr.mxu0 0.0
        %4852 = vmatpush2.msra.mxu0 0.0
        %4853 = vmatprep.subr.mxu0 0.0
        %4854 = vmatpush2.msra.mxu0 0.0
        %4855 = vmatprep.subr.mxu0 0.0
        %4856 = vmatpush2.msra.mxu0 0.0
        %4857 = vmatprep.subr.mxu0 0.0
        %4858 = vmatpush2.msra.mxu0 0.0
        %4859 = vmatprep.subr.mxu0 0.0
        %4860 = vmatpush2.msra.mxu0 0.0
        %4861 = vmatprep.subr.mxu0 0.0
        %4862 = vmatpush2.msra.mxu0 0.0
        %4863 = vmatprep.subr.mxu0 0.0
        %4864 = vmatpush2.msra.mxu0 0.0
        %4865 = vmatprep.subr.mxu0 0.0
        %4866 = vmatpush2.msra.mxu0 0.0
        %4867 = vmatprep.subr.mxu0 0.0
        %4868 = vmatpush2.msra.mxu0 0.0
        %4869 = vmatprep.subr.mxu0 0.0
        %4870 = vmatpush2.msra.mxu0 0.0
        %4871 = vmatprep.mubr.f32.mxu0 0.0
        %4872 = vmatmul.mubr.f32.gmra.mxu0 %v4607
        %v4873 = vpop.f32.mrf.mxu0
        %v4874 = vadd.f32 0.0, %v4873
        %v4875 = vpop.f32.mrf.mxu0
        %4876 = vmatprep.mubr.f32.mxu0 0.0
        %4877 = vmatmul.mubr.f32.gmra.mxu0 %v4610
        %v4878 = vpop.f32.mrf.mxu0
        %v4879 = vadd.f32 0.0, %v4878
        %v4880 = vpop.f32.mrf.mxu0
        %4881 = vmatprep.mubr.f32.mxu0 0.0
        %4882 = vmatmul.mubr.f32.gmra.mxu0 %v4613
        %v4883 = vpop.f32.mrf.mxu0
        %v4884 = vadd.f32 0.0, %v4883
        %v4885 = vpop.f32.mrf.mxu0
        %4886 = vmatprep.mubr.f32.mxu0 0.0
        %4887 = vmatmul.mubr.f32.gmra.mxu0 %v4616
        %v4888 = vpop.f32.mrf.mxu0
        %v4889 = vadd.f32 0.0, %v4888
        %v4890 = vpop.f32.mrf.mxu0
        %4891 = vmatprep.mubr.f32.mxu0 0.0
        %4892 = vmatmul.mubr.f32.gmra.mxu0 %v4619
        %v4893 = vpop.f32.mrf.mxu0
        %v4894 = vadd.f32 0.0, %v4893
        %v4895 = vpop.f32.mrf.mxu0
        %4896 = vmatprep.mubr.f32.mxu0 0.0
        %4897 = vmatmul.mubr.f32.gmra.mxu0 %v4622
        %v4898 = vpop.f32.mrf.mxu0
        %v4899 = vadd.f32 0.0, %v4898
        %v4900 = vpop.f32.mrf.mxu0
        %4901 = vmatprep.mubr.f32.mxu0 0.0
        %4902 = vmatmul.mubr.f32.gmra.mxu0 %v4625
        %v4903 = vpop.f32.mrf.mxu0
        %v4904 = vadd.f32 0.0, %v4903
        %v4905 = vpop.f32.mrf.mxu0
        %4906 = vmatprep.mubr.f32.mxu0 0.0
        %4907 = vmatmul.mubr.f32.gmra.mxu0 %v4628
        %v4908 = vpop.f32.mrf.mxu0
        %v4909 = vadd.f32 0.0, %v4908
        %v4910 = vpop.f32.mrf.mxu0
        %4911 = vmatprep.mubr.f32.mxu0 0.0
        %4912 = vmatmul.mubr.f32.gmra.mxu0 %v4631
        %v4913 = vpop.f32.mrf.mxu0
        %v4914 = vadd.f32 0.0, %v4913
        %v4915 = vpop.f32.mrf.mxu0
        %4916 = vmatprep.mubr.f32.mxu0 0.0
        %4917 = vmatmul.mubr.f32.gmra.mxu0 %v4634
        %v4918 = vpop.f32.mrf.mxu0
        %v4919 = vadd.f32 0.0, %v4918
        %v4920 = vpop.f32.mrf.mxu0
        %4921 = vmatprep.mubr.f32.mxu0 0.0
        %4922 = vmatmul.mubr.f32.gmra.mxu0 %v4637
        %v4923 = vpop.f32.mrf.mxu0
        %v4924 = vadd.f32 0.0, %v4923
        %v4925 = vpop.f32.mrf.mxu0
        %4926 = vmatprep.mubr.f32.mxu0 0.0
        %4927 = vmatmul.mubr.f32.gmra.mxu0 %v4640
        %v4928 = vpop.f32.mrf.mxu0
        %v4929 = vadd.f32 0.0, %v4928
        %v4930 = vpop.f32.mrf.mxu0
        %4931 = vmatprep.mubr.f32.mxu0 0.0
        %4932 = vmatmul.mubr.f32.gmra.mxu0 %v4643
        %v4933 = vpop.f32.mrf.mxu0
        %v4934 = vadd.f32 0.0, %v4933
        %v4935 = vpop.f32.mrf.mxu0
        %4936 = vmatprep.mubr.f32.mxu0 0.0
        %4937 = vmatmul.mubr.f32.gmra.mxu0 %v4646
        %v4938 = vpop.f32.mrf.mxu0
        %v4939 = vadd.f32 0.0, %v4938
        %v4940 = vpop.f32.mrf.mxu0
        %4941 = vdwg.mxu0
        %s4942 = scalar_lea.vmem [#allocation6], 112
        %v4943 = vld [vmem:[%s4942] sm:$0xff]
        %v4944 = vld [vmem:[%s4942 + $0x8] sm:$0xff]
        %v4945 = vld [vmem:[%s4942 + $0x10] sm:$0xff]
        %v4946 = vld [vmem:[%s4942 + $0x18] sm:$0xff]
        %v4947 = vld [vmem:[%s4942 + $0x20] sm:$0xff]
        %v4948 = vld [vmem:[%s4942 + $0x28] sm:$0xff]
        %v4949 = vld [vmem:[%s4942 + $0x30] sm:$0xff]
        %v4950 = vld [vmem:[%s4942 + $0x38] sm:$0xff]
        %v4951 = vld [vmem:[%s4942 + $0x40] sm:$0xff]
        %v4952 = vld [vmem:[%s4942 + $0x48] sm:$0xff]
        %v4953 = vld [vmem:[%s4942 + $0x50] sm:$0xff]
        %v4954 = vld [vmem:[%s4942 + $0x58] sm:$0xff]
        %v4955 = vld [vmem:[%s4942 + $0x60] sm:$0xff]
        %v4956 = vld [vmem:[%s4942 + $0x68] sm:$0xff]
        %v4958 = vsel %vm3410, %v4943, 0
        %v4961 = vsel %vm3410, %v4944, 0
        %v4964 = vsel %vm3410, %v4945, 0
        %v4967 = vsel %vm3410, %v4946, 0
        %v4970 = vsel %vm3410, %v4947, 0
        %v4973 = vsel %vm3410, %v4948, 0
        %v4976 = vsel %vm3410, %v4949, 0
        %v4979 = vsel %vm3410, %v4950, 0
        %v4982 = vsel %vm3410, %v4951, 0
        %v4985 = vsel %vm3410, %v4952, 0
        %v4988 = vsel %vm3410, %v4953, 0
        %v4991 = vsel %vm3410, %v4954, 0
        %v4994 = vsel %vm3410, %v4955, 0
        %v4997 = vsel %vm3410, %v4956, 0
        %4999 = vmatprep.subr.mxu0 0.0
        %5000 = vmatpush1.msra.mxu0 0.0
        %5001 = vmatprep.subr.mxu0 0.0
        %5002 = vmatpush1.msra.mxu0 0.0
        %5003 = vmatprep.subr.mxu0 0.0
        %5004 = vmatpush1.msra.mxu0 %v4939
        %5005 = vmatprep.subr.mxu0 0.0
        %5006 = vmatpush1.msra.mxu0 %v4934
        %5007 = vmatprep.subr.mxu0 0.0
        %5008 = vmatpush1.msra.mxu0 %v4929
        %5009 = vmatprep.subr.mxu0 0.0
        %5010 = vmatpush1.msra.mxu0 %v4924
        %5011 = vmatprep.subr.mxu0 0.0
        %5012 = vmatpush1.msra.mxu0 %v4919
        %5013 = vmatprep.subr.mxu0 0.0
        %5014 = vmatpush1.msra.mxu0 %v4914
        %5015 = vmatprep.subr.mxu0 0.0
        %5016 = vmatpush1.msra.mxu0 %v4909
        %5017 = vmatprep.subr.mxu0 0.0
        %5018 = vmatpush1.msra.mxu0 %v4904
        %5019 = vmatprep.subr.mxu0 0.0
        %5020 = vmatpush1.msra.mxu0 %v4899
        %5021 = vmatprep.subr.mxu0 0.0
        %5022 = vmatpush1.msra.mxu0 %v4894
        %5023 = vmatprep.subr.mxu0 0.0
        %5024 = vmatpush1.msra.mxu0 %v4889
        %5025 = vmatprep.subr.mxu0 0.0
        %5026 = vmatpush1.msra.mxu0 %v4884
        %5027 = vmatprep.subr.mxu0 0.0
        %5028 = vmatpush1.msra.mxu0 %v4879
        %5029 = vmatprep.subr.mxu0 0.0
        %5030 = vmatpush1.msra.mxu0 %v4874
        %5031 = vmatprep.subr.mxu0 0.0
        %5032 = vmatpush2.msra.mxu0 0.0
        %5033 = vmatprep.subr.mxu0 0.0
        %5034 = vmatpush2.msra.mxu0 0.0
        %5035 = vmatprep.subr.mxu0 0.0
        %5036 = vmatpush2.msra.mxu0 0.0
        %5037 = vmatprep.subr.mxu0 0.0
        %5038 = vmatpush2.msra.mxu0 0.0
        %5039 = vmatprep.subr.mxu0 0.0
        %5040 = vmatpush2.msra.mxu0 0.0
        %5041 = vmatprep.subr.mxu0 0.0
        %5042 = vmatpush2.msra.mxu0 0.0
        %5043 = vmatprep.subr.mxu0 0.0
        %5044 = vmatpush2.msra.mxu0 0.0
        %5045 = vmatprep.subr.mxu0 0.0
        %5046 = vmatpush2.msra.mxu0 0.0
        %5047 = vmatprep.subr.mxu0 0.0
        %5048 = vmatpush2.msra.mxu0 0.0
        %5049 = vmatprep.subr.mxu0 0.0
        %5050 = vmatpush2.msra.mxu0 0.0
        %5051 = vmatprep.subr.mxu0 0.0
        %5052 = vmatpush2.msra.mxu0 0.0
        %5053 = vmatprep.subr.mxu0 0.0
        %5054 = vmatpush2.msra.mxu0 0.0
        %5055 = vmatprep.subr.mxu0 0.0
        %5056 = vmatpush2.msra.mxu0 0.0
        %5057 = vmatprep.subr.mxu0 0.0
        %5058 = vmatpush2.msra.mxu0 0.0
        %5059 = vmatprep.subr.mxu0 0.0
        %5060 = vmatpush2.msra.mxu0 0.0
        %5061 = vmatprep.subr.mxu0 0.0
        %5062 = vmatpush2.msra.mxu0 0.0
        %5063 = vmatprep.mubr.f32.mxu0 0.0
        %5064 = vmatmul.mubr.f32.gmra.mxu0 %v4958
        %v5065 = vpop.f32.mrf.mxu0
        %v5066 = vadd.f32 0.0, %v5065
        %v5067 = vpop.f32.mrf.mxu0
        %5068 = vmatprep.mubr.f32.mxu0 0.0
        %5069 = vmatmul.mubr.f32.gmra.mxu0 %v4961
        %v5070 = vpop.f32.mrf.mxu0
        %v5071 = vadd.f32 0.0, %v5070
        %v5072 = vpop.f32.mrf.mxu0
        %5073 = vmatprep.mubr.f32.mxu0 0.0
        %5074 = vmatmul.mubr.f32.gmra.mxu0 %v4964
        %v5075 = vpop.f32.mrf.mxu0
        %v5076 = vadd.f32 0.0, %v5075
        %v5077 = vpop.f32.mrf.mxu0
        %5078 = vmatprep.mubr.f32.mxu0 0.0
        %5079 = vmatmul.mubr.f32.gmra.mxu0 %v4967
        %v5080 = vpop.f32.mrf.mxu0
        %v5081 = vadd.f32 0.0, %v5080
        %v5082 = vpop.f32.mrf.mxu0
        %5083 = vmatprep.mubr.f32.mxu0 0.0
        %5084 = vmatmul.mubr.f32.gmra.mxu0 %v4970
        %v5085 = vpop.f32.mrf.mxu0
        %v5086 = vadd.f32 0.0, %v5085
        %v5087 = vpop.f32.mrf.mxu0
        %5088 = vmatprep.mubr.f32.mxu0 0.0
        %5089 = vmatmul.mubr.f32.gmra.mxu0 %v4973
        %v5090 = vpop.f32.mrf.mxu0
        %v5091 = vadd.f32 0.0, %v5090
        %v5092 = vpop.f32.mrf.mxu0
        %5093 = vmatprep.mubr.f32.mxu0 0.0
        %5094 = vmatmul.mubr.f32.gmra.mxu0 %v4976
        %v5095 = vpop.f32.mrf.mxu0
        %v5096 = vadd.f32 0.0, %v5095
        %v5097 = vpop.f32.mrf.mxu0
        %5098 = vmatprep.mubr.f32.mxu0 0.0
        %5099 = vmatmul.mubr.f32.gmra.mxu0 %v4979
        %v5100 = vpop.f32.mrf.mxu0
        %v5101 = vadd.f32 0.0, %v5100
        %v5102 = vpop.f32.mrf.mxu0
        %5103 = vmatprep.mubr.f32.mxu0 0.0
        %5104 = vmatmul.mubr.f32.gmra.mxu0 %v4982
        %v5105 = vpop.f32.mrf.mxu0
        %v5106 = vadd.f32 0.0, %v5105
        %v5107 = vpop.f32.mrf.mxu0
        %5108 = vmatprep.mubr.f32.mxu0 0.0
        %5109 = vmatmul.mubr.f32.gmra.mxu0 %v4985
        %v5110 = vpop.f32.mrf.mxu0
        %v5111 = vadd.f32 0.0, %v5110
        %v5112 = vpop.f32.mrf.mxu0
        %5113 = vmatprep.mubr.f32.mxu0 0.0
        %5114 = vmatmul.mubr.f32.gmra.mxu0 %v4988
        %v5115 = vpop.f32.mrf.mxu0
        %v5116 = vadd.f32 0.0, %v5115
        %v5117 = vpop.f32.mrf.mxu0
        %5118 = vmatprep.mubr.f32.mxu0 0.0
        %5119 = vmatmul.mubr.f32.gmra.mxu0 %v4991
        %v5120 = vpop.f32.mrf.mxu0
        %v5121 = vadd.f32 0.0, %v5120
        %v5122 = vpop.f32.mrf.mxu0
        %5123 = vmatprep.mubr.f32.mxu0 0.0
        %5124 = vmatmul.mubr.f32.gmra.mxu0 %v4994
        %v5125 = vpop.f32.mrf.mxu0
        %v5126 = vadd.f32 0.0, %v5125
        %v5127 = vpop.f32.mrf.mxu0
        %5128 = vmatprep.mubr.f32.mxu0 0.0
        %5129 = vmatmul.mubr.f32.gmra.mxu0 %v4997
        %v5130 = vpop.f32.mrf.mxu0
        %v5131 = vadd.f32 0.0, %v5130
        %v5132 = vpop.f32.mrf.mxu0
        %5133 = vdwg.mxu0
        %v5135 = vsel %vm3410, %v4787, 0
        %v5138 = vsel %vm3410, %v4788, 0
        %v5141 = vsel %vm3410, %v4789, 0
        %v5144 = vsel %vm3410, %v4790, 0
        %v5147 = vsel %vm3410, %v4791, 0
        %v5150 = vsel %vm3410, %v4792, 0
        %v5153 = vsel %vm3410, %v4793, 0
        %v5156 = vsel %vm3410, %v4794, 0
        %v5159 = vsel %vm3410, %v4795, 0
        %v5162 = vsel %vm3410, %v4796, 0
        %v5165 = vsel %vm3410, %v4797, 0
        %v5168 = vsel %vm3410, %v4798, 0
        %v5171 = vsel %vm3410, %v4799, 0
        %v5174 = vsel %vm3410, %v4800, 0
        %5176 = vmatprep.subr.mxu0 0.0
        %5177 = vmatpush1.msra.mxu0 0.0
        %5178 = vmatprep.subr.mxu0 0.0
        %5179 = vmatpush1.msra.mxu0 0.0
        %5180 = vmatprep.subr.mxu0 0.0
        %5181 = vmatpush1.msra.mxu0 %v4784
        %5182 = vmatprep.subr.mxu0 0.0
        %5183 = vmatpush1.msra.mxu0 %v4779
        %5184 = vmatprep.subr.mxu0 0.0
        %5185 = vmatpush1.msra.mxu0 %v4774
        %5186 = vmatprep.subr.mxu0 0.0
        %5187 = vmatpush1.msra.mxu0 %v4769
        %5188 = vmatprep.subr.mxu0 0.0
        %5189 = vmatpush1.msra.mxu0 %v4764
        %5190 = vmatprep.subr.mxu0 0.0
        %5191 = vmatpush1.msra.mxu0 %v4759
        %5192 = vmatprep.subr.mxu0 0.0
        %5193 = vmatpush1.msra.mxu0 %v4754
        %5194 = vmatprep.subr.mxu0 0.0
        %5195 = vmatpush1.msra.mxu0 %v4749
        %5196 = vmatprep.subr.mxu0 0.0
        %5197 = vmatpush1.msra.mxu0 %v4744
        %5198 = vmatprep.subr.mxu0 0.0
        %5199 = vmatpush1.msra.mxu0 %v4739
        %5200 = vmatprep.subr.mxu0 0.0
        %5201 = vmatpush1.msra.mxu0 %v4734
        %5202 = vmatprep.subr.mxu0 0.0
        %5203 = vmatpush1.msra.mxu0 %v4729
        %5204 = vmatprep.subr.mxu0 0.0
        %5205 = vmatpush1.msra.mxu0 %v4724
        %5206 = vmatprep.subr.mxu0 0.0
        %5207 = vmatpush1.msra.mxu0 %v4719
        %5208 = vmatprep.subr.mxu0 0.0
        %5209 = vmatpush2.msra.mxu0 0.0
        %5210 = vmatprep.subr.mxu0 0.0
        %5211 = vmatpush2.msra.mxu0 0.0
        %5212 = vmatprep.subr.mxu0 0.0
        %5213 = vmatpush2.msra.mxu0 0.0
        %5214 = vmatprep.subr.mxu0 0.0
        %5215 = vmatpush2.msra.mxu0 0.0
        %5216 = vmatprep.subr.mxu0 0.0
        %5217 = vmatpush2.msra.mxu0 0.0
        %5218 = vmatprep.subr.mxu0 0.0
        %5219 = vmatpush2.msra.mxu0 0.0
        %5220 = vmatprep.subr.mxu0 0.0
        %5221 = vmatpush2.msra.mxu0 0.0
        %5222 = vmatprep.subr.mxu0 0.0
        %5223 = vmatpush2.msra.mxu0 0.0
        %5224 = vmatprep.subr.mxu0 0.0
        %5225 = vmatpush2.msra.mxu0 0.0
        %5226 = vmatprep.subr.mxu0 0.0
        %5227 = vmatpush2.msra.mxu0 0.0
        %5228 = vmatprep.subr.mxu0 0.0
        %5229 = vmatpush2.msra.mxu0 0.0
        %5230 = vmatprep.subr.mxu0 0.0
        %5231 = vmatpush2.msra.mxu0 0.0
        %5232 = vmatprep.subr.mxu0 0.0
        %5233 = vmatpush2.msra.mxu0 0.0
        %5234 = vmatprep.subr.mxu0 0.0
        %5235 = vmatpush2.msra.mxu0 0.0
        %5236 = vmatprep.subr.mxu0 0.0
        %5237 = vmatpush2.msra.mxu0 0.0
        %5238 = vmatprep.subr.mxu0 0.0
        %5239 = vmatpush2.msra.mxu0 0.0
        %5240 = vmatprep.mubr.f32.mxu0 0.0
        %5241 = vmatmul.mubr.f32.gmra.mxu0 %v5135
        %v5242 = vpop.f32.mrf.mxu0
        %v5243 = vadd.f32 %v5066, %v5242
        %v5244 = vpop.f32.mrf.mxu0
        %5245 = vmatprep.mubr.f32.mxu0 0.0
        %5246 = vmatmul.mubr.f32.gmra.mxu0 %v5138
        %v5247 = vpop.f32.mrf.mxu0
        %v5248 = vadd.f32 %v5071, %v5247
        %v5249 = vpop.f32.mrf.mxu0
        %5250 = vmatprep.mubr.f32.mxu0 0.0
        %5251 = vmatmul.mubr.f32.gmra.mxu0 %v5141
        %v5252 = vpop.f32.mrf.mxu0
        %v5253 = vadd.f32 %v5076, %v5252
        %v5254 = vpop.f32.mrf.mxu0
        %5255 = vmatprep.mubr.f32.mxu0 0.0
        %5256 = vmatmul.mubr.f32.gmra.mxu0 %v5144
        %v5257 = vpop.f32.mrf.mxu0
        %v5258 = vadd.f32 %v5081, %v5257
        %v5259 = vpop.f32.mrf.mxu0
        %5260 = vmatprep.mubr.f32.mxu0 0.0
        %5261 = vmatmul.mubr.f32.gmra.mxu0 %v5147
        %v5262 = vpop.f32.mrf.mxu0
        %v5263 = vadd.f32 %v5086, %v5262
        %v5264 = vpop.f32.mrf.mxu0
        %5265 = vmatprep.mubr.f32.mxu0 0.0
        %5266 = vmatmul.mubr.f32.gmra.mxu0 %v5150
        %v5267 = vpop.f32.mrf.mxu0
        %v5268 = vadd.f32 %v5091, %v5267
        %v5269 = vpop.f32.mrf.mxu0
        %5270 = vmatprep.mubr.f32.mxu0 0.0
        %5271 = vmatmul.mubr.f32.gmra.mxu0 %v5153
        %v5272 = vpop.f32.mrf.mxu0
        %v5273 = vadd.f32 %v5096, %v5272
        %v5274 = vpop.f32.mrf.mxu0
        %5275 = vmatprep.mubr.f32.mxu0 0.0
        %5276 = vmatmul.mubr.f32.gmra.mxu0 %v5156
        %v5277 = vpop.f32.mrf.mxu0
        %v5278 = vadd.f32 %v5101, %v5277
        %v5279 = vpop.f32.mrf.mxu0
        %5280 = vmatprep.mubr.f32.mxu0 0.0
        %5281 = vmatmul.mubr.f32.gmra.mxu0 %v5159
        %v5282 = vpop.f32.mrf.mxu0
        %v5283 = vadd.f32 %v5106, %v5282
        %v5284 = vpop.f32.mrf.mxu0
        %5285 = vmatprep.mubr.f32.mxu0 0.0
        %5286 = vmatmul.mubr.f32.gmra.mxu0 %v5162
        %v5287 = vpop.f32.mrf.mxu0
        %v5288 = vadd.f32 %v5111, %v5287
        %v5289 = vpop.f32.mrf.mxu0
        %5290 = vmatprep.mubr.f32.mxu0 0.0
        %5291 = vmatmul.mubr.f32.gmra.mxu0 %v5165
        %v5292 = vpop.f32.mrf.mxu0
        %v5293 = vadd.f32 %v5116, %v5292
        %v5294 = vpop.f32.mrf.mxu0
        %5295 = vmatprep.mubr.f32.mxu0 0.0
        %5296 = vmatmul.mubr.f32.gmra.mxu0 %v5168
        %v5297 = vpop.f32.mrf.mxu0
        %v5298 = vadd.f32 %v5121, %v5297
        %v5299 = vpop.f32.mrf.mxu0
        %5300 = vmatprep.mubr.f32.mxu0 0.0
        %5301 = vmatmul.mubr.f32.gmra.mxu0 %v5171
        %v5302 = vpop.f32.mrf.mxu0
        %v5303 = vadd.f32 %v5126, %v5302
        %v5304 = vpop.f32.mrf.mxu0
        %5305 = vmatprep.mubr.f32.mxu0 0.0
        %5306 = vmatmul.mubr.f32.gmra.mxu0 %v5174
        %v5307 = vpop.f32.mrf.mxu0
        %v5308 = vadd.f32 %v5131, %v5307
        %v5309 = vpop.f32.mrf.mxu0
        %5310 = vdwg.mxu0
        %s5311 = scalar_lea.vmem %s7, 32
        %v5312 = vld [vmem:[%s5311] sm:$0xff]
        %v5313 = vld [vmem:[%s5311 + $0x8] sm:$0x3f]
        %v5315 = vsel %vm4648, %v5313, 0
        %5317 = vmatprep.subr.mxu0 0.0
        %5318 = vmatpush1.msra.mxu0 0.0
        %5319 = vmatprep.subr.mxu0 0.0
        %5320 = vmatpush1.msra.mxu0 0.0
        %5321 = vmatprep.subr.mxu0 0.0
        %5322 = vmatpush1.msra.mxu0 0.0
        %5323 = vmatprep.subr.mxu0 0.0
        %5324 = vmatpush1.msra.mxu0 0.0
        %5325 = vmatprep.subr.mxu0 0.0
        %5326 = vmatpush1.msra.mxu0 0.0
        %5327 = vmatprep.subr.mxu0 0.0
        %5328 = vmatpush1.msra.mxu0 0.0
        %5329 = vmatprep.subr.mxu0 0.0
        %5330 = vmatpush1.msra.mxu0 0.0
        %5331 = vmatprep.subr.mxu0 0.0
        %5332 = vmatpush1.msra.mxu0 0.0
        %5333 = vmatprep.subr.mxu0 0.0
        %5334 = vmatpush1.msra.mxu0 0.0
        %5335 = vmatprep.subr.mxu0 0.0
        %5336 = vmatpush1.msra.mxu0 0.0
        %5337 = vmatprep.subr.mxu0 0.0
        %5338 = vmatpush1.msra.mxu0 0.0
        %5339 = vmatprep.subr.mxu0 0.0
        %5340 = vmatpush1.msra.mxu0 0.0
        %5341 = vmatprep.subr.mxu0 0.0
        %5342 = vmatpush1.msra.mxu0 0.0
        %5343 = vmatprep.subr.mxu0 0.0
        %5344 = vmatpush1.msra.mxu0 0.0
        %5345 = vmatprep.subr.mxu0 0.0
        %5346 = vmatpush1.msra.mxu0 %v5315
        %5347 = vmatprep.subr.mxu0 0.0
        %5348 = vmatpush1.msra.mxu0 %v5312
        %5349 = vmatprep.subr.mxu0 0.0
        %5350 = vmatpush2.msra.mxu0 0.0
        %5351 = vmatprep.subr.mxu0 0.0
        %5352 = vmatpush2.msra.mxu0 0.0
        %5353 = vmatprep.subr.mxu0 0.0
        %5354 = vmatpush2.msra.mxu0 0.0
        %5355 = vmatprep.subr.mxu0 0.0
        %5356 = vmatpush2.msra.mxu0 0.0
        %5357 = vmatprep.subr.mxu0 0.0
        %5358 = vmatpush2.msra.mxu0 0.0
        %5359 = vmatprep.subr.mxu0 0.0
        %5360 = vmatpush2.msra.mxu0 0.0
        %5361 = vmatprep.subr.mxu0 0.0
        %5362 = vmatpush2.msra.mxu0 0.0
        %5363 = vmatprep.subr.mxu0 0.0
        %5364 = vmatpush2.msra.mxu0 0.0
        %5365 = vmatprep.subr.mxu0 0.0
        %5366 = vmatpush2.msra.mxu0 0.0
        %5367 = vmatprep.subr.mxu0 0.0
        %5368 = vmatpush2.msra.mxu0 0.0
        %5369 = vmatprep.subr.mxu0 0.0
        %5370 = vmatpush2.msra.mxu0 0.0
        %5371 = vmatprep.subr.mxu0 0.0
        %5372 = vmatpush2.msra.mxu0 0.0
        %5373 = vmatprep.subr.mxu0 0.0
        %5374 = vmatpush2.msra.mxu0 0.0
        %5375 = vmatprep.subr.mxu0 0.0
        %5376 = vmatpush2.msra.mxu0 0.0
        %5377 = vmatprep.subr.mxu0 0.0
        %5378 = vmatpush2.msra.mxu0 0.0
        %5379 = vmatprep.subr.mxu0 0.0
        %5380 = vmatpush2.msra.mxu0 0.0
        %5381 = vmatprep.mubr.f32.mxu0 0.0
        %5382 = vmatmul.mubr.f32.gmra.mxu0 %v4607
        %v5383 = vpop.f32.mrf.mxu0
        %v5384 = vadd.f32 0.0, %v5383
        %v5385 = vpop.f32.mrf.mxu0
        %5386 = vmatprep.mubr.f32.mxu0 0.0
        %5387 = vmatmul.mubr.f32.gmra.mxu0 %v4610
        %v5388 = vpop.f32.mrf.mxu0
        %v5389 = vadd.f32 0.0, %v5388
        %v5390 = vpop.f32.mrf.mxu0
        %5391 = vmatprep.mubr.f32.mxu0 0.0
        %5392 = vmatmul.mubr.f32.gmra.mxu0 %v4613
        %v5393 = vpop.f32.mrf.mxu0
        %v5394 = vadd.f32 0.0, %v5393
        %v5395 = vpop.f32.mrf.mxu0
        %5396 = vmatprep.mubr.f32.mxu0 0.0
        %5397 = vmatmul.mubr.f32.gmra.mxu0 %v4616
        %v5398 = vpop.f32.mrf.mxu0
        %v5399 = vadd.f32 0.0, %v5398
        %v5400 = vpop.f32.mrf.mxu0
        %5401 = vmatprep.mubr.f32.mxu0 0.0
        %5402 = vmatmul.mubr.f32.gmra.mxu0 %v4619
        %v5403 = vpop.f32.mrf.mxu0
        %v5404 = vadd.f32 0.0, %v5403
        %v5405 = vpop.f32.mrf.mxu0
        %5406 = vmatprep.mubr.f32.mxu0 0.0
        %5407 = vmatmul.mubr.f32.gmra.mxu0 %v4622
        %v5408 = vpop.f32.mrf.mxu0
        %v5409 = vadd.f32 0.0, %v5408
        %v5410 = vpop.f32.mrf.mxu0
        %5411 = vmatprep.mubr.f32.mxu0 0.0
        %5412 = vmatmul.mubr.f32.gmra.mxu0 %v4625
        %v5413 = vpop.f32.mrf.mxu0
        %v5414 = vadd.f32 0.0, %v5413
        %v5415 = vpop.f32.mrf.mxu0
        %5416 = vmatprep.mubr.f32.mxu0 0.0
        %5417 = vmatmul.mubr.f32.gmra.mxu0 %v4628
        %v5418 = vpop.f32.mrf.mxu0
        %v5419 = vadd.f32 0.0, %v5418
        %v5420 = vpop.f32.mrf.mxu0
        %5421 = vmatprep.mubr.f32.mxu0 0.0
        %5422 = vmatmul.mubr.f32.gmra.mxu0 %v4631
        %v5423 = vpop.f32.mrf.mxu0
        %v5424 = vadd.f32 0.0, %v5423
        %v5425 = vpop.f32.mrf.mxu0
        %5426 = vmatprep.mubr.f32.mxu0 0.0
        %5427 = vmatmul.mubr.f32.gmra.mxu0 %v4634
        %v5428 = vpop.f32.mrf.mxu0
        %v5429 = vadd.f32 0.0, %v5428
        %v5430 = vpop.f32.mrf.mxu0
        %5431 = vmatprep.mubr.f32.mxu0 0.0
        %5432 = vmatmul.mubr.f32.gmra.mxu0 %v4637
        %v5433 = vpop.f32.mrf.mxu0
        %v5434 = vadd.f32 0.0, %v5433
        %v5435 = vpop.f32.mrf.mxu0
        %5436 = vmatprep.mubr.f32.mxu0 0.0
        %5437 = vmatmul.mubr.f32.gmra.mxu0 %v4640
        %v5438 = vpop.f32.mrf.mxu0
        %v5439 = vadd.f32 0.0, %v5438
        %v5440 = vpop.f32.mrf.mxu0
        %5441 = vmatprep.mubr.f32.mxu0 0.0
        %5442 = vmatmul.mubr.f32.gmra.mxu0 %v4643
        %v5443 = vpop.f32.mrf.mxu0
        %v5444 = vadd.f32 0.0, %v5443
        %v5445 = vpop.f32.mrf.mxu0
        %5446 = vmatprep.mubr.f32.mxu0 0.0
        %5447 = vmatmul.mubr.f32.gmra.mxu0 %v4646
        %v5448 = vpop.f32.mrf.mxu0
        %v5449 = vadd.f32 0.0, %v5448
        %v5450 = vpop.f32.mrf.mxu0
        %5451 = vdwg.mxu0
        %s5452 = scalar_lea.vmem [#allocation6], 224
        %v5453 = vld [vmem:[%s5452] sm:$0xff]
        %v5454 = vld [vmem:[%s5452 + $0x8] sm:$0xff]
        %v5455 = vld [vmem:[%s5452 + $0x10] sm:$0xff]
        %v5456 = vld [vmem:[%s5452 + $0x18] sm:$0xff]
        %v5457 = vld [vmem:[%s5452 + $0x20] sm:$0xff]
        %v5458 = vld [vmem:[%s5452 + $0x28] sm:$0xff]
        %v5459 = vld [vmem:[%s5452 + $0x30] sm:$0xff]
        %v5460 = vld [vmem:[%s5452 + $0x38] sm:$0xff]
        %v5461 = vld [vmem:[%s5452 + $0x40] sm:$0xff]
        %v5462 = vld [vmem:[%s5452 + $0x48] sm:$0xff]
        %v5463 = vld [vmem:[%s5452 + $0x50] sm:$0xff]
        %v5464 = vld [vmem:[%s5452 + $0x58] sm:$0xff]
        %v5465 = vld [vmem:[%s5452 + $0x60] sm:$0xff]
        %v5466 = vld [vmem:[%s5452 + $0x68] sm:$0xff]
        %v5468 = vsel %vm3410, %v5453, 0
        %v5471 = vsel %vm3410, %v5454, 0
        %v5474 = vsel %vm3410, %v5455, 0
        %v5477 = vsel %vm3410, %v5456, 0
        %v5480 = vsel %vm3410, %v5457, 0
        %v5483 = vsel %vm3410, %v5458, 0
        %v5486 = vsel %vm3410, %v5459, 0
        %v5489 = vsel %vm3410, %v5460, 0
        %v5492 = vsel %vm3410, %v5461, 0
        %v5495 = vsel %vm3410, %v5462, 0
        %v5498 = vsel %vm3410, %v5463, 0
        %v5501 = vsel %vm3410, %v5464, 0
        %v5504 = vsel %vm3410, %v5465, 0
        %v5507 = vsel %vm3410, %v5466, 0
        %5509 = vmatprep.subr.mxu0 0.0
        %5510 = vmatpush1.msra.mxu0 0.0
        %5511 = vmatprep.subr.mxu0 0.0
        %5512 = vmatpush1.msra.mxu0 0.0
        %5513 = vmatprep.subr.mxu0 0.0
        %5514 = vmatpush1.msra.mxu0 %v5449
        %5515 = vmatprep.subr.mxu0 0.0
        %5516 = vmatpush1.msra.mxu0 %v5444
        %5517 = vmatprep.subr.mxu0 0.0
        %5518 = vmatpush1.msra.mxu0 %v5439
        %5519 = vmatprep.subr.mxu0 0.0
        %5520 = vmatpush1.msra.mxu0 %v5434
        %5521 = vmatprep.subr.mxu0 0.0
        %5522 = vmatpush1.msra.mxu0 %v5429
        %5523 = vmatprep.subr.mxu0 0.0
        %5524 = vmatpush1.msra.mxu0 %v5424
        %5525 = vmatprep.subr.mxu0 0.0
        %5526 = vmatpush1.msra.mxu0 %v5419
        %5527 = vmatprep.subr.mxu0 0.0
        %5528 = vmatpush1.msra.mxu0 %v5414
        %5529 = vmatprep.subr.mxu0 0.0
        %5530 = vmatpush1.msra.mxu0 %v5409
        %5531 = vmatprep.subr.mxu0 0.0
        %5532 = vmatpush1.msra.mxu0 %v5404
        %5533 = vmatprep.subr.mxu0 0.0
        %5534 = vmatpush1.msra.mxu0 %v5399
        %5535 = vmatprep.subr.mxu0 0.0
        %5536 = vmatpush1.msra.mxu0 %v5394
        %5537 = vmatprep.subr.mxu0 0.0
        %5538 = vmatpush1.msra.mxu0 %v5389
        %5539 = vmatprep.subr.mxu0 0.0
        %5540 = vmatpush1.msra.mxu0 %v5384
        %5541 = vmatprep.subr.mxu0 0.0
        %5542 = vmatpush2.msra.mxu0 0.0
        %5543 = vmatprep.subr.mxu0 0.0
        %5544 = vmatpush2.msra.mxu0 0.0
        %5545 = vmatprep.subr.mxu0 0.0
        %5546 = vmatpush2.msra.mxu0 0.0
        %5547 = vmatprep.subr.mxu0 0.0
        %5548 = vmatpush2.msra.mxu0 0.0
        %5549 = vmatprep.subr.mxu0 0.0
        %5550 = vmatpush2.msra.mxu0 0.0
        %5551 = vmatprep.subr.mxu0 0.0
        %5552 = vmatpush2.msra.mxu0 0.0
        %5553 = vmatprep.subr.mxu0 0.0
        %5554 = vmatpush2.msra.mxu0 0.0
        %5555 = vmatprep.subr.mxu0 0.0
        %5556 = vmatpush2.msra.mxu0 0.0
        %5557 = vmatprep.subr.mxu0 0.0
        %5558 = vmatpush2.msra.mxu0 0.0
        %5559 = vmatprep.subr.mxu0 0.0
        %5560 = vmatpush2.msra.mxu0 0.0
        %5561 = vmatprep.subr.mxu0 0.0
        %5562 = vmatpush2.msra.mxu0 0.0
        %5563 = vmatprep.subr.mxu0 0.0
        %5564 = vmatpush2.msra.mxu0 0.0
        %5565 = vmatprep.subr.mxu0 0.0
        %5566 = vmatpush2.msra.mxu0 0.0
        %5567 = vmatprep.subr.mxu0 0.0
        %5568 = vmatpush2.msra.mxu0 0.0
        %5569 = vmatprep.subr.mxu0 0.0
        %5570 = vmatpush2.msra.mxu0 0.0
        %5571 = vmatprep.subr.mxu0 0.0
        %5572 = vmatpush2.msra.mxu0 0.0
        %5573 = vmatprep.mubr.f32.mxu0 0.0
        %5574 = vmatmul.mubr.f32.gmra.mxu0 %v5468
        %v5575 = vpop.f32.mrf.mxu0
        %v5576 = vadd.f32 0.0, %v5575
        %v5577 = vpop.f32.mrf.mxu0
        %5578 = vmatprep.mubr.f32.mxu0 0.0
        %5579 = vmatmul.mubr.f32.gmra.mxu0 %v5471
        %v5580 = vpop.f32.mrf.mxu0
        %v5581 = vadd.f32 0.0, %v5580
        %v5582 = vpop.f32.mrf.mxu0
        %5583 = vmatprep.mubr.f32.mxu0 0.0
        %5584 = vmatmul.mubr.f32.gmra.mxu0 %v5474
        %v5585 = vpop.f32.mrf.mxu0
        %v5586 = vadd.f32 0.0, %v5585
        %v5587 = vpop.f32.mrf.mxu0
        %5588 = vmatprep.mubr.f32.mxu0 0.0
        %5589 = vmatmul.mubr.f32.gmra.mxu0 %v5477
        %v5590 = vpop.f32.mrf.mxu0
        %v5591 = vadd.f32 0.0, %v5590
        %v5592 = vpop.f32.mrf.mxu0
        %5593 = vmatprep.mubr.f32.mxu0 0.0
        %5594 = vmatmul.mubr.f32.gmra.mxu0 %v5480
        %v5595 = vpop.f32.mrf.mxu0
        %v5596 = vadd.f32 0.0, %v5595
        %v5597 = vpop.f32.mrf.mxu0
        %5598 = vmatprep.mubr.f32.mxu0 0.0
        %5599 = vmatmul.mubr.f32.gmra.mxu0 %v5483
        %v5600 = vpop.f32.mrf.mxu0
        %v5601 = vadd.f32 0.0, %v5600
        %v5602 = vpop.f32.mrf.mxu0
        %5603 = vmatprep.mubr.f32.mxu0 0.0
        %5604 = vmatmul.mubr.f32.gmra.mxu0 %v5486
        %v5605 = vpop.f32.mrf.mxu0
        %v5606 = vadd.f32 0.0, %v5605
        %v5607 = vpop.f32.mrf.mxu0
        %5608 = vmatprep.mubr.f32.mxu0 0.0
        %5609 = vmatmul.mubr.f32.gmra.mxu0 %v5489
        %v5610 = vpop.f32.mrf.mxu0
        %v5611 = vadd.f32 0.0, %v5610
        %v5612 = vpop.f32.mrf.mxu0
        %5613 = vmatprep.mubr.f32.mxu0 0.0
        %5614 = vmatmul.mubr.f32.gmra.mxu0 %v5492
        %v5615 = vpop.f32.mrf.mxu0
        %v5616 = vadd.f32 0.0, %v5615
        %v5617 = vpop.f32.mrf.mxu0
        %5618 = vmatprep.mubr.f32.mxu0 0.0
        %5619 = vmatmul.mubr.f32.gmra.mxu0 %v5495
        %v5620 = vpop.f32.mrf.mxu0
        %v5621 = vadd.f32 0.0, %v5620
        %v5622 = vpop.f32.mrf.mxu0
        %5623 = vmatprep.mubr.f32.mxu0 0.0
        %5624 = vmatmul.mubr.f32.gmra.mxu0 %v5498
        %v5625 = vpop.f32.mrf.mxu0
        %v5626 = vadd.f32 0.0, %v5625
        %v5627 = vpop.f32.mrf.mxu0
        %5628 = vmatprep.mubr.f32.mxu0 0.0
        %5629 = vmatmul.mubr.f32.gmra.mxu0 %v5501
        %v5630 = vpop.f32.mrf.mxu0
        %v5631 = vadd.f32 0.0, %v5630
        %v5632 = vpop.f32.mrf.mxu0
        %5633 = vmatprep.mubr.f32.mxu0 0.0
        %5634 = vmatmul.mubr.f32.gmra.mxu0 %v5504
        %v5635 = vpop.f32.mrf.mxu0
        %v5636 = vadd.f32 0.0, %v5635
        %v5637 = vpop.f32.mrf.mxu0
        %5638 = vmatprep.mubr.f32.mxu0 0.0
        %5639 = vmatmul.mubr.f32.gmra.mxu0 %v5507
        %v5640 = vpop.f32.mrf.mxu0
        %v5641 = vadd.f32 0.0, %v5640
        %v5642 = vpop.f32.mrf.mxu0
        %5643 = vdwg.mxu0
        %v5644 = vadd.f32 %v5243, %v5576
        %v5645 = vadd.f32 %v5248, %v5581
        %v5646 = vadd.f32 %v5253, %v5586
        %v5647 = vadd.f32 %v5258, %v5591
        %v5648 = vadd.f32 %v5263, %v5596
        %v5649 = vadd.f32 %v5268, %v5601
        %v5650 = vadd.f32 %v5273, %v5606
        %v5651 = vadd.f32 %v5278, %v5611
        %v5652 = vadd.f32 %v5283, %v5616
        %v5653 = vadd.f32 %v5288, %v5621
        %v5654 = vadd.f32 %v5293, %v5626
        %v5655 = vadd.f32 %v5298, %v5631
        %v5656 = vadd.f32 %v5303, %v5636
        %v5657 = vadd.f32 %v5308, %v5641
        %s5658 = scalar_lea.vmem %s7, 48
        %v5659 = vld [vmem:[%s5658] sm:$0xff]
        %v5660 = vld [vmem:[%s5658 + $0x8] sm:$0x3f]
        %v5662 = vsel %vm4648, %v5660, 0
        %5664 = vmatprep.subr.mxu0 0.0
        %5665 = vmatpush1.msra.mxu0 0.0
        %5666 = vmatprep.subr.mxu0 0.0
        %5667 = vmatpush1.msra.mxu0 0.0
        %5668 = vmatprep.subr.mxu0 0.0
        %5669 = vmatpush1.msra.mxu0 0.0
        %5670 = vmatprep.subr.mxu0 0.0
        %5671 = vmatpush1.msra.mxu0 0.0
        %5672 = vmatprep.subr.mxu0 0.0
        %5673 = vmatpush1.msra.mxu0 0.0
        %5674 = vmatprep.subr.mxu0 0.0
        %5675 = vmatpush1.msra.mxu0 0.0
        %5676 = vmatprep.subr.mxu0 0.0
        %5677 = vmatpush1.msra.mxu0 0.0
        %5678 = vmatprep.subr.mxu0 0.0
        %5679 = vmatpush1.msra.mxu0 0.0
        %5680 = vmatprep.subr.mxu0 0.0
        %5681 = vmatpush1.msra.mxu0 0.0
        %5682 = vmatprep.subr.mxu0 0.0
        %5683 = vmatpush1.msra.mxu0 0.0
        %5684 = vmatprep.subr.mxu0 0.0
        %5685 = vmatpush1.msra.mxu0 0.0
        %5686 = vmatprep.subr.mxu0 0.0
        %5687 = vmatpush1.msra.mxu0 0.0
        %5688 = vmatprep.subr.mxu0 0.0
        %5689 = vmatpush1.msra.mxu0 0.0
        %5690 = vmatprep.subr.mxu0 0.0
        %5691 = vmatpush1.msra.mxu0 0.0
        %5692 = vmatprep.subr.mxu0 0.0
        %5693 = vmatpush1.msra.mxu0 %v5662
        %5694 = vmatprep.subr.mxu0 0.0
        %5695 = vmatpush1.msra.mxu0 %v5659
        %5696 = vmatprep.subr.mxu0 0.0
        %5697 = vmatpush2.msra.mxu0 0.0
        %5698 = vmatprep.subr.mxu0 0.0
        %5699 = vmatpush2.msra.mxu0 0.0
        %5700 = vmatprep.subr.mxu0 0.0
        %5701 = vmatpush2.msra.mxu0 0.0
        %5702 = vmatprep.subr.mxu0 0.0
        %5703 = vmatpush2.msra.mxu0 0.0
        %5704 = vmatprep.subr.mxu0 0.0
        %5705 = vmatpush2.msra.mxu0 0.0
        %5706 = vmatprep.subr.mxu0 0.0
        %5707 = vmatpush2.msra.mxu0 0.0
        %5708 = vmatprep.subr.mxu0 0.0
        %5709 = vmatpush2.msra.mxu0 0.0
        %5710 = vmatprep.subr.mxu0 0.0
        %5711 = vmatpush2.msra.mxu0 0.0
        %5712 = vmatprep.subr.mxu0 0.0
        %5713 = vmatpush2.msra.mxu0 0.0
        %5714 = vmatprep.subr.mxu0 0.0
        %5715 = vmatpush2.msra.mxu0 0.0
        %5716 = vmatprep.subr.mxu0 0.0
        %5717 = vmatpush2.msra.mxu0 0.0
        %5718 = vmatprep.subr.mxu0 0.0
        %5719 = vmatpush2.msra.mxu0 0.0
        %5720 = vmatprep.subr.mxu0 0.0
        %5721 = vmatpush2.msra.mxu0 0.0
        %5722 = vmatprep.subr.mxu0 0.0
        %5723 = vmatpush2.msra.mxu0 0.0
        %5724 = vmatprep.subr.mxu0 0.0
        %5725 = vmatpush2.msra.mxu0 0.0
        %5726 = vmatprep.subr.mxu0 0.0
        %5727 = vmatpush2.msra.mxu0 0.0
        %5728 = vmatprep.mubr.f32.mxu0 0.0
        %5729 = vmatmul.mubr.f32.gmra.mxu0 %v4607
        %v5730 = vpop.f32.mrf.mxu0
        %v5731 = vadd.f32 0.0, %v5730
        %v5732 = vpop.f32.mrf.mxu0
        %5733 = vmatprep.mubr.f32.mxu0 0.0
        %5734 = vmatmul.mubr.f32.gmra.mxu0 %v4610
        %v5735 = vpop.f32.mrf.mxu0
        %v5736 = vadd.f32 0.0, %v5735
        %v5737 = vpop.f32.mrf.mxu0
        %5738 = vmatprep.mubr.f32.mxu0 0.0
        %5739 = vmatmul.mubr.f32.gmra.mxu0 %v4613
        %v5740 = vpop.f32.mrf.mxu0
        %v5741 = vadd.f32 0.0, %v5740
        %v5742 = vpop.f32.mrf.mxu0
        %5743 = vmatprep.mubr.f32.mxu0 0.0
        %5744 = vmatmul.mubr.f32.gmra.mxu0 %v4616
        %v5745 = vpop.f32.mrf.mxu0
        %v5746 = vadd.f32 0.0, %v5745
        %v5747 = vpop.f32.mrf.mxu0
        %5748 = vmatprep.mubr.f32.mxu0 0.0
        %5749 = vmatmul.mubr.f32.gmra.mxu0 %v4619
        %v5750 = vpop.f32.mrf.mxu0
        %v5751 = vadd.f32 0.0, %v5750
        %v5752 = vpop.f32.mrf.mxu0
        %5753 = vmatprep.mubr.f32.mxu0 0.0
        %5754 = vmatmul.mubr.f32.gmra.mxu0 %v4622
        %v5755 = vpop.f32.mrf.mxu0
        %v5756 = vadd.f32 0.0, %v5755
        %v5757 = vpop.f32.mrf.mxu0
        %5758 = vmatprep.mubr.f32.mxu0 0.0
        %5759 = vmatmul.mubr.f32.gmra.mxu0 %v4625
        %v5760 = vpop.f32.mrf.mxu0
        %v5761 = vadd.f32 0.0, %v5760
        %v5762 = vpop.f32.mrf.mxu0
        %5763 = vmatprep.mubr.f32.mxu0 0.0
        %5764 = vmatmul.mubr.f32.gmra.mxu0 %v4628
        %v5765 = vpop.f32.mrf.mxu0
        %v5766 = vadd.f32 0.0, %v5765
        %v5767 = vpop.f32.mrf.mxu0
        %5768 = vmatprep.mubr.f32.mxu0 0.0
        %5769 = vmatmul.mubr.f32.gmra.mxu0 %v4631
        %v5770 = vpop.f32.mrf.mxu0
        %v5771 = vadd.f32 0.0, %v5770
        %v5772 = vpop.f32.mrf.mxu0
        %5773 = vmatprep.mubr.f32.mxu0 0.0
        %5774 = vmatmul.mubr.f32.gmra.mxu0 %v4634
        %v5775 = vpop.f32.mrf.mxu0
        %v5776 = vadd.f32 0.0, %v5775
        %v5777 = vpop.f32.mrf.mxu0
        %5778 = vmatprep.mubr.f32.mxu0 0.0
        %5779 = vmatmul.mubr.f32.gmra.mxu0 %v4637
        %v5780 = vpop.f32.mrf.mxu0
        %v5781 = vadd.f32 0.0, %v5780
        %v5782 = vpop.f32.mrf.mxu0
        %5783 = vmatprep.mubr.f32.mxu0 0.0
        %5784 = vmatmul.mubr.f32.gmra.mxu0 %v4640
        %v5785 = vpop.f32.mrf.mxu0
        %v5786 = vadd.f32 0.0, %v5785
        %v5787 = vpop.f32.mrf.mxu0
        %5788 = vmatprep.mubr.f32.mxu0 0.0
        %5789 = vmatmul.mubr.f32.gmra.mxu0 %v4643
        %v5790 = vpop.f32.mrf.mxu0
        %v5791 = vadd.f32 0.0, %v5790
        %v5792 = vpop.f32.mrf.mxu0
        %5793 = vmatprep.mubr.f32.mxu0 0.0
        %5794 = vmatmul.mubr.f32.gmra.mxu0 %v4646
        %v5795 = vpop.f32.mrf.mxu0
        %v5796 = vadd.f32 0.0, %v5795
        %v5797 = vpop.f32.mrf.mxu0
        %5798 = vdwg.mxu0
        %s5799 = scalar_lea.vmem [#allocation6], 336
        %v5800 = vld [vmem:[%s5799] sm:$0xff]
        %v5801 = vld [vmem:[%s5799 + $0x8] sm:$0xff]
        %v5802 = vld [vmem:[%s5799 + $0x10] sm:$0xff]
        %v5803 = vld [vmem:[%s5799 + $0x18] sm:$0xff]
        %v5804 = vld [vmem:[%s5799 + $0x20] sm:$0xff]
        %v5805 = vld [vmem:[%s5799 + $0x28] sm:$0xff]
        %v5806 = vld [vmem:[%s5799 + $0x30] sm:$0xff]
        %v5807 = vld [vmem:[%s5799 + $0x38] sm:$0xff]
        %v5808 = vld [vmem:[%s5799 + $0x40] sm:$0xff]
        %v5809 = vld [vmem:[%s5799 + $0x48] sm:$0xff]
        %v5810 = vld [vmem:[%s5799 + $0x50] sm:$0xff]
        %v5811 = vld [vmem:[%s5799 + $0x58] sm:$0xff]
        %v5812 = vld [vmem:[%s5799 + $0x60] sm:$0xff]
        %v5813 = vld [vmem:[%s5799 + $0x68] sm:$0xff]
        %v5815 = vsel %vm3410, %v5800, 0
        %v5818 = vsel %vm3410, %v5801, 0
        %v5821 = vsel %vm3410, %v5802, 0
        %v5824 = vsel %vm3410, %v5803, 0
        %v5827 = vsel %vm3410, %v5804, 0
        %v5830 = vsel %vm3410, %v5805, 0
        %v5833 = vsel %vm3410, %v5806, 0
        %v5836 = vsel %vm3410, %v5807, 0
        %v5839 = vsel %vm3410, %v5808, 0
        %v5842 = vsel %vm3410, %v5809, 0
        %v5845 = vsel %vm3410, %v5810, 0
        %v5848 = vsel %vm3410, %v5811, 0
        %v5851 = vsel %vm3410, %v5812, 0
        %v5854 = vsel %vm3410, %v5813, 0
        %5856 = vmatprep.subr.mxu0 0.0
        %5857 = vmatpush1.msra.mxu0 0.0
        %5858 = vmatprep.subr.mxu0 0.0
        %5859 = vmatpush1.msra.mxu0 0.0
        %5860 = vmatprep.subr.mxu0 0.0
        %5861 = vmatpush1.msra.mxu0 %v5796
        %5862 = vmatprep.subr.mxu0 0.0
        %5863 = vmatpush1.msra.mxu0 %v5791
        %5864 = vmatprep.subr.mxu0 0.0
        %5865 = vmatpush1.msra.mxu0 %v5786
        %5866 = vmatprep.subr.mxu0 0.0
        %5867 = vmatpush1.msra.mxu0 %v5781
        %5868 = vmatprep.subr.mxu0 0.0
        %5869 = vmatpush1.msra.mxu0 %v5776
        %5870 = vmatprep.subr.mxu0 0.0
        %5871 = vmatpush1.msra.mxu0 %v5771
        %5872 = vmatprep.subr.mxu0 0.0
        %5873 = vmatpush1.msra.mxu0 %v5766
        %5874 = vmatprep.subr.mxu0 0.0
        %5875 = vmatpush1.msra.mxu0 %v5761
        %5876 = vmatprep.subr.mxu0 0.0
        %5877 = vmatpush1.msra.mxu0 %v5756
        %5878 = vmatprep.subr.mxu0 0.0
        %5879 = vmatpush1.msra.mxu0 %v5751
        %5880 = vmatprep.subr.mxu0 0.0
        %5881 = vmatpush1.msra.mxu0 %v5746
        %5882 = vmatprep.subr.mxu0 0.0
        %5883 = vmatpush1.msra.mxu0 %v5741
        %5884 = vmatprep.subr.mxu0 0.0
        %5885 = vmatpush1.msra.mxu0 %v5736
        %5886 = vmatprep.subr.mxu0 0.0
        %5887 = vmatpush1.msra.mxu0 %v5731
        %5888 = vmatprep.subr.mxu0 0.0
        %5889 = vmatpush2.msra.mxu0 0.0
        %5890 = vmatprep.subr.mxu0 0.0
        %5891 = vmatpush2.msra.mxu0 0.0
        %5892 = vmatprep.subr.mxu0 0.0
        %5893 = vmatpush2.msra.mxu0 0.0
        %5894 = vmatprep.subr.mxu0 0.0
        %5895 = vmatpush2.msra.mxu0 0.0
        %5896 = vmatprep.subr.mxu0 0.0
        %5897 = vmatpush2.msra.mxu0 0.0
        %5898 = vmatprep.subr.mxu0 0.0
        %5899 = vmatpush2.msra.mxu0 0.0
        %5900 = vmatprep.subr.mxu0 0.0
        %5901 = vmatpush2.msra.mxu0 0.0
        %5902 = vmatprep.subr.mxu0 0.0
        %5903 = vmatpush2.msra.mxu0 0.0
        %5904 = vmatprep.subr.mxu0 0.0
        %5905 = vmatpush2.msra.mxu0 0.0
        %5906 = vmatprep.subr.mxu0 0.0
        %5907 = vmatpush2.msra.mxu0 0.0
        %5908 = vmatprep.subr.mxu0 0.0
        %5909 = vmatpush2.msra.mxu0 0.0
        %5910 = vmatprep.subr.mxu0 0.0
        %5911 = vmatpush2.msra.mxu0 0.0
        %5912 = vmatprep.subr.mxu0 0.0
        %5913 = vmatpush2.msra.mxu0 0.0
        %5914 = vmatprep.subr.mxu0 0.0
        %5915 = vmatpush2.msra.mxu0 0.0
        %5916 = vmatprep.subr.mxu0 0.0
        %5917 = vmatpush2.msra.mxu0 0.0
        %5918 = vmatprep.subr.mxu0 0.0
        %5919 = vmatpush2.msra.mxu0 0.0
        %5920 = vmatprep.mubr.f32.mxu0 0.0
        %5921 = vmatmul.mubr.f32.gmra.mxu0 %v5815
        %v5922 = vpop.f32.mrf.mxu0
        %v5923 = vadd.f32 0.0, %v5922
        %v5924 = vpop.f32.mrf.mxu0
        %5925 = vmatprep.mubr.f32.mxu0 0.0
        %5926 = vmatmul.mubr.f32.gmra.mxu0 %v5818
        %v5927 = vpop.f32.mrf.mxu0
        %v5928 = vadd.f32 0.0, %v5927
        %v5929 = vpop.f32.mrf.mxu0
        %5930 = vmatprep.mubr.f32.mxu0 0.0
        %5931 = vmatmul.mubr.f32.gmra.mxu0 %v5821
        %v5932 = vpop.f32.mrf.mxu0
        %v5933 = vadd.f32 0.0, %v5932
        %v5934 = vpop.f32.mrf.mxu0
        %5935 = vmatprep.mubr.f32.mxu0 0.0
        %5936 = vmatmul.mubr.f32.gmra.mxu0 %v5824
        %v5937 = vpop.f32.mrf.mxu0
        %v5938 = vadd.f32 0.0, %v5937
        %v5939 = vpop.f32.mrf.mxu0
        %5940 = vmatprep.mubr.f32.mxu0 0.0
        %5941 = vmatmul.mubr.f32.gmra.mxu0 %v5827
        %v5942 = vpop.f32.mrf.mxu0
        %v5943 = vadd.f32 0.0, %v5942
        %v5944 = vpop.f32.mrf.mxu0
        %5945 = vmatprep.mubr.f32.mxu0 0.0
        %5946 = vmatmul.mubr.f32.gmra.mxu0 %v5830
        %v5947 = vpop.f32.mrf.mxu0
        %v5948 = vadd.f32 0.0, %v5947
        %v5949 = vpop.f32.mrf.mxu0
        %5950 = vmatprep.mubr.f32.mxu0 0.0
        %5951 = vmatmul.mubr.f32.gmra.mxu0 %v5833
        %v5952 = vpop.f32.mrf.mxu0
        %v5953 = vadd.f32 0.0, %v5952
        %v5954 = vpop.f32.mrf.mxu0
        %5955 = vmatprep.mubr.f32.mxu0 0.0
        %5956 = vmatmul.mubr.f32.gmra.mxu0 %v5836
        %v5957 = vpop.f32.mrf.mxu0
        %v5958 = vadd.f32 0.0, %v5957
        %v5959 = vpop.f32.mrf.mxu0
        %5960 = vmatprep.mubr.f32.mxu0 0.0
        %5961 = vmatmul.mubr.f32.gmra.mxu0 %v5839
        %v5962 = vpop.f32.mrf.mxu0
        %v5963 = vadd.f32 0.0, %v5962
        %v5964 = vpop.f32.mrf.mxu0
        %5965 = vmatprep.mubr.f32.mxu0 0.0
        %5966 = vmatmul.mubr.f32.gmra.mxu0 %v5842
        %v5967 = vpop.f32.mrf.mxu0
        %v5968 = vadd.f32 0.0, %v5967
        %v5969 = vpop.f32.mrf.mxu0
        %5970 = vmatprep.mubr.f32.mxu0 0.0
        %5971 = vmatmul.mubr.f32.gmra.mxu0 %v5845
        %v5972 = vpop.f32.mrf.mxu0
        %v5973 = vadd.f32 0.0, %v5972
        %v5974 = vpop.f32.mrf.mxu0
        %5975 = vmatprep.mubr.f32.mxu0 0.0
        %5976 = vmatmul.mubr.f32.gmra.mxu0 %v5848
        %v5977 = vpop.f32.mrf.mxu0
        %v5978 = vadd.f32 0.0, %v5977
        %v5979 = vpop.f32.mrf.mxu0
        %5980 = vmatprep.mubr.f32.mxu0 0.0
        %5981 = vmatmul.mubr.f32.gmra.mxu0 %v5851
        %v5982 = vpop.f32.mrf.mxu0
        %v5983 = vadd.f32 0.0, %v5982
        %v5984 = vpop.f32.mrf.mxu0
        %5985 = vmatprep.mubr.f32.mxu0 0.0
        %5986 = vmatmul.mubr.f32.gmra.mxu0 %v5854
        %v5987 = vpop.f32.mrf.mxu0
        %v5988 = vadd.f32 0.0, %v5987
        %v5989 = vpop.f32.mrf.mxu0
        %5990 = vdwg.mxu0
        %v5991 = vadd.f32 %v5644, %v5923
        %v5992 = vadd.f32 %v5645, %v5928
        %v5993 = vadd.f32 %v5646, %v5933
        %v5994 = vadd.f32 %v5647, %v5938
        %v5995 = vadd.f32 %v5648, %v5943
        %v5996 = vadd.f32 %v5649, %v5948
        %v5997 = vadd.f32 %v5650, %v5953
        %v5998 = vadd.f32 %v5651, %v5958
        %v5999 = vadd.f32 %v5652, %v5963
        %v6000 = vadd.f32 %v5653, %v5968
        %v6001 = vadd.f32 %v5654, %v5973
        %v6002 = vadd.f32 %v5655, %v5978
        %v6003 = vadd.f32 %v5656, %v5983
        %v6004 = vadd.f32 %v5657, %v5988
        %v6005 = vld [vmem:[%s8] sm:$0xff]
        %v6006 = vld [vmem:[%s8 + $0x8] sm:$0xff]
        %v6007 = vld [vmem:[%s8 + $0x10] sm:$0xff]
        %v6008 = vld [vmem:[%s8 + $0x18] sm:$0xff]
        %v6009 = vld [vmem:[%s8 + $0x20] sm:$0xff]
        %v6010 = vld [vmem:[%s8 + $0x28] sm:$0xff]
        %v6011 = vld [vmem:[%s8 + $0x30] sm:$0xff]
        %v6012 = vld [vmem:[%s8 + $0x38] sm:$0xff]
        %v6013 = vld [vmem:[%s8 + $0x40] sm:$0xff]
        %v6014 = vld [vmem:[%s8 + $0x48] sm:$0xff]
        %v6015 = vld [vmem:[%s8 + $0x50] sm:$0xff]
        %v6016 = vld [vmem:[%s8 + $0x58] sm:$0xff]
        %v6017 = vld [vmem:[%s8 + $0x60] sm:$0xff]
        %v6018 = vld [vmem:[%s8 + $0x68] sm:$0xff]
        %6020 = vset.pattern.permute.xlu0 0
        %6021 = vperm.xlu0 %6020, %v6005
        %v6022 = vpop.permute.xlu0 %6021
        %6025 = vset.pattern.permute.xlu0 0
        %6026 = vperm.xlu0 %6025, %v6006
        %v6027 = vpop.permute.xlu0 %6026
        %6030 = vset.pattern.permute.xlu0 0
        %6031 = vperm.xlu0 %6030, %v6007
        %v6032 = vpop.permute.xlu0 %6031
        %6035 = vset.pattern.permute.xlu0 0
        %6036 = vperm.xlu0 %6035, %v6008
        %v6037 = vpop.permute.xlu0 %6036
        %6040 = vset.pattern.permute.xlu0 0
        %6041 = vperm.xlu0 %6040, %v6009
        %v6042 = vpop.permute.xlu0 %6041
        %6045 = vset.pattern.permute.xlu0 0
        %6046 = vperm.xlu0 %6045, %v6010
        %v6047 = vpop.permute.xlu0 %6046
        %6050 = vset.pattern.permute.xlu0 0
        %6051 = vperm.xlu0 %6050, %v6011
        %v6052 = vpop.permute.xlu0 %6051
        %6055 = vset.pattern.permute.xlu0 0
        %6056 = vperm.xlu0 %6055, %v6012
        %v6057 = vpop.permute.xlu0 %6056
        %6060 = vset.pattern.permute.xlu0 0
        %6061 = vperm.xlu0 %6060, %v6013
        %v6062 = vpop.permute.xlu0 %6061
        %6065 = vset.pattern.permute.xlu0 0
        %6066 = vperm.xlu0 %6065, %v6014
        %v6067 = vpop.permute.xlu0 %6066
        %6070 = vset.pattern.permute.xlu0 0
        %6071 = vperm.xlu0 %6070, %v6015
        %v6072 = vpop.permute.xlu0 %6071
        %6075 = vset.pattern.permute.xlu0 0
        %6076 = vperm.xlu0 %6075, %v6016
        %v6077 = vpop.permute.xlu0 %6076
        %6080 = vset.pattern.permute.xlu0 0
        %6081 = vperm.xlu0 %6080, %v6017
        %v6082 = vpop.permute.xlu0 %6081
        %6085 = vset.pattern.permute.xlu0 0
        %6086 = vperm.xlu0 %6085, %v6018
        %v6087 = vpop.permute.xlu0 %6086
        %v6089 = vadd.f32 %v5991, %v6022
        %v6090 = vadd.f32 %v5992, %v6027
        %v6091 = vadd.f32 %v5993, %v6032
        %v6092 = vadd.f32 %v5994, %v6037
        %v6093 = vadd.f32 %v5995, %v6042
        %v6094 = vadd.f32 %v5996, %v6047
        %v6095 = vadd.f32 %v5997, %v6052
        %v6096 = vadd.f32 %v5998, %v6057
        %v6097 = vadd.f32 %v5999, %v6062
        %v6098 = vadd.f32 %v6000, %v6067
        %v6099 = vadd.f32 %v6001, %v6072
        %v6100 = vadd.f32 %v6002, %v6077
        %v6101 = vadd.f32 %v6003, %v6082
        %v6102 = vadd.f32 %v6004, %v6087
        %vm6103 = vcmp.ge.f32.partialorder %v6089, 0.0
        %vm6104 = vcmp.ge.f32.partialorder %v6090, 0.0
        %vm6105 = vcmp.ge.f32.partialorder %v6091, 0.0
        %vm6106 = vcmp.ge.f32.partialorder %v6092, 0.0
        %vm6107 = vcmp.ge.f32.partialorder %v6093, 0.0
        %vm6108 = vcmp.ge.f32.partialorder %v6094, 0.0
        %vm6109 = vcmp.ge.f32.partialorder %v6095, 0.0
        %vm6110 = vcmp.ge.f32.partialorder %v6096, 0.0
        %vm6111 = vcmp.ge.f32.partialorder %v6097, 0.0
        %vm6112 = vcmp.ge.f32.partialorder %v6098, 0.0
        %vm6113 = vcmp.ge.f32.partialorder %v6099, 0.0
        %vm6114 = vcmp.ge.f32.partialorder %v6100, 0.0
        %vm6115 = vcmp.ge.f32.partialorder %v6101, 0.0
        %vm6116 = vcmp.ge.f32.partialorder %v6102, 0.0
        %v6117 = vmul.f32 %v6089, 0.01
        %v6118 = vmul.f32 %v6090, 0.01
        %v6119 = vmul.f32 %v6091, 0.01
        %v6120 = vmul.f32 %v6092, 0.01
        %v6121 = vmul.f32 %v6093, 0.01
        %v6122 = vmul.f32 %v6094, 0.01
        %v6123 = vmul.f32 %v6095, 0.01
        %v6124 = vmul.f32 %v6096, 0.01
        %v6125 = vmul.f32 %v6097, 0.01
        %v6126 = vmul.f32 %v6098, 0.01
        %v6127 = vmul.f32 %v6099, 0.01
        %v6128 = vmul.f32 %v6100, 0.01
        %v6129 = vmul.f32 %v6101, 0.01
        %v6130 = vmul.f32 %v6102, 0.01
        %v6131 = vsel %vm6103, %v6089, %v6117
        %v6132 = vsel %vm6104, %v6090, %v6118
        %v6133 = vsel %vm6105, %v6091, %v6119
        %v6134 = vsel %vm6106, %v6092, %v6120
        %v6135 = vsel %vm6107, %v6093, %v6121
        %v6136 = vsel %vm6108, %v6094, %v6122
        %v6137 = vsel %vm6109, %v6095, %v6123
        %v6138 = vsel %vm6110, %v6096, %v6124
        %v6139 = vsel %vm6111, %v6097, %v6125
        %v6140 = vsel %vm6112, %v6098, %v6126
        %v6141 = vsel %vm6113, %v6099, %v6127
        %v6142 = vsel %vm6114, %v6100, %v6128
        %v6143 = vsel %vm6115, %v6101, %v6129
        %v6144 = vsel %vm6116, %v6102, %v6130
        %v6145 = vld [vmem:[#allocation8] sm:$0x7f]
        %vm6146 = vcmask 56320
        %v6148 = vsel %vm6146, %v6131, 0
        %v6151 = vsel %vm6146, %v6132, 0
        %v6154 = vsel %vm6146, %v6133, 0
        %v6157 = vsel %vm6146, %v6134, 0
        %v6160 = vsel %vm6146, %v6135, 0
        %v6163 = vsel %vm6146, %v6136, 0
        %v6166 = vsel %vm6146, %v6137, 0
        %v6169 = vsel %vm6146, %v6138, 0
        %v6172 = vsel %vm6146, %v6139, 0
        %v6175 = vsel %vm6146, %v6140, 0
        %v6178 = vsel %vm6146, %v6141, 0
        %v6181 = vsel %vm6146, %v6142, 0
        %v6184 = vsel %vm6146, %v6143, 0
        %v6187 = vsel %vm6146, %v6144, 0
        %vm6189 = vcmask 1046528
        %v6191 = vsel %vm6189, %v6145, 0
        %6193 = vmatprep.subr.mxu0 0.0
        %6194 = vmatpush1.msra.mxu0 0.0
        %6195 = vmatprep.subr.mxu0 0.0
        %6196 = vmatpush1.msra.mxu0 0.0
        %6197 = vmatprep.subr.mxu0 0.0
        %6198 = vmatpush1.msra.mxu0 0.0
        %6199 = vmatprep.subr.mxu0 0.0
        %6200 = vmatpush1.msra.mxu0 0.0
        %6201 = vmatprep.subr.mxu0 0.0
        %6202 = vmatpush1.msra.mxu0 0.0
        %6203 = vmatprep.subr.mxu0 0.0
        %6204 = vmatpush1.msra.mxu0 0.0
        %6205 = vmatprep.subr.mxu0 0.0
        %6206 = vmatpush1.msra.mxu0 0.0
        %6207 = vmatprep.subr.mxu0 0.0
        %6208 = vmatpush1.msra.mxu0 0.0
        %6209 = vmatprep.subr.mxu0 0.0
        %6210 = vmatpush1.msra.mxu0 0.0
        %6211 = vmatprep.subr.mxu0 0.0
        %6212 = vmatpush1.msra.mxu0 0.0
        %6213 = vmatprep.subr.mxu0 0.0
        %6214 = vmatpush1.msra.mxu0 0.0
        %6215 = vmatprep.subr.mxu0 0.0
        %6216 = vmatpush1.msra.mxu0 0.0
        %6217 = vmatprep.subr.mxu0 0.0
        %6218 = vmatpush1.msra.mxu0 0.0
        %6219 = vmatprep.subr.mxu0 0.0
        %6220 = vmatpush1.msra.mxu0 0.0
        %6221 = vmatprep.subr.mxu0 0.0
        %6222 = vmatpush1.msra.mxu0 0.0
        %6223 = vmatprep.subr.mxu0 0.0
        %6224 = vmatpush1.msra.mxu0 %v6191
        %6225 = vmatprep.subr.mxu0 0.0
        %6226 = vmatpush2.msra.mxu0 0.0
        %6227 = vmatprep.subr.mxu0 0.0
        %6228 = vmatpush2.msra.mxu0 0.0
        %6229 = vmatprep.subr.mxu0 0.0
        %6230 = vmatpush2.msra.mxu0 0.0
        %6231 = vmatprep.subr.mxu0 0.0
        %6232 = vmatpush2.msra.mxu0 0.0
        %6233 = vmatprep.subr.mxu0 0.0
        %6234 = vmatpush2.msra.mxu0 0.0
        %6235 = vmatprep.subr.mxu0 0.0
        %6236 = vmatpush2.msra.mxu0 0.0
        %6237 = vmatprep.subr.mxu0 0.0
        %6238 = vmatpush2.msra.mxu0 0.0
        %6239 = vmatprep.subr.mxu0 0.0
        %6240 = vmatpush2.msra.mxu0 0.0
        %6241 = vmatprep.subr.mxu0 0.0
        %6242 = vmatpush2.msra.mxu0 0.0
        %6243 = vmatprep.subr.mxu0 0.0
        %6244 = vmatpush2.msra.mxu0 0.0
        %6245 = vmatprep.subr.mxu0 0.0
        %6246 = vmatpush2.msra.mxu0 0.0
        %6247 = vmatprep.subr.mxu0 0.0
        %6248 = vmatpush2.msra.mxu0 0.0
        %6249 = vmatprep.subr.mxu0 0.0
        %6250 = vmatpush2.msra.mxu0 0.0
        %6251 = vmatprep.subr.mxu0 0.0
        %6252 = vmatpush2.msra.mxu0 0.0
        %6253 = vmatprep.subr.mxu0 0.0
        %6254 = vmatpush2.msra.mxu0 0.0
        %6255 = vmatprep.subr.mxu0 0.0
        %6256 = vmatpush2.msra.mxu0 0.0
        %6257 = vmatprep.mubr.f32.mxu0 0.0
        %6258 = vmatmul.mubr.f32.gmra.mxu0 %v6148
        %v6259 = vpop.f32.mrf.mxu0
        %v6260 = vadd.f32 0.0, %v6259
        %v6261 = vpop.f32.mrf.mxu0
        %6262 = vmatprep.mubr.f32.mxu0 0.0
        %6263 = vmatmul.mubr.f32.gmra.mxu0 %v6151
        %v6264 = vpop.f32.mrf.mxu0
        %v6265 = vadd.f32 0.0, %v6264
        %v6266 = vpop.f32.mrf.mxu0
        %6267 = vmatprep.mubr.f32.mxu0 0.0
        %6268 = vmatmul.mubr.f32.gmra.mxu0 %v6154
        %v6269 = vpop.f32.mrf.mxu0
        %v6270 = vadd.f32 0.0, %v6269
        %v6271 = vpop.f32.mrf.mxu0
        %6272 = vmatprep.mubr.f32.mxu0 0.0
        %6273 = vmatmul.mubr.f32.gmra.mxu0 %v6157
        %v6274 = vpop.f32.mrf.mxu0
        %v6275 = vadd.f32 0.0, %v6274
        %v6276 = vpop.f32.mrf.mxu0
        %6277 = vmatprep.mubr.f32.mxu0 0.0
        %6278 = vmatmul.mubr.f32.gmra.mxu0 %v6160
        %v6279 = vpop.f32.mrf.mxu0
        %v6280 = vadd.f32 0.0, %v6279
        %v6281 = vpop.f32.mrf.mxu0
        %6282 = vmatprep.mubr.f32.mxu0 0.0
        %6283 = vmatmul.mubr.f32.gmra.mxu0 %v6163
        %v6284 = vpop.f32.mrf.mxu0
        %v6285 = vadd.f32 0.0, %v6284
        %v6286 = vpop.f32.mrf.mxu0
        %6287 = vmatprep.mubr.f32.mxu0 0.0
        %6288 = vmatmul.mubr.f32.gmra.mxu0 %v6166
        %v6289 = vpop.f32.mrf.mxu0
        %v6290 = vadd.f32 0.0, %v6289
        %v6291 = vpop.f32.mrf.mxu0
        %6292 = vmatprep.mubr.f32.mxu0 0.0
        %6293 = vmatmul.mubr.f32.gmra.mxu0 %v6169
        %v6294 = vpop.f32.mrf.mxu0
        %v6295 = vadd.f32 0.0, %v6294
        %v6296 = vpop.f32.mrf.mxu0
        %6297 = vmatprep.mubr.f32.mxu0 0.0
        %6298 = vmatmul.mubr.f32.gmra.mxu0 %v6172
        %v6299 = vpop.f32.mrf.mxu0
        %v6300 = vadd.f32 0.0, %v6299
        %v6301 = vpop.f32.mrf.mxu0
        %6302 = vmatprep.mubr.f32.mxu0 0.0
        %6303 = vmatmul.mubr.f32.gmra.mxu0 %v6175
        %v6304 = vpop.f32.mrf.mxu0
        %v6305 = vadd.f32 0.0, %v6304
        %v6306 = vpop.f32.mrf.mxu0
        %6307 = vmatprep.mubr.f32.mxu0 0.0
        %6308 = vmatmul.mubr.f32.gmra.mxu0 %v6178
        %v6309 = vpop.f32.mrf.mxu0
        %v6310 = vadd.f32 0.0, %v6309
        %v6311 = vpop.f32.mrf.mxu0
        %6312 = vmatprep.mubr.f32.mxu0 0.0
        %6313 = vmatmul.mubr.f32.gmra.mxu0 %v6181
        %v6314 = vpop.f32.mrf.mxu0
        %v6315 = vadd.f32 0.0, %v6314
        %v6316 = vpop.f32.mrf.mxu0
        %6317 = vmatprep.mubr.f32.mxu0 0.0
        %6318 = vmatmul.mubr.f32.gmra.mxu0 %v6184
        %v6319 = vpop.f32.mrf.mxu0
        %v6320 = vadd.f32 0.0, %v6319
        %v6321 = vpop.f32.mrf.mxu0
        %6322 = vmatprep.mubr.f32.mxu0 0.0
        %6323 = vmatmul.mubr.f32.gmra.mxu0 %v6187
        %v6324 = vpop.f32.mrf.mxu0
        %v6325 = vadd.f32 0.0, %v6324
        %v6326 = vpop.f32.mrf.mxu0
        %6327 = vdwg.mxu0
        %v6328 = vld [vmem:[%s9] sm:$0xff]
        %v6329 = vld [vmem:[%s9 + $0x8] sm:$0xff]
        %v6330 = vld [vmem:[%s9 + $0x10] sm:$0xff]
        %v6331 = vld [vmem:[%s9 + $0x18] sm:$0xff]
        %v6332 = vld [vmem:[%s9 + $0x20] sm:$0xff]
        %v6333 = vld [vmem:[%s9 + $0x28] sm:$0xff]
        %v6334 = vld [vmem:[%s9 + $0x30] sm:$0xff]
        %v6335 = vld [vmem:[%s9 + $0x38] sm:$0xff]
        %v6336 = vld [vmem:[%s9 + $0x40] sm:$0xff]
        %v6337 = vld [vmem:[%s9 + $0x48] sm:$0xff]
        %v6338 = vld [vmem:[%s9 + $0x50] sm:$0xff]
        %v6339 = vld [vmem:[%s9 + $0x58] sm:$0xff]
        %v6340 = vld [vmem:[%s9 + $0x60] sm:$0xff]
        %v6341 = vld [vmem:[%s9 + $0x68] sm:$0xff]
        %v6342 = vld [vmem:[%s9 + $0x70] sm:$0xff]
        %v6343 = vld [vmem:[%s9 + $0x78] sm:$0xff]
        %v6344 = vld [vmem:[%s9 + $0x80] sm:$0xff]
        %v6345 = vld [vmem:[%s9 + $0x88] sm:$0xff]
        %v6346 = vld [vmem:[%s9 + $0x90] sm:$0xff]
        %v6347 = vld [vmem:[%s9 + $0x98] sm:$0xff]
        %v6348 = vld [vmem:[%s9 + $0xa0] sm:$0xff]
        %v6349 = vld [vmem:[%s9 + $0xa8] sm:$0xff]
        %v6350 = vld [vmem:[%s9 + $0xb0] sm:$0xff]
        %v6351 = vld [vmem:[%s9 + $0xb8] sm:$0xff]
        %v6352 = vld [vmem:[%s9 + $0xc0] sm:$0xff]
        %v6353 = vld [vmem:[%s9 + $0xc8] sm:$0xff]
        %v6354 = vld [vmem:[%s9 + $0xd0] sm:$0xff]
        %v6355 = vld [vmem:[%s9 + $0xd8] sm:$0xff]
        %s6356 = scalar_lea.vmem [#allocation8], 8
        %v6357 = vld [vmem:[%s6356] sm:$0x7f]
        %v6359 = vsel %vm6189, %v6357, 0
        %6361 = vmatprep.subr.mxu0 0.0
        %6362 = vmatpush1.msra.mxu0 0.0
        %6363 = vmatprep.subr.mxu0 0.0
        %6364 = vmatpush1.msra.mxu0 0.0
        %6365 = vmatprep.subr.mxu0 0.0
        %6366 = vmatpush1.msra.mxu0 0.0
        %6367 = vmatprep.subr.mxu0 0.0
        %6368 = vmatpush1.msra.mxu0 0.0
        %6369 = vmatprep.subr.mxu0 0.0
        %6370 = vmatpush1.msra.mxu0 0.0
        %6371 = vmatprep.subr.mxu0 0.0
        %6372 = vmatpush1.msra.mxu0 0.0
        %6373 = vmatprep.subr.mxu0 0.0
        %6374 = vmatpush1.msra.mxu0 0.0
        %6375 = vmatprep.subr.mxu0 0.0
        %6376 = vmatpush1.msra.mxu0 0.0
        %6377 = vmatprep.subr.mxu0 0.0
        %6378 = vmatpush1.msra.mxu0 0.0
        %6379 = vmatprep.subr.mxu0 0.0
        %6380 = vmatpush1.msra.mxu0 0.0
        %6381 = vmatprep.subr.mxu0 0.0
        %6382 = vmatpush1.msra.mxu0 0.0
        %6383 = vmatprep.subr.mxu0 0.0
        %6384 = vmatpush1.msra.mxu0 0.0
        %6385 = vmatprep.subr.mxu0 0.0
        %6386 = vmatpush1.msra.mxu0 0.0
        %6387 = vmatprep.subr.mxu0 0.0
        %6388 = vmatpush1.msra.mxu0 0.0
        %6389 = vmatprep.subr.mxu0 0.0
        %6390 = vmatpush1.msra.mxu0 0.0
        %6391 = vmatprep.subr.mxu0 0.0
        %6392 = vmatpush1.msra.mxu0 %v6359
        %6393 = vmatprep.subr.mxu0 0.0
        %6394 = vmatpush2.msra.mxu0 0.0
        %6395 = vmatprep.subr.mxu0 0.0
        %6396 = vmatpush2.msra.mxu0 0.0
        %6397 = vmatprep.subr.mxu0 0.0
        %6398 = vmatpush2.msra.mxu0 0.0
        %6399 = vmatprep.subr.mxu0 0.0
        %6400 = vmatpush2.msra.mxu0 0.0
        %6401 = vmatprep.subr.mxu0 0.0
        %6402 = vmatpush2.msra.mxu0 0.0
        %6403 = vmatprep.subr.mxu0 0.0
        %6404 = vmatpush2.msra.mxu0 0.0
        %6405 = vmatprep.subr.mxu0 0.0
        %6406 = vmatpush2.msra.mxu0 0.0
        %6407 = vmatprep.subr.mxu0 0.0
        %6408 = vmatpush2.msra.mxu0 0.0
        %6409 = vmatprep.subr.mxu0 0.0
        %6410 = vmatpush2.msra.mxu0 0.0
        %6411 = vmatprep.subr.mxu0 0.0
        %6412 = vmatpush2.msra.mxu0 0.0
        %6413 = vmatprep.subr.mxu0 0.0
        %6414 = vmatpush2.msra.mxu0 0.0
        %6415 = vmatprep.subr.mxu0 0.0
        %6416 = vmatpush2.msra.mxu0 0.0
        %6417 = vmatprep.subr.mxu0 0.0
        %6418 = vmatpush2.msra.mxu0 0.0
        %6419 = vmatprep.subr.mxu0 0.0
        %6420 = vmatpush2.msra.mxu0 0.0
        %6421 = vmatprep.subr.mxu0 0.0
        %6422 = vmatpush2.msra.mxu0 0.0
        %6423 = vmatprep.subr.mxu0 0.0
        %6424 = vmatpush2.msra.mxu0 0.0
        %6425 = vmatprep.mubr.f32.mxu0 0.0
        %6426 = vmatmul.mubr.f32.gmra.mxu0 %v6148
        %v6427 = vpop.f32.mrf.mxu0
        %v6428 = vadd.f32 0.0, %v6427
        %v6429 = vpop.f32.mrf.mxu0
        %6430 = vmatprep.mubr.f32.mxu0 0.0
        %6431 = vmatmul.mubr.f32.gmra.mxu0 %v6151
        %v6432 = vpop.f32.mrf.mxu0
        %v6433 = vadd.f32 0.0, %v6432
        %v6434 = vpop.f32.mrf.mxu0
        %6435 = vmatprep.mubr.f32.mxu0 0.0
        %6436 = vmatmul.mubr.f32.gmra.mxu0 %v6154
        %v6437 = vpop.f32.mrf.mxu0
        %v6438 = vadd.f32 0.0, %v6437
        %v6439 = vpop.f32.mrf.mxu0
        %6440 = vmatprep.mubr.f32.mxu0 0.0
        %6441 = vmatmul.mubr.f32.gmra.mxu0 %v6157
        %v6442 = vpop.f32.mrf.mxu0
        %v6443 = vadd.f32 0.0, %v6442
        %v6444 = vpop.f32.mrf.mxu0
        %6445 = vmatprep.mubr.f32.mxu0 0.0
        %6446 = vmatmul.mubr.f32.gmra.mxu0 %v6160
        %v6447 = vpop.f32.mrf.mxu0
        %v6448 = vadd.f32 0.0, %v6447
        %v6449 = vpop.f32.mrf.mxu0
        %6450 = vmatprep.mubr.f32.mxu0 0.0
        %6451 = vmatmul.mubr.f32.gmra.mxu0 %v6163
        %v6452 = vpop.f32.mrf.mxu0
        %v6453 = vadd.f32 0.0, %v6452
        %v6454 = vpop.f32.mrf.mxu0
        %6455 = vmatprep.mubr.f32.mxu0 0.0
        %6456 = vmatmul.mubr.f32.gmra.mxu0 %v6166
        %v6457 = vpop.f32.mrf.mxu0
        %v6458 = vadd.f32 0.0, %v6457
        %v6459 = vpop.f32.mrf.mxu0
        %6460 = vmatprep.mubr.f32.mxu0 0.0
        %6461 = vmatmul.mubr.f32.gmra.mxu0 %v6169
        %v6462 = vpop.f32.mrf.mxu0
        %v6463 = vadd.f32 0.0, %v6462
        %v6464 = vpop.f32.mrf.mxu0
        %6465 = vmatprep.mubr.f32.mxu0 0.0
        %6466 = vmatmul.mubr.f32.gmra.mxu0 %v6172
        %v6467 = vpop.f32.mrf.mxu0
        %v6468 = vadd.f32 0.0, %v6467
        %v6469 = vpop.f32.mrf.mxu0
        %6470 = vmatprep.mubr.f32.mxu0 0.0
        %6471 = vmatmul.mubr.f32.gmra.mxu0 %v6175
        %v6472 = vpop.f32.mrf.mxu0
        %v6473 = vadd.f32 0.0, %v6472
        %v6474 = vpop.f32.mrf.mxu0
        %6475 = vmatprep.mubr.f32.mxu0 0.0
        %6476 = vmatmul.mubr.f32.gmra.mxu0 %v6178
        %v6477 = vpop.f32.mrf.mxu0
        %v6478 = vadd.f32 0.0, %v6477
        %v6479 = vpop.f32.mrf.mxu0
        %6480 = vmatprep.mubr.f32.mxu0 0.0
        %6481 = vmatmul.mubr.f32.gmra.mxu0 %v6181
        %v6482 = vpop.f32.mrf.mxu0
        %v6483 = vadd.f32 0.0, %v6482
        %v6484 = vpop.f32.mrf.mxu0
        %6485 = vmatprep.mubr.f32.mxu0 0.0
        %6486 = vmatmul.mubr.f32.gmra.mxu0 %v6184
        %v6487 = vpop.f32.mrf.mxu0
        %v6488 = vadd.f32 0.0, %v6487
        %v6489 = vpop.f32.mrf.mxu0
        %6490 = vmatprep.mubr.f32.mxu0 0.0
        %6491 = vmatmul.mubr.f32.gmra.mxu0 %v6187
        %v6492 = vpop.f32.mrf.mxu0
        %v6493 = vadd.f32 0.0, %v6492
        %v6494 = vpop.f32.mrf.mxu0
        %6495 = vdwg.mxu0
        %s6496 = scalar_lea.vmem %s9, 224
        %v6497 = vld [vmem:[%s6496] sm:$0xff]
        %v6498 = vld [vmem:[%s6496 + $0x8] sm:$0xff]
        %v6499 = vld [vmem:[%s6496 + $0x10] sm:$0xff]
        %v6500 = vld [vmem:[%s6496 + $0x18] sm:$0xff]
        %v6501 = vld [vmem:[%s6496 + $0x20] sm:$0xff]
        %v6502 = vld [vmem:[%s6496 + $0x28] sm:$0xff]
        %v6503 = vld [vmem:[%s6496 + $0x30] sm:$0xff]
        %v6504 = vld [vmem:[%s6496 + $0x38] sm:$0xff]
        %v6505 = vld [vmem:[%s6496 + $0x40] sm:$0xff]
        %v6506 = vld [vmem:[%s6496 + $0x48] sm:$0xff]
        %v6507 = vld [vmem:[%s6496 + $0x50] sm:$0xff]
        %v6508 = vld [vmem:[%s6496 + $0x58] sm:$0xff]
        %v6509 = vld [vmem:[%s6496 + $0x60] sm:$0xff]
        %v6510 = vld [vmem:[%s6496 + $0x68] sm:$0xff]
        %v6511 = vld [vmem:[%s6496 + $0x70] sm:$0xff]
        %v6512 = vld [vmem:[%s6496 + $0x78] sm:$0xff]
        %v6513 = vld [vmem:[%s6496 + $0x80] sm:$0xff]
        %v6514 = vld [vmem:[%s6496 + $0x88] sm:$0xff]
        %v6515 = vld [vmem:[%s6496 + $0x90] sm:$0xff]
        %v6516 = vld [vmem:[%s6496 + $0x98] sm:$0xff]
        %v6517 = vld [vmem:[%s6496 + $0xa0] sm:$0xff]
        %v6518 = vld [vmem:[%s6496 + $0xa8] sm:$0xff]
        %v6519 = vld [vmem:[%s6496 + $0xb0] sm:$0xff]
        %v6520 = vld [vmem:[%s6496 + $0xb8] sm:$0xff]
        %v6521 = vld [vmem:[%s6496 + $0xc0] sm:$0xff]
        %v6522 = vld [vmem:[%s6496 + $0xc8] sm:$0xff]
        %v6523 = vld [vmem:[%s6496 + $0xd0] sm:$0xff]
        %v6524 = vld [vmem:[%s6496 + $0xd8] sm:$0xff]
        %v6526 = vsel %vm3410, %v6497, 0
        %v6529 = vsel %vm3410, %v6498, 0
        %v6532 = vsel %vm3410, %v6499, 0
        %v6535 = vsel %vm3410, %v6500, 0
        %v6538 = vsel %vm3410, %v6501, 0
        %v6541 = vsel %vm3410, %v6502, 0
        %v6544 = vsel %vm3410, %v6503, 0
        %v6547 = vsel %vm3410, %v6504, 0
        %v6550 = vsel %vm3410, %v6505, 0
        %v6553 = vsel %vm3410, %v6506, 0
        %v6556 = vsel %vm3410, %v6507, 0
        %v6559 = vsel %vm3410, %v6508, 0
        %v6562 = vsel %vm3410, %v6509, 0
        %v6565 = vsel %vm3410, %v6510, 0
        %v6568 = vsel %vm3410, %v6511, 0
        %v6571 = vsel %vm3410, %v6512, 0
        %v6574 = vsel %vm3410, %v6513, 0
        %v6577 = vsel %vm3410, %v6514, 0
        %v6580 = vsel %vm3410, %v6515, 0
        %v6583 = vsel %vm3410, %v6516, 0
        %v6586 = vsel %vm3410, %v6517, 0
        %v6589 = vsel %vm3410, %v6518, 0
        %v6592 = vsel %vm3410, %v6519, 0
        %v6595 = vsel %vm3410, %v6520, 0
        %v6598 = vsel %vm3410, %v6521, 0
        %v6601 = vsel %vm3410, %v6522, 0
        %v6604 = vsel %vm3410, %v6523, 0
        %v6607 = vsel %vm3410, %v6524, 0
        %6609 = vmatprep.subr.mxu0 0.0
        %6610 = vmatpush1.msra.mxu0 0.0
        %6611 = vmatprep.subr.mxu0 0.0
        %6612 = vmatpush1.msra.mxu0 0.0
        %6613 = vmatprep.subr.mxu0 0.0
        %6614 = vmatpush1.msra.mxu0 %v6493
        %6615 = vmatprep.subr.mxu0 0.0
        %6616 = vmatpush1.msra.mxu0 %v6488
        %6617 = vmatprep.subr.mxu0 0.0
        %6618 = vmatpush1.msra.mxu0 %v6483
        %6619 = vmatprep.subr.mxu0 0.0
        %6620 = vmatpush1.msra.mxu0 %v6478
        %6621 = vmatprep.subr.mxu0 0.0
        %6622 = vmatpush1.msra.mxu0 %v6473
        %6623 = vmatprep.subr.mxu0 0.0
        %6624 = vmatpush1.msra.mxu0 %v6468
        %6625 = vmatprep.subr.mxu0 0.0
        %6626 = vmatpush1.msra.mxu0 %v6463
        %6627 = vmatprep.subr.mxu0 0.0
        %6628 = vmatpush1.msra.mxu0 %v6458
        %6629 = vmatprep.subr.mxu0 0.0
        %6630 = vmatpush1.msra.mxu0 %v6453
        %6631 = vmatprep.subr.mxu0 0.0
        %6632 = vmatpush1.msra.mxu0 %v6448
        %6633 = vmatprep.subr.mxu0 0.0
        %6634 = vmatpush1.msra.mxu0 %v6443
        %6635 = vmatprep.subr.mxu0 0.0
        %6636 = vmatpush1.msra.mxu0 %v6438
        %6637 = vmatprep.subr.mxu0 0.0
        %6638 = vmatpush1.msra.mxu0 %v6433
        %6639 = vmatprep.subr.mxu0 0.0
        %6640 = vmatpush1.msra.mxu0 %v6428
        %6641 = vmatprep.subr.mxu0 0.0
        %6642 = vmatpush2.msra.mxu0 0.0
        %6643 = vmatprep.subr.mxu0 0.0
        %6644 = vmatpush2.msra.mxu0 0.0
        %6645 = vmatprep.subr.mxu0 0.0
        %6646 = vmatpush2.msra.mxu0 0.0
        %6647 = vmatprep.subr.mxu0 0.0
        %6648 = vmatpush2.msra.mxu0 0.0
        %6649 = vmatprep.subr.mxu0 0.0
        %6650 = vmatpush2.msra.mxu0 0.0
        %6651 = vmatprep.subr.mxu0 0.0
        %6652 = vmatpush2.msra.mxu0 0.0
        %6653 = vmatprep.subr.mxu0 0.0
        %6654 = vmatpush2.msra.mxu0 0.0
        %6655 = vmatprep.subr.mxu0 0.0
        %6656 = vmatpush2.msra.mxu0 0.0
        %6657 = vmatprep.subr.mxu0 0.0
        %6658 = vmatpush2.msra.mxu0 0.0
        %6659 = vmatprep.subr.mxu0 0.0
        %6660 = vmatpush2.msra.mxu0 0.0
        %6661 = vmatprep.subr.mxu0 0.0
        %6662 = vmatpush2.msra.mxu0 0.0
        %6663 = vmatprep.subr.mxu0 0.0
        %6664 = vmatpush2.msra.mxu0 0.0
        %6665 = vmatprep.subr.mxu0 0.0
        %6666 = vmatpush2.msra.mxu0 0.0
        %6667 = vmatprep.subr.mxu0 0.0
        %6668 = vmatpush2.msra.mxu0 0.0
        %6669 = vmatprep.subr.mxu0 0.0
        %6670 = vmatpush2.msra.mxu0 0.0
        %6671 = vmatprep.subr.mxu0 0.0
        %6672 = vmatpush2.msra.mxu0 0.0
        %6673 = vmatprep.mubr.f32.mxu0 0.0
        %6674 = vmatmul.mubr.f32.gmra.mxu0 %v6526
        %v6675 = vpop.f32.mrf.mxu0
        %v6676 = vadd.f32 0.0, %v6675
        %v6677 = vpop.f32.mrf.mxu0
        %6678 = vmatprep.mubr.f32.mxu0 0.0
        %6679 = vmatmul.mubr.f32.gmra.mxu0 %v6529
        %v6680 = vpop.f32.mrf.mxu0
        %v6681 = vadd.f32 0.0, %v6680
        %v6682 = vpop.f32.mrf.mxu0
        %6683 = vmatprep.mubr.f32.mxu0 0.0
        %6684 = vmatmul.mubr.f32.gmra.mxu0 %v6532
        %v6685 = vpop.f32.mrf.mxu0
        %v6686 = vadd.f32 0.0, %v6685
        %v6687 = vpop.f32.mrf.mxu0
        %6688 = vmatprep.mubr.f32.mxu0 0.0
        %6689 = vmatmul.mubr.f32.gmra.mxu0 %v6535
        %v6690 = vpop.f32.mrf.mxu0
        %v6691 = vadd.f32 0.0, %v6690
        %v6692 = vpop.f32.mrf.mxu0
        %6693 = vmatprep.mubr.f32.mxu0 0.0
        %6694 = vmatmul.mubr.f32.gmra.mxu0 %v6538
        %v6695 = vpop.f32.mrf.mxu0
        %v6696 = vadd.f32 0.0, %v6695
        %v6697 = vpop.f32.mrf.mxu0
        %6698 = vmatprep.mubr.f32.mxu0 0.0
        %6699 = vmatmul.mubr.f32.gmra.mxu0 %v6541
        %v6700 = vpop.f32.mrf.mxu0
        %v6701 = vadd.f32 0.0, %v6700
        %v6702 = vpop.f32.mrf.mxu0
        %6703 = vmatprep.mubr.f32.mxu0 0.0
        %6704 = vmatmul.mubr.f32.gmra.mxu0 %v6544
        %v6705 = vpop.f32.mrf.mxu0
        %v6706 = vadd.f32 0.0, %v6705
        %v6707 = vpop.f32.mrf.mxu0
        %6708 = vmatprep.mubr.f32.mxu0 0.0
        %6709 = vmatmul.mubr.f32.gmra.mxu0 %v6547
        %v6710 = vpop.f32.mrf.mxu0
        %v6711 = vadd.f32 0.0, %v6710
        %v6712 = vpop.f32.mrf.mxu0
        %6713 = vmatprep.mubr.f32.mxu0 0.0
        %6714 = vmatmul.mubr.f32.gmra.mxu0 %v6550
        %v6715 = vpop.f32.mrf.mxu0
        %v6716 = vadd.f32 0.0, %v6715
        %v6717 = vpop.f32.mrf.mxu0
        %6718 = vmatprep.mubr.f32.mxu0 0.0
        %6719 = vmatmul.mubr.f32.gmra.mxu0 %v6553
        %v6720 = vpop.f32.mrf.mxu0
        %v6721 = vadd.f32 0.0, %v6720
        %v6722 = vpop.f32.mrf.mxu0
        %6723 = vmatprep.mubr.f32.mxu0 0.0
        %6724 = vmatmul.mubr.f32.gmra.mxu0 %v6556
        %v6725 = vpop.f32.mrf.mxu0
        %v6726 = vadd.f32 0.0, %v6725
        %v6727 = vpop.f32.mrf.mxu0
        %6728 = vmatprep.mubr.f32.mxu0 0.0
        %6729 = vmatmul.mubr.f32.gmra.mxu0 %v6559
        %v6730 = vpop.f32.mrf.mxu0
        %v6731 = vadd.f32 0.0, %v6730
        %v6732 = vpop.f32.mrf.mxu0
        %6733 = vmatprep.mubr.f32.mxu0 0.0
        %6734 = vmatmul.mubr.f32.gmra.mxu0 %v6562
        %v6735 = vpop.f32.mrf.mxu0
        %v6736 = vadd.f32 0.0, %v6735
        %v6737 = vpop.f32.mrf.mxu0
        %6738 = vmatprep.mubr.f32.mxu0 0.0
        %6739 = vmatmul.mubr.f32.gmra.mxu0 %v6565
        %v6740 = vpop.f32.mrf.mxu0
        %v6741 = vadd.f32 0.0, %v6740
        %v6742 = vpop.f32.mrf.mxu0
        %6743 = vmatprep.mubr.f32.mxu0 0.0
        %6744 = vmatmul.mubr.f32.gmra.mxu0 %v6568
        %v6745 = vpop.f32.mrf.mxu0
        %v6746 = vadd.f32 0.0, %v6745
        %v6747 = vpop.f32.mrf.mxu0
        %6748 = vmatprep.mubr.f32.mxu0 0.0
        %6749 = vmatmul.mubr.f32.gmra.mxu0 %v6571
        %v6750 = vpop.f32.mrf.mxu0
        %v6751 = vadd.f32 0.0, %v6750
        %v6752 = vpop.f32.mrf.mxu0
        %6753 = vmatprep.mubr.f32.mxu0 0.0
        %6754 = vmatmul.mubr.f32.gmra.mxu0 %v6574
        %v6755 = vpop.f32.mrf.mxu0
        %v6756 = vadd.f32 0.0, %v6755
        %v6757 = vpop.f32.mrf.mxu0
        %6758 = vmatprep.mubr.f32.mxu0 0.0
        %6759 = vmatmul.mubr.f32.gmra.mxu0 %v6577
        %v6760 = vpop.f32.mrf.mxu0
        %v6761 = vadd.f32 0.0, %v6760
        %v6762 = vpop.f32.mrf.mxu0
        %6763 = vmatprep.mubr.f32.mxu0 0.0
        %6764 = vmatmul.mubr.f32.gmra.mxu0 %v6580
        %v6765 = vpop.f32.mrf.mxu0
        %v6766 = vadd.f32 0.0, %v6765
        %v6767 = vpop.f32.mrf.mxu0
        %6768 = vmatprep.mubr.f32.mxu0 0.0
        %6769 = vmatmul.mubr.f32.gmra.mxu0 %v6583
        %v6770 = vpop.f32.mrf.mxu0
        %v6771 = vadd.f32 0.0, %v6770
        %v6772 = vpop.f32.mrf.mxu0
        %6773 = vmatprep.mubr.f32.mxu0 0.0
        %6774 = vmatmul.mubr.f32.gmra.mxu0 %v6586
        %v6775 = vpop.f32.mrf.mxu0
        %v6776 = vadd.f32 0.0, %v6775
        %v6777 = vpop.f32.mrf.mxu0
        %6778 = vmatprep.mubr.f32.mxu0 0.0
        %6779 = vmatmul.mubr.f32.gmra.mxu0 %v6589
        %v6780 = vpop.f32.mrf.mxu0
        %v6781 = vadd.f32 0.0, %v6780
        %v6782 = vpop.f32.mrf.mxu0
        %6783 = vmatprep.mubr.f32.mxu0 0.0
        %6784 = vmatmul.mubr.f32.gmra.mxu0 %v6592
        %v6785 = vpop.f32.mrf.mxu0
        %v6786 = vadd.f32 0.0, %v6785
        %v6787 = vpop.f32.mrf.mxu0
        %6788 = vmatprep.mubr.f32.mxu0 0.0
        %6789 = vmatmul.mubr.f32.gmra.mxu0 %v6595
        %v6790 = vpop.f32.mrf.mxu0
        %v6791 = vadd.f32 0.0, %v6790
        %v6792 = vpop.f32.mrf.mxu0
        %6793 = vmatprep.mubr.f32.mxu0 0.0
        %6794 = vmatmul.mubr.f32.gmra.mxu0 %v6598
        %v6795 = vpop.f32.mrf.mxu0
        %v6796 = vadd.f32 0.0, %v6795
        %v6797 = vpop.f32.mrf.mxu0
        %6798 = vmatprep.mubr.f32.mxu0 0.0
        %6799 = vmatmul.mubr.f32.gmra.mxu0 %v6601
        %v6800 = vpop.f32.mrf.mxu0
        %v6801 = vadd.f32 0.0, %v6800
        %v6802 = vpop.f32.mrf.mxu0
        %6803 = vmatprep.mubr.f32.mxu0 0.0
        %6804 = vmatmul.mubr.f32.gmra.mxu0 %v6604
        %v6805 = vpop.f32.mrf.mxu0
        %v6806 = vadd.f32 0.0, %v6805
        %v6807 = vpop.f32.mrf.mxu0
        %6808 = vmatprep.mubr.f32.mxu0 0.0
        %6809 = vmatmul.mubr.f32.gmra.mxu0 %v6607
        %v6810 = vpop.f32.mrf.mxu0
        %v6811 = vadd.f32 0.0, %v6810
        %v6812 = vpop.f32.mrf.mxu0
        %6813 = vdwg.mxu0
        %v6815 = vsel %vm3410, %v6328, 0
        %v6818 = vsel %vm3410, %v6329, 0
        %v6821 = vsel %vm3410, %v6330, 0
        %v6824 = vsel %vm3410, %v6331, 0
        %v6827 = vsel %vm3410, %v6332, 0
        %v6830 = vsel %vm3410, %v6333, 0
        %v6833 = vsel %vm3410, %v6334, 0
        %v6836 = vsel %vm3410, %v6335, 0
        %v6839 = vsel %vm3410, %v6336, 0
        %v6842 = vsel %vm3410, %v6337, 0
        %v6845 = vsel %vm3410, %v6338, 0
        %v6848 = vsel %vm3410, %v6339, 0
        %v6851 = vsel %vm3410, %v6340, 0
        %v6854 = vsel %vm3410, %v6341, 0
        %v6857 = vsel %vm3410, %v6342, 0
        %v6860 = vsel %vm3410, %v6343, 0
        %v6863 = vsel %vm3410, %v6344, 0
        %v6866 = vsel %vm3410, %v6345, 0
        %v6869 = vsel %vm3410, %v6346, 0
        %v6872 = vsel %vm3410, %v6347, 0
        %v6875 = vsel %vm3410, %v6348, 0
        %v6878 = vsel %vm3410, %v6349, 0
        %v6881 = vsel %vm3410, %v6350, 0
        %v6884 = vsel %vm3410, %v6351, 0
        %v6887 = vsel %vm3410, %v6352, 0
        %v6890 = vsel %vm3410, %v6353, 0
        %v6893 = vsel %vm3410, %v6354, 0
        %v6896 = vsel %vm3410, %v6355, 0
        %6898 = vmatprep.subr.mxu0 0.0
        %6899 = vmatpush1.msra.mxu0 0.0
        %6900 = vmatprep.subr.mxu0 0.0
        %6901 = vmatpush1.msra.mxu0 0.0
        %6902 = vmatprep.subr.mxu0 0.0
        %6903 = vmatpush1.msra.mxu0 %v6325
        %6904 = vmatprep.subr.mxu0 0.0
        %6905 = vmatpush1.msra.mxu0 %v6320
        %6906 = vmatprep.subr.mxu0 0.0
        %6907 = vmatpush1.msra.mxu0 %v6315
        %6908 = vmatprep.subr.mxu0 0.0
        %6909 = vmatpush1.msra.mxu0 %v6310
        %6910 = vmatprep.subr.mxu0 0.0
        %6911 = vmatpush1.msra.mxu0 %v6305
        %6912 = vmatprep.subr.mxu0 0.0
        %6913 = vmatpush1.msra.mxu0 %v6300
        %6914 = vmatprep.subr.mxu0 0.0
        %6915 = vmatpush1.msra.mxu0 %v6295
        %6916 = vmatprep.subr.mxu0 0.0
        %6917 = vmatpush1.msra.mxu0 %v6290
        %6918 = vmatprep.subr.mxu0 0.0
        %6919 = vmatpush1.msra.mxu0 %v6285
        %6920 = vmatprep.subr.mxu0 0.0
        %6921 = vmatpush1.msra.mxu0 %v6280
        %6922 = vmatprep.subr.mxu0 0.0
        %6923 = vmatpush1.msra.mxu0 %v6275
        %6924 = vmatprep.subr.mxu0 0.0
        %6925 = vmatpush1.msra.mxu0 %v6270
        %6926 = vmatprep.subr.mxu0 0.0
        %6927 = vmatpush1.msra.mxu0 %v6265
        %6928 = vmatprep.subr.mxu0 0.0
        %6929 = vmatpush1.msra.mxu0 %v6260
        %6930 = vmatprep.subr.mxu0 0.0
        %6931 = vmatpush2.msra.mxu0 0.0
        %6932 = vmatprep.subr.mxu0 0.0
        %6933 = vmatpush2.msra.mxu0 0.0
        %6934 = vmatprep.subr.mxu0 0.0
        %6935 = vmatpush2.msra.mxu0 0.0
        %6936 = vmatprep.subr.mxu0 0.0
        %6937 = vmatpush2.msra.mxu0 0.0
        %6938 = vmatprep.subr.mxu0 0.0
        %6939 = vmatpush2.msra.mxu0 0.0
        %6940 = vmatprep.subr.mxu0 0.0
        %6941 = vmatpush2.msra.mxu0 0.0
        %6942 = vmatprep.subr.mxu0 0.0
        %6943 = vmatpush2.msra.mxu0 0.0
        %6944 = vmatprep.subr.mxu0 0.0
        %6945 = vmatpush2.msra.mxu0 0.0
        %6946 = vmatprep.subr.mxu0 0.0
        %6947 = vmatpush2.msra.mxu0 0.0
        %6948 = vmatprep.subr.mxu0 0.0
        %6949 = vmatpush2.msra.mxu0 0.0
        %6950 = vmatprep.subr.mxu0 0.0
        %6951 = vmatpush2.msra.mxu0 0.0
        %6952 = vmatprep.subr.mxu0 0.0
        %6953 = vmatpush2.msra.mxu0 0.0
        %6954 = vmatprep.subr.mxu0 0.0
        %6955 = vmatpush2.msra.mxu0 0.0
        %6956 = vmatprep.subr.mxu0 0.0
        %6957 = vmatpush2.msra.mxu0 0.0
        %6958 = vmatprep.subr.mxu0 0.0
        %6959 = vmatpush2.msra.mxu0 0.0
        %6960 = vmatprep.subr.mxu0 0.0
        %6961 = vmatpush2.msra.mxu0 0.0
        %6962 = vmatprep.mubr.f32.mxu0 0.0
        %6963 = vmatmul.mubr.f32.gmra.mxu0 %v6815
        %v6964 = vpop.f32.mrf.mxu0
        %v6965 = vadd.f32 %v6676, %v6964
        %v6966 = vpop.f32.mrf.mxu0
        %6967 = vmatprep.mubr.f32.mxu0 0.0
        %6968 = vmatmul.mubr.f32.gmra.mxu0 %v6818
        %v6969 = vpop.f32.mrf.mxu0
        %v6970 = vadd.f32 %v6681, %v6969
        %v6971 = vpop.f32.mrf.mxu0
        %6972 = vmatprep.mubr.f32.mxu0 0.0
        %6973 = vmatmul.mubr.f32.gmra.mxu0 %v6821
        %v6974 = vpop.f32.mrf.mxu0
        %v6975 = vadd.f32 %v6686, %v6974
        %v6976 = vpop.f32.mrf.mxu0
        %6977 = vmatprep.mubr.f32.mxu0 0.0
        %6978 = vmatmul.mubr.f32.gmra.mxu0 %v6824
        %v6979 = vpop.f32.mrf.mxu0
        %v6980 = vadd.f32 %v6691, %v6979
        %v6981 = vpop.f32.mrf.mxu0
        %6982 = vmatprep.mubr.f32.mxu0 0.0
        %6983 = vmatmul.mubr.f32.gmra.mxu0 %v6827
        %v6984 = vpop.f32.mrf.mxu0
        %v6985 = vadd.f32 %v6696, %v6984
        %v6986 = vpop.f32.mrf.mxu0
        %6987 = vmatprep.mubr.f32.mxu0 0.0
        %6988 = vmatmul.mubr.f32.gmra.mxu0 %v6830
        %v6989 = vpop.f32.mrf.mxu0
        %v6990 = vadd.f32 %v6701, %v6989
        %v6991 = vpop.f32.mrf.mxu0
        %6992 = vmatprep.mubr.f32.mxu0 0.0
        %6993 = vmatmul.mubr.f32.gmra.mxu0 %v6833
        %v6994 = vpop.f32.mrf.mxu0
        %v6995 = vadd.f32 %v6706, %v6994
        %v6996 = vpop.f32.mrf.mxu0
        %6997 = vmatprep.mubr.f32.mxu0 0.0
        %6998 = vmatmul.mubr.f32.gmra.mxu0 %v6836
        %v6999 = vpop.f32.mrf.mxu0
        %v7000 = vadd.f32 %v6711, %v6999
        %v7001 = vpop.f32.mrf.mxu0
        %7002 = vmatprep.mubr.f32.mxu0 0.0
        %7003 = vmatmul.mubr.f32.gmra.mxu0 %v6839
        %v7004 = vpop.f32.mrf.mxu0
        %v7005 = vadd.f32 %v6716, %v7004
        %v7006 = vpop.f32.mrf.mxu0
        %7007 = vmatprep.mubr.f32.mxu0 0.0
        %7008 = vmatmul.mubr.f32.gmra.mxu0 %v6842
        %v7009 = vpop.f32.mrf.mxu0
        %v7010 = vadd.f32 %v6721, %v7009
        %v7011 = vpop.f32.mrf.mxu0
        %7012 = vmatprep.mubr.f32.mxu0 0.0
        %7013 = vmatmul.mubr.f32.gmra.mxu0 %v6845
        %v7014 = vpop.f32.mrf.mxu0
        %v7015 = vadd.f32 %v6726, %v7014
        %v7016 = vpop.f32.mrf.mxu0
        %7017 = vmatprep.mubr.f32.mxu0 0.0
        %7018 = vmatmul.mubr.f32.gmra.mxu0 %v6848
        %v7019 = vpop.f32.mrf.mxu0
        %v7020 = vadd.f32 %v6731, %v7019
        %v7021 = vpop.f32.mrf.mxu0
        %7022 = vmatprep.mubr.f32.mxu0 0.0
        %7023 = vmatmul.mubr.f32.gmra.mxu0 %v6851
        %v7024 = vpop.f32.mrf.mxu0
        %v7025 = vadd.f32 %v6736, %v7024
        %v7026 = vpop.f32.mrf.mxu0
        %7027 = vmatprep.mubr.f32.mxu0 0.0
        %7028 = vmatmul.mubr.f32.gmra.mxu0 %v6854
        %v7029 = vpop.f32.mrf.mxu0
        %v7030 = vadd.f32 %v6741, %v7029
        %v7031 = vpop.f32.mrf.mxu0
        %7032 = vmatprep.mubr.f32.mxu0 0.0
        %7033 = vmatmul.mubr.f32.gmra.mxu0 %v6857
        %v7034 = vpop.f32.mrf.mxu0
        %v7035 = vadd.f32 %v6746, %v7034
        %v7036 = vpop.f32.mrf.mxu0
        %7037 = vmatprep.mubr.f32.mxu0 0.0
        %7038 = vmatmul.mubr.f32.gmra.mxu0 %v6860
        %v7039 = vpop.f32.mrf.mxu0
        %v7040 = vadd.f32 %v6751, %v7039
        %v7041 = vpop.f32.mrf.mxu0
        %7042 = vmatprep.mubr.f32.mxu0 0.0
        %7043 = vmatmul.mubr.f32.gmra.mxu0 %v6863
        %v7044 = vpop.f32.mrf.mxu0
        %v7045 = vadd.f32 %v6756, %v7044
        %v7046 = vpop.f32.mrf.mxu0
        %7047 = vmatprep.mubr.f32.mxu0 0.0
        %7048 = vmatmul.mubr.f32.gmra.mxu0 %v6866
        %v7049 = vpop.f32.mrf.mxu0
        %v7050 = vadd.f32 %v6761, %v7049
        %v7051 = vpop.f32.mrf.mxu0
        %7052 = vmatprep.mubr.f32.mxu0 0.0
        %7053 = vmatmul.mubr.f32.gmra.mxu0 %v6869
        %v7054 = vpop.f32.mrf.mxu0
        %v7055 = vadd.f32 %v6766, %v7054
        %v7056 = vpop.f32.mrf.mxu0
        %7057 = vmatprep.mubr.f32.mxu0 0.0
        %7058 = vmatmul.mubr.f32.gmra.mxu0 %v6872
        %v7059 = vpop.f32.mrf.mxu0
        %v7060 = vadd.f32 %v6771, %v7059
        %v7061 = vpop.f32.mrf.mxu0
        %7062 = vmatprep.mubr.f32.mxu0 0.0
        %7063 = vmatmul.mubr.f32.gmra.mxu0 %v6875
        %v7064 = vpop.f32.mrf.mxu0
        %v7065 = vadd.f32 %v6776, %v7064
        %v7066 = vpop.f32.mrf.mxu0
        %7067 = vmatprep.mubr.f32.mxu0 0.0
        %7068 = vmatmul.mubr.f32.gmra.mxu0 %v6878
        %v7069 = vpop.f32.mrf.mxu0
        %v7070 = vadd.f32 %v6781, %v7069
        %v7071 = vpop.f32.mrf.mxu0
        %7072 = vmatprep.mubr.f32.mxu0 0.0
        %7073 = vmatmul.mubr.f32.gmra.mxu0 %v6881
        %v7074 = vpop.f32.mrf.mxu0
        %v7075 = vadd.f32 %v6786, %v7074
        %v7076 = vpop.f32.mrf.mxu0
        %7077 = vmatprep.mubr.f32.mxu0 0.0
        %7078 = vmatmul.mubr.f32.gmra.mxu0 %v6884
        %v7079 = vpop.f32.mrf.mxu0
        %v7080 = vadd.f32 %v6791, %v7079
        %v7081 = vpop.f32.mrf.mxu0
        %7082 = vmatprep.mubr.f32.mxu0 0.0
        %7083 = vmatmul.mubr.f32.gmra.mxu0 %v6887
        %v7084 = vpop.f32.mrf.mxu0
        %v7085 = vadd.f32 %v6796, %v7084
        %v7086 = vpop.f32.mrf.mxu0
        %7087 = vmatprep.mubr.f32.mxu0 0.0
        %7088 = vmatmul.mubr.f32.gmra.mxu0 %v6890
        %v7089 = vpop.f32.mrf.mxu0
        %v7090 = vadd.f32 %v6801, %v7089
        %v7091 = vpop.f32.mrf.mxu0
        %7092 = vmatprep.mubr.f32.mxu0 0.0
        %7093 = vmatmul.mubr.f32.gmra.mxu0 %v6893
        %v7094 = vpop.f32.mrf.mxu0
        %v7095 = vadd.f32 %v6806, %v7094
        %v7096 = vpop.f32.mrf.mxu0
        %7097 = vmatprep.mubr.f32.mxu0 0.0
        %7098 = vmatmul.mubr.f32.gmra.mxu0 %v6896
        %v7099 = vpop.f32.mrf.mxu0
        %v7100 = vadd.f32 %v6811, %v7099
        %v7101 = vpop.f32.mrf.mxu0
        %7102 = vdwg.mxu0
        %s7103 = scalar_lea.vmem [#allocation8], 16
        %v7104 = vld [vmem:[%s7103] sm:$0x7f]
        %v7106 = vsel %vm6189, %v7104, 0
        %7108 = vmatprep.subr.mxu0 0.0
        %7109 = vmatpush1.msra.mxu0 0.0
        %7110 = vmatprep.subr.mxu0 0.0
        %7111 = vmatpush1.msra.mxu0 0.0
        %7112 = vmatprep.subr.mxu0 0.0
        %7113 = vmatpush1.msra.mxu0 0.0
        %7114 = vmatprep.subr.mxu0 0.0
        %7115 = vmatpush1.msra.mxu0 0.0
        %7116 = vmatprep.subr.mxu0 0.0
        %7117 = vmatpush1.msra.mxu0 0.0
        %7118 = vmatprep.subr.mxu0 0.0
        %7119 = vmatpush1.msra.mxu0 0.0
        %7120 = vmatprep.subr.mxu0 0.0
        %7121 = vmatpush1.msra.mxu0 0.0
        %7122 = vmatprep.subr.mxu0 0.0
        %7123 = vmatpush1.msra.mxu0 0.0
        %7124 = vmatprep.subr.mxu0 0.0
        %7125 = vmatpush1.msra.mxu0 0.0
        %7126 = vmatprep.subr.mxu0 0.0
        %7127 = vmatpush1.msra.mxu0 0.0
        %7128 = vmatprep.subr.mxu0 0.0
        %7129 = vmatpush1.msra.mxu0 0.0
        %7130 = vmatprep.subr.mxu0 0.0
        %7131 = vmatpush1.msra.mxu0 0.0
        %7132 = vmatprep.subr.mxu0 0.0
        %7133 = vmatpush1.msra.mxu0 0.0
        %7134 = vmatprep.subr.mxu0 0.0
        %7135 = vmatpush1.msra.mxu0 0.0
        %7136 = vmatprep.subr.mxu0 0.0
        %7137 = vmatpush1.msra.mxu0 0.0
        %7138 = vmatprep.subr.mxu0 0.0
        %7139 = vmatpush1.msra.mxu0 %v7106
        %7140 = vmatprep.subr.mxu0 0.0
        %7141 = vmatpush2.msra.mxu0 0.0
        %7142 = vmatprep.subr.mxu0 0.0
        %7143 = vmatpush2.msra.mxu0 0.0
        %7144 = vmatprep.subr.mxu0 0.0
        %7145 = vmatpush2.msra.mxu0 0.0
        %7146 = vmatprep.subr.mxu0 0.0
        %7147 = vmatpush2.msra.mxu0 0.0
        %7148 = vmatprep.subr.mxu0 0.0
        %7149 = vmatpush2.msra.mxu0 0.0
        %7150 = vmatprep.subr.mxu0 0.0
        %7151 = vmatpush2.msra.mxu0 0.0
        %7152 = vmatprep.subr.mxu0 0.0
        %7153 = vmatpush2.msra.mxu0 0.0
        %7154 = vmatprep.subr.mxu0 0.0
        %7155 = vmatpush2.msra.mxu0 0.0
        %7156 = vmatprep.subr.mxu0 0.0
        %7157 = vmatpush2.msra.mxu0 0.0
        %7158 = vmatprep.subr.mxu0 0.0
        %7159 = vmatpush2.msra.mxu0 0.0
        %7160 = vmatprep.subr.mxu0 0.0
        %7161 = vmatpush2.msra.mxu0 0.0
        %7162 = vmatprep.subr.mxu0 0.0
        %7163 = vmatpush2.msra.mxu0 0.0
        %7164 = vmatprep.subr.mxu0 0.0
        %7165 = vmatpush2.msra.mxu0 0.0
        %7166 = vmatprep.subr.mxu0 0.0
        %7167 = vmatpush2.msra.mxu0 0.0
        %7168 = vmatprep.subr.mxu0 0.0
        %7169 = vmatpush2.msra.mxu0 0.0
        %7170 = vmatprep.subr.mxu0 0.0
        %7171 = vmatpush2.msra.mxu0 0.0
        %7172 = vmatprep.mubr.f32.mxu0 0.0
        %7173 = vmatmul.mubr.f32.gmra.mxu0 %v6148
        %v7174 = vpop.f32.mrf.mxu0
        %v7175 = vadd.f32 0.0, %v7174
        %v7176 = vpop.f32.mrf.mxu0
        %7177 = vmatprep.mubr.f32.mxu0 0.0
        %7178 = vmatmul.mubr.f32.gmra.mxu0 %v6151
        %v7179 = vpop.f32.mrf.mxu0
        %v7180 = vadd.f32 0.0, %v7179
        %v7181 = vpop.f32.mrf.mxu0
        %7182 = vmatprep.mubr.f32.mxu0 0.0
        %7183 = vmatmul.mubr.f32.gmra.mxu0 %v6154
        %v7184 = vpop.f32.mrf.mxu0
        %v7185 = vadd.f32 0.0, %v7184
        %v7186 = vpop.f32.mrf.mxu0
        %7187 = vmatprep.mubr.f32.mxu0 0.0
        %7188 = vmatmul.mubr.f32.gmra.mxu0 %v6157
        %v7189 = vpop.f32.mrf.mxu0
        %v7190 = vadd.f32 0.0, %v7189
        %v7191 = vpop.f32.mrf.mxu0
        %7192 = vmatprep.mubr.f32.mxu0 0.0
        %7193 = vmatmul.mubr.f32.gmra.mxu0 %v6160
        %v7194 = vpop.f32.mrf.mxu0
        %v7195 = vadd.f32 0.0, %v7194
        %v7196 = vpop.f32.mrf.mxu0
        %7197 = vmatprep.mubr.f32.mxu0 0.0
        %7198 = vmatmul.mubr.f32.gmra.mxu0 %v6163
        %v7199 = vpop.f32.mrf.mxu0
        %v7200 = vadd.f32 0.0, %v7199
        %v7201 = vpop.f32.mrf.mxu0
        %7202 = vmatprep.mubr.f32.mxu0 0.0
        %7203 = vmatmul.mubr.f32.gmra.mxu0 %v6166
        %v7204 = vpop.f32.mrf.mxu0
        %v7205 = vadd.f32 0.0, %v7204
        %v7206 = vpop.f32.mrf.mxu0
        %7207 = vmatprep.mubr.f32.mxu0 0.0
        %7208 = vmatmul.mubr.f32.gmra.mxu0 %v6169
        %v7209 = vpop.f32.mrf.mxu0
        %v7210 = vadd.f32 0.0, %v7209
        %v7211 = vpop.f32.mrf.mxu0
        %7212 = vmatprep.mubr.f32.mxu0 0.0
        %7213 = vmatmul.mubr.f32.gmra.mxu0 %v6172
        %v7214 = vpop.f32.mrf.mxu0
        %v7215 = vadd.f32 0.0, %v7214
        %v7216 = vpop.f32.mrf.mxu0
        %7217 = vmatprep.mubr.f32.mxu0 0.0
        %7218 = vmatmul.mubr.f32.gmra.mxu0 %v6175
        %v7219 = vpop.f32.mrf.mxu0
        %v7220 = vadd.f32 0.0, %v7219
        %v7221 = vpop.f32.mrf.mxu0
        %7222 = vmatprep.mubr.f32.mxu0 0.0
        %7223 = vmatmul.mubr.f32.gmra.mxu0 %v6178
        %v7224 = vpop.f32.mrf.mxu0
        %v7225 = vadd.f32 0.0, %v7224
        %v7226 = vpop.f32.mrf.mxu0
        %7227 = vmatprep.mubr.f32.mxu0 0.0
        %7228 = vmatmul.mubr.f32.gmra.mxu0 %v6181
        %v7229 = vpop.f32.mrf.mxu0
        %v7230 = vadd.f32 0.0, %v7229
        %v7231 = vpop.f32.mrf.mxu0
        %7232 = vmatprep.mubr.f32.mxu0 0.0
        %7233 = vmatmul.mubr.f32.gmra.mxu0 %v6184
        %v7234 = vpop.f32.mrf.mxu0
        %v7235 = vadd.f32 0.0, %v7234
        %v7236 = vpop.f32.mrf.mxu0
        %7237 = vmatprep.mubr.f32.mxu0 0.0
        %7238 = vmatmul.mubr.f32.gmra.mxu0 %v6187
        %v7239 = vpop.f32.mrf.mxu0
        %v7240 = vadd.f32 0.0, %v7239
        %v7241 = vpop.f32.mrf.mxu0
        %7242 = vdwg.mxu0
        %s7243 = scalar_lea.vmem %s9, 448
        %v7244 = vld [vmem:[%s7243] sm:$0xff]
        %v7245 = vld [vmem:[%s7243 + $0x8] sm:$0xff]
        %v7246 = vld [vmem:[%s7243 + $0x10] sm:$0xff]
        %v7247 = vld [vmem:[%s7243 + $0x18] sm:$0xff]
        %v7248 = vld [vmem:[%s7243 + $0x20] sm:$0xff]
        %v7249 = vld [vmem:[%s7243 + $0x28] sm:$0xff]
        %v7250 = vld [vmem:[%s7243 + $0x30] sm:$0xff]
        %v7251 = vld [vmem:[%s7243 + $0x38] sm:$0xff]
        %v7252 = vld [vmem:[%s7243 + $0x40] sm:$0xff]
        %v7253 = vld [vmem:[%s7243 + $0x48] sm:$0xff]
        %v7254 = vld [vmem:[%s7243 + $0x50] sm:$0xff]
        %v7255 = vld [vmem:[%s7243 + $0x58] sm:$0xff]
        %v7256 = vld [vmem:[%s7243 + $0x60] sm:$0xff]
        %v7257 = vld [vmem:[%s7243 + $0x68] sm:$0xff]
        %v7258 = vld [vmem:[%s7243 + $0x70] sm:$0xff]
        %v7259 = vld [vmem:[%s7243 + $0x78] sm:$0xff]
        %v7260 = vld [vmem:[%s7243 + $0x80] sm:$0xff]
        %v7261 = vld [vmem:[%s7243 + $0x88] sm:$0xff]
        %v7262 = vld [vmem:[%s7243 + $0x90] sm:$0xff]
        %v7263 = vld [vmem:[%s7243 + $0x98] sm:$0xff]
        %v7264 = vld [vmem:[%s7243 + $0xa0] sm:$0xff]
        %v7265 = vld [vmem:[%s7243 + $0xa8] sm:$0xff]
        %v7266 = vld [vmem:[%s7243 + $0xb0] sm:$0xff]
        %v7267 = vld [vmem:[%s7243 + $0xb8] sm:$0xff]
        %v7268 = vld [vmem:[%s7243 + $0xc0] sm:$0xff]
        %v7269 = vld [vmem:[%s7243 + $0xc8] sm:$0xff]
        %v7270 = vld [vmem:[%s7243 + $0xd0] sm:$0xff]
        %v7271 = vld [vmem:[%s7243 + $0xd8] sm:$0xff]
        %v7273 = vsel %vm3410, %v7244, 0
        %v7276 = vsel %vm3410, %v7245, 0
        %v7279 = vsel %vm3410, %v7246, 0
        %v7282 = vsel %vm3410, %v7247, 0
        %v7285 = vsel %vm3410, %v7248, 0
        %v7288 = vsel %vm3410, %v7249, 0
        %v7291 = vsel %vm3410, %v7250, 0
        %v7294 = vsel %vm3410, %v7251, 0
        %v7297 = vsel %vm3410, %v7252, 0
        %v7300 = vsel %vm3410, %v7253, 0
        %v7303 = vsel %vm3410, %v7254, 0
        %v7306 = vsel %vm3410, %v7255, 0
        %v7309 = vsel %vm3410, %v7256, 0
        %v7312 = vsel %vm3410, %v7257, 0
        %v7315 = vsel %vm3410, %v7258, 0
        %v7318 = vsel %vm3410, %v7259, 0
        %v7321 = vsel %vm3410, %v7260, 0
        %v7324 = vsel %vm3410, %v7261, 0
        %v7327 = vsel %vm3410, %v7262, 0
        %v7330 = vsel %vm3410, %v7263, 0
        %v7333 = vsel %vm3410, %v7264, 0
        %v7336 = vsel %vm3410, %v7265, 0
        %v7339 = vsel %vm3410, %v7266, 0
        %v7342 = vsel %vm3410, %v7267, 0
        %v7345 = vsel %vm3410, %v7268, 0
        %v7348 = vsel %vm3410, %v7269, 0
        %v7351 = vsel %vm3410, %v7270, 0
        %v7354 = vsel %vm3410, %v7271, 0
        %7356 = vmatprep.subr.mxu0 0.0
        %7357 = vmatpush1.msra.mxu0 0.0
        %7358 = vmatprep.subr.mxu0 0.0
        %7359 = vmatpush1.msra.mxu0 0.0
        %7360 = vmatprep.subr.mxu0 0.0
        %7361 = vmatpush1.msra.mxu0 %v7240
        %7362 = vmatprep.subr.mxu0 0.0
        %7363 = vmatpush1.msra.mxu0 %v7235
        %7364 = vmatprep.subr.mxu0 0.0
        %7365 = vmatpush1.msra.mxu0 %v7230
        %7366 = vmatprep.subr.mxu0 0.0
        %7367 = vmatpush1.msra.mxu0 %v7225
        %7368 = vmatprep.subr.mxu0 0.0
        %7369 = vmatpush1.msra.mxu0 %v7220
        %7370 = vmatprep.subr.mxu0 0.0
        %7371 = vmatpush1.msra.mxu0 %v7215
        %7372 = vmatprep.subr.mxu0 0.0
        %7373 = vmatpush1.msra.mxu0 %v7210
        %7374 = vmatprep.subr.mxu0 0.0
        %7375 = vmatpush1.msra.mxu0 %v7205
        %7376 = vmatprep.subr.mxu0 0.0
        %7377 = vmatpush1.msra.mxu0 %v7200
        %7378 = vmatprep.subr.mxu0 0.0
        %7379 = vmatpush1.msra.mxu0 %v7195
        %7380 = vmatprep.subr.mxu0 0.0
        %7381 = vmatpush1.msra.mxu0 %v7190
        %7382 = vmatprep.subr.mxu0 0.0
        %7383 = vmatpush1.msra.mxu0 %v7185
        %7384 = vmatprep.subr.mxu0 0.0
        %7385 = vmatpush1.msra.mxu0 %v7180
        %7386 = vmatprep.subr.mxu0 0.0
        %7387 = vmatpush1.msra.mxu0 %v7175
        %7388 = vmatprep.subr.mxu0 0.0
        %7389 = vmatpush2.msra.mxu0 0.0
        %7390 = vmatprep.subr.mxu0 0.0
        %7391 = vmatpush2.msra.mxu0 0.0
        %7392 = vmatprep.subr.mxu0 0.0
        %7393 = vmatpush2.msra.mxu0 0.0
        %7394 = vmatprep.subr.mxu0 0.0
        %7395 = vmatpush2.msra.mxu0 0.0
        %7396 = vmatprep.subr.mxu0 0.0
        %7397 = vmatpush2.msra.mxu0 0.0
        %7398 = vmatprep.subr.mxu0 0.0
        %7399 = vmatpush2.msra.mxu0 0.0
        %7400 = vmatprep.subr.mxu0 0.0
        %7401 = vmatpush2.msra.mxu0 0.0
        %7402 = vmatprep.subr.mxu0 0.0
        %7403 = vmatpush2.msra.mxu0 0.0
        %7404 = vmatprep.subr.mxu0 0.0
        %7405 = vmatpush2.msra.mxu0 0.0
        %7406 = vmatprep.subr.mxu0 0.0
        %7407 = vmatpush2.msra.mxu0 0.0
        %7408 = vmatprep.subr.mxu0 0.0
        %7409 = vmatpush2.msra.mxu0 0.0
        %7410 = vmatprep.subr.mxu0 0.0
        %7411 = vmatpush2.msra.mxu0 0.0
        %7412 = vmatprep.subr.mxu0 0.0
        %7413 = vmatpush2.msra.mxu0 0.0
        %7414 = vmatprep.subr.mxu0 0.0
        %7415 = vmatpush2.msra.mxu0 0.0
        %7416 = vmatprep.subr.mxu0 0.0
        %7417 = vmatpush2.msra.mxu0 0.0
        %7418 = vmatprep.subr.mxu0 0.0
        %7419 = vmatpush2.msra.mxu0 0.0
        %7420 = vmatprep.mubr.f32.mxu0 0.0
        %7421 = vmatmul.mubr.f32.gmra.mxu0 %v7273
        %v7422 = vpop.f32.mrf.mxu0
        %v7423 = vadd.f32 0.0, %v7422
        %v7424 = vpop.f32.mrf.mxu0
        %7425 = vmatprep.mubr.f32.mxu0 0.0
        %7426 = vmatmul.mubr.f32.gmra.mxu0 %v7276
        %v7427 = vpop.f32.mrf.mxu0
        %v7428 = vadd.f32 0.0, %v7427
        %v7429 = vpop.f32.mrf.mxu0
        %7430 = vmatprep.mubr.f32.mxu0 0.0
        %7431 = vmatmul.mubr.f32.gmra.mxu0 %v7279
        %v7432 = vpop.f32.mrf.mxu0
        %v7433 = vadd.f32 0.0, %v7432
        %v7434 = vpop.f32.mrf.mxu0
        %7435 = vmatprep.mubr.f32.mxu0 0.0
        %7436 = vmatmul.mubr.f32.gmra.mxu0 %v7282
        %v7437 = vpop.f32.mrf.mxu0
        %v7438 = vadd.f32 0.0, %v7437
        %v7439 = vpop.f32.mrf.mxu0
        %7440 = vmatprep.mubr.f32.mxu0 0.0
        %7441 = vmatmul.mubr.f32.gmra.mxu0 %v7285
        %v7442 = vpop.f32.mrf.mxu0
        %v7443 = vadd.f32 0.0, %v7442
        %v7444 = vpop.f32.mrf.mxu0
        %7445 = vmatprep.mubr.f32.mxu0 0.0
        %7446 = vmatmul.mubr.f32.gmra.mxu0 %v7288
        %v7447 = vpop.f32.mrf.mxu0
        %v7448 = vadd.f32 0.0, %v7447
        %v7449 = vpop.f32.mrf.mxu0
        %7450 = vmatprep.mubr.f32.mxu0 0.0
        %7451 = vmatmul.mubr.f32.gmra.mxu0 %v7291
        %v7452 = vpop.f32.mrf.mxu0
        %v7453 = vadd.f32 0.0, %v7452
        %v7454 = vpop.f32.mrf.mxu0
        %7455 = vmatprep.mubr.f32.mxu0 0.0
        %7456 = vmatmul.mubr.f32.gmra.mxu0 %v7294
        %v7457 = vpop.f32.mrf.mxu0
        %v7458 = vadd.f32 0.0, %v7457
        %v7459 = vpop.f32.mrf.mxu0
        %7460 = vmatprep.mubr.f32.mxu0 0.0
        %7461 = vmatmul.mubr.f32.gmra.mxu0 %v7297
        %v7462 = vpop.f32.mrf.mxu0
        %v7463 = vadd.f32 0.0, %v7462
        %v7464 = vpop.f32.mrf.mxu0
        %7465 = vmatprep.mubr.f32.mxu0 0.0
        %7466 = vmatmul.mubr.f32.gmra.mxu0 %v7300
        %v7467 = vpop.f32.mrf.mxu0
        %v7468 = vadd.f32 0.0, %v7467
        %v7469 = vpop.f32.mrf.mxu0
        %7470 = vmatprep.mubr.f32.mxu0 0.0
        %7471 = vmatmul.mubr.f32.gmra.mxu0 %v7303
        %v7472 = vpop.f32.mrf.mxu0
        %v7473 = vadd.f32 0.0, %v7472
        %v7474 = vpop.f32.mrf.mxu0
        %7475 = vmatprep.mubr.f32.mxu0 0.0
        %7476 = vmatmul.mubr.f32.gmra.mxu0 %v7306
        %v7477 = vpop.f32.mrf.mxu0
        %v7478 = vadd.f32 0.0, %v7477
        %v7479 = vpop.f32.mrf.mxu0
        %7480 = vmatprep.mubr.f32.mxu0 0.0
        %7481 = vmatmul.mubr.f32.gmra.mxu0 %v7309
        %v7482 = vpop.f32.mrf.mxu0
        %v7483 = vadd.f32 0.0, %v7482
        %v7484 = vpop.f32.mrf.mxu0
        %7485 = vmatprep.mubr.f32.mxu0 0.0
        %7486 = vmatmul.mubr.f32.gmra.mxu0 %v7312
        %v7487 = vpop.f32.mrf.mxu0
        %v7488 = vadd.f32 0.0, %v7487
        %v7489 = vpop.f32.mrf.mxu0
        %7490 = vmatprep.mubr.f32.mxu0 0.0
        %7491 = vmatmul.mubr.f32.gmra.mxu0 %v7315
        %v7492 = vpop.f32.mrf.mxu0
        %v7493 = vadd.f32 0.0, %v7492
        %v7494 = vpop.f32.mrf.mxu0
        %7495 = vmatprep.mubr.f32.mxu0 0.0
        %7496 = vmatmul.mubr.f32.gmra.mxu0 %v7318
        %v7497 = vpop.f32.mrf.mxu0
        %v7498 = vadd.f32 0.0, %v7497
        %v7499 = vpop.f32.mrf.mxu0
        %7500 = vmatprep.mubr.f32.mxu0 0.0
        %7501 = vmatmul.mubr.f32.gmra.mxu0 %v7321
        %v7502 = vpop.f32.mrf.mxu0
        %v7503 = vadd.f32 0.0, %v7502
        %v7504 = vpop.f32.mrf.mxu0
        %7505 = vmatprep.mubr.f32.mxu0 0.0
        %7506 = vmatmul.mubr.f32.gmra.mxu0 %v7324
        %v7507 = vpop.f32.mrf.mxu0
        %v7508 = vadd.f32 0.0, %v7507
        %v7509 = vpop.f32.mrf.mxu0
        %7510 = vmatprep.mubr.f32.mxu0 0.0
        %7511 = vmatmul.mubr.f32.gmra.mxu0 %v7327
        %v7512 = vpop.f32.mrf.mxu0
        %v7513 = vadd.f32 0.0, %v7512
        %v7514 = vpop.f32.mrf.mxu0
        %7515 = vmatprep.mubr.f32.mxu0 0.0
        %7516 = vmatmul.mubr.f32.gmra.mxu0 %v7330
        %v7517 = vpop.f32.mrf.mxu0
        %v7518 = vadd.f32 0.0, %v7517
        %v7519 = vpop.f32.mrf.mxu0
        %7520 = vmatprep.mubr.f32.mxu0 0.0
        %7521 = vmatmul.mubr.f32.gmra.mxu0 %v7333
        %v7522 = vpop.f32.mrf.mxu0
        %v7523 = vadd.f32 0.0, %v7522
        %v7524 = vpop.f32.mrf.mxu0
        %7525 = vmatprep.mubr.f32.mxu0 0.0
        %7526 = vmatmul.mubr.f32.gmra.mxu0 %v7336
        %v7527 = vpop.f32.mrf.mxu0
        %v7528 = vadd.f32 0.0, %v7527
        %v7529 = vpop.f32.mrf.mxu0
        %7530 = vmatprep.mubr.f32.mxu0 0.0
        %7531 = vmatmul.mubr.f32.gmra.mxu0 %v7339
        %v7532 = vpop.f32.mrf.mxu0
        %v7533 = vadd.f32 0.0, %v7532
        %v7534 = vpop.f32.mrf.mxu0
        %7535 = vmatprep.mubr.f32.mxu0 0.0
        %7536 = vmatmul.mubr.f32.gmra.mxu0 %v7342
        %v7537 = vpop.f32.mrf.mxu0
        %v7538 = vadd.f32 0.0, %v7537
        %v7539 = vpop.f32.mrf.mxu0
        %7540 = vmatprep.mubr.f32.mxu0 0.0
        %7541 = vmatmul.mubr.f32.gmra.mxu0 %v7345
        %v7542 = vpop.f32.mrf.mxu0
        %v7543 = vadd.f32 0.0, %v7542
        %v7544 = vpop.f32.mrf.mxu0
        %7545 = vmatprep.mubr.f32.mxu0 0.0
        %7546 = vmatmul.mubr.f32.gmra.mxu0 %v7348
        %v7547 = vpop.f32.mrf.mxu0
        %v7548 = vadd.f32 0.0, %v7547
        %v7549 = vpop.f32.mrf.mxu0
        %7550 = vmatprep.mubr.f32.mxu0 0.0
        %7551 = vmatmul.mubr.f32.gmra.mxu0 %v7351
        %v7552 = vpop.f32.mrf.mxu0
        %v7553 = vadd.f32 0.0, %v7552
        %v7554 = vpop.f32.mrf.mxu0
        %7555 = vmatprep.mubr.f32.mxu0 0.0
        %7556 = vmatmul.mubr.f32.gmra.mxu0 %v7354
        %v7557 = vpop.f32.mrf.mxu0
        %v7558 = vadd.f32 0.0, %v7557
        %v7559 = vpop.f32.mrf.mxu0
        %7560 = vdwg.mxu0
        %v7561 = vadd.f32 %v6965, %v7423
        %v7562 = vadd.f32 %v6970, %v7428
        %v7563 = vadd.f32 %v6975, %v7433
        %v7564 = vadd.f32 %v6980, %v7438
        %v7565 = vadd.f32 %v6985, %v7443
        %v7566 = vadd.f32 %v6990, %v7448
        %v7567 = vadd.f32 %v6995, %v7453
        %v7568 = vadd.f32 %v7000, %v7458
        %v7569 = vadd.f32 %v7005, %v7463
        %v7570 = vadd.f32 %v7010, %v7468
        %v7571 = vadd.f32 %v7015, %v7473
        %v7572 = vadd.f32 %v7020, %v7478
        %v7573 = vadd.f32 %v7025, %v7483
        %v7574 = vadd.f32 %v7030, %v7488
        %v7575 = vadd.f32 %v7035, %v7493
        %v7576 = vadd.f32 %v7040, %v7498
        %v7577 = vadd.f32 %v7045, %v7503
        %v7578 = vadd.f32 %v7050, %v7508
        %v7579 = vadd.f32 %v7055, %v7513
        %v7580 = vadd.f32 %v7060, %v7518
        %v7581 = vadd.f32 %v7065, %v7523
        %v7582 = vadd.f32 %v7070, %v7528
        %v7583 = vadd.f32 %v7075, %v7533
        %v7584 = vadd.f32 %v7080, %v7538
        %v7585 = vadd.f32 %v7085, %v7543
        %v7586 = vadd.f32 %v7090, %v7548
        %v7587 = vadd.f32 %v7095, %v7553
        %v7588 = vadd.f32 %v7100, %v7558
        %v7589 = vld [vmem:[%s11] sm:$0xff]
        %v7590 = vld [vmem:[%s11 + $0x8] sm:$0xff]
        %v7591 = vld [vmem:[%s11 + $0x10] sm:$0xff]
        %v7592 = vld [vmem:[%s11 + $0x18] sm:$0xff]
        %v7593 = vld [vmem:[%s11 + $0x20] sm:$0xff]
        %v7594 = vld [vmem:[%s11 + $0x28] sm:$0xff]
        %v7595 = vld [vmem:[%s11 + $0x30] sm:$0xff]
        %v7596 = vld [vmem:[%s11 + $0x38] sm:$0xff]
        %v7597 = vld [vmem:[%s11 + $0x40] sm:$0xff]
        %v7598 = vld [vmem:[%s11 + $0x48] sm:$0xff]
        %v7599 = vld [vmem:[%s11 + $0x50] sm:$0xff]
        %v7600 = vld [vmem:[%s11 + $0x58] sm:$0xff]
        %v7601 = vld [vmem:[%s11 + $0x60] sm:$0xff]
        %v7602 = vld [vmem:[%s11 + $0x68] sm:$0xff]
        %v7603 = vld [vmem:[%s11 + $0x70] sm:$0xff]
        %v7604 = vld [vmem:[%s11 + $0x78] sm:$0xff]
        %v7605 = vld [vmem:[%s11 + $0x80] sm:$0xff]
        %v7606 = vld [vmem:[%s11 + $0x88] sm:$0xff]
        %v7607 = vld [vmem:[%s11 + $0x90] sm:$0xff]
        %v7608 = vld [vmem:[%s11 + $0x98] sm:$0xff]
        %v7609 = vld [vmem:[%s11 + $0xa0] sm:$0xff]
        %v7610 = vld [vmem:[%s11 + $0xa8] sm:$0xff]
        %v7611 = vld [vmem:[%s11 + $0xb0] sm:$0xff]
        %v7612 = vld [vmem:[%s11 + $0xb8] sm:$0xff]
        %v7613 = vld [vmem:[%s11 + $0xc0] sm:$0xff]
        %v7614 = vld [vmem:[%s11 + $0xc8] sm:$0xff]
        %v7615 = vld [vmem:[%s11 + $0xd0] sm:$0xff]
        %v7616 = vld [vmem:[%s11 + $0xd8] sm:$0xff]
        %7618 = vset.pattern.permute.xlu0 0
        %7619 = vperm.xlu0 %7618, %v7589
        %v7620 = vpop.permute.xlu0 %7619
        %7623 = vset.pattern.permute.xlu0 0
        %7624 = vperm.xlu0 %7623, %v7590
        %v7625 = vpop.permute.xlu0 %7624
        %7628 = vset.pattern.permute.xlu0 0
        %7629 = vperm.xlu0 %7628, %v7591
        %v7630 = vpop.permute.xlu0 %7629
        %7633 = vset.pattern.permute.xlu0 0
        %7634 = vperm.xlu0 %7633, %v7592
        %v7635 = vpop.permute.xlu0 %7634
        %7638 = vset.pattern.permute.xlu0 0
        %7639 = vperm.xlu0 %7638, %v7593
        %v7640 = vpop.permute.xlu0 %7639
        %7643 = vset.pattern.permute.xlu0 0
        %7644 = vperm.xlu0 %7643, %v7594
        %v7645 = vpop.permute.xlu0 %7644
        %7648 = vset.pattern.permute.xlu0 0
        %7649 = vperm.xlu0 %7648, %v7595
        %v7650 = vpop.permute.xlu0 %7649
        %7653 = vset.pattern.permute.xlu0 0
        %7654 = vperm.xlu0 %7653, %v7596
        %v7655 = vpop.permute.xlu0 %7654
        %7658 = vset.pattern.permute.xlu0 0
        %7659 = vperm.xlu0 %7658, %v7597
        %v7660 = vpop.permute.xlu0 %7659
        %7663 = vset.pattern.permute.xlu0 0
        %7664 = vperm.xlu0 %7663, %v7598
        %v7665 = vpop.permute.xlu0 %7664
        %7668 = vset.pattern.permute.xlu0 0
        %7669 = vperm.xlu0 %7668, %v7599
        %v7670 = vpop.permute.xlu0 %7669
        %7673 = vset.pattern.permute.xlu0 0
        %7674 = vperm.xlu0 %7673, %v7600
        %v7675 = vpop.permute.xlu0 %7674
        %7678 = vset.pattern.permute.xlu0 0
        %7679 = vperm.xlu0 %7678, %v7601
        %v7680 = vpop.permute.xlu0 %7679
        %7683 = vset.pattern.permute.xlu0 0
        %7684 = vperm.xlu0 %7683, %v7602
        %v7685 = vpop.permute.xlu0 %7684
        %7688 = vset.pattern.permute.xlu0 0
        %7689 = vperm.xlu0 %7688, %v7603
        %v7690 = vpop.permute.xlu0 %7689
        %7693 = vset.pattern.permute.xlu0 0
        %7694 = vperm.xlu0 %7693, %v7604
        %v7695 = vpop.permute.xlu0 %7694
        %7698 = vset.pattern.permute.xlu0 0
        %7699 = vperm.xlu0 %7698, %v7605
        %v7700 = vpop.permute.xlu0 %7699
        %7703 = vset.pattern.permute.xlu0 0
        %7704 = vperm.xlu0 %7703, %v7606
        %v7705 = vpop.permute.xlu0 %7704
        %7708 = vset.pattern.permute.xlu0 0
        %7709 = vperm.xlu0 %7708, %v7607
        %v7710 = vpop.permute.xlu0 %7709
        %7713 = vset.pattern.permute.xlu0 0
        %7714 = vperm.xlu0 %7713, %v7608
        %v7715 = vpop.permute.xlu0 %7714
        %7718 = vset.pattern.permute.xlu0 0
        %7719 = vperm.xlu0 %7718, %v7609
        %v7720 = vpop.permute.xlu0 %7719
        %7723 = vset.pattern.permute.xlu0 0
        %7724 = vperm.xlu0 %7723, %v7610
        %v7725 = vpop.permute.xlu0 %7724
        %7728 = vset.pattern.permute.xlu0 0
        %7729 = vperm.xlu0 %7728, %v7611
        %v7730 = vpop.permute.xlu0 %7729
        %7733 = vset.pattern.permute.xlu0 0
        %7734 = vperm.xlu0 %7733, %v7612
        %v7735 = vpop.permute.xlu0 %7734
        %7738 = vset.pattern.permute.xlu0 0
        %7739 = vperm.xlu0 %7738, %v7613
        %v7740 = vpop.permute.xlu0 %7739
        %7743 = vset.pattern.permute.xlu0 0
        %7744 = vperm.xlu0 %7743, %v7614
        %v7745 = vpop.permute.xlu0 %7744
        %7748 = vset.pattern.permute.xlu0 0
        %7749 = vperm.xlu0 %7748, %v7615
        %v7750 = vpop.permute.xlu0 %7749
        %7753 = vset.pattern.permute.xlu0 0
        %7754 = vperm.xlu0 %7753, %v7616
        %v7755 = vpop.permute.xlu0 %7754
        %v7757 = vadd.f32 %v7561, %v7620
        %v7758 = vadd.f32 %v7562, %v7625
        %v7759 = vadd.f32 %v7563, %v7630
        %v7760 = vadd.f32 %v7564, %v7635
        %v7761 = vadd.f32 %v7565, %v7640
        %v7762 = vadd.f32 %v7566, %v7645
        %v7763 = vadd.f32 %v7567, %v7650
        %v7764 = vadd.f32 %v7568, %v7655
        %v7765 = vadd.f32 %v7569, %v7660
        %v7766 = vadd.f32 %v7570, %v7665
        %v7767 = vadd.f32 %v7571, %v7670
        %v7768 = vadd.f32 %v7572, %v7675
        %v7769 = vadd.f32 %v7573, %v7680
        %v7770 = vadd.f32 %v7574, %v7685
        %v7771 = vadd.f32 %v7575, %v7690
        %v7772 = vadd.f32 %v7576, %v7695
        %v7773 = vadd.f32 %v7577, %v7700
        %v7774 = vadd.f32 %v7578, %v7705
        %v7775 = vadd.f32 %v7579, %v7710
        %v7776 = vadd.f32 %v7580, %v7715
        %v7777 = vadd.f32 %v7581, %v7720
        %v7778 = vadd.f32 %v7582, %v7725
        %v7779 = vadd.f32 %v7583, %v7730
        %v7780 = vadd.f32 %v7584, %v7735
        %v7781 = vadd.f32 %v7585, %v7740
        %v7782 = vadd.f32 %v7586, %v7745
        %v7783 = vadd.f32 %v7587, %v7750
        %v7784 = vadd.f32 %v7588, %v7755
        %vm7785 = vcmp.ge.f32.partialorder %v7757, 0.0
        %vm7786 = vcmp.ge.f32.partialorder %v7758, 0.0
        %vm7787 = vcmp.ge.f32.partialorder %v7759, 0.0
        %vm7788 = vcmp.ge.f32.partialorder %v7760, 0.0
        %vm7789 = vcmp.ge.f32.partialorder %v7761, 0.0
        %vm7790 = vcmp.ge.f32.partialorder %v7762, 0.0
        %vm7791 = vcmp.ge.f32.partialorder %v7763, 0.0
        %vm7792 = vcmp.ge.f32.partialorder %v7764, 0.0
        %vm7793 = vcmp.ge.f32.partialorder %v7765, 0.0
        %vm7794 = vcmp.ge.f32.partialorder %v7766, 0.0
        %vm7795 = vcmp.ge.f32.partialorder %v7767, 0.0
        %vm7796 = vcmp.ge.f32.partialorder %v7768, 0.0
        %vm7797 = vcmp.ge.f32.partialorder %v7769, 0.0
        %vm7798 = vcmp.ge.f32.partialorder %v7770, 0.0
        %vm7799 = vcmp.ge.f32.partialorder %v7771, 0.0
        %vm7800 = vcmp.ge.f32.partialorder %v7772, 0.0
        %vm7801 = vcmp.ge.f32.partialorder %v7773, 0.0
        %vm7802 = vcmp.ge.f32.partialorder %v7774, 0.0
        %vm7803 = vcmp.ge.f32.partialorder %v7775, 0.0
        %vm7804 = vcmp.ge.f32.partialorder %v7776, 0.0
        %vm7805 = vcmp.ge.f32.partialorder %v7777, 0.0
        %vm7806 = vcmp.ge.f32.partialorder %v7778, 0.0
        %vm7807 = vcmp.ge.f32.partialorder %v7779, 0.0
        %vm7808 = vcmp.ge.f32.partialorder %v7780, 0.0
        %vm7809 = vcmp.ge.f32.partialorder %v7781, 0.0
        %vm7810 = vcmp.ge.f32.partialorder %v7782, 0.0
        %vm7811 = vcmp.ge.f32.partialorder %v7783, 0.0
        %vm7812 = vcmp.ge.f32.partialorder %v7784, 0.0
        %v7813 = vmul.f32 %v7757, 0.01
        %v7814 = vmul.f32 %v7758, 0.01
        %v7815 = vmul.f32 %v7759, 0.01
        %v7816 = vmul.f32 %v7760, 0.01
        %v7817 = vmul.f32 %v7761, 0.01
        %v7818 = vmul.f32 %v7762, 0.01
        %v7819 = vmul.f32 %v7763, 0.01
        %v7820 = vmul.f32 %v7764, 0.01
        %v7821 = vmul.f32 %v7765, 0.01
        %v7822 = vmul.f32 %v7766, 0.01
        %v7823 = vmul.f32 %v7767, 0.01
        %v7824 = vmul.f32 %v7768, 0.01
        %v7825 = vmul.f32 %v7769, 0.01
        %v7826 = vmul.f32 %v7770, 0.01
        %v7827 = vmul.f32 %v7771, 0.01
        %v7828 = vmul.f32 %v7772, 0.01
        %v7829 = vmul.f32 %v7773, 0.01
        %v7830 = vmul.f32 %v7774, 0.01
        %v7831 = vmul.f32 %v7775, 0.01
        %v7832 = vmul.f32 %v7776, 0.01
        %v7833 = vmul.f32 %v7777, 0.01
        %v7834 = vmul.f32 %v7778, 0.01
        %v7835 = vmul.f32 %v7779, 0.01
        %v7836 = vmul.f32 %v7780, 0.01
        %v7837 = vmul.f32 %v7781, 0.01
        %v7838 = vmul.f32 %v7782, 0.01
        %v7839 = vmul.f32 %v7783, 0.01
        %v7840 = vmul.f32 %v7784, 0.01
        %v7841 = vsel %vm7785, %v7757, %v7813
        %v7842 = vsel %vm7786, %v7758, %v7814
        %v7843 = vsel %vm7787, %v7759, %v7815
        %v7844 = vsel %vm7788, %v7760, %v7816
        %v7845 = vsel %vm7789, %v7761, %v7817
        %v7846 = vsel %vm7790, %v7762, %v7818
        %v7847 = vsel %vm7791, %v7763, %v7819
        %v7848 = vsel %vm7792, %v7764, %v7820
        %v7849 = vsel %vm7793, %v7765, %v7821
        %v7850 = vsel %vm7794, %v7766, %v7822
        %v7851 = vsel %vm7795, %v7767, %v7823
        %v7852 = vsel %vm7796, %v7768, %v7824
        %v7853 = vsel %vm7797, %v7769, %v7825
        %v7854 = vsel %vm7798, %v7770, %v7826
        %v7855 = vsel %vm7799, %v7771, %v7827
        %v7856 = vsel %vm7800, %v7772, %v7828
        %v7857 = vsel %vm7801, %v7773, %v7829
        %v7858 = vsel %vm7802, %v7774, %v7830
        %v7859 = vsel %vm7803, %v7775, %v7831
        %v7860 = vsel %vm7804, %v7776, %v7832
        %v7861 = vsel %vm7805, %v7777, %v7833
        %v7862 = vsel %vm7806, %v7778, %v7834
        %v7863 = vsel %vm7807, %v7779, %v7835
        %v7864 = vsel %vm7808, %v7780, %v7836
        %v7865 = vsel %vm7809, %v7781, %v7837
        %v7866 = vsel %vm7810, %v7782, %v7838
        %v7867 = vsel %vm7811, %v7783, %v7839
        %v7868 = vsel %vm7812, %v7784, %v7840
        %v7869 = vld [vmem:[%s13] sm:$0xff]
        %v7870 = vld [vmem:[%s13 + $0x8] sm:$0xff]
        %v7871 = vld [vmem:[%s12] sm:$0xff]
        %v7872 = vld [vmem:[%s12 + $0x8] sm:$0xff]
        %v7873 = vld [vmem:[%s12 + $0x10] sm:$0xff]
        %v7874 = vld [vmem:[%s12 + $0x18] sm:$0xff]
        %vm7875 = vcmask 785408
        %v7877 = vsel %vm7875, %v7872, 0
        %v7880 = vsel %vm7875, %v7874, 0
        %7882 = vmatprep.subr.mxu0 0.0
        %7883 = vmatpush1.msra.mxu0 %v7856
        %7884 = vmatprep.subr.mxu0 0.0
        %7885 = vmatpush1.msra.mxu0 %v7855
        %7886 = vmatprep.subr.mxu0 0.0
        %7887 = vmatpush1.msra.mxu0 %v7854
        %7888 = vmatprep.subr.mxu0 0.0
        %7889 = vmatpush1.msra.mxu0 %v7853
        %7890 = vmatprep.subr.mxu0 0.0
        %7891 = vmatpush1.msra.mxu0 %v7852
        %7892 = vmatprep.subr.mxu0 0.0
        %7893 = vmatpush1.msra.mxu0 %v7851
        %7894 = vmatprep.subr.mxu0 0.0
        %7895 = vmatpush1.msra.mxu0 %v7850
        %7896 = vmatprep.subr.mxu0 0.0
        %7897 = vmatpush1.msra.mxu0 %v7849
        %7898 = vmatprep.subr.mxu0 0.0
        %7899 = vmatpush1.msra.mxu0 %v7848
        %7900 = vmatprep.subr.mxu0 0.0
        %7901 = vmatpush1.msra.mxu0 %v7847
        %7902 = vmatprep.subr.mxu0 0.0
        %7903 = vmatpush1.msra.mxu0 %v7846
        %7904 = vmatprep.subr.mxu0 0.0
        %7905 = vmatpush1.msra.mxu0 %v7845
        %7906 = vmatprep.subr.mxu0 0.0
        %7907 = vmatpush1.msra.mxu0 %v7844
        %7908 = vmatprep.subr.mxu0 0.0
        %7909 = vmatpush1.msra.mxu0 %v7843
        %7910 = vmatprep.subr.mxu0 0.0
        %7911 = vmatpush1.msra.mxu0 %v7842
        %7912 = vmatprep.subr.mxu0 0.0
        %7913 = vmatpush1.msra.mxu0 %v7841
        %7914 = vmatprep.subr.mxu0 0.0
        %7915 = vmatpush2.msra.mxu0 0.0
        %7916 = vmatprep.subr.mxu0 0.0
        %7917 = vmatpush2.msra.mxu0 0.0
        %7918 = vmatprep.subr.mxu0 0.0
        %7919 = vmatpush2.msra.mxu0 0.0
        %7920 = vmatprep.subr.mxu0 0.0
        %7921 = vmatpush2.msra.mxu0 0.0
        %7922 = vmatprep.subr.mxu0 0.0
        %7923 = vmatpush2.msra.mxu0 %v7868
        %7924 = vmatprep.subr.mxu0 0.0
        %7925 = vmatpush2.msra.mxu0 %v7867
        %7926 = vmatprep.subr.mxu0 0.0
        %7927 = vmatpush2.msra.mxu0 %v7866
        %7928 = vmatprep.subr.mxu0 0.0
        %7929 = vmatpush2.msra.mxu0 %v7865
        %7930 = vmatprep.subr.mxu0 0.0
        %7931 = vmatpush2.msra.mxu0 %v7864
        %7932 = vmatprep.subr.mxu0 0.0
        %7933 = vmatpush2.msra.mxu0 %v7863
        %7934 = vmatprep.subr.mxu0 0.0
        %7935 = vmatpush2.msra.mxu0 %v7862
        %7936 = vmatprep.subr.mxu0 0.0
        %7937 = vmatpush2.msra.mxu0 %v7861
        %7938 = vmatprep.subr.mxu0 0.0
        %7939 = vmatpush2.msra.mxu0 %v7860
        %7940 = vmatprep.subr.mxu0 0.0
        %7941 = vmatpush2.msra.mxu0 %v7859
        %7942 = vmatprep.subr.mxu0 0.0
        %7943 = vmatpush2.msra.mxu0 %v7858
        %7944 = vmatprep.subr.mxu0 0.0
        %7945 = vmatpush2.msra.mxu0 %v7857
        %7946 = vmatprep.mubr.f32.mxu0 %v7877
        %7947 = vmatmul.mubr.f32.gmra.mxu0 %v7871
        %v7948 = vpop.f32.mrf.mxu0
        %v7949 = vadd.f32 0.0, %v7948
        %v7950 = vpop.f32.mrf.mxu0
        %7951 = vmatprep.mubr.f32.mxu0 %v7880
        %7952 = vmatmul.mubr.f32.gmra.mxu0 %v7873
        %v7953 = vpop.f32.mrf.mxu0
        %v7954 = vadd.f32 0.0, %v7953
        %v7955 = vpop.f32.mrf.mxu0
        %7956 = vdwg.mxu0
        %v7957 = vadd.f32 %v7869, %v7949
        %v7958 = vadd.f32 %v7870, %v7954
        %s7959 = scalar_lea.vmem %s12, 32
        %v7960 = vld [vmem:[%s7959] sm:$0xff]
        %v7961 = vld [vmem:[%s7959 + $0x8] sm:$0xff]
        %v7962 = vld [vmem:[%s7959 + $0x10] sm:$0xff]
        %v7963 = vld [vmem:[%s7959 + $0x18] sm:$0xff]
        %7992 = vrot.lane.b32.xlu0 %v7841, 127
        %v7993 = vpop.permute.xlu0 %7992
        %7994 = vrot.lane.b32.xlu0 %v7842, 127
        %v7995 = vpop.permute.xlu0 %7994
        %7996 = vrot.lane.b32.xlu0 %v7843, 127
        %v7997 = vpop.permute.xlu0 %7996
        %7998 = vrot.lane.b32.xlu0 %v7844, 127
        %v7999 = vpop.permute.xlu0 %7998
        %8000 = vrot.lane.b32.xlu0 %v7845, 127
        %v8001 = vpop.permute.xlu0 %8000
        %8002 = vrot.lane.b32.xlu0 %v7846, 127
        %v8003 = vpop.permute.xlu0 %8002
        %8004 = vrot.lane.b32.xlu0 %v7847, 127
        %v8005 = vpop.permute.xlu0 %8004
        %8006 = vrot.lane.b32.xlu0 %v7848, 127
        %v8007 = vpop.permute.xlu0 %8006
        %8008 = vrot.lane.b32.xlu0 %v7849, 127
        %v8009 = vpop.permute.xlu0 %8008
        %8010 = vrot.lane.b32.xlu0 %v7850, 127
        %v8011 = vpop.permute.xlu0 %8010
        %8012 = vrot.lane.b32.xlu0 %v7851, 127
        %v8013 = vpop.permute.xlu0 %8012
        %8014 = vrot.lane.b32.xlu0 %v7852, 127
        %v8015 = vpop.permute.xlu0 %8014
        %8016 = vrot.lane.b32.xlu0 %v7853, 127
        %v8017 = vpop.permute.xlu0 %8016
        %8018 = vrot.lane.b32.xlu0 %v7854, 127
        %v8019 = vpop.permute.xlu0 %8018
        %8020 = vrot.lane.b32.xlu0 %v7855, 127
        %v8021 = vpop.permute.xlu0 %8020
        %8022 = vrot.lane.b32.xlu0 %v7856, 127
        %v8023 = vpop.permute.xlu0 %8022
        %8024 = vrot.lane.b32.xlu0 %v7857, 127
        %v8025 = vpop.permute.xlu0 %8024
        %8026 = vrot.lane.b32.xlu0 %v7858, 127
        %v8027 = vpop.permute.xlu0 %8026
        %8028 = vrot.lane.b32.xlu0 %v7859, 127
        %v8029 = vpop.permute.xlu0 %8028
        %8030 = vrot.lane.b32.xlu0 %v7860, 127
        %v8031 = vpop.permute.xlu0 %8030
        %8032 = vrot.lane.b32.xlu0 %v7861, 127
        %v8033 = vpop.permute.xlu0 %8032
        %8034 = vrot.lane.b32.xlu0 %v7862, 127
        %v8035 = vpop.permute.xlu0 %8034
        %8036 = vrot.lane.b32.xlu0 %v7863, 127
        %v8037 = vpop.permute.xlu0 %8036
        %8038 = vrot.lane.b32.xlu0 %v7864, 127
        %v8039 = vpop.permute.xlu0 %8038
        %8040 = vrot.lane.b32.xlu0 %v7865, 127
        %v8041 = vpop.permute.xlu0 %8040
        %8042 = vrot.lane.b32.xlu0 %v7866, 127
        %v8043 = vpop.permute.xlu0 %8042
        %8044 = vrot.lane.b32.xlu0 %v7867, 127
        %v8045 = vpop.permute.xlu0 %8044
        %8046 = vrot.lane.b32.xlu0 %v7868, 127
        %v8047 = vpop.permute.xlu0 %8046
        %v8077 = vsel %vm7875, %v7961, 0
        %v8080 = vsel %vm7875, %v7963, 0
        %8082 = vmatprep.subr.mxu0 0.0
        %8083 = vmatpush1.msra.mxu0 %v8023
        %8084 = vmatprep.subr.mxu0 0.0
        %8085 = vmatpush1.msra.mxu0 %v8021
        %8086 = vmatprep.subr.mxu0 0.0
        %8087 = vmatpush1.msra.mxu0 %v8019
        %8088 = vmatprep.subr.mxu0 0.0
        %8089 = vmatpush1.msra.mxu0 %v8017
        %8090 = vmatprep.subr.mxu0 0.0
        %8091 = vmatpush1.msra.mxu0 %v8015
        %8092 = vmatprep.subr.mxu0 0.0
        %8093 = vmatpush1.msra.mxu0 %v8013
        %8094 = vmatprep.subr.mxu0 0.0
        %8095 = vmatpush1.msra.mxu0 %v8011
        %8096 = vmatprep.subr.mxu0 0.0
        %8097 = vmatpush1.msra.mxu0 %v8009
        %8098 = vmatprep.subr.mxu0 0.0
        %8099 = vmatpush1.msra.mxu0 %v8007
        %8100 = vmatprep.subr.mxu0 0.0
        %8101 = vmatpush1.msra.mxu0 %v8005
        %8102 = vmatprep.subr.mxu0 0.0
        %8103 = vmatpush1.msra.mxu0 %v8003
        %8104 = vmatprep.subr.mxu0 0.0
        %8105 = vmatpush1.msra.mxu0 %v8001
        %8106 = vmatprep.subr.mxu0 0.0
        %8107 = vmatpush1.msra.mxu0 %v7999
        %8108 = vmatprep.subr.mxu0 0.0
        %8109 = vmatpush1.msra.mxu0 %v7997
        %8110 = vmatprep.subr.mxu0 0.0
        %8111 = vmatpush1.msra.mxu0 %v7995
        %8112 = vmatprep.subr.mxu0 0.0
        %8113 = vmatpush1.msra.mxu0 %v7993
        %8114 = vmatprep.subr.mxu0 0.0
        %8115 = vmatpush2.msra.mxu0 0.0
        %8116 = vmatprep.subr.mxu0 0.0
        %8117 = vmatpush2.msra.mxu0 0.0
        %8118 = vmatprep.subr.mxu0 0.0
        %8119 = vmatpush2.msra.mxu0 0.0
        %8120 = vmatprep.subr.mxu0 0.0
        %8121 = vmatpush2.msra.mxu0 0.0
        %8122 = vmatprep.subr.mxu0 0.0
        %8123 = vmatpush2.msra.mxu0 %v8047
        %8124 = vmatprep.subr.mxu0 0.0
        %8125 = vmatpush2.msra.mxu0 %v8045
        %8126 = vmatprep.subr.mxu0 0.0
        %8127 = vmatpush2.msra.mxu0 %v8043
        %8128 = vmatprep.subr.mxu0 0.0
        %8129 = vmatpush2.msra.mxu0 %v8041
        %8130 = vmatprep.subr.mxu0 0.0
        %8131 = vmatpush2.msra.mxu0 %v8039
        %8132 = vmatprep.subr.mxu0 0.0
        %8133 = vmatpush2.msra.mxu0 %v8037
        %8134 = vmatprep.subr.mxu0 0.0
        %8135 = vmatpush2.msra.mxu0 %v8035
        %8136 = vmatprep.subr.mxu0 0.0
        %8137 = vmatpush2.msra.mxu0 %v8033
        %8138 = vmatprep.subr.mxu0 0.0
        %8139 = vmatpush2.msra.mxu0 %v8031
        %8140 = vmatprep.subr.mxu0 0.0
        %8141 = vmatpush2.msra.mxu0 %v8029
        %8142 = vmatprep.subr.mxu0 0.0
        %8143 = vmatpush2.msra.mxu0 %v8027
        %8144 = vmatprep.subr.mxu0 0.0
        %8145 = vmatpush2.msra.mxu0 %v8025
        %8146 = vmatprep.mubr.f32.mxu0 %v8077
        %8147 = vmatmul.mubr.f32.gmra.mxu0 %v7960
        %v8148 = vpop.f32.mrf.mxu0
        %v8149 = vadd.f32 0.0, %v8148
        %v8150 = vpop.f32.mrf.mxu0
        %8151 = vmatprep.mubr.f32.mxu0 %v8080
        %8152 = vmatmul.mubr.f32.gmra.mxu0 %v7962
        %v8153 = vpop.f32.mrf.mxu0
        %v8154 = vadd.f32 0.0, %v8153
        %v8155 = vpop.f32.mrf.mxu0
        %8156 = vdwg.mxu0
        %v8157 = vadd.f32 %v7957, %v8149
        %v8158 = vadd.f32 %v7958, %v8154
        %s8159 = scalar_lea.vmem %s12, 64
        %v8160 = vld [vmem:[%s8159] sm:$0xff]
        %v8161 = vld [vmem:[%s8159 + $0x8] sm:$0xff]
        %v8162 = vld [vmem:[%s8159 + $0x10] sm:$0xff]
        %v8163 = vld [vmem:[%s8159 + $0x18] sm:$0xff]
        %8164 = vrot.lane.b32.xlu0 %v7841, 126
        %v8165 = vpop.permute.xlu0 %8164
        %8166 = vrot.lane.b32.xlu0 %v7842, 126
        %v8167 = vpop.permute.xlu0 %8166
        %8168 = vrot.lane.b32.xlu0 %v7843, 126
        %v8169 = vpop.permute.xlu0 %8168
        %8170 = vrot.lane.b32.xlu0 %v7844, 126
        %v8171 = vpop.permute.xlu0 %8170
        %8172 = vrot.lane.b32.xlu0 %v7845, 126
        %v8173 = vpop.permute.xlu0 %8172
        %8174 = vrot.lane.b32.xlu0 %v7846, 126
        %v8175 = vpop.permute.xlu0 %8174
        %8176 = vrot.lane.b32.xlu0 %v7847, 126
        %v8177 = vpop.permute.xlu0 %8176
        %8178 = vrot.lane.b32.xlu0 %v7848, 126
        %v8179 = vpop.permute.xlu0 %8178
        %8180 = vrot.lane.b32.xlu0 %v7849, 126
        %v8181 = vpop.permute.xlu0 %8180
        %8182 = vrot.lane.b32.xlu0 %v7850, 126
        %v8183 = vpop.permute.xlu0 %8182
        %8184 = vrot.lane.b32.xlu0 %v7851, 126
        %v8185 = vpop.permute.xlu0 %8184
        %8186 = vrot.lane.b32.xlu0 %v7852, 126
        %v8187 = vpop.permute.xlu0 %8186
        %8188 = vrot.lane.b32.xlu0 %v7853, 126
        %v8189 = vpop.permute.xlu0 %8188
        %8190 = vrot.lane.b32.xlu0 %v7854, 126
        %v8191 = vpop.permute.xlu0 %8190
        %8192 = vrot.lane.b32.xlu0 %v7855, 126
        %v8193 = vpop.permute.xlu0 %8192
        %8194 = vrot.lane.b32.xlu0 %v7856, 126
        %v8195 = vpop.permute.xlu0 %8194
        %8196 = vrot.lane.b32.xlu0 %v7857, 126
        %v8197 = vpop.permute.xlu0 %8196
        %8198 = vrot.lane.b32.xlu0 %v7858, 126
        %v8199 = vpop.permute.xlu0 %8198
        %8200 = vrot.lane.b32.xlu0 %v7859, 126
        %v8201 = vpop.permute.xlu0 %8200
        %8202 = vrot.lane.b32.xlu0 %v7860, 126
        %v8203 = vpop.permute.xlu0 %8202
        %8204 = vrot.lane.b32.xlu0 %v7861, 126
        %v8205 = vpop.permute.xlu0 %8204
        %8206 = vrot.lane.b32.xlu0 %v7862, 126
        %v8207 = vpop.permute.xlu0 %8206
        %8208 = vrot.lane.b32.xlu0 %v7863, 126
        %v8209 = vpop.permute.xlu0 %8208
        %8210 = vrot.lane.b32.xlu0 %v7864, 126
        %v8211 = vpop.permute.xlu0 %8210
        %8212 = vrot.lane.b32.xlu0 %v7865, 126
        %v8213 = vpop.permute.xlu0 %8212
        %8214 = vrot.lane.b32.xlu0 %v7866, 126
        %v8215 = vpop.permute.xlu0 %8214
        %8216 = vrot.lane.b32.xlu0 %v7867, 126
        %v8217 = vpop.permute.xlu0 %8216
        %8218 = vrot.lane.b32.xlu0 %v7868, 126
        %v8219 = vpop.permute.xlu0 %8218
        %v8249 = vsel %vm7875, %v8161, 0
        %v8252 = vsel %vm7875, %v8163, 0
        %8254 = vmatprep.subr.mxu0 0.0
        %8255 = vmatpush1.msra.mxu0 %v8195
        %8256 = vmatprep.subr.mxu0 0.0
        %8257 = vmatpush1.msra.mxu0 %v8193
        %8258 = vmatprep.subr.mxu0 0.0
        %8259 = vmatpush1.msra.mxu0 %v8191
        %8260 = vmatprep.subr.mxu0 0.0
        %8261 = vmatpush1.msra.mxu0 %v8189
        %8262 = vmatprep.subr.mxu0 0.0
        %8263 = vmatpush1.msra.mxu0 %v8187
        %8264 = vmatprep.subr.mxu0 0.0
        %8265 = vmatpush1.msra.mxu0 %v8185
        %8266 = vmatprep.subr.mxu0 0.0
        %8267 = vmatpush1.msra.mxu0 %v8183
        %8268 = vmatprep.subr.mxu0 0.0
        %8269 = vmatpush1.msra.mxu0 %v8181
        %8270 = vmatprep.subr.mxu0 0.0
        %8271 = vmatpush1.msra.mxu0 %v8179
        %8272 = vmatprep.subr.mxu0 0.0
        %8273 = vmatpush1.msra.mxu0 %v8177
        %8274 = vmatprep.subr.mxu0 0.0
        %8275 = vmatpush1.msra.mxu0 %v8175
        %8276 = vmatprep.subr.mxu0 0.0
        %8277 = vmatpush1.msra.mxu0 %v8173
        %8278 = vmatprep.subr.mxu0 0.0
        %8279 = vmatpush1.msra.mxu0 %v8171
        %8280 = vmatprep.subr.mxu0 0.0
        %8281 = vmatpush1.msra.mxu0 %v8169
        %8282 = vmatprep.subr.mxu0 0.0
        %8283 = vmatpush1.msra.mxu0 %v8167
        %8284 = vmatprep.subr.mxu0 0.0
        %8285 = vmatpush1.msra.mxu0 %v8165
        %8286 = vmatprep.subr.mxu0 0.0
        %8287 = vmatpush2.msra.mxu0 0.0
        %8288 = vmatprep.subr.mxu0 0.0
        %8289 = vmatpush2.msra.mxu0 0.0
        %8290 = vmatprep.subr.mxu0 0.0
        %8291 = vmatpush2.msra.mxu0 0.0
        %8292 = vmatprep.subr.mxu0 0.0
        %8293 = vmatpush2.msra.mxu0 0.0
        %8294 = vmatprep.subr.mxu0 0.0
        %8295 = vmatpush2.msra.mxu0 %v8219
        %8296 = vmatprep.subr.mxu0 0.0
        %8297 = vmatpush2.msra.mxu0 %v8217
        %8298 = vmatprep.subr.mxu0 0.0
        %8299 = vmatpush2.msra.mxu0 %v8215
        %8300 = vmatprep.subr.mxu0 0.0
        %8301 = vmatpush2.msra.mxu0 %v8213
        %8302 = vmatprep.subr.mxu0 0.0
        %8303 = vmatpush2.msra.mxu0 %v8211
        %8304 = vmatprep.subr.mxu0 0.0
        %8305 = vmatpush2.msra.mxu0 %v8209
        %8306 = vmatprep.subr.mxu0 0.0
        %8307 = vmatpush2.msra.mxu0 %v8207
        %8308 = vmatprep.subr.mxu0 0.0
        %8309 = vmatpush2.msra.mxu0 %v8205
        %8310 = vmatprep.subr.mxu0 0.0
        %8311 = vmatpush2.msra.mxu0 %v8203
        %8312 = vmatprep.subr.mxu0 0.0
        %8313 = vmatpush2.msra.mxu0 %v8201
        %8314 = vmatprep.subr.mxu0 0.0
        %8315 = vmatpush2.msra.mxu0 %v8199
        %8316 = vmatprep.subr.mxu0 0.0
        %8317 = vmatpush2.msra.mxu0 %v8197
        %8318 = vmatprep.mubr.f32.mxu0 %v8249
        %8319 = vmatmul.mubr.f32.gmra.mxu0 %v8160
        %v8320 = vpop.f32.mrf.mxu0
        %v8321 = vadd.f32 0.0, %v8320
        %v8322 = vpop.f32.mrf.mxu0
        %8323 = vmatprep.mubr.f32.mxu0 %v8252
        %8324 = vmatmul.mubr.f32.gmra.mxu0 %v8162
        %v8325 = vpop.f32.mrf.mxu0
        %v8326 = vadd.f32 0.0, %v8325
        %v8327 = vpop.f32.mrf.mxu0
        %8328 = vdwg.mxu0
        %v8329 = vadd.f32 %v8157, %v8321
        %v8330 = vadd.f32 %v8158, %v8326
        %s8331 = scalar_lea.vmem %s12, 96
        %v8332 = vld [vmem:[%s8331] sm:$0xff]
        %v8333 = vld [vmem:[%s8331 + $0x8] sm:$0xff]
        %v8334 = vld [vmem:[%s8331 + $0x10] sm:$0xff]
        %v8335 = vld [vmem:[%s8331 + $0x18] sm:$0xff]
        %8336 = vrot.lane.b32.xlu0 %v7841, 125
        %v8337 = vpop.permute.xlu0 %8336
        %8338 = vrot.lane.b32.xlu0 %v7842, 125
        %v8339 = vpop.permute.xlu0 %8338
        %8340 = vrot.lane.b32.xlu0 %v7843, 125
        %v8341 = vpop.permute.xlu0 %8340
        %8342 = vrot.lane.b32.xlu0 %v7844, 125
        %v8343 = vpop.permute.xlu0 %8342
        %8344 = vrot.lane.b32.xlu0 %v7845, 125
        %v8345 = vpop.permute.xlu0 %8344
        %8346 = vrot.lane.b32.xlu0 %v7846, 125
        %v8347 = vpop.permute.xlu0 %8346
        %8348 = vrot.lane.b32.xlu0 %v7847, 125
        %v8349 = vpop.permute.xlu0 %8348
        %8350 = vrot.lane.b32.xlu0 %v7848, 125
        %v8351 = vpop.permute.xlu0 %8350
        %8352 = vrot.lane.b32.xlu0 %v7849, 125
        %v8353 = vpop.permute.xlu0 %8352
        %8354 = vrot.lane.b32.xlu0 %v7850, 125
        %v8355 = vpop.permute.xlu0 %8354
        %8356 = vrot.lane.b32.xlu0 %v7851, 125
        %v8357 = vpop.permute.xlu0 %8356
        %8358 = vrot.lane.b32.xlu0 %v7852, 125
        %v8359 = vpop.permute.xlu0 %8358
        %8360 = vrot.lane.b32.xlu0 %v7853, 125
        %v8361 = vpop.permute.xlu0 %8360
        %8362 = vrot.lane.b32.xlu0 %v7854, 125
        %v8363 = vpop.permute.xlu0 %8362
        %8364 = vrot.lane.b32.xlu0 %v7855, 125
        %v8365 = vpop.permute.xlu0 %8364
        %8366 = vrot.lane.b32.xlu0 %v7856, 125
        %v8367 = vpop.permute.xlu0 %8366
        %8368 = vrot.lane.b32.xlu0 %v7857, 125
        %v8369 = vpop.permute.xlu0 %8368
        %8370 = vrot.lane.b32.xlu0 %v7858, 125
        %v8371 = vpop.permute.xlu0 %8370
        %8372 = vrot.lane.b32.xlu0 %v7859, 125
        %v8373 = vpop.permute.xlu0 %8372
        %8374 = vrot.lane.b32.xlu0 %v7860, 125
        %v8375 = vpop.permute.xlu0 %8374
        %8376 = vrot.lane.b32.xlu0 %v7861, 125
        %v8377 = vpop.permute.xlu0 %8376
        %8378 = vrot.lane.b32.xlu0 %v7862, 125
        %v8379 = vpop.permute.xlu0 %8378
        %8380 = vrot.lane.b32.xlu0 %v7863, 125
        %v8381 = vpop.permute.xlu0 %8380
        %8382 = vrot.lane.b32.xlu0 %v7864, 125
        %v8383 = vpop.permute.xlu0 %8382
        %8384 = vrot.lane.b32.xlu0 %v7865, 125
        %v8385 = vpop.permute.xlu0 %8384
        %8386 = vrot.lane.b32.xlu0 %v7866, 125
        %v8387 = vpop.permute.xlu0 %8386
        %8388 = vrot.lane.b32.xlu0 %v7867, 125
        %v8389 = vpop.permute.xlu0 %8388
        %8390 = vrot.lane.b32.xlu0 %v7868, 125
        %v8391 = vpop.permute.xlu0 %8390
        %v8421 = vsel %vm7875, %v8333, 0
        %v8424 = vsel %vm7875, %v8335, 0
        %8426 = vmatprep.subr.mxu0 0.0
        %8427 = vmatpush1.msra.mxu0 %v8367
        %8428 = vmatprep.subr.mxu0 0.0
        %8429 = vmatpush1.msra.mxu0 %v8365
        %8430 = vmatprep.subr.mxu0 0.0
        %8431 = vmatpush1.msra.mxu0 %v8363
        %8432 = vmatprep.subr.mxu0 0.0
        %8433 = vmatpush1.msra.mxu0 %v8361
        %8434 = vmatprep.subr.mxu0 0.0
        %8435 = vmatpush1.msra.mxu0 %v8359
        %8436 = vmatprep.subr.mxu0 0.0
        %8437 = vmatpush1.msra.mxu0 %v8357
        %8438 = vmatprep.subr.mxu0 0.0
        %8439 = vmatpush1.msra.mxu0 %v8355
        %8440 = vmatprep.subr.mxu0 0.0
        %8441 = vmatpush1.msra.mxu0 %v8353
        %8442 = vmatprep.subr.mxu0 0.0
        %8443 = vmatpush1.msra.mxu0 %v8351
        %8444 = vmatprep.subr.mxu0 0.0
        %8445 = vmatpush1.msra.mxu0 %v8349
        %8446 = vmatprep.subr.mxu0 0.0
        %8447 = vmatpush1.msra.mxu0 %v8347
        %8448 = vmatprep.subr.mxu0 0.0
        %8449 = vmatpush1.msra.mxu0 %v8345
        %8450 = vmatprep.subr.mxu0 0.0
        %8451 = vmatpush1.msra.mxu0 %v8343
        %8452 = vmatprep.subr.mxu0 0.0
        %8453 = vmatpush1.msra.mxu0 %v8341
        %8454 = vmatprep.subr.mxu0 0.0
        %8455 = vmatpush1.msra.mxu0 %v8339
        %8456 = vmatprep.subr.mxu0 0.0
        %8457 = vmatpush1.msra.mxu0 %v8337
        %8458 = vmatprep.subr.mxu0 0.0
        %8459 = vmatpush2.msra.mxu0 0.0
        %8460 = vmatprep.subr.mxu0 0.0
        %8461 = vmatpush2.msra.mxu0 0.0
        %8462 = vmatprep.subr.mxu0 0.0
        %8463 = vmatpush2.msra.mxu0 0.0
        %8464 = vmatprep.subr.mxu0 0.0
        %8465 = vmatpush2.msra.mxu0 0.0
        %8466 = vmatprep.subr.mxu0 0.0
        %8467 = vmatpush2.msra.mxu0 %v8391
        %8468 = vmatprep.subr.mxu0 0.0
        %8469 = vmatpush2.msra.mxu0 %v8389
        %8470 = vmatprep.subr.mxu0 0.0
        %8471 = vmatpush2.msra.mxu0 %v8387
        %8472 = vmatprep.subr.mxu0 0.0
        %8473 = vmatpush2.msra.mxu0 %v8385
        %8474 = vmatprep.subr.mxu0 0.0
        %8475 = vmatpush2.msra.mxu0 %v8383
        %8476 = vmatprep.subr.mxu0 0.0
        %8477 = vmatpush2.msra.mxu0 %v8381
        %8478 = vmatprep.subr.mxu0 0.0
        %8479 = vmatpush2.msra.mxu0 %v8379
        %8480 = vmatprep.subr.mxu0 0.0
        %8481 = vmatpush2.msra.mxu0 %v8377
        %8482 = vmatprep.subr.mxu0 0.0
        %8483 = vmatpush2.msra.mxu0 %v8375
        %8484 = vmatprep.subr.mxu0 0.0
        %8485 = vmatpush2.msra.mxu0 %v8373
        %8486 = vmatprep.subr.mxu0 0.0
        %8487 = vmatpush2.msra.mxu0 %v8371
        %8488 = vmatprep.subr.mxu0 0.0
        %8489 = vmatpush2.msra.mxu0 %v8369
        %8490 = vmatprep.mubr.f32.mxu0 %v8421
        %8491 = vmatmul.mubr.f32.gmra.mxu0 %v8332
        %v8492 = vpop.f32.mrf.mxu0
        %v8493 = vadd.f32 0.0, %v8492
        %v8494 = vpop.f32.mrf.mxu0
        %8495 = vmatprep.mubr.f32.mxu0 %v8424
        %8496 = vmatmul.mubr.f32.gmra.mxu0 %v8334
        %v8497 = vpop.f32.mrf.mxu0
        %v8498 = vadd.f32 0.0, %v8497
        %v8499 = vpop.f32.mrf.mxu0
        %8500 = vdwg.mxu0
        %v8501 = vadd.f32 %v8329, %v8493
        %v8502 = vadd.f32 %v8330, %v8498
        %s8503 = scalar_lea.vmem %s12, 128
        %v8504 = vld [vmem:[%s8503] sm:$0xff]
        %v8505 = vld [vmem:[%s8503 + $0x8] sm:$0xff]
        %v8506 = vld [vmem:[%s8503 + $0x10] sm:$0xff]
        %v8507 = vld [vmem:[%s8503 + $0x18] sm:$0xff]
        %8508 = vrot.lane.b32.xlu0 %v7841, 124
        %v8509 = vpop.permute.xlu0 %8508
        %8510 = vrot.lane.b32.xlu0 %v7842, 124
        %v8511 = vpop.permute.xlu0 %8510
        %8512 = vrot.lane.b32.xlu0 %v7843, 124
        %v8513 = vpop.permute.xlu0 %8512
        %8514 = vrot.lane.b32.xlu0 %v7844, 124
        %v8515 = vpop.permute.xlu0 %8514
        %8516 = vrot.lane.b32.xlu0 %v7845, 124
        %v8517 = vpop.permute.xlu0 %8516
        %8518 = vrot.lane.b32.xlu0 %v7846, 124
        %v8519 = vpop.permute.xlu0 %8518
        %8520 = vrot.lane.b32.xlu0 %v7847, 124
        %v8521 = vpop.permute.xlu0 %8520
        %8522 = vrot.lane.b32.xlu0 %v7848, 124
        %v8523 = vpop.permute.xlu0 %8522
        %8524 = vrot.lane.b32.xlu0 %v7849, 124
        %v8525 = vpop.permute.xlu0 %8524
        %8526 = vrot.lane.b32.xlu0 %v7850, 124
        %v8527 = vpop.permute.xlu0 %8526
        %8528 = vrot.lane.b32.xlu0 %v7851, 124
        %v8529 = vpop.permute.xlu0 %8528
        %8530 = vrot.lane.b32.xlu0 %v7852, 124
        %v8531 = vpop.permute.xlu0 %8530
        %8532 = vrot.lane.b32.xlu0 %v7853, 124
        %v8533 = vpop.permute.xlu0 %8532
        %8534 = vrot.lane.b32.xlu0 %v7854, 124
        %v8535 = vpop.permute.xlu0 %8534
        %8536 = vrot.lane.b32.xlu0 %v7855, 124
        %v8537 = vpop.permute.xlu0 %8536
        %8538 = vrot.lane.b32.xlu0 %v7856, 124
        %v8539 = vpop.permute.xlu0 %8538
        %8540 = vrot.lane.b32.xlu0 %v7857, 124
        %v8541 = vpop.permute.xlu0 %8540
        %8542 = vrot.lane.b32.xlu0 %v7858, 124
        %v8543 = vpop.permute.xlu0 %8542
        %8544 = vrot.lane.b32.xlu0 %v7859, 124
        %v8545 = vpop.permute.xlu0 %8544
        %8546 = vrot.lane.b32.xlu0 %v7860, 124
        %v8547 = vpop.permute.xlu0 %8546
        %8548 = vrot.lane.b32.xlu0 %v7861, 124
        %v8549 = vpop.permute.xlu0 %8548
        %8550 = vrot.lane.b32.xlu0 %v7862, 124
        %v8551 = vpop.permute.xlu0 %8550
        %8552 = vrot.lane.b32.xlu0 %v7863, 124
        %v8553 = vpop.permute.xlu0 %8552
        %8554 = vrot.lane.b32.xlu0 %v7864, 124
        %v8555 = vpop.permute.xlu0 %8554
        %8556 = vrot.lane.b32.xlu0 %v7865, 124
        %v8557 = vpop.permute.xlu0 %8556
        %8558 = vrot.lane.b32.xlu0 %v7866, 124
        %v8559 = vpop.permute.xlu0 %8558
        %8560 = vrot.lane.b32.xlu0 %v7867, 124
        %v8561 = vpop.permute.xlu0 %8560
        %8562 = vrot.lane.b32.xlu0 %v7868, 124
        %v8563 = vpop.permute.xlu0 %8562
        %v8593 = vsel %vm7875, %v8505, 0
        %v8596 = vsel %vm7875, %v8507, 0
        %8598 = vmatprep.subr.mxu0 0.0
        %8599 = vmatpush1.msra.mxu0 %v8539
        %8600 = vmatprep.subr.mxu0 0.0
        %8601 = vmatpush1.msra.mxu0 %v8537
        %8602 = vmatprep.subr.mxu0 0.0
        %8603 = vmatpush1.msra.mxu0 %v8535
        %8604 = vmatprep.subr.mxu0 0.0
        %8605 = vmatpush1.msra.mxu0 %v8533
        %8606 = vmatprep.subr.mxu0 0.0
        %8607 = vmatpush1.msra.mxu0 %v8531
        %8608 = vmatprep.subr.mxu0 0.0
        %8609 = vmatpush1.msra.mxu0 %v8529
        %8610 = vmatprep.subr.mxu0 0.0
        %8611 = vmatpush1.msra.mxu0 %v8527
        %8612 = vmatprep.subr.mxu0 0.0
        %8613 = vmatpush1.msra.mxu0 %v8525
        %8614 = vmatprep.subr.mxu0 0.0
        %8615 = vmatpush1.msra.mxu0 %v8523
        %8616 = vmatprep.subr.mxu0 0.0
        %8617 = vmatpush1.msra.mxu0 %v8521
        %8618 = vmatprep.subr.mxu0 0.0
        %8619 = vmatpush1.msra.mxu0 %v8519
        %8620 = vmatprep.subr.mxu0 0.0
        %8621 = vmatpush1.msra.mxu0 %v8517
        %8622 = vmatprep.subr.mxu0 0.0
        %8623 = vmatpush1.msra.mxu0 %v8515
        %8624 = vmatprep.subr.mxu0 0.0
        %8625 = vmatpush1.msra.mxu0 %v8513
        %8626 = vmatprep.subr.mxu0 0.0
        %8627 = vmatpush1.msra.mxu0 %v8511
        %8628 = vmatprep.subr.mxu0 0.0
        %8629 = vmatpush1.msra.mxu0 %v8509
        %8630 = vmatprep.subr.mxu0 0.0
        %8631 = vmatpush2.msra.mxu0 0.0
        %8632 = vmatprep.subr.mxu0 0.0
        %8633 = vmatpush2.msra.mxu0 0.0
        %8634 = vmatprep.subr.mxu0 0.0
        %8635 = vmatpush2.msra.mxu0 0.0
        %8636 = vmatprep.subr.mxu0 0.0
        %8637 = vmatpush2.msra.mxu0 0.0
        %8638 = vmatprep.subr.mxu0 0.0
        %8639 = vmatpush2.msra.mxu0 %v8563
        %8640 = vmatprep.subr.mxu0 0.0
        %8641 = vmatpush2.msra.mxu0 %v8561
        %8642 = vmatprep.subr.mxu0 0.0
        %8643 = vmatpush2.msra.mxu0 %v8559
        %8644 = vmatprep.subr.mxu0 0.0
        %8645 = vmatpush2.msra.mxu0 %v8557
        %8646 = vmatprep.subr.mxu0 0.0
        %8647 = vmatpush2.msra.mxu0 %v8555
        %8648 = vmatprep.subr.mxu0 0.0
        %8649 = vmatpush2.msra.mxu0 %v8553
        %8650 = vmatprep.subr.mxu0 0.0
        %8651 = vmatpush2.msra.mxu0 %v8551
        %8652 = vmatprep.subr.mxu0 0.0
        %8653 = vmatpush2.msra.mxu0 %v8549
        %8654 = vmatprep.subr.mxu0 0.0
        %8655 = vmatpush2.msra.mxu0 %v8547
        %8656 = vmatprep.subr.mxu0 0.0
        %8657 = vmatpush2.msra.mxu0 %v8545
        %8658 = vmatprep.subr.mxu0 0.0
        %8659 = vmatpush2.msra.mxu0 %v8543
        %8660 = vmatprep.subr.mxu0 0.0
        %8661 = vmatpush2.msra.mxu0 %v8541
        %8662 = vmatprep.mubr.f32.mxu0 %v8593
        %8663 = vmatmul.mubr.f32.gmra.mxu0 %v8504
        %v8664 = vpop.f32.mrf.mxu0
        %v8665 = vadd.f32 0.0, %v8664
        %v8666 = vpop.f32.mrf.mxu0
        %8667 = vmatprep.mubr.f32.mxu0 %v8596
        %8668 = vmatmul.mubr.f32.gmra.mxu0 %v8506
        %v8669 = vpop.f32.mrf.mxu0
        %v8670 = vadd.f32 0.0, %v8669
        %v8671 = vpop.f32.mrf.mxu0
        %8672 = vdwg.mxu0
        %v8673 = vadd.f32 %v8501, %v8665
        %v8674 = vadd.f32 %v8502, %v8670
        %s8675 = scalar_lea.vmem %s12, 160
        %v8676 = vld [vmem:[%s8675] sm:$0xff]
        %v8677 = vld [vmem:[%s8675 + $0x8] sm:$0xff]
        %v8678 = vld [vmem:[%s8675 + $0x10] sm:$0xff]
        %v8679 = vld [vmem:[%s8675 + $0x18] sm:$0xff]
        %8680 = vrot.lane.b32.xlu0 %v7841, 123
        %v8681 = vpop.permute.xlu0 %8680
        %8682 = vrot.lane.b32.xlu0 %v7842, 123
        %v8683 = vpop.permute.xlu0 %8682
        %8684 = vrot.lane.b32.xlu0 %v7843, 123
        %v8685 = vpop.permute.xlu0 %8684
        %8686 = vrot.lane.b32.xlu0 %v7844, 123
        %v8687 = vpop.permute.xlu0 %8686
        %8688 = vrot.lane.b32.xlu0 %v7845, 123
        %v8689 = vpop.permute.xlu0 %8688
        %8690 = vrot.lane.b32.xlu0 %v7846, 123
        %v8691 = vpop.permute.xlu0 %8690
        %8692 = vrot.lane.b32.xlu0 %v7847, 123
        %v8693 = vpop.permute.xlu0 %8692
        %8694 = vrot.lane.b32.xlu0 %v7848, 123
        %v8695 = vpop.permute.xlu0 %8694
        %8696 = vrot.lane.b32.xlu0 %v7849, 123
        %v8697 = vpop.permute.xlu0 %8696
        %8698 = vrot.lane.b32.xlu0 %v7850, 123
        %v8699 = vpop.permute.xlu0 %8698
        %8700 = vrot.lane.b32.xlu0 %v7851, 123
        %v8701 = vpop.permute.xlu0 %8700
        %8702 = vrot.lane.b32.xlu0 %v7852, 123
        %v8703 = vpop.permute.xlu0 %8702
        %8704 = vrot.lane.b32.xlu0 %v7853, 123
        %v8705 = vpop.permute.xlu0 %8704
        %8706 = vrot.lane.b32.xlu0 %v7854, 123
        %v8707 = vpop.permute.xlu0 %8706
        %8708 = vrot.lane.b32.xlu0 %v7855, 123
        %v8709 = vpop.permute.xlu0 %8708
        %8710 = vrot.lane.b32.xlu0 %v7856, 123
        %v8711 = vpop.permute.xlu0 %8710
        %8712 = vrot.lane.b32.xlu0 %v7857, 123
        %v8713 = vpop.permute.xlu0 %8712
        %8714 = vrot.lane.b32.xlu0 %v7858, 123
        %v8715 = vpop.permute.xlu0 %8714
        %8716 = vrot.lane.b32.xlu0 %v7859, 123
        %v8717 = vpop.permute.xlu0 %8716
        %8718 = vrot.lane.b32.xlu0 %v7860, 123
        %v8719 = vpop.permute.xlu0 %8718
        %8720 = vrot.lane.b32.xlu0 %v7861, 123
        %v8721 = vpop.permute.xlu0 %8720
        %8722 = vrot.lane.b32.xlu0 %v7862, 123
        %v8723 = vpop.permute.xlu0 %8722
        %8724 = vrot.lane.b32.xlu0 %v7863, 123
        %v8725 = vpop.permute.xlu0 %8724
        %8726 = vrot.lane.b32.xlu0 %v7864, 123
        %v8727 = vpop.permute.xlu0 %8726
        %8728 = vrot.lane.b32.xlu0 %v7865, 123
        %v8729 = vpop.permute.xlu0 %8728
        %8730 = vrot.lane.b32.xlu0 %v7866, 123
        %v8731 = vpop.permute.xlu0 %8730
        %8732 = vrot.lane.b32.xlu0 %v7867, 123
        %v8733 = vpop.permute.xlu0 %8732
        %8734 = vrot.lane.b32.xlu0 %v7868, 123
        %v8735 = vpop.permute.xlu0 %8734
        %v8765 = vsel %vm7875, %v8677, 0
        %v8768 = vsel %vm7875, %v8679, 0
        %8770 = vmatprep.subr.mxu0 0.0
        %8771 = vmatpush1.msra.mxu0 %v8711
        %8772 = vmatprep.subr.mxu0 0.0
        %8773 = vmatpush1.msra.mxu0 %v8709
        %8774 = vmatprep.subr.mxu0 0.0
        %8775 = vmatpush1.msra.mxu0 %v8707
        %8776 = vmatprep.subr.mxu0 0.0
        %8777 = vmatpush1.msra.mxu0 %v8705
        %8778 = vmatprep.subr.mxu0 0.0
        %8779 = vmatpush1.msra.mxu0 %v8703
        %8780 = vmatprep.subr.mxu0 0.0
        %8781 = vmatpush1.msra.mxu0 %v8701
        %8782 = vmatprep.subr.mxu0 0.0
        %8783 = vmatpush1.msra.mxu0 %v8699
        %8784 = vmatprep.subr.mxu0 0.0
        %8785 = vmatpush1.msra.mxu0 %v8697
        %8786 = vmatprep.subr.mxu0 0.0
        %8787 = vmatpush1.msra.mxu0 %v8695
        %8788 = vmatprep.subr.mxu0 0.0
        %8789 = vmatpush1.msra.mxu0 %v8693
        %8790 = vmatprep.subr.mxu0 0.0
        %8791 = vmatpush1.msra.mxu0 %v8691
        %8792 = vmatprep.subr.mxu0 0.0
        %8793 = vmatpush1.msra.mxu0 %v8689
        %8794 = vmatprep.subr.mxu0 0.0
        %8795 = vmatpush1.msra.mxu0 %v8687
        %8796 = vmatprep.subr.mxu0 0.0
        %8797 = vmatpush1.msra.mxu0 %v8685
        %8798 = vmatprep.subr.mxu0 0.0
        %8799 = vmatpush1.msra.mxu0 %v8683
        %8800 = vmatprep.subr.mxu0 0.0
        %8801 = vmatpush1.msra.mxu0 %v8681
        %8802 = vmatprep.subr.mxu0 0.0
        %8803 = vmatpush2.msra.mxu0 0.0
        %8804 = vmatprep.subr.mxu0 0.0
        %8805 = vmatpush2.msra.mxu0 0.0
        %8806 = vmatprep.subr.mxu0 0.0
        %8807 = vmatpush2.msra.mxu0 0.0
        %8808 = vmatprep.subr.mxu0 0.0
        %8809 = vmatpush2.msra.mxu0 0.0
        %8810 = vmatprep.subr.mxu0 0.0
        %8811 = vmatpush2.msra.mxu0 %v8735
        %8812 = vmatprep.subr.mxu0 0.0
        %8813 = vmatpush2.msra.mxu0 %v8733
        %8814 = vmatprep.subr.mxu0 0.0
        %8815 = vmatpush2.msra.mxu0 %v8731
        %8816 = vmatprep.subr.mxu0 0.0
        %8817 = vmatpush2.msra.mxu0 %v8729
        %8818 = vmatprep.subr.mxu0 0.0
        %8819 = vmatpush2.msra.mxu0 %v8727
        %8820 = vmatprep.subr.mxu0 0.0
        %8821 = vmatpush2.msra.mxu0 %v8725
        %8822 = vmatprep.subr.mxu0 0.0
        %8823 = vmatpush2.msra.mxu0 %v8723
        %8824 = vmatprep.subr.mxu0 0.0
        %8825 = vmatpush2.msra.mxu0 %v8721
        %8826 = vmatprep.subr.mxu0 0.0
        %8827 = vmatpush2.msra.mxu0 %v8719
        %8828 = vmatprep.subr.mxu0 0.0
        %8829 = vmatpush2.msra.mxu0 %v8717
        %8830 = vmatprep.subr.mxu0 0.0
        %8831 = vmatpush2.msra.mxu0 %v8715
        %8832 = vmatprep.subr.mxu0 0.0
        %8833 = vmatpush2.msra.mxu0 %v8713
        %8834 = vmatprep.mubr.f32.mxu0 %v8765
        %8835 = vmatmul.mubr.f32.gmra.mxu0 %v8676
        %v8836 = vpop.f32.mrf.mxu0
        %v8837 = vadd.f32 0.0, %v8836
        %v8838 = vpop.f32.mrf.mxu0
        %8839 = vmatprep.mubr.f32.mxu0 %v8768
        %8840 = vmatmul.mubr.f32.gmra.mxu0 %v8678
        %v8841 = vpop.f32.mrf.mxu0
        %v8842 = vadd.f32 0.0, %v8841
        %v8843 = vpop.f32.mrf.mxu0
        %8844 = vdwg.mxu0
        %v8845 = vadd.f32 %v8673, %v8837
        %v8846 = vadd.f32 %v8674, %v8842
        %s8847 = scalar_lea.vmem %s12, 192
        %v8848 = vld [vmem:[%s8847] sm:$0xff]
        %v8849 = vld [vmem:[%s8847 + $0x8] sm:$0xff]
        %v8850 = vld [vmem:[%s8847 + $0x10] sm:$0xff]
        %v8851 = vld [vmem:[%s8847 + $0x18] sm:$0xff]
        %8852 = vrot.lane.b32.xlu0 %v7841, 122
        %v8853 = vpop.permute.xlu0 %8852
        %8854 = vrot.lane.b32.xlu0 %v7842, 122
        %v8855 = vpop.permute.xlu0 %8854
        %8856 = vrot.lane.b32.xlu0 %v7843, 122
        %v8857 = vpop.permute.xlu0 %8856
        %8858 = vrot.lane.b32.xlu0 %v7844, 122
        %v8859 = vpop.permute.xlu0 %8858
        %8860 = vrot.lane.b32.xlu0 %v7845, 122
        %v8861 = vpop.permute.xlu0 %8860
        %8862 = vrot.lane.b32.xlu0 %v7846, 122
        %v8863 = vpop.permute.xlu0 %8862
        %8864 = vrot.lane.b32.xlu0 %v7847, 122
        %v8865 = vpop.permute.xlu0 %8864
        %8866 = vrot.lane.b32.xlu0 %v7848, 122
        %v8867 = vpop.permute.xlu0 %8866
        %8868 = vrot.lane.b32.xlu0 %v7849, 122
        %v8869 = vpop.permute.xlu0 %8868
        %8870 = vrot.lane.b32.xlu0 %v7850, 122
        %v8871 = vpop.permute.xlu0 %8870
        %8872 = vrot.lane.b32.xlu0 %v7851, 122
        %v8873 = vpop.permute.xlu0 %8872
        %8874 = vrot.lane.b32.xlu0 %v7852, 122
        %v8875 = vpop.permute.xlu0 %8874
        %8876 = vrot.lane.b32.xlu0 %v7853, 122
        %v8877 = vpop.permute.xlu0 %8876
        %8878 = vrot.lane.b32.xlu0 %v7854, 122
        %v8879 = vpop.permute.xlu0 %8878
        %8880 = vrot.lane.b32.xlu0 %v7855, 122
        %v8881 = vpop.permute.xlu0 %8880
        %8882 = vrot.lane.b32.xlu0 %v7856, 122
        %v8883 = vpop.permute.xlu0 %8882
        %8884 = vrot.lane.b32.xlu0 %v7857, 122
        %v8885 = vpop.permute.xlu0 %8884
        %8886 = vrot.lane.b32.xlu0 %v7858, 122
        %v8887 = vpop.permute.xlu0 %8886
        %8888 = vrot.lane.b32.xlu0 %v7859, 122
        %v8889 = vpop.permute.xlu0 %8888
        %8890 = vrot.lane.b32.xlu0 %v7860, 122
        %v8891 = vpop.permute.xlu0 %8890
        %8892 = vrot.lane.b32.xlu0 %v7861, 122
        %v8893 = vpop.permute.xlu0 %8892
        %8894 = vrot.lane.b32.xlu0 %v7862, 122
        %v8895 = vpop.permute.xlu0 %8894
        %8896 = vrot.lane.b32.xlu0 %v7863, 122
        %v8897 = vpop.permute.xlu0 %8896
        %8898 = vrot.lane.b32.xlu0 %v7864, 122
        %v8899 = vpop.permute.xlu0 %8898
        %8900 = vrot.lane.b32.xlu0 %v7865, 122
        %v8901 = vpop.permute.xlu0 %8900
        %8902 = vrot.lane.b32.xlu0 %v7866, 122
        %v8903 = vpop.permute.xlu0 %8902
        %8904 = vrot.lane.b32.xlu0 %v7867, 122
        %v8905 = vpop.permute.xlu0 %8904
        %8906 = vrot.lane.b32.xlu0 %v7868, 122
        %v8907 = vpop.permute.xlu0 %8906
        %v8937 = vsel %vm7875, %v8849, 0
        %v8940 = vsel %vm7875, %v8851, 0
        %8942 = vmatprep.subr.mxu0 0.0
        %8943 = vmatpush1.msra.mxu0 %v8883
        %8944 = vmatprep.subr.mxu0 0.0
        %8945 = vmatpush1.msra.mxu0 %v8881
        %8946 = vmatprep.subr.mxu0 0.0
        %8947 = vmatpush1.msra.mxu0 %v8879
        %8948 = vmatprep.subr.mxu0 0.0
        %8949 = vmatpush1.msra.mxu0 %v8877
        %8950 = vmatprep.subr.mxu0 0.0
        %8951 = vmatpush1.msra.mxu0 %v8875
        %8952 = vmatprep.subr.mxu0 0.0
        %8953 = vmatpush1.msra.mxu0 %v8873
        %8954 = vmatprep.subr.mxu0 0.0
        %8955 = vmatpush1.msra.mxu0 %v8871
        %8956 = vmatprep.subr.mxu0 0.0
        %8957 = vmatpush1.msra.mxu0 %v8869
        %8958 = vmatprep.subr.mxu0 0.0
        %8959 = vmatpush1.msra.mxu0 %v8867
        %8960 = vmatprep.subr.mxu0 0.0
        %8961 = vmatpush1.msra.mxu0 %v8865
        %8962 = vmatprep.subr.mxu0 0.0
        %8963 = vmatpush1.msra.mxu0 %v8863
        %8964 = vmatprep.subr.mxu0 0.0
        %8965 = vmatpush1.msra.mxu0 %v8861
        %8966 = vmatprep.subr.mxu0 0.0
        %8967 = vmatpush1.msra.mxu0 %v8859
        %8968 = vmatprep.subr.mxu0 0.0
        %8969 = vmatpush1.msra.mxu0 %v8857
        %8970 = vmatprep.subr.mxu0 0.0
        %8971 = vmatpush1.msra.mxu0 %v8855
        %8972 = vmatprep.subr.mxu0 0.0
        %8973 = vmatpush1.msra.mxu0 %v8853
        %8974 = vmatprep.subr.mxu0 0.0
        %8975 = vmatpush2.msra.mxu0 0.0
        %8976 = vmatprep.subr.mxu0 0.0
        %8977 = vmatpush2.msra.mxu0 0.0
        %8978 = vmatprep.subr.mxu0 0.0
        %8979 = vmatpush2.msra.mxu0 0.0
        %8980 = vmatprep.subr.mxu0 0.0
        %8981 = vmatpush2.msra.mxu0 0.0
        %8982 = vmatprep.subr.mxu0 0.0
        %8983 = vmatpush2.msra.mxu0 %v8907
        %8984 = vmatprep.subr.mxu0 0.0
        %8985 = vmatpush2.msra.mxu0 %v8905
        %8986 = vmatprep.subr.mxu0 0.0
        %8987 = vmatpush2.msra.mxu0 %v8903
        %8988 = vmatprep.subr.mxu0 0.0
        %8989 = vmatpush2.msra.mxu0 %v8901
        %8990 = vmatprep.subr.mxu0 0.0
        %8991 = vmatpush2.msra.mxu0 %v8899
        %8992 = vmatprep.subr.mxu0 0.0
        %8993 = vmatpush2.msra.mxu0 %v8897
        %8994 = vmatprep.subr.mxu0 0.0
        %8995 = vmatpush2.msra.mxu0 %v8895
        %8996 = vmatprep.subr.mxu0 0.0
        %8997 = vmatpush2.msra.mxu0 %v8893
        %8998 = vmatprep.subr.mxu0 0.0
        %8999 = vmatpush2.msra.mxu0 %v8891
        %9000 = vmatprep.subr.mxu0 0.0
        %9001 = vmatpush2.msra.mxu0 %v8889
        %9002 = vmatprep.subr.mxu0 0.0
        %9003 = vmatpush2.msra.mxu0 %v8887
        %9004 = vmatprep.subr.mxu0 0.0
        %9005 = vmatpush2.msra.mxu0 %v8885
        %9006 = vmatprep.mubr.f32.mxu0 %v8937
        %9007 = vmatmul.mubr.f32.gmra.mxu0 %v8848
        %v9008 = vpop.f32.mrf.mxu0
        %v9009 = vadd.f32 0.0, %v9008
        %v9010 = vpop.f32.mrf.mxu0
        %9011 = vmatprep.mubr.f32.mxu0 %v8940
        %9012 = vmatmul.mubr.f32.gmra.mxu0 %v8850
        %v9013 = vpop.f32.mrf.mxu0
        %v9014 = vadd.f32 0.0, %v9013
        %v9015 = vpop.f32.mrf.mxu0
        %9016 = vdwg.mxu0
        %v9017 = vadd.f32 %v8845, %v9009
        %v9018 = vadd.f32 %v8846, %v9014
        %vm9019 = vcmask 7168
        %9020 = vst.msk [vmem:[%s508] sm:$0xff] %vm9019, %v9017
        %9021 = vst.msk [vmem:[%s508 + $0x8] sm:$0xff] %vm9019, %v9018
        %p9022 = scmp.lt.s32.totalorder %s27, 1
        %s9023 = scalar_select %p9022, %s27, 1
        %s9024 = smul.addr %s9023, 2
        %s9025 = smul.addr %s9024, 8
        %s9026 = scalar_lea.vmem %s14, %s9025
        // Predicated region
        $region89: #{causal_reservoir_encoder.1} parent=75 // pred_check
          %p9027 = pneg %p344
        $region90: #{causal_reservoir_encoder.1} parent=75 // pred_check_branch
          %9029 = sbr.rel (%p9027) target = $region92
        $region91: #{causal_reservoir_encoder.1} parent=75 // pred_region
          _
        $region92: #{causal_reservoir_encoder.1} parent=75 // pred_fallthru
          _
      $region76: #{causal_reservoir_encoder.1} parent=5 // pred_fallthru
        _
      %p9030 = scmp.le.s32.totalorder 2, %s22
      // Predicated region
      $region93: #{causal_reservoir_encoder.1} parent=5 // pred_check
        %p9031 = pneg %p9030
      $region94: #{causal_reservoir_encoder.1} parent=5 // pred_check_branch
        %9033 = sbr.rel (%p9031) target = $region96
      $region95: #{causal_reservoir_encoder.1} parent=5 // pred_region
        %s9034 = ssub.s32 %s22, 2
        // Predicated region
        $region97: #{causal_reservoir_encoder.1} parent=95 // pred_check
          %p9035 = pneg %p350
        $region98: #{causal_reservoir_encoder.1} parent=95 // pred_check_branch
          %9037 = sbr.rel (%p9035) target = $region100
        $region99: #{causal_reservoir_encoder.1} parent=95 // pred_region
          %p9038 = scmp.lt.s32.totalorder %s28, 1
          %s9039 = scalar_select %p9038, %s28, 1
          %s9040 = smul.addr %s9039, 2
          %s9041 = smul.addr %s9040, 8
          %s9042 = scalar_lea.vmem %s14, %s9041
        $region100: #{causal_reservoir_encoder.1} parent=95 // pred_fallthru
          _
      $region96: #{causal_reservoir_encoder.1} parent=5 // pred_fallthru
        _
    $region6: #{causal_reservoir_encoder.1} parent=1 // loop_footer
      %s26 = sadd.s32 1, %s22
    $region7: #{causal_reservoir_encoder.1} parent=1 // loop_footer_branch
      %21 = sbr.rel target = $region3
    $region8: #{causal_reservoir_encoder.1} parent=1 // loop_exit
      _
    %9043 = vsyncpa [#allocation5], 1
    %s9044 = scalar_lea.sflag [#allocation5], 1
    %9045 = vsyncpa %s9044, 1
    %9046 = vsyncpa [#allocation7], 1

</llo_original>
